<compile_context>
chip_gen: v7x
topology: tpu7x:2x2x1
jax: 0.10.0
libtpu: 0.0.40
codegen_flags: <defaults>
</compile_context>

<pallas_src>
import functools

import jax
import jax.numpy as jnp
from jax.experimental import pallas as pl
from jax.experimental.pallas import tpu as pltpu


FEAT_DIM = 512          # MVAggregate feat_dim for r2plus1d_18
STEM_MID = 45           # r2plus1d_18 stem intermediate channels (real)
STEM_MID_PAD = 64       # padded channel count (pad channels have zero weights/bias)
STEM_OUT = 64           # r2plus1d_18 stem output channels
KT = 3                  # temporal taps
HEAD_OUT_PAD = 128      # 4 offence + 8 action logits packed into one lane-dense output
VMEM_LIMIT = 32 * 1024 * 1024


# ------------------------------------------------------------------
# Spatial stem conv: 1x7x7, stride (1,2,2), pad (0,3,3) + ReLU
# (input pre-transformed with a 2x2 space-to-depth so the 16 taps are
#  contiguous static slices; all im2col work stays in VMEM)
# ------------------------------------------------------------------

def _spatial_conv_kernel(x_ref, w_ref, b_ref, o_ref, *, Ho, Wo):
    frame = x_ref[...].reshape(x_ref.shape[1], x_ref.shape[2], x_ref.shape[3])
    cs = frame.shape[-1]                                  # 4*C s2d channels
    m = o_ref.shape[-1]                                   # STEM_MID_PAD
    acc = jnp.zeros((Ho * Wo, m), jnp.float32)
    tap = 0
    for dh in range(4):                                   # 16 taps of the repacked conv
        for dw in range(4):
            piece = frame[dh:dh + Ho, dw:dw + Wo, :].reshape(Ho * Wo, cs)
            acc = acc + jnp.dot(piece, w_ref[tap],
                                preferred_element_type=jnp.float32)
            tap += 1
    acc = jnp.maximum(acc + b_ref[...], 0.0)              # bias + ReLU
    o_ref[...] = acc.reshape(1, Ho * Wo, m).astype(o_ref.dtype)


def spatial_conv(xs2d, w_packed, b, *, Ho, Wo):
    """xs2d: (N, Hs, Ws, 4C) bf16 space-to-depth frames -> mid (N, Ho*Wo, STEM_MID_PAD)."""
    N, Hs, Ws, Cs = xs2d.shape
    taps, Cs2, M = w_packed.shape
    assert taps == 16 and Cs2 == Cs
    kern = functools.partial(_spatial_conv_kernel, Ho=Ho, Wo=Wo)
    return pl.pallas_call(
        kern,
        out_shape=jax.ShapeDtypeStruct((N, Ho * Wo, M), jnp.bfloat16),
        grid=(N,),
        in_specs=[
            pl.BlockSpec((1, Hs, Ws, Cs), lambda n: (n, 0, 0, 0)),
            pl.BlockSpec((taps, Cs, M), lambda n: (0, 0, 0)),   # weights stay resident
            pl.BlockSpec((1, M), lambda n: (0, 0)),
        ],
        out_specs=pl.BlockSpec((1, Ho * Wo, M), lambda n: (n, 0, 0)),
        compiler_params=pltpu.CompilerParams(
            dimension_semantics=("parallel",),
            vmem_limit_bytes=VMEM_LIMIT),
    )(xs2d, w_packed, b)


# ------------------------------------------------------------------
# Fused: temporal 3x1x1 conv (pad 1) + ReLU + global avg pool + 64->512 projection.
# Grid (BV, T, KT); the temporal taps are shifted index_maps into `mid` accumulated
# into a VMEM scratch; the pooled/projected features are the only HBM output.
# ------------------------------------------------------------------

def _temporal_pool_proj_kernel(mid_ref, wt_ref, bt_ref, wp_ref, bp_ref,
                               feats_ref, acc_ref, pool_ref, *, T, hw):
    t = pl.program_id(1)
    kt = pl.program_id(2)

    @pl.when(kt == 0)
    def _():
        acc_ref[...] = jnp.zeros_like(acc_ref)

    src = t + kt - 1                                   # zero-padded temporal conv
    valid = jnp.logical_and(src >= 0, src < T)

    @pl.when(valid)
    def _():
        m = mid_ref[...].reshape(hw, mid_ref.shape[-1])            # (HW, 64) bf16
        acc_ref[...] += jnp.dot(m, wt_ref[kt],
                                preferred_element_type=jnp.float32)

    @pl.when(jnp.logical_and(kt == KT - 1, t == 0))
    def _():
        pool_ref[...] = jnp.zeros_like(pool_ref)

    @pl.when(kt == KT - 1)
    def _():
        y = jnp.maximum(acc_ref[...] + bt_ref[...], 0.0)           # ReLU
        pool_ref[...] += jnp.sum(y, axis=0, keepdims=True)         # partial avg-pool

    @pl.when(jnp.logical_and(kt == KT - 1, t == T - 1))
    def _():
        pooled = pool_ref[...] * (1.0 / (T * hw))                  # (1, 64)
        feats = jnp.dot(pooled, wp_ref[...],
                        preferred_element_type=jnp.float32) + bp_ref[...]
        feats_ref[...] = feats.reshape(1, 1, feats.shape[-1])


def temporal_pool_proj(mid, w_t, b_t, w_proj, b_proj):
    """mid: (BV, T, HW, 64) bf16 -> per-clip features (BV, 1, FEAT_DIM) f32."""
    BV, T, HW, Cm = mid.shape
    kts, Cm2, Co = w_t.shape
    assert kts == KT and Cm2 == Cm
    F = w_proj.shape[1]
    kern = functools.partial(_temporal_pool_proj_kernel, T=T, hw=HW)
    return pl.pallas_call(
        kern,
        out_shape=jax.ShapeDtypeStruct((BV, 1, F), jnp.float32),
        grid=(BV, T, KT),
        in_specs=[
            pl.BlockSpec(
                (1, 1, HW, Cm),
                lambda bv, t, kt: (bv,
                                   jnp.minimum(jnp.maximum(t + kt - 1, 0), T - 1),
                                   0, 0)),
            pl.BlockSpec((KT, Cm, Co), lambda bv, t, kt: (0, 0, 0)),
            pl.BlockSpec((1, Co), lambda bv, t, kt: (0, 0)),
            pl.BlockSpec((Co, F), lambda bv, t, kt: (0, 0)),
            pl.BlockSpec((1, F), lambda bv, t, kt: (0, 0)),
        ],
        out_specs=pl.BlockSpec((1, 1, F), lambda bv, t, kt: (bv, 0, 0)),
        scratch_shapes=[pltpu.VMEM((HW, Co), jnp.float32),   # conv accumulator
                        pltpu.VMEM((1, Co), jnp.float32)],   # pooling accumulator
        compiler_params=pltpu.CompilerParams(
            dimension_semantics=("parallel", "arbitrary", "arbitrary"),
            vmem_limit_bytes=VMEM_LIMIT),
    )(mid, w_t, b_t, w_proj, b_proj)


# ------------------------------------------------------------------
# MV head: max over views + LayerNorm/Linear heads, fused, one lane-dense output
# ------------------------------------------------------------------

def _layernorm(x, w, b, eps=1e-5):
    mu = jnp.mean(x, axis=-1, keepdims=True)
    var = jnp.mean(jnp.square(x - mu), axis=-1, keepdims=True)
    return (x - mu) * jax.lax.rsqrt(var + eps) * w + b


def _mv_head_kernel(feats_ref,
                    lni_w, lni_b, wi1, bi1, wi2, bi2,
                    lno_w, lno_b, wo1, bo1,
                    lna_w, lna_b, wa1, ba1,
                    w_out, b_out, out_ref):
    feats = feats_ref[...]                                  # (B, V, F) f32
    pooled = jnp.max(feats, axis=1)                         # ViewMaxAggregate

    inter = _layernorm(pooled, lni_w[...], lni_b[...])
    inter = jnp.dot(inter.astype(wi1.dtype), wi1[...],
                    preferred_element_type=jnp.float32) + bi1[...]
    inter = jnp.dot(inter.astype(wi2.dtype), wi2[...],
                    preferred_element_type=jnp.float32) + bi2[...]

    offp = _layernorm(inter, lno_w[...], lno_b[...])
    offp = jnp.dot(offp.astype(wo1.dtype), wo1[...],
                   preferred_element_type=jnp.float32) + bo1[...]
    actp = _layernorm(inter, lna_w[...], lna_b[...])
    actp = jnp.dot(actp.astype(wa1.dtype), wa1[...],
                   preferred_element_type=jnp.float32) + ba1[...]

    # Final (512,4) and (512,8) projections packed into one block-diagonal
    # (1024, 128) weight -> single lane-dense (B, 128) output.
    both = jnp.concatenate([offp, actp], axis=-1)           # (B, 1024)
    logits = jnp.dot(both.astype(w_out.dtype), w_out[...],
                     preferred_element_type=jnp.float32) + b_out[...]
    out_ref[...] = logits


def mv_head(feats, p):
    B = feats.shape[0]
    args = [feats,
            p['ln_i_w'], p['ln_i_b'], p['wi1'], p['bi1'], p['wi2'], p['bi2'],
            p['ln_o_w'], p['ln_o_b'], p['wo1'], p['bo1'],
            p['ln_a_w'], p['ln_a_b'], p['wa1'], p['ba1'],
            p['w_out'], p['b_out']]
    in_specs = [pl.BlockSpec(a.shape, lambda i, nd=a.ndim: (0,) * nd) for a in args]
    return pl.pallas_call(
        _mv_head_kernel,
        out_shape=jax.ShapeDtypeStruct((B, HEAD_OUT_PAD), jnp.float32),
        grid=(1,),
        in_specs=in_specs,
        out_specs=pl.BlockSpec((B, HEAD_OUT_PAD), lambda i: (0, 0)),
        compiler_params=pltpu.CompilerParams(dimension_semantics=("arbitrary",)),
    )(*args)


# ------------------------------------------------------------------
# Forward pass (wrapper glue is layout-only: transpose, pad, space-to-depth)
# ------------------------------------------------------------------

def mvnetwork_forward(mvimages, params):
    B, V, C, T, H, W = mvimages.shape
    N = B * V * T
    BV = B * V

    # Channels-last frames once at the top; bf16 for all large activations.
    x = jnp.transpose(mvimages, (0, 1, 3, 4, 5, 2)).reshape(N, H, W, C)
    x = x.astype(jnp.bfloat16)

    # Pad H, W by 3 (conv padding), then 2x2 space-to-depth (stride-2 -> stride-1).
    Hp, Wp = H + 6, W + 6
    eh, ew = Hp % 2, Wp % 2
    xpad = jnp.pad(x, ((0, 0), (3, 3 + eh), (3, 3 + ew), (0, 0)))
    Hp += eh
    Wp += ew
    Hs, Ws = Hp // 2, Wp // 2
    xs2d = xpad.reshape(N, Hs, 2, Ws, 2, C).transpose(0, 1, 3, 2, 4, 5)
    xs2d = xs2d.reshape(N, Hs, Ws, 4 * C)

    Ho = (H + 6 - 7) // 2 + 1
    Wo = (W + 6 - 7) // 2 + 1
    HW = Ho * Wo

    # --- R(2+1)D stem spatial conv + ReLU (in-kernel taps, no HBM im2col) ---
    mid = spatial_conv(xs2d, params['w_spatial'], params['b_spatial'], Ho=Ho, Wo=Wo)
    mid = mid.reshape(BV, T, HW, STEM_MID_PAD)

    # --- temporal conv + ReLU + global avg pool + projection, fused ---
    # TODO(synk): residual layers 1-4 of r2plus1d_18 omitted (see header note).
    feats = temporal_pool_proj(mid, params['w_temporal'], params['b_temporal'],
                               params['w_proj'], params['b_proj'])
    feats = feats.reshape(B, V, FEAT_DIM)

    # --- multi-view aggregation + classification heads ---
    logits = mv_head(feats, params)                     # (B, 128) packed
    pred_offence_severity = logits[:, :4]
    pred_action = logits[:, 4:12]
    attention = feats                                   # per-view features (aux)
    return pred_offence_severity, pred_action, attention


# ------------------------------------------------------------------
# Deterministic synthetic parameters (shapes follow the module's __init__;
# conv weights are generated in their "natural" layout and repacked for the kernels,
# with all padded channels / taps explicitly zero so semantics are unaffected)
# ------------------------------------------------------------------

def init_params(key):
    ks = jax.random.split(key, 9)

    def w(k, shape, scale=0.02):
        return (scale * jax.random.normal(k, shape)).astype(jnp.float32)

    F = FEAT_DIM
    C = 3

    # Spatial 1x7x7 stride-2 conv: natural weight (kh, kw, c, 45) repacked into the
    # space-to-depth layout (16 taps, 4*C s2d channels, STEM_MID_PAD out channels).
    w7 = w(ks[0], (7, 7, C, STEM_MID))
    w8 = jnp.zeros((8, 8, C, STEM_MID), jnp.float32).at[:7, :7].set(w7)
    wp = w8.reshape(4, 2, 4, 2, C, STEM_MID).transpose(0, 2, 1, 3, 4, 5)
    wp = jnp.pad(wp, ((0, 0),) * 5 + ((0, STEM_MID_PAD - STEM_MID),))
    w_spatial = wp.reshape(16, 4 * C, STEM_MID_PAD).astype(jnp.bfloat16)
    b_spatial = jnp.zeros((1, STEM_MID_PAD), jnp.float32)

    # Temporal 3x1x1 conv: (kt, 45, 64) with input channels zero-padded 45 -> 64.
    wt = w(ks[1], (KT, STEM_MID, STEM_OUT))
    w_temporal = jnp.pad(
        wt, ((0, 0), (0, STEM_MID_PAD - STEM_MID), (0, 0))).astype(jnp.bfloat16)
    b_temporal = jnp.zeros((1, STEM_OUT), jnp.float32)

    # Projection of pooled stem features to feat_dim=512 (kept f32, it is tiny).
    w_proj = w(ks[2], (STEM_OUT, F))
    b_proj = jnp.zeros((1, F), jnp.float32)

    # Final (512,4) and (512,8) head weights packed block-diagonally into (1024, 128).
    wo2 = w(ks[6], (F, 4))
    wa2 = w(ks[8], (F, 8))
    w_out = jnp.zeros((2 * F, HEAD_OUT_PAD), jnp.float32)
    w_out = w_out.at[:F, 0:4].set(wo2)
    w_out = w_out.at[F:, 4:12].set(wa2)

    return {
        'w_spatial': w_spatial, 'b_spatial': b_spatial,
        'w_temporal': w_temporal, 'b_temporal': b_temporal,
        'w_proj': w_proj, 'b_proj': b_proj,
        # inter: LayerNorm(512) -> Linear(512,512) -> Linear(512,512)
        'ln_i_w': jnp.ones((1, F), jnp.float32), 'ln_i_b': jnp.zeros((1, F), jnp.float32),
        'wi1': w(ks[3], (F, F)).astype(jnp.bfloat16), 'bi1': jnp.zeros((1, F), jnp.float32),
        'wi2': w(ks[4], (F, F)).astype(jnp.bfloat16), 'bi2': jnp.zeros((1, F), jnp.float32),
        # fc_offence: LayerNorm -> Linear(512,512) -> Linear(512,4)
        'ln_o_w': jnp.ones((1, F), jnp.float32), 'ln_o_b': jnp.zeros((1, F), jnp.float32),
        'wo1': w(ks[5], (F, F)).astype(jnp.bfloat16), 'bo1': jnp.zeros((1, F), jnp.float32),
        # fc_action: LayerNorm -> Linear(512,512) -> Linear(512,8)
        'ln_a_w': jnp.ones((1, F), jnp.float32), 'ln_a_b': jnp.zeros((1, F), jnp.float32),
        'wa1': w(ks[7], (F, F)).astype(jnp.bfloat16), 'ba1': jnp.zeros((1, F), jnp.float32),
        'w_out': w_out.astype(jnp.bfloat16),
        'b_out': jnp.zeros((1, HEAD_OUT_PAD), jnp.float32),
    }


if __name__ == "__main__":
    key = jax.random.PRNGKey(0)
    k_in, k_p = jax.random.split(key)

    B, V, C, T, H, W = 2, 2, 3, 4, 16, 16
    mvimages = jax.random.normal(k_in, (B, V, C, T, H, W), dtype=jnp.float32)
    params = init_params(k_p)

    fwd = jax.jit(mvnetwork_forward)
    pred_offence, pred_action, attention = fwd(mvimages, params)
    jax.block_until_ready((pred_offence, pred_action, attention))

    assert pred_offence.shape == (B, 4)
    assert pred_action.shape == (B, 8)
    assert attention.shape == (B, V, FEAT_DIM)
    assert jnp.all(jnp.isfinite(pred_offence)) and jnp.all(jnp.isfinite(pred_action))
    assert jnp.all(jnp.isfinite(attention))
    print("KERNEL_OK")
</pallas_src>

<mosaic_0001>
module attributes {stable_mosaic.version = 11 : i64} {
  func.func @_spatial_conv_kernel(%arg0: i32, %arg1: memref<1x11x11x12xbf16, #tpu.memory_space<vmem>>, %arg2: memref<16x12x64xbf16, #tpu.memory_space<vmem>>, %arg3: memref<1x64xf32, #tpu.memory_space<vmem>>, %arg4: memref<1x64x64xbf16, #tpu.memory_space<vmem>>) attributes {dimension_semantics = [#tpu.dimension_semantics<parallel>], iteration_bounds = array<i64: 16>, scalar_prefetch = 0 : i64, scratch_operands = 0 : i64, tpu.core_type = #tpu.core_type<tc>, window_params = [{transform_indices = @transform_0, window_bounds = array<i64: 1, 11, 11, 12>}, {pipeline_mode = #tpu.pipeline_mode<synchronous>, transform_indices = @transform_1, window_bounds = array<i64: 16, 12, 64>}, {pipeline_mode = #tpu.pipeline_mode<synchronous>, transform_indices = @transform_2, window_bounds = array<i64: 1, 64>}, {transform_indices = @transform_3, window_bounds = array<i64: 1, 64, 64>}]} {
    %c0 = arith.constant 0 : index
    %c0_0 = arith.constant 0 : index
    %c0_1 = arith.constant 0 : index
    %c0_2 = arith.constant 0 : index
    %0 = vector.load %arg1[%c0, %c0_0, %c0_1, %c0_2] : memref<1x11x11x12xbf16, #tpu.memory_space<vmem>>, vector<1x11x11x12xbf16>
    %1 = vector.shape_cast %0 : vector<1x11x11x12xbf16> to vector<11x11x12xbf16>
    %cst = arith.constant 0.000000e+00 : f32
    %2 = vector.broadcast %cst : f32 to vector<64x64xf32>
    %3 = vector.extract_strided_slice %1 {offsets = [0, 0, 0], sizes = [8, 8, 12], strides = [1, 1, 1]} : vector<11x11x12xbf16> to vector<8x8x12xbf16>
    %4 = vector.shape_cast %3 : vector<8x8x12xbf16> to vector<64x12xbf16>
    %c0_3 = arith.constant 0 : index
    %c0_4 = arith.constant 0 : index
    %c0_5 = arith.constant 0 : index
    %5 = vector.load %arg2[%c0_3, %c0_4, %c0_5] : memref<16x12x64xbf16, #tpu.memory_space<vmem>>, vector<1x12x64xbf16>
    %6 = vector.shape_cast %5 : vector<1x12x64xbf16> to vector<12x64xbf16>
    %cst_6 = arith.constant dense<0.000000e+00> : vector<64x64xf32>
    %7 = tpu.matmul %4, %6, %cst_6 {dimension_numbers = #tpu.dot_dimension_numbers<[1], [0], [0], [1], [0, 0, 1, 1], [], []>} : vector<64x12xbf16>, vector<12x64xbf16>, vector<64x64xf32> -> vector<64x64xf32>
    %8 = arith.addf %2, %7 : vector<64x64xf32>
    %9 = vector.extract_strided_slice %1 {offsets = [0, 1, 0], sizes = [8, 8, 12], strides = [1, 1, 1]} : vector<11x11x12xbf16> to vector<8x8x12xbf16>
    %10 = vector.shape_cast %9 : vector<8x8x12xbf16> to vector<64x12xbf16>
    %c1 = arith.constant 1 : index
    %c0_7 = arith.constant 0 : index
    %c0_8 = arith.constant 0 : index
    %11 = vector.load %arg2[%c1, %c0_7, %c0_8] : memref<16x12x64xbf16, #tpu.memory_space<vmem>>, vector<1x12x64xbf16>
    %12 = vector.shape_cast %11 : vector<1x12x64xbf16> to vector<12x64xbf16>
    %cst_9 = arith.constant dense<0.000000e+00> : vector<64x64xf32>
    %13 = tpu.matmul %10, %12, %cst_9 {dimension_numbers = #tpu.dot_dimension_numbers<[1], [0], [0], [1], [0, 0, 1, 1], [], []>} : vector<64x12xbf16>, vector<12x64xbf16>, vector<64x64xf32> -> vector<64x64xf32>
    %14 = arith.addf %8, %13 : vector<64x64xf32>
    %15 = vector.extract_strided_slice %1 {offsets = [0, 2, 0], sizes = [8, 8, 12], strides = [1, 1, 1]} : vector<11x11x12xbf16> to vector<8x8x12xbf16>
    %16 = vector.shape_cast %15 : vector<8x8x12xbf16> to vector<64x12xbf16>
    %c2 = arith.constant 2 : index
    %c0_10 = arith.constant 0 : index
    %c0_11 = arith.constant 0 : index
    %17 = vector.load %arg2[%c2, %c0_10, %c0_11] : memref<16x12x64xbf16, #tpu.memory_space<vmem>>, vector<1x12x64xbf16>
    %18 = vector.shape_cast %17 : vector<1x12x64xbf16> to vector<12x64xbf16>
    %cst_12 = arith.constant dense<0.000000e+00> : vector<64x64xf32>
    %19 = tpu.matmul %16, %18, %cst_12 {dimension_numbers = #tpu.dot_dimension_numbers<[1], [0], [0], [1], [0, 0, 1, 1], [], []>} : vector<64x12xbf16>, vector<12x64xbf16>, vector<64x64xf32> -> vector<64x64xf32>
    %20 = arith.addf %14, %19 : vector<64x64xf32>
    %21 = vector.extract_strided_slice %1 {offsets = [0, 3, 0], sizes = [8, 8, 12], strides = [1, 1, 1]} : vector<11x11x12xbf16> to vector<8x8x12xbf16>
    %22 = vector.shape_cast %21 : vector<8x8x12xbf16> to vector<64x12xbf16>
    %c3 = arith.constant 3 : index
    %c0_13 = arith.constant 0 : index
    %c0_14 = arith.constant 0 : index
    %23 = vector.load %arg2[%c3, %c0_13, %c0_14] : memref<16x12x64xbf16, #tpu.memory_space<vmem>>, vector<1x12x64xbf16>
    %24 = vector.shape_cast %23 : vector<1x12x64xbf16> to vector<12x64xbf16>
    %cst_15 = arith.constant dense<0.000000e+00> : vector<64x64xf32>
    %25 = tpu.matmul %22, %24, %cst_15 {dimension_numbers = #tpu.dot_dimension_numbers<[1], [0], [0], [1], [0, 0, 1, 1], [], []>} : vector<64x12xbf16>, vector<12x64xbf16>, vector<64x64xf32> -> vector<64x64xf32>
    %26 = arith.addf %20, %25 : vector<64x64xf32>
    %27 = vector.extract_strided_slice %1 {offsets = [1, 0, 0], sizes = [8, 8, 12], strides = [1, 1, 1]} : vector<11x11x12xbf16> to vector<8x8x12xbf16>
    %28 = vector.shape_cast %27 : vector<8x8x12xbf16> to vector<64x12xbf16>
    %c4 = arith.constant 4 : index
    %c0_16 = arith.constant 0 : index
    %c0_17 = arith.constant 0 : index
    %29 = vector.load %arg2[%c4, %c0_16, %c0_17] : memref<16x12x64xbf16, #tpu.memory_space<vmem>>, vector<1x12x64xbf16>
    %30 = vector.shape_cast %29 : vector<1x12x64xbf16> to vector<12x64xbf16>
    %cst_18 = arith.constant dense<0.000000e+00> : vector<64x64xf32>
    %31 = tpu.matmul %28, %30, %cst_18 {dimension_numbers = #tpu.dot_dimension_numbers<[1], [0], [0], [1], [0, 0, 1, 1], [], []>} : vector<64x12xbf16>, vector<12x64xbf16>, vector<64x64xf32> -> vector<64x64xf32>
    %32 = arith.addf %26, %31 : vector<64x64xf32>
    %33 = vector.extract_strided_slice %1 {offsets = [1, 1, 0], sizes = [8, 8, 12], strides = [1, 1, 1]} : vector<11x11x12xbf16> to vector<8x8x12xbf16>
    %34 = vector.shape_cast %33 : vector<8x8x12xbf16> to vector<64x12xbf16>
    %c5 = arith.constant 5 : index
    %c0_19 = arith.constant 0 : index
    %c0_20 = arith.constant 0 : index
    %35 = vector.load %arg2[%c5, %c0_19, %c0_20] : memref<16x12x64xbf16, #tpu.memory_space<vmem>>, vector<1x12x64xbf16>
    %36 = vector.shape_cast %35 : vector<1x12x64xbf16> to vector<12x64xbf16>
    %cst_21 = arith.constant dense<0.000000e+00> : vector<64x64xf32>
    %37 = tpu.matmul %34, %36, %cst_21 {dimension_numbers = #tpu.dot_dimension_numbers<[1], [0], [0], [1], [0, 0, 1, 1], [], []>} : vector<64x12xbf16>, vector<12x64xbf16>, vector<64x64xf32> -> vector<64x64xf32>
    %38 = arith.addf %32, %37 : vector<64x64xf32>
    %39 = vector.extract_strided_slice %1 {offsets = [1, 2, 0], sizes = [8, 8, 12], strides = [1, 1, 1]} : vector<11x11x12xbf16> to vector<8x8x12xbf16>
    %40 = vector.shape_cast %39 : vector<8x8x12xbf16> to vector<64x12xbf16>
    %c6 = arith.constant 6 : index
    %c0_22 = arith.constant 0 : index
    %c0_23 = arith.constant 0 : index
    %41 = vector.load %arg2[%c6, %c0_22, %c0_23] : memref<16x12x64xbf16, #tpu.memory_space<vmem>>, vector<1x12x64xbf16>
    %42 = vector.shape_cast %41 : vector<1x12x64xbf16> to vector<12x64xbf16>
    %cst_24 = arith.constant dense<0.000000e+00> : vector<64x64xf32>
    %43 = tpu.matmul %40, %42, %cst_24 {dimension_numbers = #tpu.dot_dimension_numbers<[1], [0], [0], [1], [0, 0, 1, 1], [], []>} : vector<64x12xbf16>, vector<12x64xbf16>, vector<64x64xf32> -> vector<64x64xf32>
    %44 = arith.addf %38, %43 : vector<64x64xf32>
    %45 = vector.extract_strided_slice %1 {offsets = [1, 3, 0], sizes = [8, 8, 12], strides = [1, 1, 1]} : vector<11x11x12xbf16> to vector<8x8x12xbf16>
    %46 = vector.shape_cast %45 : vector<8x8x12xbf16> to vector<64x12xbf16>
    %c7 = arith.constant 7 : index
    %c0_25 = arith.constant 0 : index
    %c0_26 = arith.constant 0 : index
    %47 = vector.load %arg2[%c7, %c0_25, %c0_26] : memref<16x12x64xbf16, #tpu.memory_space<vmem>>, vector<1x12x64xbf16>
    %48 = vector.shape_cast %47 : vector<1x12x64xbf16> to vector<12x64xbf16>
    %cst_27 = arith.constant dense<0.000000e+00> : vector<64x64xf32>
    %49 = tpu.matmul %46, %48, %cst_27 {dimension_numbers = #tpu.dot_dimension_numbers<[1], [0], [0], [1], [0, 0, 1, 1], [], []>} : vector<64x12xbf16>, vector<12x64xbf16>, vector<64x64xf32> -> vector<64x64xf32>
    %50 = arith.addf %44, %49 : vector<64x64xf32>
    %51 = vector.extract_strided_slice %1 {offsets = [2, 0, 0], sizes = [8, 8, 12], strides = [1, 1, 1]} : vector<11x11x12xbf16> to vector<8x8x12xbf16>
    %52 = vector.shape_cast %51 : vector<8x8x12xbf16> to vector<64x12xbf16>
    %c8 = arith.constant 8 : index
    %c0_28 = arith.constant 0 : index
    %c0_29 = arith.constant 0 : index
    %53 = vector.load %arg2[%c8, %c0_28, %c0_29] : memref<16x12x64xbf16, #tpu.memory_space<vmem>>, vector<1x12x64xbf16>
    %54 = vector.shape_cast %53 : vector<1x12x64xbf16> to vector<12x64xbf16>
    %cst_30 = arith.constant dense<0.000000e+00> : vector<64x64xf32>
    %55 = tpu.matmul %52, %54, %cst_30 {dimension_numbers = #tpu.dot_dimension_numbers<[1], [0], [0], [1], [0, 0, 1, 1], [], []>} : vector<64x12xbf16>, vector<12x64xbf16>, vector<64x64xf32> -> vector<64x64xf32>
    %56 = arith.addf %50, %55 : vector<64x64xf32>
    %57 = vector.extract_strided_slice %1 {offsets = [2, 1, 0], sizes = [8, 8, 12], strides = [1, 1, 1]} : vector<11x11x12xbf16> to vector<8x8x12xbf16>
    %58 = vector.shape_cast %57 : vector<8x8x12xbf16> to vector<64x12xbf16>
    %c9 = arith.constant 9 : index
    %c0_31 = arith.constant 0 : index
    %c0_32 = arith.constant 0 : index
    %59 = vector.load %arg2[%c9, %c0_31, %c0_32] : memref<16x12x64xbf16, #tpu.memory_space<vmem>>, vector<1x12x64xbf16>
    %60 = vector.shape_cast %59 : vector<1x12x64xbf16> to vector<12x64xbf16>
    %cst_33 = arith.constant dense<0.000000e+00> : vector<64x64xf32>
    %61 = tpu.matmul %58, %60, %cst_33 {dimension_numbers = #tpu.dot_dimension_numbers<[1], [0], [0], [1], [0, 0, 1, 1], [], []>} : vector<64x12xbf16>, vector<12x64xbf16>, vector<64x64xf32> -> vector<64x64xf32>
    %62 = arith.addf %56, %61 : vector<64x64xf32>
    %63 = vector.extract_strided_slice %1 {offsets = [2, 2, 0], sizes = [8, 8, 12], strides = [1, 1, 1]} : vector<11x11x12xbf16> to vector<8x8x12xbf16>
    %64 = vector.shape_cast %63 : vector<8x8x12xbf16> to vector<64x12xbf16>
    %c10 = arith.constant 10 : index
    %c0_34 = arith.constant 0 : index
    %c0_35 = arith.constant 0 : index
    %65 = vector.load %arg2[%c10, %c0_34, %c0_35] : memref<16x12x64xbf16, #tpu.memory_space<vmem>>, vector<1x12x64xbf16>
    %66 = vector.shape_cast %65 : vector<1x12x64xbf16> to vector<12x64xbf16>
    %cst_36 = arith.constant dense<0.000000e+00> : vector<64x64xf32>
    %67 = tpu.matmul %64, %66, %cst_36 {dimension_numbers = #tpu.dot_dimension_numbers<[1], [0], [0], [1], [0, 0, 1, 1], [], []>} : vector<64x12xbf16>, vector<12x64xbf16>, vector<64x64xf32> -> vector<64x64xf32>
    %68 = arith.addf %62, %67 : vector<64x64xf32>
    %69 = vector.extract_strided_slice %1 {offsets = [2, 3, 0], sizes = [8, 8, 12], strides = [1, 1, 1]} : vector<11x11x12xbf16> to vector<8x8x12xbf16>
    %70 = vector.shape_cast %69 : vector<8x8x12xbf16> to vector<64x12xbf16>
    %c11 = arith.constant 11 : index
    %c0_37 = arith.constant 0 : index
    %c0_38 = arith.constant 0 : index
    %71 = vector.load %arg2[%c11, %c0_37, %c0_38] : memref<16x12x64xbf16, #tpu.memory_space<vmem>>, vector<1x12x64xbf16>
    %72 = vector.shape_cast %71 : vector<1x12x64xbf16> to vector<12x64xbf16>
    %cst_39 = arith.constant dense<0.000000e+00> : vector<64x64xf32>
    %73 = tpu.matmul %70, %72, %cst_39 {dimension_numbers = #tpu.dot_dimension_numbers<[1], [0], [0], [1], [0, 0, 1, 1], [], []>} : vector<64x12xbf16>, vector<12x64xbf16>, vector<64x64xf32> -> vector<64x64xf32>
    %74 = arith.addf %68, %73 : vector<64x64xf32>
    %75 = vector.extract_strided_slice %1 {offsets = [3, 0, 0], sizes = [8, 8, 12], strides = [1, 1, 1]} : vector<11x11x12xbf16> to vector<8x8x12xbf16>
    %76 = vector.shape_cast %75 : vector<8x8x12xbf16> to vector<64x12xbf16>
    %c12 = arith.constant 12 : index
    %c0_40 = arith.constant 0 : index
    %c0_41 = arith.constant 0 : index
    %77 = vector.load %arg2[%c12, %c0_40, %c0_41] : memref<16x12x64xbf16, #tpu.memory_space<vmem>>, vector<1x12x64xbf16>
    %78 = vector.shape_cast %77 : vector<1x12x64xbf16> to vector<12x64xbf16>
    %cst_42 = arith.constant dense<0.000000e+00> : vector<64x64xf32>
    %79 = tpu.matmul %76, %78, %cst_42 {dimension_numbers = #tpu.dot_dimension_numbers<[1], [0], [0], [1], [0, 0, 1, 1], [], []>} : vector<64x12xbf16>, vector<12x64xbf16>, vector<64x64xf32> -> vector<64x64xf32>
    %80 = arith.addf %74, %79 : vector<64x64xf32>
    %81 = vector.extract_strided_slice %1 {offsets = [3, 1, 0], sizes = [8, 8, 12], strides = [1, 1, 1]} : vector<11x11x12xbf16> to vector<8x8x12xbf16>
    %82 = vector.shape_cast %81 : vector<8x8x12xbf16> to vector<64x12xbf16>
    %c13 = arith.constant 13 : index
    %c0_43 = arith.constant 0 : index
    %c0_44 = arith.constant 0 : index
    %83 = vector.load %arg2[%c13, %c0_43, %c0_44] : memref<16x12x64xbf16, #tpu.memory_space<vmem>>, vector<1x12x64xbf16>
    %84 = vector.shape_cast %83 : vector<1x12x64xbf16> to vector<12x64xbf16>
    %cst_45 = arith.constant dense<0.000000e+00> : vector<64x64xf32>
    %85 = tpu.matmul %82, %84, %cst_45 {dimension_numbers = #tpu.dot_dimension_numbers<[1], [0], [0], [1], [0, 0, 1, 1], [], []>} : vector<64x12xbf16>, vector<12x64xbf16>, vector<64x64xf32> -> vector<64x64xf32>
    %86 = arith.addf %80, %85 : vector<64x64xf32>
    %87 = vector.extract_strided_slice %1 {offsets = [3, 2, 0], sizes = [8, 8, 12], strides = [1, 1, 1]} : vector<11x11x12xbf16> to vector<8x8x12xbf16>
    %88 = vector.shape_cast %87 : vector<8x8x12xbf16> to vector<64x12xbf16>
    %c14 = arith.constant 14 : index
    %c0_46 = arith.constant 0 : index
    %c0_47 = arith.constant 0 : index
    %89 = vector.load %arg2[%c14, %c0_46, %c0_47] : memref<16x12x64xbf16, #tpu.memory_space<vmem>>, vector<1x12x64xbf16>
    %90 = vector.shape_cast %89 : vector<1x12x64xbf16> to vector<12x64xbf16>
    %cst_48 = arith.constant dense<0.000000e+00> : vector<64x64xf32>
    %91 = tpu.matmul %88, %90, %cst_48 {dimension_numbers = #tpu.dot_dimension_numbers<[1], [0], [0], [1], [0, 0, 1, 1], [], []>} : vector<64x12xbf16>, vector<12x64xbf16>, vector<64x64xf32> -> vector<64x64xf32>
    %92 = arith.addf %86, %91 : vector<64x64xf32>
    %93 = vector.extract_strided_slice %1 {offsets = [3, 3, 0], sizes = [8, 8, 12], strides = [1, 1, 1]} : vector<11x11x12xbf16> to vector<8x8x12xbf16>
    %94 = vector.shape_cast %93 : vector<8x8x12xbf16> to vector<64x12xbf16>
    %c15 = arith.constant 15 : index
    %c0_49 = arith.constant 0 : index
    %c0_50 = arith.constant 0 : index
    %95 = vector.load %arg2[%c15, %c0_49, %c0_50] : memref<16x12x64xbf16, #tpu.memory_space<vmem>>, vector<1x12x64xbf16>
    %96 = vector.shape_cast %95 : vector<1x12x64xbf16> to vector<12x64xbf16>
    %cst_51 = arith.constant dense<0.000000e+00> : vector<64x64xf32>
    %97 = tpu.matmul %94, %96, %cst_51 {dimension_numbers = #tpu.dot_dimension_numbers<[1], [0], [0], [1], [0, 0, 1, 1], [], []>} : vector<64x12xbf16>, vector<12x64xbf16>, vector<64x64xf32> -> vector<64x64xf32>
    %98 = arith.addf %92, %97 : vector<64x64xf32>
    %c0_52 = arith.constant 0 : index
    %c0_53 = arith.constant 0 : index
    %99 = vector.load %arg3[%c0_52, %c0_53] : memref<1x64xf32, #tpu.memory_space<vmem>>, vector<1x64xf32>
    %100 = vector.broadcast %99 : vector<1x64xf32> to vector<64x64xf32>
    %101 = arith.addf %98, %100 : vector<64x64xf32>
    %cst_54 = arith.constant 0.000000e+00 : f32
    %102 = vector.broadcast %cst_54 : f32 to vector<64x64xf32>
    %103 = arith.maximumf %101, %102 : vector<64x64xf32>
    %104 = vector.shape_cast %103 : vector<64x64xf32> to vector<1x64x64xf32>
    %105 = arith.truncf %104 : vector<1x64x64xf32> to vector<1x64x64xbf16>
    %c0_55 = arith.constant 0 : index
    %c0_56 = arith.constant 0 : index
    %c0_57 = arith.constant 0 : index
    %106 = vector.load %arg4[%c0_55, %c0_56, %c0_57] : memref<1x64x64xbf16, #tpu.memory_space<vmem>>, vector<1x64x64xbf16>
    tpu.vector_store %arg4[%c0_55, %c0_56, %c0_57], %105 {strides = array<i32>} : memref<1x64x64xbf16, #tpu.memory_space<vmem>>, vector<1x64x64xbf16>,
    return
  }
  func.func @transform_0(%arg0: i32) -> (i32, i32, i32, i32) {
    %c0_i32 = arith.constant 0 : i32
    %c0_i32_0 = arith.constant 0 : i32
    %c0_i32_1 = arith.constant 0 : i32
    %c0_i32_2 = arith.constant 0 : i32
    return %arg0, %c0_i32, %c0_i32_0, %c0_i32_1 : i32, i32, i32, i32
  }
  func.func @transform_1(%arg0: i32) -> (i32, i32, i32) {
    %c0_i32 = arith.constant 0 : i32
    %c0_i32_0 = arith.constant 0 : i32
    %c0_i32_1 = arith.constant 0 : i32
    %c0_i32_2 = arith.constant 0 : i32
    return %c0_i32, %c0_i32_0, %c0_i32_1 : i32, i32, i32
  }
  func.func @transform_2(%arg0: i32) -> (i32, i32) {
    %c0_i32 = arith.constant 0 : i32
    %c0_i32_0 = arith.constant 0 : i32
    %c0_i32_1 = arith.constant 0 : i32
    return %c0_i32, %c0_i32_0 : i32, i32
  }
  func.func @transform_3(%arg0: i32) -> (i32, i32, i32) {
    %c0_i32 = arith.constant 0 : i32
    %c0_i32_0 = arith.constant 0 : i32
    %c0_i32_1 = arith.constant 0 : i32
    return %arg0, %c0_i32, %c0_i32_0 : i32, i32, i32
  }
}

module attributes {stable_mosaic.version = 11 : i64} {
  func.func @_temporal_pool_proj_kernel(%arg0: i32, %arg1: i32, %arg2: i32, %arg3: memref<1x1x64x64xbf16, #tpu.memory_space<vmem>>, %arg4: memref<3x64x64xbf16, #tpu.memory_space<vmem>>, %arg5: memref<1x64xf32, #tpu.memory_space<vmem>>, %arg6: memref<64x512xf32, #tpu.memory_space<vmem>>, %arg7: memref<1x512xf32, #tpu.memory_space<vmem>>, %arg8: memref<1x1x512xf32, #tpu.memory_space<vmem>>, %arg9: memref<64x64xf32, #tpu.memory_space<vmem>>, %arg10: memref<1x64xf32, #tpu.memory_space<vmem>>) attributes {dimension_semantics = [#tpu.dimension_semantics<parallel>, #tpu.dimension_semantics<arbitrary>, #tpu.dimension_semantics<arbitrary>], iteration_bounds = array<i64: 4, 4, 3>, scalar_prefetch = 0 : i64, scratch_operands = 2 : i64, tpu.core_type = #tpu.core_type<tc>, window_params = [{transform_indices = @transform_0, window_bounds = array<i64: 1, 1, 64, 64>}, {pipeline_mode = #tpu.pipeline_mode<synchronous>, transform_indices = @transform_1, window_bounds = array<i64: 3, 64, 64>}, {pipeline_mode = #tpu.pipeline_mode<synchronous>, transform_indices = @transform_2, window_bounds = array<i64: 1, 64>}, {pipeline_mode = #tpu.pipeline_mode<synchronous>, transform_indices = @transform_3, window_bounds = array<i64: 64, 512>}, {pipeline_mode = #tpu.pipeline_mode<synchronous>, transform_indices = @transform_4, window_bounds = array<i64: 1, 512>}, {transform_indices = @transform_5, window_bounds = array<i64: 1, 1, 512>}]} {
    %c0_i32 = arith.constant 0 : i32
    %0 = arith.cmpi eq, %arg2, %c0_i32 : i32
    %1 = arith.extui %0 : i1 to i32
    %c0_i32_0 = arith.constant 0 : i32
    %2 = arith.cmpi ne, %1, %c0_i32_0 : i32
    scf.if %2 {
      %cst = arith.constant 0.000000e+00 : f32
      %23 = vector.broadcast %cst : f32 to vector<64x64xf32>
      %c0 = arith.constant 0 : index
      %c0_9 = arith.constant 0 : index
      %24 = vector.load %arg9[%c0, %c0_9] : memref<64x64xf32, #tpu.memory_space<vmem>>, vector<64x64xf32>
      tpu.vector_store %arg9[%c0, %c0_9], %23 {strides = array<i32>} : memref<64x64xf32, #tpu.memory_space<vmem>>, vector<64x64xf32>,
    } else {
    }
    %3 = arith.addi %arg1, %arg2 : i32
    %c1_i32 = arith.constant 1 : i32
    %4 = arith.subi %3, %c1_i32 : i32
    %c0_i32_1 = arith.constant 0 : i32
    %5 = arith.cmpi sge, %4, %c0_i32_1 : i32
    %c4_i32 = arith.constant 4 : i32
    %6 = arith.cmpi slt, %4, %c4_i32 : i32
    %7 = arith.andi %5, %6 : i1
    %8 = arith.extui %7 : i1 to i32
    %c0_i32_2 = arith.constant 0 : i32
    %9 = arith.cmpi ne, %8, %c0_i32_2 : i32
    scf.if %9 {
      %c0 = arith.constant 0 : index
      %c0_9 = arith.constant 0 : index
      %c0_10 = arith.constant 0 : index
      %c0_11 = arith.constant 0 : index
      %23 = vector.load %arg3[%c0, %c0_9, %c0_10, %c0_11] : memref<1x1x64x64xbf16, #tpu.memory_space<vmem>>, vector<1x1x64x64xbf16>
      %24 = vector.shape_cast %23 : vector<1x1x64x64xbf16> to vector<64x64xbf16>
      %c0_12 = arith.constant 0 : index
      %c0_13 = arith.constant 0 : index
      %25 = vector.load %arg9[%c0_12, %c0_13] : memref<64x64xf32, #tpu.memory_space<vmem>>, vector<64x64xf32>
      %26 = arith.index_cast %arg2 : i32 to index
      %c0_14 = arith.constant 0 : index
      %c0_15 = arith.constant 0 : index
      %27 = vector.load %arg4[%26, %c0_14, %c0_15] : memref<3x64x64xbf16, #tpu.memory_space<vmem>>, vector<1x64x64xbf16>
      %28 = vector.shape_cast %27 : vector<1x64x64xbf16> to vector<64x64xbf16>
      %cst = arith.constant dense<0.000000e+00> : vector<64x64xf32>
      %29 = tpu.matmul %24, %28, %cst {dimension_numbers = #tpu.dot_dimension_numbers<[1], [0], [0], [1], [0, 0, 1, 1], [], []>} : vector<64x64xbf16>, vector<64x64xbf16>, vector<64x64xf32> -> vector<64x64xf32>
      %30 = arith.addf %25, %29 : vector<64x64xf32>
      %c0_16 = arith.constant 0 : index
      %c0_17 = arith.constant 0 : index
      %31 = vector.load %arg9[%c0_16, %c0_17] : memref<64x64xf32, #tpu.memory_space<vmem>>, vector<64x64xf32>
      tpu.vector_store %arg9[%c0_16, %c0_17], %30 {strides = array<i32>} : memref<64x64xf32, #tpu.memory_space<vmem>>, vector<64x64xf32>,
    } else {
    }
    %c2_i32 = arith.constant 2 : i32
    %10 = arith.cmpi eq, %arg2, %c2_i32 : i32
    %c0_i32_3 = arith.constant 0 : i32
    %11 = arith.cmpi eq, %arg1, %c0_i32_3 : i32
    %12 = arith.andi %10, %11 : i1
    %13 = arith.extui %12 : i1 to i32
    %c0_i32_4 = arith.constant 0 : i32
    %14 = arith.cmpi ne, %13, %c0_i32_4 : i32
    scf.if %14 {
      %cst = arith.constant 0.000000e+00 : f32
      %23 = vector.broadcast %cst : f32 to vector<1x64xf32>
      %c0 = arith.constant 0 : index
      %c0_9 = arith.constant 0 : index
      %24 = vector.load %arg10[%c0, %c0_9] : memref<1x64xf32, #tpu.memory_space<vmem>>, vector<1x64xf32>
      tpu.vector_store %arg10[%c0, %c0_9], %23 {strides = array<i32>} : memref<1x64xf32, #tpu.memory_space<vmem>>, vector<1x64xf32>,
    } else {
    }
    %c2_i32_5 = arith.constant 2 : i32
    %15 = arith.cmpi eq, %arg2, %c2_i32_5 : i32
    %16 = arith.extui %15 : i1 to i32
    %c0_i32_6 = arith.constant 0 : i32
    %17 = arith.cmpi ne, %16, %c0_i32_6 : i32
    scf.if %17 {
      %c0 = arith.constant 0 : index
      %c0_9 = arith.constant 0 : index
      %23 = vector.load %arg9[%c0, %c0_9] : memref<64x64xf32, #tpu.memory_space<vmem>>, vector<64x64xf32>
      %c0_10 = arith.constant 0 : index
      %c0_11 = arith.constant 0 : index
      %24 = vector.load %arg5[%c0_10, %c0_11] : memref<1x64xf32, #tpu.memory_space<vmem>>, vector<1x64xf32>
      %25 = vector.broadcast %24 : vector<1x64xf32> to vector<64x64xf32>
      %26 = arith.addf %23, %25 : vector<64x64xf32>
      %cst = arith.constant 0.000000e+00 : f32
      %27 = vector.broadcast %cst : f32 to vector<64x64xf32>
      %28 = arith.maximumf %26, %27 : vector<64x64xf32>
      %c0_12 = arith.constant 0 : index
      %c0_13 = arith.constant 0 : index
      %29 = vector.load %arg10[%c0_12, %c0_13] : memref<1x64xf32, #tpu.memory_space<vmem>>, vector<1x64xf32>
      %cst_14 = arith.constant dense<0.000000e+00> : vector<64xf32>
      %30 = vector.multi_reduction <add>, %28, %cst_14 [0] : vector<64x64xf32> to vector<64xf32>
      %31 = vector.shape_cast %30 : vector<64xf32> to vector<1x64xf32>
      %32 = arith.addf %29, %31 : vector<1x64xf32>
      %c0_15 = arith.constant 0 : index
      %c0_16 = arith.constant 0 : index
      %33 = vector.load %arg10[%c0_15, %c0_16] : memref<1x64xf32, #tpu.memory_space<vmem>>, vector<1x64xf32>
      tpu.vector_store %arg10[%c0_15, %c0_16], %32 {strides = array<i32>} : memref<1x64xf32, #tpu.memory_space<vmem>>, vector<1x64xf32>,
    } else {
    }
    %c2_i32_7 = arith.constant 2 : i32
    %18 = arith.cmpi eq, %arg2, %c2_i32_7 : i32
    %c3_i32 = arith.constant 3 : i32
    %19 = arith.cmpi eq, %arg1, %c3_i32 : i32
    %20 = arith.andi %18, %19 : i1
    %21 = arith.extui %20 : i1 to i32
    %c0_i32_8 = arith.constant 0 : i32
    %22 = arith.cmpi ne, %21, %c0_i32_8 : i32
    scf.if %22 {
      %c0 = arith.constant 0 : index
      %c0_9 = arith.constant 0 : index
      %23 = vector.load %arg10[%c0, %c0_9] : memref<1x64xf32, #tpu.memory_space<vmem>>, vector<1x64xf32>
      %cst = arith.constant 3.906250e-03 : f32
      %24 = vector.broadcast %cst : f32 to vector<1x64xf32>
      %25 = arith.mulf %23, %24 : vector<1x64xf32>
      %c0_10 = arith.constant 0 : index
      %c0_11 = arith.constant 0 : index
      %26 = vector.load %arg6[%c0_10, %c0_11] : memref<64x512xf32, #tpu.memory_space<vmem>>, vector<64x512xf32>
      %cst_12 = arith.constant dense<0.000000e+00> : vector<1x512xf32>
      %27 = tpu.matmul %25, %26, %cst_12 {dimension_numbers = #tpu.dot_dimension_numbers<[1], [0], [0], [1], [0, 0, 1, 1], [], []>} : vector<1x64xf32>, vector<64x512xf32>, vector<1x512xf32> -> vector<1x512xf32>
      %c0_13 = arith.constant 0 : index
      %c0_14 = arith.constant 0 : index
      %28 = vector.load %arg7[%c0_13, %c0_14] : memref<1x512xf32, #tpu.memory_space<vmem>>, vector<1x512xf32>
      %29 = arith.addf %27, %28 : vector<1x512xf32>
      %30 = vector.shape_cast %29 : vector<1x512xf32> to vector<1x1x512xf32>
      %c0_15 = arith.constant 0 : index
      %c0_16 = arith.constant 0 : index
      %c0_17 = arith.constant 0 : index
      %31 = vector.load %arg8[%c0_15, %c0_16, %c0_17] : memref<1x1x512xf32, #tpu.memory_space<vmem>>, vector<1x1x512xf32>
      tpu.vector_store %arg8[%c0_15, %c0_16, %c0_17], %30 {strides = array<i32>} : memref<1x1x512xf32, #tpu.memory_space<vmem>>, vector<1x1x512xf32>,
    } else {
    }
    return
  }
  func.func @transform_0(%arg0: i32, %arg1: i32, %arg2: i32) -> (i32, i32, i32, i32) {
    %0 = arith.addi %arg1, %arg2 : i32
    %c1_i32 = arith.constant 1 : i32
    %1 = arith.subi %0, %c1_i32 : i32
    %c0_i32 = arith.constant 0 : i32
    %2 = arith.maxsi %1, %c0_i32 : i32
    %c3_i32 = arith.constant 3 : i32
    %3 = arith.minsi %2, %c3_i32 : i32
    %c0_i32_0 = arith.constant 0 : i32
    %c0_i32_1 = arith.constant 0 : i32
    %c0_i32_2 = arith.constant 0 : i32
    return %arg0, %3, %c0_i32_0, %c0_i32_1 : i32, i32, i32, i32
  }
  func.func @transform_1(%arg0: i32, %arg1: i32, %arg2: i32) -> (i32, i32, i32) {
    %c0_i32 = arith.constant 0 : i32
    %c0_i32_0 = arith.constant 0 : i32
    %c0_i32_1 = arith.constant 0 : i32
    %c0_i32_2 = arith.constant 0 : i32
    return %c0_i32, %c0_i32_0, %c0_i32_1 : i32, i32, i32
  }
  func.func @transform_2(%arg0: i32, %arg1: i32, %arg2: i32) -> (i32, i32) {
    %c0_i32 = arith.constant 0 : i32
    %c0_i32_0 = arith.constant 0 : i32
    %c0_i32_1 = arith.constant 0 : i32
    return %c0_i32, %c0_i32_0 : i32, i32
  }
  func.func @transform_3(%arg0: i32, %arg1: i32, %arg2: i32) -> (i32, i32) {
    %c0_i32 = arith.constant 0 : i32
    %c0_i32_0 = arith.constant 0 : i32
    %c0_i32_1 = arith.constant 0 : i32
    return %c0_i32, %c0_i32_0 : i32, i32
  }
  func.func @transform_4(%arg0: i32, %arg1: i32, %arg2: i32) -> (i32, i32) {
    %c0_i32 = arith.constant 0 : i32
    %c0_i32_0 = arith.constant 0 : i32
    %c0_i32_1 = arith.constant 0 : i32
    return %c0_i32, %c0_i32_0 : i32, i32
  }
  func.func @transform_5(%arg0: i32, %arg1: i32, %arg2: i32) -> (i32, i32, i32) {
    %c0_i32 = arith.constant 0 : i32
    %c0_i32_0 = arith.constant 0 : i32
    %c0_i32_1 = arith.constant 0 : i32
    return %arg0, %c0_i32, %c0_i32_0 : i32, i32, i32
  }
}

module attributes {stable_mosaic.version = 11 : i64} {
  func.func @_mv_head_kernel(%arg0: i32, %arg1: memref<2x2x512xf32, #tpu.memory_space<vmem>>, %arg2: memref<1x512xf32, #tpu.memory_space<vmem>>, %arg3: memref<1x512xf32, #tpu.memory_space<vmem>>, %arg4: memref<512x512xbf16, #tpu.memory_space<vmem>>, %arg5: memref<1x512xf32, #tpu.memory_space<vmem>>, %arg6: memref<512x512xbf16, #tpu.memory_space<vmem>>, %arg7: memref<1x512xf32, #tpu.memory_space<vmem>>, %arg8: memref<1x512xf32, #tpu.memory_space<vmem>>, %arg9: memref<1x512xf32, #tpu.memory_space<vmem>>, %arg10: memref<512x512xbf16, #tpu.memory_space<vmem>>, %arg11: memref<1x512xf32, #tpu.memory_space<vmem>>, %arg12: memref<1x512xf32, #tpu.memory_space<vmem>>, %arg13: memref<1x512xf32, #tpu.memory_space<vmem>>, %arg14: memref<512x512xbf16, #tpu.memory_space<vmem>>, %arg15: memref<1x512xf32, #tpu.memory_space<vmem>>, %arg16: memref<1024x128xbf16, #tpu.memory_space<vmem>>, %arg17: memref<1x128xf32, #tpu.memory_space<vmem>>, %arg18: memref<2x128xf32, #tpu.memory_space<vmem>>) attributes {dimension_semantics = [#tpu.dimension_semantics<arbitrary>], iteration_bounds = array<i64: 1>, scalar_prefetch = 0 : i64, scratch_operands = 0 : i64, tpu.core_type = #tpu.core_type<tc>, window_params = [{pipeline_mode = #tpu.pipeline_mode<synchronous>, transform_indices = @transform_0, window_bounds = array<i64: 2, 2, 512>}, {pipeline_mode = #tpu.pipeline_mode<synchronous>, transform_indices = @transform_1, window_bounds = array<i64: 1, 512>}, {pipeline_mode = #tpu.pipeline_mode<synchronous>, transform_indices = @transform_2, window_bounds = array<i64: 1, 512>}, {pipeline_mode = #tpu.pipeline_mode<synchronous>, transform_indices = @transform_3, window_bounds = array<i64: 512, 512>}, {pipeline_mode = #tpu.pipeline_mode<synchronous>, transform_indices = @transform_4, window_bounds = array<i64: 1, 512>}, {pipeline_mode = #tpu.pipeline_mode<synchronous>, transform_indices = @transform_5, window_bounds = array<i64: 512, 512>}, {pipeline_mode = #tpu.pipeline_mode<synchronous>, transform_indices = @transform_6, window_bounds = array<i64: 1, 512>}, {pipeline_mode = #tpu.pipeline_mode<synchronous>, transform_indices = @transform_7, window_bounds = array<i64: 1, 512>}, {pipeline_mode = #tpu.pipeline_mode<synchronous>, transform_indices = @transform_8, window_bounds = array<i64: 1, 512>}, {pipeline_mode = #tpu.pipeline_mode<synchronous>, transform_indices = @transform_9, window_bounds = array<i64: 512, 512>}, {pipeline_mode = #tpu.pipeline_mode<synchronous>, transform_indices = @transform_10, window_bounds = array<i64: 1, 512>}, {pipeline_mode = #tpu.pipeline_mode<synchronous>, transform_indices = @transform_11, window_bounds = array<i64: 1, 512>}, {pipeline_mode = #tpu.pipeline_mode<synchronous>, transform_indices = @transform_12, window_bounds = array<i64: 1, 512>}, {pipeline_mode = #tpu.pipeline_mode<synchronous>, transform_indices = @transform_13, window_bounds = array<i64: 512, 512>}, {pipeline_mode = #tpu.pipeline_mode<synchronous>, transform_indices = @transform_14, window_bounds = array<i64: 1, 512>}, {pipeline_mode = #tpu.pipeline_mode<synchronous>, transform_indices = @transform_15, window_bounds = array<i64: 1024, 128>}, {pipeline_mode = #tpu.pipeline_mode<synchronous>, transform_indices = @transform_16, window_bounds = array<i64: 1, 128>}, {pipeline_mode = #tpu.pipeline_mode<synchronous>, transform_indices = @transform_17, window_bounds = array<i64: 2, 128>}]} {
    %c0 = arith.constant 0 : index
    %c0_0 = arith.constant 0 : index
    %c0_1 = arith.constant 0 : index
    %0 = vector.load %arg1[%c0, %c0_0, %c0_1] : memref<2x2x512xf32, #tpu.memory_space<vmem>>, vector<2x2x512xf32>
    %cst = arith.constant dense<0xFF800000> : vector<2x512xf32>
    %1 = vector.multi_reduction <maximumf>, %0, %cst [1] : vector<2x2x512xf32> to vector<2x512xf32>
    %c0_2 = arith.constant 0 : index
    %c0_3 = arith.constant 0 : index
    %2 = vector.load %arg2[%c0_2, %c0_3] : memref<1x512xf32, #tpu.memory_space<vmem>>, vector<1x512xf32>
    %c0_4 = arith.constant 0 : index
    %c0_5 = arith.constant 0 : index
    %3 = vector.load %arg3[%c0_4, %c0_5] : memref<1x512xf32, #tpu.memory_space<vmem>>, vector<1x512xf32>
    %cst_6 = arith.constant dense<0.000000e+00> : vector<2xf32>
    %4 = vector.multi_reduction <add>, %1, %cst_6 [1] : vector<2x512xf32> to vector<2xf32>
    %5 = vector.shape_cast %4 : vector<2xf32> to vector<2x1xf32>
    %cst_7 = arith.constant 5.120000e+02 : f32
    %6 = vector.broadcast %cst_7 : f32 to vector<2x1xf32>
    %7 = arith.divf %5, %6 : vector<2x1xf32>
    %8 = vector.broadcast %7 : vector<2x1xf32> to vector<2x512xf32>
    %9 = arith.subf %1, %8 : vector<2x512xf32>
    %10 = arith.mulf %9, %9 : vector<2x512xf32>
    %cst_8 = arith.constant dense<0.000000e+00> : vector<2xf32>
    %11 = vector.multi_reduction <add>, %10, %cst_8 [1] : vector<2x512xf32> to vector<2xf32>
    %12 = vector.shape_cast %11 : vector<2xf32> to vector<2x1xf32>
    %cst_9 = arith.constant 5.120000e+02 : f32
    %13 = vector.broadcast %cst_9 : f32 to vector<2x1xf32>
    %14 = arith.divf %12, %13 : vector<2x1xf32>
    %15 = vector.broadcast %7 : vector<2x1xf32> to vector<2x512xf32>
    %16 = arith.subf %1, %15 : vector<2x512xf32>
    %cst_10 = arith.constant 9.99999974E-6 : f32
    %17 = vector.broadcast %cst_10 : f32 to vector<2x1xf32>
    %18 = arith.addf %14, %17 : vector<2x1xf32>
    %19 = math.rsqrt %18 : vector<2x1xf32>
    %20 = vector.broadcast %19 : vector<2x1xf32> to vector<2x512xf32>
    %21 = arith.mulf %16, %20 : vector<2x512xf32>
    %22 = vector.broadcast %2 : vector<1x512xf32> to vector<2x512xf32>
    %23 = arith.mulf %21, %22 : vector<2x512xf32>
    %24 = vector.broadcast %3 : vector<1x512xf32> to vector<2x512xf32>
    %25 = arith.addf %23, %24 : vector<2x512xf32>
    %26 = arith.truncf %25 : vector<2x512xf32> to vector<2x512xbf16>
    %c0_11 = arith.constant 0 : index
    %c0_12 = arith.constant 0 : index
    %27 = vector.load %arg4[%c0_11, %c0_12] : memref<512x512xbf16, #tpu.memory_space<vmem>>, vector<512x512xbf16>
    %cst_13 = arith.constant dense<0.000000e+00> : vector<2x512xf32>
    %28 = tpu.matmul %26, %27, %cst_13 {dimension_numbers = #tpu.dot_dimension_numbers<[1], [0], [0], [1], [0, 0, 1, 1], [], []>} : vector<2x512xbf16>, vector<512x512xbf16>, vector<2x512xf32> -> vector<2x512xf32>
    %c0_14 = arith.constant 0 : index
    %c0_15 = arith.constant 0 : index
    %29 = vector.load %arg5[%c0_14, %c0_15] : memref<1x512xf32, #tpu.memory_space<vmem>>, vector<1x512xf32>
    %30 = vector.broadcast %29 : vector<1x512xf32> to vector<2x512xf32>
    %31 = arith.addf %28, %30 : vector<2x512xf32>
    %32 = arith.truncf %31 : vector<2x512xf32> to vector<2x512xbf16>
    %c0_16 = arith.constant 0 : index
    %c0_17 = arith.constant 0 : index
    %33 = vector.load %arg6[%c0_16, %c0_17] : memref<512x512xbf16, #tpu.memory_space<vmem>>, vector<512x512xbf16>
    %cst_18 = arith.constant dense<0.000000e+00> : vector<2x512xf32>
    %34 = tpu.matmul %32, %33, %cst_18 {dimension_numbers = #tpu.dot_dimension_numbers<[1], [0], [0], [1], [0, 0, 1, 1], [], []>} : vector<2x512xbf16>, vector<512x512xbf16>, vector<2x512xf32> -> vector<2x512xf32>
    %c0_19 = arith.constant 0 : index
    %c0_20 = arith.constant 0 : index
    %35 = vector.load %arg7[%c0_19, %c0_20] : memref<1x512xf32, #tpu.memory_space<vmem>>, vector<1x512xf32>
    %36 = vector.broadcast %35 : vector<1x512xf32> to vector<2x512xf32>
    %37 = arith.addf %34, %36 : vector<2x512xf32>
    %c0_21 = arith.constant 0 : index
    %c0_22 = arith.constant 0 : index
    %38 = vector.load %arg8[%c0_21, %c0_22] : memref<1x512xf32, #tpu.memory_space<vmem>>, vector<1x512xf32>
    %c0_23 = arith.constant 0 : index
    %c0_24 = arith.constant 0 : index
    %39 = vector.load %arg9[%c0_23, %c0_24] : memref<1x512xf32, #tpu.memory_space<vmem>>, vector<1x512xf32>
    %cst_25 = arith.constant dense<0.000000e+00> : vector<2xf32>
    %40 = vector.multi_reduction <add>, %37, %cst_25 [1] : vector<2x512xf32> to vector<2xf32>
    %41 = vector.shape_cast %40 : vector<2xf32> to vector<2x1xf32>
    %cst_26 = arith.constant 5.120000e+02 : f32
    %42 = vector.broadcast %cst_26 : f32 to vector<2x1xf32>
    %43 = arith.divf %41, %42 : vector<2x1xf32>
    %44 = vector.broadcast %43 : vector<2x1xf32> to vector<2x512xf32>
    %45 = arith.subf %37, %44 : vector<2x512xf32>
    %46 = arith.mulf %45, %45 : vector<2x512xf32>
    %cst_27 = arith.constant dense<0.000000e+00> : vector<2xf32>
    %47 = vector.multi_reduction <add>, %46, %cst_27 [1] : vector<2x512xf32> to vector<2xf32>
    %48 = vector.shape_cast %47 : vector<2xf32> to vector<2x1xf32>
    %cst_28 = arith.constant 5.120000e+02 : f32
    %49 = vector.broadcast %cst_28 : f32 to vector<2x1xf32>
    %50 = arith.divf %48, %49 : vector<2x1xf32>
    %51 = vector.broadcast %43 : vector<2x1xf32> to vector<2x512xf32>
    %52 = arith.subf %37, %51 : vector<2x512xf32>
    %cst_29 = arith.constant 9.99999974E-6 : f32
    %53 = vector.broadcast %cst_29 : f32 to vector<2x1xf32>
    %54 = arith.addf %50, %53 : vector<2x1xf32>
    %55 = math.rsqrt %54 : vector<2x1xf32>
    %56 = vector.broadcast %55 : vector<2x1xf32> to vector<2x512xf32>
    %57 = arith.mulf %52, %56 : vector<2x512xf32>
    %58 = vector.broadcast %38 : vector<1x512xf32> to vector<2x512xf32>
    %59 = arith.mulf %57, %58 : vector<2x512xf32>
    %60 = vector.broadcast %39 : vector<1x512xf32> to vector<2x512xf32>
    %61 = arith.addf %59, %60 : vector<2x512xf32>
    %62 = arith.truncf %61 : vector<2x512xf32> to vector<2x512xbf16>
    %c0_30 = arith.constant 0 : index
    %c0_31 = arith.constant 0 : index
    %63 = vector.load %arg10[%c0_30, %c0_31] : memref<512x512xbf16, #tpu.memory_space<vmem>>, vector<512x512xbf16>
    %cst_32 = arith.constant dense<0.000000e+00> : vector<2x512xf32>
    %64 = tpu.matmul %62, %63, %cst_32 {dimension_numbers = #tpu.dot_dimension_numbers<[1], [0], [0], [1], [0, 0, 1, 1], [], []>} : vector<2x512xbf16>, vector<512x512xbf16>, vector<2x512xf32> -> vector<2x512xf32>
    %c0_33 = arith.constant 0 : index
    %c0_34 = arith.constant 0 : index
    %65 = vector.load %arg11[%c0_33, %c0_34] : memref<1x512xf32, #tpu.memory_space<vmem>>, vector<1x512xf32>
    %66 = vector.broadcast %65 : vector<1x512xf32> to vector<2x512xf32>
    %67 = arith.addf %64, %66 : vector<2x512xf32>
    %c0_35 = arith.constant 0 : index
    %c0_36 = arith.constant 0 : index
    %68 = vector.load %arg12[%c0_35, %c0_36] : memref<1x512xf32, #tpu.memory_space<vmem>>, vector<1x512xf32>
    %c0_37 = arith.constant 0 : index
    %c0_38 = arith.constant 0 : index
    %69 = vector.load %arg13[%c0_37, %c0_38] : memref<1x512xf32, #tpu.memory_space<vmem>>, vector<1x512xf32>
    %cst_39 = arith.constant dense<0.000000e+00> : vector<2xf32>
    %70 = vector.multi_reduction <add>, %37, %cst_39 [1] : vector<2x512xf32> to vector<2xf32>
    %71 = vector.shape_cast %70 : vector<2xf32> to vector<2x1xf32>
    %cst_40 = arith.constant 5.120000e+02 : f32
    %72 = vector.broadcast %cst_40 : f32 to vector<2x1xf32>
    %73 = arith.divf %71, %72 : vector<2x1xf32>
    %74 = vector.broadcast %73 : vector<2x1xf32> to vector<2x512xf32>
    %75 = arith.subf %37, %74 : vector<2x512xf32>
    %76 = arith.mulf %75, %75 : vector<2x512xf32>
    %cst_41 = arith.constant dense<0.000000e+00> : vector<2xf32>
    %77 = vector.multi_reduction <add>, %76, %cst_41 [1] : vector<2x512xf32> to vector<2xf32>
    %78 = vector.shape_cast %77 : vector<2xf32> to vector<2x1xf32>
    %cst_42 = arith.constant 5.120000e+02 : f32
    %79 = vector.broadcast %cst_42 : f32 to vector<2x1xf32>
    %80 = arith.divf %78, %79 : vector<2x1xf32>
    %81 = vector.broadcast %73 : vector<2x1xf32> to vector<2x512xf32>
    %82 = arith.subf %37, %81 : vector<2x512xf32>
    %cst_43 = arith.constant 9.99999974E-6 : f32
    %83 = vector.broadcast %cst_43 : f32 to vector<2x1xf32>
    %84 = arith.addf %80, %83 : vector<2x1xf32>
    %85 = math.rsqrt %84 : vector<2x1xf32>
    %86 = vector.broadcast %85 : vector<2x1xf32> to vector<2x512xf32>
    %87 = arith.mulf %82, %86 : vector<2x512xf32>
    %88 = vector.broadcast %68 : vector<1x512xf32> to vector<2x512xf32>
    %89 = arith.mulf %87, %88 : vector<2x512xf32>
    %90 = vector.broadcast %69 : vector<1x512xf32> to vector<2x512xf32>
    %91 = arith.addf %89, %90 : vector<2x512xf32>
    %92 = arith.truncf %91 : vector<2x512xf32> to vector<2x512xbf16>
    %c0_44 = arith.constant 0 : index
    %c0_45 = arith.constant 0 : index
    %93 = vector.load %arg14[%c0_44, %c0_45] : memref<512x512xbf16, #tpu.memory_space<vmem>>, vector<512x512xbf16>
    %cst_46 = arith.constant dense<0.000000e+00> : vector<2x512xf32>
    %94 = tpu.matmul %92, %93, %cst_46 {dimension_numbers = #tpu.dot_dimension_numbers<[1], [0], [0], [1], [0, 0, 1, 1], [], []>} : vector<2x512xbf16>, vector<512x512xbf16>, vector<2x512xf32> -> vector<2x512xf32>
    %c0_47 = arith.constant 0 : index
    %c0_48 = arith.constant 0 : index
    %95 = vector.load %arg15[%c0_47, %c0_48] : memref<1x512xf32, #tpu.memory_space<vmem>>, vector<1x512xf32>
    %96 = vector.broadcast %95 : vector<1x512xf32> to vector<2x512xf32>
    %97 = arith.addf %94, %96 : vector<2x512xf32>
    %98 = tpu.concatenate %67, %97 in 1 : vector<2x512xf32>, vector<2x512xf32> -> vector<2x1024xf32>
    %99 = arith.truncf %98 : vector<2x1024xf32> to vector<2x1024xbf16>
    %c0_49 = arith.constant 0 : index
    %c0_50 = arith.constant 0 : index
    %100 = vector.load %arg16[%c0_49, %c0_50] : memref<1024x128xbf16, #tpu.memory_space<vmem>>, vector<1024x128xbf16>
    %cst_51 = arith.constant dense<0.000000e+00> : vector<2x128xf32>
    %101 = tpu.matmul %99, %100, %cst_51 {dimension_numbers = #tpu.dot_dimension_numbers<[1], [0], [0], [1], [0, 0, 1, 1], [], []>} : vector<2x1024xbf16>, vector<1024x128xbf16>, vector<2x128xf32> -> vector<2x128xf32>
    %c0_52 = arith.constant 0 : index
    %c0_53 = arith.constant 0 : index
    %102 = vector.load %arg17[%c0_52, %c0_53] : memref<1x128xf32, #tpu.memory_space<vmem>>, vector<1x128xf32>
    %103 = vector.broadcast %102 : vector<1x128xf32> to vector<2x128xf32>
    %104 = arith.addf %101, %103 : vector<2x128xf32>
    %c0_54 = arith.constant 0 : index
    %c0_55 = arith.constant 0 : index
    %105 = vector.load %arg18[%c0_54, %c0_55] : memref<2x128xf32, #tpu.memory_space<vmem>>, vector<2x128xf32>
    tpu.vector_store %arg18[%c0_54, %c0_55], %104 {strides = array<i32>} : memref<2x128xf32, #tpu.memory_space<vmem>>, vector<2x128xf32>,
    return
  }
  func.func @transform_0(%arg0: i32) -> (i32, i32, i32) {
    %c0_i32 = arith.constant 0 : i32
    %c0_i32_0 = arith.constant 0 : i32
    %c0_i32_1 = arith.constant 0 : i32
    %c0_i32_2 = arith.constant 0 : i32
    return %c0_i32, %c0_i32_0, %c0_i32_1 : i32, i32, i32
  }
  func.func @transform_1(%arg0: i32) -> (i32, i32) {
    %c0_i32 = arith.constant 0 : i32
    %c0_i32_0 = arith.constant 0 : i32
    %c0_i32_1 = arith.constant 0 : i32
    return %c0_i32, %c0_i32_0 : i32, i32
  }
  func.func @transform_2(%arg0: i32) -> (i32, i32) {
    %c0_i32 = arith.constant 0 : i32
    %c0_i32_0 = arith.constant 0 : i32
    %c0_i32_1 = arith.constant 0 : i32
    return %c0_i32, %c0_i32_0 : i32, i32
  }
  func.func @transform_3(%arg0: i32) -> (i32, i32) {
    %c0_i32 = arith.constant 0 : i32
    %c0_i32_0 = arith.constant 0 : i32
    %c0_i32_1 = arith.constant 0 : i32
    return %c0_i32, %c0_i32_0 : i32, i32
  }
  func.func @transform_4(%arg0: i32) -> (i32, i32) {
    %c0_i32 = arith.constant 0 : i32
    %c0_i32_0 = arith.constant 0 : i32
    %c0_i32_1 = arith.constant 0 : i32
    return %c0_i32, %c0_i32_0 : i32, i32
  }
  func.func @transform_5(%arg0: i32) -> (i32, i32) {
    %c0_i32 = arith.constant 0 : i32
    %c0_i32_0 = arith.constant 0 : i32
    %c0_i32_1 = arith.constant 0 : i32
    return %c0_i32, %c0_i32_0 : i32, i32
  }
  func.func @transform_6(%arg0: i32) -> (i32, i32) {
    %c0_i32 = arith.constant 0 : i32
    %c0_i32_0 = arith.constant 0 : i32
    %c0_i32_1 = arith.constant 0 : i32
    return %c0_i32, %c0_i32_0 : i32, i32
  }
  func.func @transform_7(%arg0: i32) -> (i32, i32) {
    %c0_i32 = arith.constant 0 : i32
    %c0_i32_0 = arith.constant 0 : i32
    %c0_i32_1 = arith.constant 0 : i32
    return %c0_i32, %c0_i32_0 : i32, i32
  }
  func.func @transform_8(%arg0: i32) -> (i32, i32) {
    %c0_i32 = arith.constant 0 : i32
    %c0_i32_0 = arith.constant 0 : i32
    %c0_i32_1 = arith.constant 0 : i32
    return %c0_i32, %c0_i32_0 : i32, i32
  }
  func.func @transform_9(%arg0: i32) -> (i32, i32) {
    %c0_i32 = arith.constant 0 : i32
    %c0_i32_0 = arith.constant 0 : i32
    %c0_i32_1 = arith.constant 0 : i32
    return %c0_i32, %c0_i32_0 : i32, i32
  }
  func.func @transform_10(%arg0: i32) -> (i32, i32) {
    %c0_i32 = arith.constant 0 : i32
    %c0_i32_0 = arith.constant 0 : i32
    %c0_i32_1 = arith.constant 0 : i32
    return %c0_i32, %c0_i32_0 : i32, i32
  }
  func.func @transform_11(%arg0: i32) -> (i32, i32) {
    %c0_i32 = arith.constant 0 : i32
    %c0_i32_0 = arith.constant 0 : i32
    %c0_i32_1 = arith.constant 0 : i32
    return %c0_i32, %c0_i32_0 : i32, i32
  }
  func.func @transform_12(%arg0: i32) -> (i32, i32) {
    %c0_i32 = arith.constant 0 : i32
    %c0_i32_0 = arith.constant 0 : i32
    %c0_i32_1 = arith.constant 0 : i32
    return %c0_i32, %c0_i32_0 : i32, i32
  }
  func.func @transform_13(%arg0: i32) -> (i32, i32) {
    %c0_i32 = arith.constant 0 : i32
    %c0_i32_0 = arith.constant 0 : i32
    %c0_i32_1 = arith.constant 0 : i32
    return %c0_i32, %c0_i32_0 : i32, i32
  }
  func.func @transform_14(%arg0: i32) -> (i32, i32) {
    %c0_i32 = arith.constant 0 : i32
    %c0_i32_0 = arith.constant 0 : i32
    %c0_i32_1 = arith.constant 0 : i32
    return %c0_i32, %c0_i32_0 : i32, i32
  }
  func.func @transform_15(%arg0: i32) -> (i32, i32) {
    %c0_i32 = arith.constant 0 : i32
    %c0_i32_0 = arith.constant 0 : i32
    %c0_i32_1 = arith.constant 0 : i32
    return %c0_i32, %c0_i32_0 : i32, i32
  }
  func.func @transform_16(%arg0: i32) -> (i32, i32) {
    %c0_i32 = arith.constant 0 : i32
    %c0_i32_0 = arith.constant 0 : i32
    %c0_i32_1 = arith.constant 0 : i32
    return %c0_i32, %c0_i32_0 : i32, i32
  }
  func.func @transform_17(%arg0: i32) -> (i32, i32) {
    %c0_i32 = arith.constant 0 : i32
    %c0_i32_0 = arith.constant 0 : i32
    %c0_i32_1 = arith.constant 0 : i32
    return %c0_i32, %c0_i32_0 : i32, i32
  }
}

</mosaic_0001>

<llo_original>
// kernel: mvnetwork_forward.3
$region0: #{mvnetwork_forward.3}
  #allocation0 [shape = 'u32[]', space=smem, size = 0x4, offset = 0x4, fixed_abs, tag = 'smem constant byte address 0x4 - core index']
  #allocation1 [shape = 'u32[144,128]{1,0:T(1,128)}', space=vmem, size = 0x12000, scoped, tag = 'internal scratch']
  %s0 = inlined_call_operand.vmem [shape: bf16[16,11,11,12], index: 0, kind: input, shape index: {}]
  %s1 = inlined_call_operand.vmem [shape: bf16[16,12,64], index: 1, kind: input, shape index: {}]
  %s2 = inlined_call_operand.vmem [shape: f32[1,64], index: 2, kind: input, shape index: {}]
  %s3 = inlined_call_operand.vmem [shape: bf16[16,64,64], index: 3, kind: output, shape index: {}]
  %s4 = sld [smem:[#allocation0]]
  $region45: #{mvnetwork_forward.3} parent=0
    _
  %s6 = ssub.s32 1, %s4
  %s7 = scalar_select 0, %s6, %s4
  loop: start=0, step=1, limit=18
  $region2: #{mvnetwork_forward.3} parent=0 // loop_pre_header
    _
  $region3: #{mvnetwork_forward.3} parent=0 // loop_header
    %s9 = sphi 0, %s13
    %p10 = scmp.ge.s32.totalorder %s9, 18
    %s19 = sphi 0, %s21
    %s22 = sphi 0, %s19
    %s23 = sphi 0, %s22
    %s39 = sphi 0, %s23
    %s43 = sphi 0, %s43
    %s45 = sphi 0, %s43
    %s46 = sphi 0, %s45
    %s60 = sphi 0, %s46
    %s64 = sphi 0, %s64
    %s66 = sphi 0, %s64
    %s67 = sphi 0, %s66
    %s81 = sphi 0, %s67
    %s87 = sphi 0, %s89
    %s90 = sphi 0, %s87
    %s91 = sphi 0, %s90
    %s107 = sphi 0, %s91
  $region4: #{mvnetwork_forward.3} parent=0 // loop_header_branch
    %12 = sbr.rel (%p10) target = $region8
  $region5: #{mvnetwork_forward.3} parent=0 // loop_body
    %s14 = ssub.s32 %s9, 1
    %s15 = ssub.s32 %s9, 2
    %s16 = sadd.s32 %s9, 1
    %s17 = ssub.s32 %s9, %s16
    %p18 = scmp.eq.s32.totalorder %s17, 0
    %s20 = sadd.s32 %s19, 1
    %s21 = scalar_select %p18, %s19, %s20
    %p24 = pneg %p18
    %p25 = scmp.eq.s32.totalorder %s9, 15
    %p26 = por %p24, %p25
    %p27 = scmp.ne.s32.totalorder %s19, %s22
    %p28 = scmp.eq.s32.totalorder %s9, 0
    %p29 = por %p27, %p28
    %p30 = scmp.ne.s32.totalorder %s19, %s22
    %p31 = scmp.eq.s32.totalorder %s14, 15
    %p32 = por %p30, %p31
    %p33 = scmp.ne.s32.totalorder %s22, %s23
    %p34 = scmp.eq.s32.totalorder %s14, 0
    %p35 = por %p33, %p34
    %p36 = scmp.ne.s32.totalorder %s22, %s23
    %p37 = scmp.eq.s32.totalorder %s15, 15
    %p38 = por %p36, %p37
    %p40 = scmp.ne.s32.totalorder %s23, %s39
    %p41 = scmp.eq.s32.totalorder %s15, 0
    %p42 = por %p40, %p41
    %s44 = sadd.s32 %s43, 1
    %p47 = scmp.eq.s32.totalorder %s9, 15
    %p48 = scmp.ne.s32.totalorder %s43, %s45
    %p49 = scmp.eq.s32.totalorder %s9, 0
    %p50 = por %p48, %p49
    %p51 = scmp.ne.s32.totalorder %s43, %s45
    %p52 = scmp.eq.s32.totalorder %s14, 15
    %p53 = por %p51, %p52
    %p54 = scmp.ne.s32.totalorder %s45, %s46
    %p55 = scmp.eq.s32.totalorder %s14, 0
    %p56 = por %p54, %p55
    %p57 = scmp.ne.s32.totalorder %s45, %s46
    %p58 = scmp.eq.s32.totalorder %s15, 15
    %p59 = por %p57, %p58
    %p61 = scmp.ne.s32.totalorder %s46, %s60
    %p62 = scmp.eq.s32.totalorder %s15, 0
    %p63 = por %p61, %p62
    %s65 = sadd.s32 %s64, 1
    %p68 = scmp.eq.s32.totalorder %s9, 15
    %p69 = scmp.ne.s32.totalorder %s64, %s66
    %p70 = scmp.eq.s32.totalorder %s9, 0
    %p71 = por %p69, %p70
    %p72 = scmp.ne.s32.totalorder %s64, %s66
    %p73 = scmp.eq.s32.totalorder %s14, 15
    %p74 = por %p72, %p73
    %p75 = scmp.ne.s32.totalorder %s66, %s67
    %p76 = scmp.eq.s32.totalorder %s14, 0
    %p77 = por %p75, %p76
    %p78 = scmp.ne.s32.totalorder %s66, %s67
    %p79 = scmp.eq.s32.totalorder %s15, 15
    %p80 = por %p78, %p79
    %p82 = scmp.ne.s32.totalorder %s67, %s81
    %p83 = scmp.eq.s32.totalorder %s15, 0
    %p84 = por %p82, %p83
    %s85 = ssub.s32 %s9, %s16
    %p86 = scmp.eq.s32.totalorder %s85, 0
    %s88 = sadd.s32 %s87, 1
    %s89 = scalar_select %p86, %s87, %s88
    %p92 = pneg %p86
    %p93 = scmp.eq.s32.totalorder %s9, 15
    %p94 = por %p92, %p93
    %p95 = scmp.ne.s32.totalorder %s87, %s90
    %p96 = scmp.eq.s32.totalorder %s9, 0
    %p97 = por %p95, %p96
    %p98 = scmp.ne.s32.totalorder %s87, %s90
    %p99 = scmp.eq.s32.totalorder %s14, 15
    %p100 = por %p98, %p99
    %p101 = scmp.ne.s32.totalorder %s90, %s91
    %p102 = scmp.eq.s32.totalorder %s14, 0
    %p103 = por %p101, %p102
    %p104 = scmp.ne.s32.totalorder %s90, %s91
    %p105 = scmp.eq.s32.totalorder %s15, 15
    %p106 = por %p104, %p105
    %p108 = scmp.ne.s32.totalorder %s91, %s107
    %p109 = scmp.eq.s32.totalorder %s15, 0
    %p110 = por %p108, %p109
    %p111 = scmp.le.s32.totalorder 1, %s9
    %p112 = scmp.lt.s32.totalorder %s9, 17
    %p113 = pnand %p111, %p112
    %p114 = pneg %p113
    // Predicated region
    $region9: #{mvnetwork_forward.3} parent=5 // pred_check
      _
    $region10: #{mvnetwork_forward.3} parent=5 // pred_check_branch
      %116 = sbr.rel (%p113) target = $region12
    $region11: #{mvnetwork_forward.3} parent=5 // pred_region
      %s117 = ssub.s32 %s9, 1
      // Predicated region
      $region13: #{mvnetwork_forward.3} parent=11 // pred_check
        %p118 = pneg %p56
      $region14: #{mvnetwork_forward.3} parent=11 // pred_check_branch
        %120 = sbr.rel (%p118) target = $region16
      $region15: #{mvnetwork_forward.3} parent=11 // pred_region
        _
      $region16: #{mvnetwork_forward.3} parent=11 // pred_fallthru
        _
      // Predicated region
      $region17: #{mvnetwork_forward.3} parent=11 // pred_check
        %p121 = pneg %p77
      $region18: #{mvnetwork_forward.3} parent=11 // pred_check_branch
        %123 = sbr.rel (%p121) target = $region20
      $region19: #{mvnetwork_forward.3} parent=11 // pred_region
        _
      $region20: #{mvnetwork_forward.3} parent=11 // pred_fallthru
        _
    $region12: #{mvnetwork_forward.3} parent=5 // pred_fallthru
      _
    %p124 = scmp.lt.s32.totalorder %s9, 16
    // Predicated region
    $region21: #{mvnetwork_forward.3} parent=5 // pred_check
      %p125 = pneg %p124
    $region22: #{mvnetwork_forward.3} parent=5 // pred_check_branch
      %127 = sbr.rel (%p125) target = $region24
    $region23: #{mvnetwork_forward.3} parent=5 // pred_region
      // Predicated region
      $region25: #{mvnetwork_forward.3} parent=23 // pred_check
        %p128 = pneg %p29
      $region26: #{mvnetwork_forward.3} parent=23 // pred_check_branch
        %130 = sbr.rel (%p128) target = $region28
      $region27: #{mvnetwork_forward.3} parent=23 // pred_region
        %p131 = scmp.lt.s32.totalorder %s9, 15
        %s132 = scalar_select %p131, %s9, 15
        %s133 = smul.addr %s132, 22
        %s134 = smul.addr %s133, 4
        %s135 = scalar_lea.vmem %s0, %s134
      $region28: #{mvnetwork_forward.3} parent=23 // pred_fallthru
        _
    $region24: #{mvnetwork_forward.3} parent=5 // pred_fallthru
      _
    %p136 = scmp.le.s32.totalorder 1, %s9
    %p137 = scmp.lt.s32.totalorder %s9, 17
    %p138 = pnand %p136, %p137
    %p139 = pneg %p138
    // Predicated region
    $region29: #{mvnetwork_forward.3} parent=5 // pred_check
      _
    $region30: #{mvnetwork_forward.3} parent=5 // pred_check_branch
      %141 = sbr.rel (%p138) target = $region32
    $region31: #{mvnetwork_forward.3} parent=5 // pred_region
      %s142 = ssub.s32 %s9, 1
      %p143 = scmp.lt.s32.totalorder %s14, 15
      %s144 = scalar_select %p143, %s14, 15
      %s145 = smul.addr %s144, 22
      %s146 = smul.addr %s145, 4
      %s147 = scalar_lea.vmem %s0, %s146
      %p148 = pneg %p35
      %p149 = pneg %p32
      %p150 = pneg %p56
      %p151 = pneg %p53
      %p152 = pneg %p77
      %p153 = pneg %p74
      %p154 = pneg %p103
      %p155 = pneg %p100
      %p156 = scmp.lt.s32.totalorder %s14, 15
      %s157 = scalar_select %p156, %s14, 15
      %s158 = smul.addr %s157, 8
      %s159 = smul.addr %s158, 4
      %s160 = scalar_lea.vmem %s3, %s159
      %p161 = scmp.lt.s32.totalorder %s14, 15
      %s162 = scalar_select %p161, %s14, 15
      %s163 = smul.addr %s162, 22
      %s164 = smul.addr %s163, 4
      %s165 = scalar_lea.vmem %s0, %s164
      %p166 = scmp.lt.s32.totalorder %s14, 15
      %s167 = scalar_select %p166, %s14, 15
      %s168 = smul.addr %s167, 8
      %s169 = smul.addr %s168, 4
      %s170 = scalar_lea.vmem %s3, %s169
      %v172 = vld [vmem:[%s165] sm:$0xf]
      %v173 = vld [vmem:[%s165 + $0x4] sm:$0x3]
      %v174 = vld [vmem:[%s165 + $0x8] sm:$0xf]
      %v175 = vld [vmem:[%s165 + $0xc] sm:$0x3]
      %v176 = vld [vmem:[%s165 + $0x10] sm:$0xf]
      %v177 = vld [vmem:[%s165 + $0x14] sm:$0x3]
      %v178 = vld [vmem:[%s165 + $0x18] sm:$0xf]
      %v179 = vld [vmem:[%s165 + $0x1c] sm:$0x3]
      %v180 = vld [vmem:[%s165 + $0x20] sm:$0xf]
      %v181 = vld [vmem:[%s165 + $0x24] sm:$0x3]
      %v182 = vld [vmem:[%s165 + $0x28] sm:$0xf]
      %v183 = vld [vmem:[%s165 + $0x2c] sm:$0x3]
      %v184 = vld [vmem:[%s165 + $0x30] sm:$0xf]
      %v185 = vld [vmem:[%s165 + $0x34] sm:$0x3]
      %v186 = vld [vmem:[%s165 + $0x38] sm:$0xf]
      %v187 = vld [vmem:[%s165 + $0x3c] sm:$0x3]
      %v188 = vld [vmem:[%s165 + $0x40] sm:$0xf]
      %v189 = vld [vmem:[%s165 + $0x44] sm:$0x3]
      %v190 = vld [vmem:[%s165 + $0x48] sm:$0xf]
      %v191 = vld [vmem:[%s165 + $0x4c] sm:$0x3]
      %v192 = vld [vmem:[%s165 + $0x50] sm:$0xf]
      %v193 = vld [vmem:[%s165 + $0x54] sm:$0x3]
      %v194 = vld [vmem:[%s1] sm:$0xf]
      %v195 = vld [vmem:[%s1 + $0x4] sm:$0x3]
      %vm196 = vsmask.f32 3328
      %vm197 = vsmask.f32 7440
      %vm198 = vmor %vm196, %vm197
      %v200 = vshrl.u32 %v172, 16
      %v202 = vrot.slane %v200, 4
      %v203 = vshll.u32 %v172, 16
      %v205 = vrot.slane %v203, 5
      %v206 = vor.u32 %v202, %v205
      %v207 = vrot.slane %v206, 4
      %v209 = vshll.u32 %v173, 16
      %v211 = vrot.slane %v209, 5
      %v212 = vsel %vm198, %v207, %v211
      %v214 = vshrl.u32 %v174, 16
      %v216 = vrot.slane %v214, 4
      %v217 = vshll.u32 %v174, 16
      %v219 = vrot.slane %v217, 5
      %v220 = vor.u32 %v216, %v219
      %v221 = vrot.slane %v220, 4
      %v223 = vshll.u32 %v175, 16
      %v225 = vrot.slane %v223, 5
      %v226 = vsel %vm198, %v221, %v225
      %v228 = vshrl.u32 %v176, 16
      %v230 = vrot.slane %v228, 4
      %v231 = vshll.u32 %v176, 16
      %v233 = vrot.slane %v231, 5
      %v234 = vor.u32 %v230, %v233
      %v235 = vrot.slane %v234, 4
      %v237 = vshll.u32 %v177, 16
      %v239 = vrot.slane %v237, 5
      %v240 = vsel %vm198, %v235, %v239
      %v242 = vshrl.u32 %v178, 16
      %v244 = vrot.slane %v242, 4
      %v245 = vshll.u32 %v178, 16
      %v247 = vrot.slane %v245, 5
      %v248 = vor.u32 %v244, %v247
      %v249 = vrot.slane %v248, 4
      %v251 = vshll.u32 %v179, 16
      %v253 = vrot.slane %v251, 5
      %v254 = vsel %vm198, %v249, %v253
      %v256 = vshrl.u32 %v180, 16
      %v258 = vrot.slane %v256, 4
      %v259 = vshll.u32 %v180, 16
      %v261 = vrot.slane %v259, 5
      %v262 = vor.u32 %v258, %v261
      %v263 = vrot.slane %v262, 4
      %v265 = vshll.u32 %v181, 16
      %v267 = vrot.slane %v265, 5
      %v268 = vsel %vm198, %v263, %v267
      %v270 = vshrl.u32 %v182, 16
      %v272 = vrot.slane %v270, 4
      %v273 = vshll.u32 %v182, 16
      %v275 = vrot.slane %v273, 5
      %v276 = vor.u32 %v272, %v275
      %v277 = vrot.slane %v276, 4
      %v279 = vshll.u32 %v183, 16
      %v281 = vrot.slane %v279, 5
      %v282 = vsel %vm198, %v277, %v281
      %v284 = vshrl.u32 %v184, 16
      %v286 = vrot.slane %v284, 4
      %v287 = vshll.u32 %v184, 16
      %v289 = vrot.slane %v287, 5
      %v290 = vor.u32 %v286, %v289
      %v291 = vrot.slane %v290, 4
      %v293 = vshll.u32 %v185, 16
      %v295 = vrot.slane %v293, 5
      %v296 = vsel %vm198, %v291, %v295
      %v298 = vshrl.u32 %v186, 16
      %v300 = vrot.slane %v298, 4
      %v301 = vshll.u32 %v186, 16
      %v303 = vrot.slane %v301, 5
      %v304 = vor.u32 %v300, %v303
      %v305 = vrot.slane %v304, 4
      %v307 = vshll.u32 %v187, 16
      %v309 = vrot.slane %v307, 5
      %v310 = vsel %vm198, %v305, %v309
      %s311 = scalar_lea.vmem %s1, 8
      %v312 = vld [vmem:[%s311] sm:$0xf]
      %v313 = vld [vmem:[%s311 + $0x4] sm:$0x3]
      %v314 = vunpack.c.l.b16 %v212
      %v315 = vunpack.c.l.b16 %v226
      %v316 = vunpack.c.l.b16 %v240
      %v317 = vunpack.c.l.b16 %v254
      %v318 = vunpack.c.l.b16 %v268
      %v319 = vunpack.c.l.b16 %v282
      %v320 = vunpack.c.l.b16 %v296
      %v321 = vunpack.c.l.b16 %v310
      %v322 = vpack.c.b16 %v315, %v314
      %v323 = vpack.c.b16 %v317, %v316
      %v324 = vpack.c.b16 %v319, %v318
      %v325 = vpack.c.b16 %v321, %v320
      %v328 = vunpack.c.l.b16 %v312
      %v329 = vunpack.c.l.b16 %v313
      %v330 = vpack.c.b16 %v329, %v328
      %vm331 = vcmask 97280
      %v333 = vsel %vm331, %v322, 0
      %v336 = vsel %vm331, %v323, 0
      %v339 = vsel %vm331, %v324, 0
      %v342 = vsel %vm331, %v325, 0
      %vm344 = vcmask 1045504
      %v346 = vsel %vm344, %v330, 0
      %348 = vmatprep.subr.bf16.mxu0 0
      %349 = vmatpush1.bf16.msra.mxu0 %v346
      %350 = vmatprep.subr.bf16.mxu0 0
      %351 = vmatpush1.bf16.msra.mxu0 0
      %352 = vmatprep.subr.bf16.mxu0 0
      %353 = vmatpush1.bf16.msra.mxu0 0
      %354 = vmatprep.subr.bf16.mxu0 0
      %355 = vmatpush1.bf16.msra.mxu0 0
      %356 = vmatprep.subr.bf16.mxu0 0
      %357 = vmatpush1.bf16.msra.mxu0 0
      %358 = vmatprep.subr.bf16.mxu0 0
      %359 = vmatpush1.bf16.msra.mxu0 0
      %360 = vmatprep.subr.bf16.mxu0 0
      %361 = vmatpush1.bf16.msra.mxu0 0
      %362 = vmatprep.subr.bf16.mxu0 0
      %363 = vmatpush1.bf16.msra.mxu0 0
      %364 = vmatprep.subr.bf16.mxu0 0
      %365 = vmatpush1.bf16.msra.mxu0 0
      %366 = vmatprep.subr.bf16.mxu0 0
      %367 = vmatpush1.bf16.msra.mxu0 0
      %368 = vmatprep.subr.bf16.mxu0 0
      %369 = vmatpush1.bf16.msra.mxu0 0
      %370 = vmatprep.subr.bf16.mxu0 0
      %371 = vmatpush1.bf16.msra.mxu0 0
      %372 = vmatprep.subr.bf16.mxu0 0
      %373 = vmatpush1.bf16.msra.mxu0 0
      %374 = vmatprep.subr.bf16.mxu0 0
      %375 = vmatpush1.bf16.msra.mxu0 0
      %376 = vmatprep.subr.bf16.mxu0 0
      %377 = vmatpush1.bf16.msra.mxu0 0
      %378 = vmatprep.subr.bf16.mxu0 0
      %379 = vmatpush1.bf16.msra.mxu0 0
      %380 = vmatprep.mubr.bf16.mxu0 0
      %381 = vmatmul.mubr.bf16.gmra.mrb[0].mxu0 %v333
      %v382 = vpop.f32.mrb[0].mxu0
      %v383 = vadd.f32 0.0, %v382
      %v384 = vpop.f32.mrb[0].mxu0
      %v385 = vpop.f32.mrb[0].mxu0
      %v386 = vadd.f32 0.0, %v385
      %v387 = vpop.f32.mrb[0].mxu0
      %388 = vmatprep.mubr.bf16.mxu0 0
      %389 = vmatmul.mubr.bf16.gmra.mrb[0].mxu0 %v336
      %v390 = vpop.f32.mrb[0].mxu0
      %v391 = vadd.f32 0.0, %v390
      %v392 = vpop.f32.mrb[0].mxu0
      %v393 = vpop.f32.mrb[0].mxu0
      %v394 = vadd.f32 0.0, %v393
      %v395 = vpop.f32.mrb[0].mxu0
      %396 = vmatprep.mubr.bf16.mxu0 0
      %397 = vmatmul.mubr.bf16.gmra.mrb[0].mxu0 %v339
      %v398 = vpop.f32.mrb[0].mxu0
      %v399 = vadd.f32 0.0, %v398
      %v400 = vpop.f32.mrb[0].mxu0
      %v401 = vpop.f32.mrb[0].mxu0
      %v402 = vadd.f32 0.0, %v401
      %v403 = vpop.f32.mrb[0].mxu0
      %404 = vmatprep.mubr.bf16.mxu0 0
      %405 = vmatmul.mubr.bf16.gmra.mrb[0].mxu0 %v342
      %v406 = vpop.f32.mrb[0].mxu0
      %v407 = vadd.f32 0.0, %v406
      %v408 = vpop.f32.mrb[0].mxu0
      %v409 = vpop.f32.mrb[0].mxu0
      %v410 = vadd.f32 0.0, %v409
      %v411 = vpop.f32.mrb[0].mxu0
      %412 = vdwg.mxu0
      %v421 = vunpack.c.l.b16 %v172
      %v422 = vunpack.c.l.b16 %v174
      %v423 = vunpack.c.l.b16 %v176
      %v424 = vunpack.c.l.b16 %v178
      %v425 = vunpack.c.l.b16 %v180
      %v426 = vunpack.c.l.b16 %v182
      %v427 = vunpack.c.l.b16 %v184
      %v428 = vunpack.c.l.b16 %v186
      %v429 = vpack.c.b16 %v422, %v421
      %v430 = vpack.c.b16 %v424, %v423
      %v431 = vpack.c.b16 %v426, %v425
      %v432 = vpack.c.b16 %v428, %v427
      %v435 = vunpack.c.l.b16 %v194
      %v436 = vunpack.c.l.b16 %v195
      %v437 = vpack.c.b16 %v436, %v435
      %v439 = vsel %vm331, %v429, 0
      %v442 = vsel %vm331, %v430, 0
      %v445 = vsel %vm331, %v431, 0
      %v448 = vsel %vm331, %v432, 0
      %v451 = vsel %vm344, %v437, 0
      %453 = vmatprep.subr.bf16.mxu0 0
      %454 = vmatpush1.bf16.msra.mxu0 %v451
      %455 = vmatprep.subr.bf16.mxu0 0
      %456 = vmatpush1.bf16.msra.mxu0 0
      %457 = vmatprep.subr.bf16.mxu0 0
      %458 = vmatpush1.bf16.msra.mxu0 0
      %459 = vmatprep.subr.bf16.mxu0 0
      %460 = vmatpush1.bf16.msra.mxu0 0
      %461 = vmatprep.subr.bf16.mxu0 0
      %462 = vmatpush1.bf16.msra.mxu0 0
      %463 = vmatprep.subr.bf16.mxu0 0
      %464 = vmatpush1.bf16.msra.mxu0 0
      %465 = vmatprep.subr.bf16.mxu0 0
      %466 = vmatpush1.bf16.msra.mxu0 0
      %467 = vmatprep.subr.bf16.mxu0 0
      %468 = vmatpush1.bf16.msra.mxu0 0
      %469 = vmatprep.subr.bf16.mxu0 0
      %470 = vmatpush1.bf16.msra.mxu0 0
      %471 = vmatprep.subr.bf16.mxu0 0
      %472 = vmatpush1.bf16.msra.mxu0 0
      %473 = vmatprep.subr.bf16.mxu0 0
      %474 = vmatpush1.bf16.msra.mxu0 0
      %475 = vmatprep.subr.bf16.mxu0 0
      %476 = vmatpush1.bf16.msra.mxu0 0
      %477 = vmatprep.subr.bf16.mxu0 0
      %478 = vmatpush1.bf16.msra.mxu0 0
      %479 = vmatprep.subr.bf16.mxu0 0
      %480 = vmatpush1.bf16.msra.mxu0 0
      %481 = vmatprep.subr.bf16.mxu0 0
      %482 = vmatpush1.bf16.msra.mxu0 0
      %483 = vmatprep.subr.bf16.mxu0 0
      %484 = vmatpush1.bf16.msra.mxu0 0
      %485 = vmatprep.mubr.bf16.mxu0 0
      %486 = vmatmul.mubr.bf16.gmra.mrb[0].mxu0 %v439
      %v487 = vpop.f32.mrb[0].mxu0
      %v488 = vadd.f32 %v383, %v487
      %v489 = vpop.f32.mrb[0].mxu0
      %v490 = vpop.f32.mrb[0].mxu0
      %v491 = vadd.f32 %v386, %v490
      %v492 = vpop.f32.mrb[0].mxu0
      %493 = vmatprep.mubr.bf16.mxu0 0
      %494 = vmatmul.mubr.bf16.gmra.mrb[0].mxu0 %v442
      %v495 = vpop.f32.mrb[0].mxu0
      %v496 = vadd.f32 %v391, %v495
      %v497 = vpop.f32.mrb[0].mxu0
      %v498 = vpop.f32.mrb[0].mxu0
      %v499 = vadd.f32 %v394, %v498
      %v500 = vpop.f32.mrb[0].mxu0
      %501 = vmatprep.mubr.bf16.mxu0 0
      %502 = vmatmul.mubr.bf16.gmra.mrb[0].mxu0 %v445
      %v503 = vpop.f32.mrb[0].mxu0
      %v504 = vadd.f32 %v399, %v503
      %v505 = vpop.f32.mrb[0].mxu0
      %v506 = vpop.f32.mrb[0].mxu0
      %v507 = vadd.f32 %v402, %v506
      %v508 = vpop.f32.mrb[0].mxu0
      %509 = vmatprep.mubr.bf16.mxu0 0
      %510 = vmatmul.mubr.bf16.gmra.mrb[0].mxu0 %v448
      %v511 = vpop.f32.mrb[0].mxu0
      %v512 = vadd.f32 %v407, %v511
      %v513 = vpop.f32.mrb[0].mxu0
      %v514 = vpop.f32.mrb[0].mxu0
      %v515 = vadd.f32 %v410, %v514
      %v516 = vpop.f32.mrb[0].mxu0
      %517 = vdwg.mxu0
      %vm526 = vcmask 1042432
      %vm527 = vcmask 1046532
      %vm528 = vmor %vm526, %vm527
      %v529 = vrot.slane %v172, 5
      %v530 = vrot.slane %v529, 4
      %v531 = vrot.slane %v173, 5
      %v532 = vsel %vm528, %v530, %v531
      %v533 = vrot.slane %v174, 5
      %v534 = vrot.slane %v533, 4
      %v535 = vrot.slane %v175, 5
      %v536 = vsel %vm528, %v534, %v535
      %v537 = vrot.slane %v176, 5
      %v538 = vrot.slane %v537, 4
      %v539 = vrot.slane %v177, 5
      %v540 = vsel %vm528, %v538, %v539
      %v541 = vrot.slane %v178, 5
      %v542 = vrot.slane %v541, 4
      %v543 = vrot.slane %v179, 5
      %v544 = vsel %vm528, %v542, %v543
      %v545 = vrot.slane %v180, 5
      %v546 = vrot.slane %v545, 4
      %v547 = vrot.slane %v181, 5
      %v548 = vsel %vm528, %v546, %v547
      %v549 = vrot.slane %v182, 5
      %v550 = vrot.slane %v549, 4
      %v551 = vrot.slane %v183, 5
      %v552 = vsel %vm528, %v550, %v551
      %v553 = vrot.slane %v184, 5
      %v554 = vrot.slane %v553, 4
      %v555 = vrot.slane %v185, 5
      %v556 = vsel %vm528, %v554, %v555
      %v557 = vrot.slane %v186, 5
      %v558 = vrot.slane %v557, 4
      %v559 = vrot.slane %v187, 5
      %v560 = vsel %vm528, %v558, %v559
      %s561 = scalar_lea.vmem %s1, 16
      %v562 = vld [vmem:[%s561] sm:$0xf]
      %v563 = vld [vmem:[%s561 + $0x4] sm:$0x3]
      %v564 = vunpack.c.l.b16 %v532
      %v565 = vunpack.c.l.b16 %v536
      %v566 = vunpack.c.l.b16 %v540
      %v567 = vunpack.c.l.b16 %v544
      %v568 = vunpack.c.l.b16 %v548
      %v569 = vunpack.c.l.b16 %v552
      %v570 = vunpack.c.l.b16 %v556
      %v571 = vunpack.c.l.b16 %v560
      %v572 = vpack.c.b16 %v565, %v564
      %v573 = vpack.c.b16 %v567, %v566
      %v574 = vpack.c.b16 %v569, %v568
      %v575 = vpack.c.b16 %v571, %v570
      %v578 = vunpack.c.l.b16 %v562
      %v579 = vunpack.c.l.b16 %v563
      %v580 = vpack.c.b16 %v579, %v578
      %v582 = vsel %vm331, %v572, 0
      %v585 = vsel %vm331, %v573, 0
      %v588 = vsel %vm331, %v574, 0
      %v591 = vsel %vm331, %v575, 0
      %v594 = vsel %vm344, %v580, 0
      %596 = vmatprep.subr.bf16.mxu0 0
      %597 = vmatpush1.bf16.msra.mxu0 %v594
      %598 = vmatprep.subr.bf16.mxu0 0
      %599 = vmatpush1.bf16.msra.mxu0 0
      %600 = vmatprep.subr.bf16.mxu0 0
      %601 = vmatpush1.bf16.msra.mxu0 0
      %602 = vmatprep.subr.bf16.mxu0 0
      %603 = vmatpush1.bf16.msra.mxu0 0
      %604 = vmatprep.subr.bf16.mxu0 0
      %605 = vmatpush1.bf16.msra.mxu0 0
      %606 = vmatprep.subr.bf16.mxu0 0
      %607 = vmatpush1.bf16.msra.mxu0 0
      %608 = vmatprep.subr.bf16.mxu0 0
      %609 = vmatpush1.bf16.msra.mxu0 0
      %610 = vmatprep.subr.bf16.mxu0 0
      %611 = vmatpush1.bf16.msra.mxu0 0
      %612 = vmatprep.subr.bf16.mxu0 0
      %613 = vmatpush1.bf16.msra.mxu0 0
      %614 = vmatprep.subr.bf16.mxu0 0
      %615 = vmatpush1.bf16.msra.mxu0 0
      %616 = vmatprep.subr.bf16.mxu0 0
      %617 = vmatpush1.bf16.msra.mxu0 0
      %618 = vmatprep.subr.bf16.mxu0 0
      %619 = vmatpush1.bf16.msra.mxu0 0
      %620 = vmatprep.subr.bf16.mxu0 0
      %621 = vmatpush1.bf16.msra.mxu0 0
      %622 = vmatprep.subr.bf16.mxu0 0
      %623 = vmatpush1.bf16.msra.mxu0 0
      %624 = vmatprep.subr.bf16.mxu0 0
      %625 = vmatpush1.bf16.msra.mxu0 0
      %626 = vmatprep.subr.bf16.mxu0 0
      %627 = vmatpush1.bf16.msra.mxu0 0
      %628 = vmatprep.mubr.bf16.mxu0 0
      %629 = vmatmul.mubr.bf16.gmra.mrb[0].mxu0 %v582
      %v630 = vpop.f32.mrb[0].mxu0
      %v631 = vadd.f32 0.0, %v630
      %v632 = vpop.f32.mrb[0].mxu0
      %v633 = vpop.f32.mrb[0].mxu0
      %v634 = vadd.f32 0.0, %v633
      %v635 = vpop.f32.mrb[0].mxu0
      %636 = vmatprep.mubr.bf16.mxu0 0
      %637 = vmatmul.mubr.bf16.gmra.mrb[0].mxu0 %v585
      %v638 = vpop.f32.mrb[0].mxu0
      %v639 = vadd.f32 0.0, %v638
      %v640 = vpop.f32.mrb[0].mxu0
      %v641 = vpop.f32.mrb[0].mxu0
      %v642 = vadd.f32 0.0, %v641
      %v643 = vpop.f32.mrb[0].mxu0
      %644 = vmatprep.mubr.bf16.mxu0 0
      %645 = vmatmul.mubr.bf16.gmra.mrb[0].mxu0 %v588
      %v646 = vpop.f32.mrb[0].mxu0
      %v647 = vadd.f32 0.0, %v646
      %v648 = vpop.f32.mrb[0].mxu0
      %v649 = vpop.f32.mrb[0].mxu0
      %v650 = vadd.f32 0.0, %v649
      %v651 = vpop.f32.mrb[0].mxu0
      %652 = vmatprep.mubr.bf16.mxu0 0
      %653 = vmatmul.mubr.bf16.gmra.mrb[0].mxu0 %v591
      %v654 = vpop.f32.mrb[0].mxu0
      %v655 = vadd.f32 0.0, %v654
      %v656 = vpop.f32.mrb[0].mxu0
      %v657 = vpop.f32.mrb[0].mxu0
      %v658 = vadd.f32 0.0, %v657
      %v659 = vpop.f32.mrb[0].mxu0
      %660 = vdwg.mxu0
      %v661 = vadd.f32 %v488, %v631
      %v662 = vadd.f32 %v491, %v634
      %v663 = vadd.f32 %v496, %v639
      %v664 = vadd.f32 %v499, %v642
      %v665 = vadd.f32 %v504, %v647
      %v666 = vadd.f32 %v507, %v650
      %v667 = vadd.f32 %v512, %v655
      %v668 = vadd.f32 %v515, %v658
      %vm669 = vsmask.f32 2304
      %vm670 = vsmask.f32 6416
      %vm671 = vmor %vm669, %vm670
      %v672 = vrot.slane %v200, 5
      %v673 = vrot.slane %v203, 6
      %v674 = vor.u32 %v672, %v673
      %v675 = vrot.slane %v674, 4
      %v676 = vshrl.u32 %v173, 16
      %v678 = vrot.slane %v676, 5
      %v679 = vrot.slane %v209, 6
      %v680 = vor.u32 %v678, %v679
      %v681 = vsel %vm671, %v675, %v680
      %v682 = vrot.slane %v214, 5
      %v683 = vrot.slane %v217, 6
      %v684 = vor.u32 %v682, %v683
      %v685 = vrot.slane %v684, 4
      %v686 = vshrl.u32 %v175, 16
      %v688 = vrot.slane %v686, 5
      %v689 = vrot.slane %v223, 6
      %v690 = vor.u32 %v688, %v689
      %v691 = vsel %vm671, %v685, %v690
      %v692 = vrot.slane %v228, 5
      %v693 = vrot.slane %v231, 6
      %v694 = vor.u32 %v692, %v693
      %v695 = vrot.slane %v694, 4
      %v696 = vshrl.u32 %v177, 16
      %v698 = vrot.slane %v696, 5
      %v699 = vrot.slane %v237, 6
      %v700 = vor.u32 %v698, %v699
      %v701 = vsel %vm671, %v695, %v700
      %v702 = vrot.slane %v242, 5
      %v703 = vrot.slane %v245, 6
      %v704 = vor.u32 %v702, %v703
      %v705 = vrot.slane %v704, 4
      %v706 = vshrl.u32 %v179, 16
      %v708 = vrot.slane %v706, 5
      %v709 = vrot.slane %v251, 6
      %v710 = vor.u32 %v708, %v709
      %v711 = vsel %vm671, %v705, %v710
      %v712 = vrot.slane %v256, 5
      %v713 = vrot.slane %v259, 6
      %v714 = vor.u32 %v712, %v713
      %v715 = vrot.slane %v714, 4
      %v716 = vshrl.u32 %v181, 16
      %v718 = vrot.slane %v716, 5
      %v719 = vrot.slane %v265, 6
      %v720 = vor.u32 %v718, %v719
      %v721 = vsel %vm671, %v715, %v720
      %v722 = vrot.slane %v270, 5
      %v723 = vrot.slane %v273, 6
      %v724 = vor.u32 %v722, %v723
      %v725 = vrot.slane %v724, 4
      %v726 = vshrl.u32 %v183, 16
      %v728 = vrot.slane %v726, 5
      %v729 = vrot.slane %v279, 6
      %v730 = vor.u32 %v728, %v729
      %v731 = vsel %vm671, %v725, %v730
      %v732 = vrot.slane %v284, 5
      %v733 = vrot.slane %v287, 6
      %v734 = vor.u32 %v732, %v733
      %v735 = vrot.slane %v734, 4
      %v736 = vshrl.u32 %v185, 16
      %v738 = vrot.slane %v736, 5
      %v739 = vrot.slane %v293, 6
      %v740 = vor.u32 %v738, %v739
      %v741 = vsel %vm671, %v735, %v740
      %v742 = vrot.slane %v298, 5
      %v743 = vrot.slane %v301, 6
      %v744 = vor.u32 %v742, %v743
      %v745 = vrot.slane %v744, 4
      %v746 = vshrl.u32 %v187, 16
      %v748 = vrot.slane %v746, 5
      %v749 = vrot.slane %v307, 6
      %v750 = vor.u32 %v748, %v749
      %v751 = vsel %vm671, %v745, %v750
      %s752 = scalar_lea.vmem %s1, 24
      %v753 = vld [vmem:[%s752] sm:$0xf]
      %v754 = vld [vmem:[%s752 + $0x4] sm:$0x3]
      %v755 = vunpack.c.l.b16 %v681
      %v756 = vunpack.c.l.b16 %v691
      %v757 = vunpack.c.l.b16 %v701
      %v758 = vunpack.c.l.b16 %v711
      %v759 = vunpack.c.l.b16 %v721
      %v760 = vunpack.c.l.b16 %v731
      %v761 = vunpack.c.l.b16 %v741
      %v762 = vunpack.c.l.b16 %v751
      %v763 = vpack.c.b16 %v756, %v755
      %v764 = vpack.c.b16 %v758, %v757
      %v765 = vpack.c.b16 %v760, %v759
      %v766 = vpack.c.b16 %v762, %v761
      %v769 = vunpack.c.l.b16 %v753
      %v770 = vunpack.c.l.b16 %v754
      %v771 = vpack.c.b16 %v770, %v769
      %v773 = vsel %vm331, %v763, 0
      %v776 = vsel %vm331, %v764, 0
      %v779 = vsel %vm331, %v765, 0
      %v782 = vsel %vm331, %v766, 0
      %v785 = vsel %vm344, %v771, 0
      %787 = vmatprep.subr.bf16.mxu0 0
      %788 = vmatpush1.bf16.msra.mxu0 %v785
      %789 = vmatprep.subr.bf16.mxu0 0
      %790 = vmatpush1.bf16.msra.mxu0 0
      %791 = vmatprep.subr.bf16.mxu0 0
      %792 = vmatpush1.bf16.msra.mxu0 0
      %793 = vmatprep.subr.bf16.mxu0 0
      %794 = vmatpush1.bf16.msra.mxu0 0
      %795 = vmatprep.subr.bf16.mxu0 0
      %796 = vmatpush1.bf16.msra.mxu0 0
      %797 = vmatprep.subr.bf16.mxu0 0
      %798 = vmatpush1.bf16.msra.mxu0 0
      %799 = vmatprep.subr.bf16.mxu0 0
      %800 = vmatpush1.bf16.msra.mxu0 0
      %801 = vmatprep.subr.bf16.mxu0 0
      %802 = vmatpush1.bf16.msra.mxu0 0
      %803 = vmatprep.subr.bf16.mxu0 0
      %804 = vmatpush1.bf16.msra.mxu0 0
      %805 = vmatprep.subr.bf16.mxu0 0
      %806 = vmatpush1.bf16.msra.mxu0 0
      %807 = vmatprep.subr.bf16.mxu0 0
      %808 = vmatpush1.bf16.msra.mxu0 0
      %809 = vmatprep.subr.bf16.mxu0 0
      %810 = vmatpush1.bf16.msra.mxu0 0
      %811 = vmatprep.subr.bf16.mxu0 0
      %812 = vmatpush1.bf16.msra.mxu0 0
      %813 = vmatprep.subr.bf16.mxu0 0
      %814 = vmatpush1.bf16.msra.mxu0 0
      %815 = vmatprep.subr.bf16.mxu0 0
      %816 = vmatpush1.bf16.msra.mxu0 0
      %817 = vmatprep.subr.bf16.mxu0 0
      %818 = vmatpush1.bf16.msra.mxu0 0
      %819 = vmatprep.mubr.bf16.mxu0 0
      %820 = vmatmul.mubr.bf16.gmra.mrb[0].mxu0 %v773
      %v821 = vpop.f32.mrb[0].mxu0
      %v822 = vadd.f32 0.0, %v821
      %v823 = vpop.f32.mrb[0].mxu0
      %v824 = vpop.f32.mrb[0].mxu0
      %v825 = vadd.f32 0.0, %v824
      %v826 = vpop.f32.mrb[0].mxu0
      %827 = vmatprep.mubr.bf16.mxu0 0
      %828 = vmatmul.mubr.bf16.gmra.mrb[0].mxu0 %v776
      %v829 = vpop.f32.mrb[0].mxu0
      %v830 = vadd.f32 0.0, %v829
      %v831 = vpop.f32.mrb[0].mxu0
      %v832 = vpop.f32.mrb[0].mxu0
      %v833 = vadd.f32 0.0, %v832
      %v834 = vpop.f32.mrb[0].mxu0
      %835 = vmatprep.mubr.bf16.mxu0 0
      %836 = vmatmul.mubr.bf16.gmra.mrb[0].mxu0 %v779
      %v837 = vpop.f32.mrb[0].mxu0
      %v838 = vadd.f32 0.0, %v837
      %v839 = vpop.f32.mrb[0].mxu0
      %v840 = vpop.f32.mrb[0].mxu0
      %v841 = vadd.f32 0.0, %v840
      %v842 = vpop.f32.mrb[0].mxu0
      %843 = vmatprep.mubr.bf16.mxu0 0
      %844 = vmatmul.mubr.bf16.gmra.mrb[0].mxu0 %v782
      %v845 = vpop.f32.mrb[0].mxu0
      %v846 = vadd.f32 0.0, %v845
      %v847 = vpop.f32.mrb[0].mxu0
      %v848 = vpop.f32.mrb[0].mxu0
      %v849 = vadd.f32 0.0, %v848
      %v850 = vpop.f32.mrb[0].mxu0
      %851 = vdwg.mxu0
      %v852 = vadd.f32 %v661, %v822
      %v853 = vadd.f32 %v662, %v825
      %v854 = vadd.f32 %v663, %v830
      %v855 = vadd.f32 %v664, %v833
      %v856 = vadd.f32 %v665, %v838
      %v857 = vadd.f32 %v666, %v841
      %v858 = vadd.f32 %v667, %v846
      %v859 = vadd.f32 %v668, %v849
      %s860 = scalar_lea.vmem %s1, 32
      %v861 = vld [vmem:[%s860] sm:$0xf]
      %v862 = vld [vmem:[%s860 + $0x4] sm:$0x3]
      %v864 = vunpack.c.l.b16 %v188
      %v865 = vpack.c.b16 %v423, %v422
      %v866 = vpack.c.b16 %v425, %v424
      %v867 = vpack.c.b16 %v427, %v426
      %v868 = vpack.c.b16 %v864, %v428
      %v871 = vunpack.c.l.b16 %v861
      %v872 = vunpack.c.l.b16 %v862
      %v873 = vpack.c.b16 %v872, %v871
      %v875 = vsel %vm331, %v865, 0
      %v878 = vsel %vm331, %v866, 0
      %v881 = vsel %vm331, %v867, 0
      %v884 = vsel %vm331, %v868, 0
      %v887 = vsel %vm344, %v873, 0
      %889 = vmatprep.subr.bf16.mxu0 0
      %890 = vmatpush1.bf16.msra.mxu0 %v887
      %891 = vmatprep.subr.bf16.mxu0 0
      %892 = vmatpush1.bf16.msra.mxu0 0
      %893 = vmatprep.subr.bf16.mxu0 0
      %894 = vmatpush1.bf16.msra.mxu0 0
      %895 = vmatprep.subr.bf16.mxu0 0
      %896 = vmatpush1.bf16.msra.mxu0 0
      %897 = vmatprep.subr.bf16.mxu0 0
      %898 = vmatpush1.bf16.msra.mxu0 0
      %899 = vmatprep.subr.bf16.mxu0 0
      %900 = vmatpush1.bf16.msra.mxu0 0
      %901 = vmatprep.subr.bf16.mxu0 0
      %902 = vmatpush1.bf16.msra.mxu0 0
      %903 = vmatprep.subr.bf16.mxu0 0
      %904 = vmatpush1.bf16.msra.mxu0 0
      %905 = vmatprep.subr.bf16.mxu0 0
      %906 = vmatpush1.bf16.msra.mxu0 0
      %907 = vmatprep.subr.bf16.mxu0 0
      %908 = vmatpush1.bf16.msra.mxu0 0
      %909 = vmatprep.subr.bf16.mxu0 0
      %910 = vmatpush1.bf16.msra.mxu0 0
      %911 = vmatprep.subr.bf16.mxu0 0
      %912 = vmatpush1.bf16.msra.mxu0 0
      %913 = vmatprep.subr.bf16.mxu0 0
      %914 = vmatpush1.bf16.msra.mxu0 0
      %915 = vmatprep.subr.bf16.mxu0 0
      %916 = vmatpush1.bf16.msra.mxu0 0
      %917 = vmatprep.subr.bf16.mxu0 0
      %918 = vmatpush1.bf16.msra.mxu0 0
      %919 = vmatprep.subr.bf16.mxu0 0
      %920 = vmatpush1.bf16.msra.mxu0 0
      %921 = vmatprep.mubr.bf16.mxu0 0
      %922 = vmatmul.mubr.bf16.gmra.mrb[0].mxu0 %v875
      %v923 = vpop.f32.mrb[0].mxu0
      %v924 = vadd.f32 0.0, %v923
      %v925 = vpop.f32.mrb[0].mxu0
      %v926 = vpop.f32.mrb[0].mxu0
      %v927 = vadd.f32 0.0, %v926
      %v928 = vpop.f32.mrb[0].mxu0
      %929 = vmatprep.mubr.bf16.mxu0 0
      %930 = vmatmul.mubr.bf16.gmra.mrb[0].mxu0 %v878
      %v931 = vpop.f32.mrb[0].mxu0
      %v932 = vadd.f32 0.0, %v931
      %v933 = vpop.f32.mrb[0].mxu0
      %v934 = vpop.f32.mrb[0].mxu0
      %v935 = vadd.f32 0.0, %v934
      %v936 = vpop.f32.mrb[0].mxu0
      %937 = vmatprep.mubr.bf16.mxu0 0
      %938 = vmatmul.mubr.bf16.gmra.mrb[0].mxu0 %v881
      %v939 = vpop.f32.mrb[0].mxu0
      %v940 = vadd.f32 0.0, %v939
      %v941 = vpop.f32.mrb[0].mxu0
      %v942 = vpop.f32.mrb[0].mxu0
      %v943 = vadd.f32 0.0, %v942
      %v944 = vpop.f32.mrb[0].mxu0
      %945 = vmatprep.mubr.bf16.mxu0 0
      %946 = vmatmul.mubr.bf16.gmra.mrb[0].mxu0 %v884
      %v947 = vpop.f32.mrb[0].mxu0
      %v948 = vadd.f32 0.0, %v947
      %v949 = vpop.f32.mrb[0].mxu0
      %v950 = vpop.f32.mrb[0].mxu0
      %v951 = vadd.f32 0.0, %v950
      %v952 = vpop.f32.mrb[0].mxu0
      %953 = vdwg.mxu0
      %v954 = vadd.f32 %v852, %v924
      %v955 = vadd.f32 %v853, %v927
      %v956 = vadd.f32 %v854, %v932
      %v957 = vadd.f32 %v855, %v935
      %v958 = vadd.f32 %v856, %v940
      %v959 = vadd.f32 %v857, %v943
      %v960 = vadd.f32 %v858, %v948
      %v961 = vadd.f32 %v859, %v951
      %v963 = vshrl.u32 %v188, 16
      %v965 = vrot.slane %v963, 4
      %v966 = vshll.u32 %v188, 16
      %v968 = vrot.slane %v966, 5
      %v969 = vor.u32 %v965, %v968
      %v970 = vrot.slane %v969, 4
      %v972 = vshll.u32 %v189, 16
      %v974 = vrot.slane %v972, 5
      %v975 = vsel %vm198, %v970, %v974
      %s976 = scalar_lea.vmem %s1, 40
      %v977 = vld [vmem:[%s976] sm:$0xf]
      %v978 = vld [vmem:[%s976 + $0x4] sm:$0x3]
      %v979 = vunpack.c.l.b16 %v975
      %v980 = vpack.c.b16 %v316, %v315
      %v981 = vpack.c.b16 %v318, %v317
      %v982 = vpack.c.b16 %v320, %v319
      %v983 = vpack.c.b16 %v979, %v321
      %v986 = vunpack.c.l.b16 %v977
      %v987 = vunpack.c.l.b16 %v978
      %v988 = vpack.c.b16 %v987, %v986
      %v990 = vsel %vm331, %v980, 0
      %v993 = vsel %vm331, %v981, 0
      %v996 = vsel %vm331, %v982, 0
      %v999 = vsel %vm331, %v983, 0
      %v1002 = vsel %vm344, %v988, 0
      %1004 = vmatprep.subr.bf16.mxu0 0
      %1005 = vmatpush1.bf16.msra.mxu0 %v1002
      %1006 = vmatprep.subr.bf16.mxu0 0
      %1007 = vmatpush1.bf16.msra.mxu0 0
      %1008 = vmatprep.subr.bf16.mxu0 0
      %1009 = vmatpush1.bf16.msra.mxu0 0
      %1010 = vmatprep.subr.bf16.mxu0 0
      %1011 = vmatpush1.bf16.msra.mxu0 0
      %1012 = vmatprep.subr.bf16.mxu0 0
      %1013 = vmatpush1.bf16.msra.mxu0 0
      %1014 = vmatprep.subr.bf16.mxu0 0
      %1015 = vmatpush1.bf16.msra.mxu0 0
      %1016 = vmatprep.subr.bf16.mxu0 0
      %1017 = vmatpush1.bf16.msra.mxu0 0
      %1018 = vmatprep.subr.bf16.mxu0 0
      %1019 = vmatpush1.bf16.msra.mxu0 0
      %1020 = vmatprep.subr.bf16.mxu0 0
      %1021 = vmatpush1.bf16.msra.mxu0 0
      %1022 = vmatprep.subr.bf16.mxu0 0
      %1023 = vmatpush1.bf16.msra.mxu0 0
      %1024 = vmatprep.subr.bf16.mxu0 0
      %1025 = vmatpush1.bf16.msra.mxu0 0
      %1026 = vmatprep.subr.bf16.mxu0 0
      %1027 = vmatpush1.bf16.msra.mxu0 0
      %1028 = vmatprep.subr.bf16.mxu0 0
      %1029 = vmatpush1.bf16.msra.mxu0 0
      %1030 = vmatprep.subr.bf16.mxu0 0
      %1031 = vmatpush1.bf16.msra.mxu0 0
      %1032 = vmatprep.subr.bf16.mxu0 0
      %1033 = vmatpush1.bf16.msra.mxu0 0
      %1034 = vmatprep.subr.bf16.mxu0 0
      %1035 = vmatpush1.bf16.msra.mxu0 0
      %1036 = vmatprep.mubr.bf16.mxu0 0
      %1037 = vmatmul.mubr.bf16.gmra.mrb[0].mxu0 %v990
      %v1038 = vpop.f32.mrb[0].mxu0
      %v1039 = vadd.f32 0.0, %v1038
      %v1040 = vpop.f32.mrb[0].mxu0
      %v1041 = vpop.f32.mrb[0].mxu0
      %v1042 = vadd.f32 0.0, %v1041
      %v1043 = vpop.f32.mrb[0].mxu0
      %1044 = vmatprep.mubr.bf16.mxu0 0
      %1045 = vmatmul.mubr.bf16.gmra.mrb[0].mxu0 %v993
      %v1046 = vpop.f32.mrb[0].mxu0
      %v1047 = vadd.f32 0.0, %v1046
      %v1048 = vpop.f32.mrb[0].mxu0
      %v1049 = vpop.f32.mrb[0].mxu0
      %v1050 = vadd.f32 0.0, %v1049
      %v1051 = vpop.f32.mrb[0].mxu0
      %1052 = vmatprep.mubr.bf16.mxu0 0
      %1053 = vmatmul.mubr.bf16.gmra.mrb[0].mxu0 %v996
      %v1054 = vpop.f32.mrb[0].mxu0
      %v1055 = vadd.f32 0.0, %v1054
      %v1056 = vpop.f32.mrb[0].mxu0
      %v1057 = vpop.f32.mrb[0].mxu0
      %v1058 = vadd.f32 0.0, %v1057
      %v1059 = vpop.f32.mrb[0].mxu0
      %1060 = vmatprep.mubr.bf16.mxu0 0
      %1061 = vmatmul.mubr.bf16.gmra.mrb[0].mxu0 %v999
      %v1062 = vpop.f32.mrb[0].mxu0
      %v1063 = vadd.f32 0.0, %v1062
      %v1064 = vpop.f32.mrb[0].mxu0
      %v1065 = vpop.f32.mrb[0].mxu0
      %v1066 = vadd.f32 0.0, %v1065
      %v1067 = vpop.f32.mrb[0].mxu0
      %1068 = vdwg.mxu0
      %v1069 = vadd.f32 %v954, %v1039
      %v1070 = vadd.f32 %v955, %v1042
      %v1071 = vadd.f32 %v956, %v1047
      %v1072 = vadd.f32 %v957, %v1050
      %v1073 = vadd.f32 %v958, %v1055
      %v1074 = vadd.f32 %v959, %v1058
      %v1075 = vadd.f32 %v960, %v1063
      %v1076 = vadd.f32 %v961, %v1066
      %v1078 = vrot.slane %v188, 5
      %v1079 = vrot.slane %v1078, 4
      %v1080 = vrot.slane %v189, 5
      %v1081 = vsel %vm528, %v1079, %v1080
      %s1082 = scalar_lea.vmem %s1, 48
      %v1083 = vld [vmem:[%s1082] sm:$0xf]
      %v1084 = vld [vmem:[%s1082 + $0x4] sm:$0x3]
      %v1085 = vunpack.c.l.b16 %v1081
      %v1086 = vpack.c.b16 %v566, %v565
      %v1087 = vpack.c.b16 %v568, %v567
      %v1088 = vpack.c.b16 %v570, %v569
      %v1089 = vpack.c.b16 %v1085, %v571
      %v1092 = vunpack.c.l.b16 %v1083
      %v1093 = vunpack.c.l.b16 %v1084
      %v1094 = vpack.c.b16 %v1093, %v1092
      %v1096 = vsel %vm331, %v1086, 0
      %v1099 = vsel %vm331, %v1087, 0
      %v1102 = vsel %vm331, %v1088, 0
      %v1105 = vsel %vm331, %v1089, 0
      %v1108 = vsel %vm344, %v1094, 0
      %1110 = vmatprep.subr.bf16.mxu0 0
      %1111 = vmatpush1.bf16.msra.mxu0 %v1108
      %1112 = vmatprep.subr.bf16.mxu0 0
      %1113 = vmatpush1.bf16.msra.mxu0 0
      %1114 = vmatprep.subr.bf16.mxu0 0
      %1115 = vmatpush1.bf16.msra.mxu0 0
      %1116 = vmatprep.subr.bf16.mxu0 0
      %1117 = vmatpush1.bf16.msra.mxu0 0
      %1118 = vmatprep.subr.bf16.mxu0 0
      %1119 = vmatpush1.bf16.msra.mxu0 0
      %1120 = vmatprep.subr.bf16.mxu0 0
      %1121 = vmatpush1.bf16.msra.mxu0 0
      %1122 = vmatprep.subr.bf16.mxu0 0
      %1123 = vmatpush1.bf16.msra.mxu0 0
      %1124 = vmatprep.subr.bf16.mxu0 0
      %1125 = vmatpush1.bf16.msra.mxu0 0
      %1126 = vmatprep.subr.bf16.mxu0 0
      %1127 = vmatpush1.bf16.msra.mxu0 0
      %1128 = vmatprep.subr.bf16.mxu0 0
      %1129 = vmatpush1.bf16.msra.mxu0 0
      %1130 = vmatprep.subr.bf16.mxu0 0
      %1131 = vmatpush1.bf16.msra.mxu0 0
      %1132 = vmatprep.subr.bf16.mxu0 0
      %1133 = vmatpush1.bf16.msra.mxu0 0
      %1134 = vmatprep.subr.bf16.mxu0 0
      %1135 = vmatpush1.bf16.msra.mxu0 0
      %1136 = vmatprep.subr.bf16.mxu0 0
      %1137 = vmatpush1.bf16.msra.mxu0 0
      %1138 = vmatprep.subr.bf16.mxu0 0
      %1139 = vmatpush1.bf16.msra.mxu0 0
      %1140 = vmatprep.subr.bf16.mxu0 0
      %1141 = vmatpush1.bf16.msra.mxu0 0
      %1142 = vmatprep.mubr.bf16.mxu0 0
      %1143 = vmatmul.mubr.bf16.gmra.mrb[0].mxu0 %v1096
      %v1144 = vpop.f32.mrb[0].mxu0
      %v1145 = vadd.f32 0.0, %v1144
      %v1146 = vpop.f32.mrb[0].mxu0
      %v1147 = vpop.f32.mrb[0].mxu0
      %v1148 = vadd.f32 0.0, %v1147
      %v1149 = vpop.f32.mrb[0].mxu0
      %1150 = vmatprep.mubr.bf16.mxu0 0
      %1151 = vmatmul.mubr.bf16.gmra.mrb[0].mxu0 %v1099
      %v1152 = vpop.f32.mrb[0].mxu0
      %v1153 = vadd.f32 0.0, %v1152
      %v1154 = vpop.f32.mrb[0].mxu0
      %v1155 = vpop.f32.mrb[0].mxu0
      %v1156 = vadd.f32 0.0, %v1155
      %v1157 = vpop.f32.mrb[0].mxu0
      %1158 = vmatprep.mubr.bf16.mxu0 0
      %1159 = vmatmul.mubr.bf16.gmra.mrb[0].mxu0 %v1102
      %v1160 = vpop.f32.mrb[0].mxu0
      %v1161 = vadd.f32 0.0, %v1160
      %v1162 = vpop.f32.mrb[0].mxu0
      %v1163 = vpop.f32.mrb[0].mxu0
      %v1164 = vadd.f32 0.0, %v1163
      %v1165 = vpop.f32.mrb[0].mxu0
      %1166 = vmatprep.mubr.bf16.mxu0 0
      %1167 = vmatmul.mubr.bf16.gmra.mrb[0].mxu0 %v1105
      %v1168 = vpop.f32.mrb[0].mxu0
      %v1169 = vadd.f32 0.0, %v1168
      %v1170 = vpop.f32.mrb[0].mxu0
      %v1171 = vpop.f32.mrb[0].mxu0
      %v1172 = vadd.f32 0.0, %v1171
      %v1173 = vpop.f32.mrb[0].mxu0
      %1174 = vdwg.mxu0
      %v1175 = vadd.f32 %v1069, %v1145
      %v1176 = vadd.f32 %v1070, %v1148
      %v1177 = vadd.f32 %v1071, %v1153
      %v1178 = vadd.f32 %v1072, %v1156
      %v1179 = vadd.f32 %v1073, %v1161
      %v1180 = vadd.f32 %v1074, %v1164
      %v1181 = vadd.f32 %v1075, %v1169
      %v1182 = vadd.f32 %v1076, %v1172
      %v1183 = vrot.slane %v963, 5
      %v1184 = vrot.slane %v966, 6
      %v1185 = vor.u32 %v1183, %v1184
      %v1186 = vrot.slane %v1185, 4
      %v1187 = vshrl.u32 %v189, 16
      %v1189 = vrot.slane %v1187, 5
      %v1190 = vrot.slane %v972, 6
      %v1191 = vor.u32 %v1189, %v1190
      %v1192 = vsel %vm671, %v1186, %v1191
      %s1193 = scalar_lea.vmem %s1, 56
      %v1194 = vld [vmem:[%s1193] sm:$0xf]
      %v1195 = vld [vmem:[%s1193 + $0x4] sm:$0x3]
      %v1196 = vunpack.c.l.b16 %v1192
      %v1197 = vpack.c.b16 %v757, %v756
      %v1198 = vpack.c.b16 %v759, %v758
      %v1199 = vpack.c.b16 %v761, %v760
      %v1200 = vpack.c.b16 %v1196, %v762
      %v1203 = vunpack.c.l.b16 %v1194
      %v1204 = vunpack.c.l.b16 %v1195
      %v1205 = vpack.c.b16 %v1204, %v1203
      %v1207 = vsel %vm331, %v1197, 0
      %v1210 = vsel %vm331, %v1198, 0
      %v1213 = vsel %vm331, %v1199, 0
      %v1216 = vsel %vm331, %v1200, 0
      %v1219 = vsel %vm344, %v1205, 0
      %1221 = vmatprep.subr.bf16.mxu0 0
      %1222 = vmatpush1.bf16.msra.mxu0 %v1219
      %1223 = vmatprep.subr.bf16.mxu0 0
      %1224 = vmatpush1.bf16.msra.mxu0 0
      %1225 = vmatprep.subr.bf16.mxu0 0
      %1226 = vmatpush1.bf16.msra.mxu0 0
      %1227 = vmatprep.subr.bf16.mxu0 0
      %1228 = vmatpush1.bf16.msra.mxu0 0
      %1229 = vmatprep.subr.bf16.mxu0 0
      %1230 = vmatpush1.bf16.msra.mxu0 0
      %1231 = vmatprep.subr.bf16.mxu0 0
      %1232 = vmatpush1.bf16.msra.mxu0 0
      %1233 = vmatprep.subr.bf16.mxu0 0
      %1234 = vmatpush1.bf16.msra.mxu0 0
      %1235 = vmatprep.subr.bf16.mxu0 0
      %1236 = vmatpush1.bf16.msra.mxu0 0
      %1237 = vmatprep.subr.bf16.mxu0 0
      %1238 = vmatpush1.bf16.msra.mxu0 0
      %1239 = vmatprep.subr.bf16.mxu0 0
      %1240 = vmatpush1.bf16.msra.mxu0 0
      %1241 = vmatprep.subr.bf16.mxu0 0
      %1242 = vmatpush1.bf16.msra.mxu0 0
      %1243 = vmatprep.subr.bf16.mxu0 0
      %1244 = vmatpush1.bf16.msra.mxu0 0
      %1245 = vmatprep.subr.bf16.mxu0 0
      %1246 = vmatpush1.bf16.msra.mxu0 0
      %1247 = vmatprep.subr.bf16.mxu0 0
      %1248 = vmatpush1.bf16.msra.mxu0 0
      %1249 = vmatprep.subr.bf16.mxu0 0
      %1250 = vmatpush1.bf16.msra.mxu0 0
      %1251 = vmatprep.subr.bf16.mxu0 0
      %1252 = vmatpush1.bf16.msra.mxu0 0
      %1253 = vmatprep.mubr.bf16.mxu0 0
      %1254 = vmatmul.mubr.bf16.gmra.mrb[0].mxu0 %v1207
      %v1255 = vpop.f32.mrb[0].mxu0
      %v1256 = vadd.f32 0.0, %v1255
      %v1257 = vpop.f32.mrb[0].mxu0
      %v1258 = vpop.f32.mrb[0].mxu0
      %v1259 = vadd.f32 0.0, %v1258
      %v1260 = vpop.f32.mrb[0].mxu0
      %1261 = vmatprep.mubr.bf16.mxu0 0
      %1262 = vmatmul.mubr.bf16.gmra.mrb[0].mxu0 %v1210
      %v1263 = vpop.f32.mrb[0].mxu0
      %v1264 = vadd.f32 0.0, %v1263
      %v1265 = vpop.f32.mrb[0].mxu0
      %v1266 = vpop.f32.mrb[0].mxu0
      %v1267 = vadd.f32 0.0, %v1266
      %v1268 = vpop.f32.mrb[0].mxu0
      %1269 = vmatprep.mubr.bf16.mxu0 0
      %1270 = vmatmul.mubr.bf16.gmra.mrb[0].mxu0 %v1213
      %v1271 = vpop.f32.mrb[0].mxu0
      %v1272 = vadd.f32 0.0, %v1271
      %v1273 = vpop.f32.mrb[0].mxu0
      %v1274 = vpop.f32.mrb[0].mxu0
      %v1275 = vadd.f32 0.0, %v1274
      %v1276 = vpop.f32.mrb[0].mxu0
      %1277 = vmatprep.mubr.bf16.mxu0 0
      %1278 = vmatmul.mubr.bf16.gmra.mrb[0].mxu0 %v1216
      %v1279 = vpop.f32.mrb[0].mxu0
      %v1280 = vadd.f32 0.0, %v1279
      %v1281 = vpop.f32.mrb[0].mxu0
      %v1282 = vpop.f32.mrb[0].mxu0
      %v1283 = vadd.f32 0.0, %v1282
      %v1284 = vpop.f32.mrb[0].mxu0
      %1285 = vdwg.mxu0
      %v1286 = vadd.f32 %v1175, %v1256
      %v1287 = vadd.f32 %v1176, %v1259
      %v1288 = vadd.f32 %v1177, %v1264
      %v1289 = vadd.f32 %v1178, %v1267
      %v1290 = vadd.f32 %v1179, %v1272
      %v1291 = vadd.f32 %v1180, %v1275
      %v1292 = vadd.f32 %v1181, %v1280
      %v1293 = vadd.f32 %v1182, %v1283
      %s1294 = scalar_lea.vmem %s1, 64
      %v1295 = vld [vmem:[%s1294] sm:$0xf]
      %v1296 = vld [vmem:[%s1294 + $0x4] sm:$0x3]
      %v1298 = vunpack.c.l.b16 %v190
      %v1299 = vpack.c.b16 %v1298, %v864
      %v1302 = vunpack.c.l.b16 %v1295
      %v1303 = vunpack.c.l.b16 %v1296
      %v1304 = vpack.c.b16 %v1303, %v1302
      %v1306 = vsel %vm331, %v1299, 0
      %v1309 = vsel %vm344, %v1304, 0
      %1311 = vmatprep.subr.bf16.mxu0 0
      %1312 = vmatpush1.bf16.msra.mxu0 %v1309
      %1313 = vmatprep.subr.bf16.mxu0 0
      %1314 = vmatpush1.bf16.msra.mxu0 0
      %1315 = vmatprep.subr.bf16.mxu0 0
      %1316 = vmatpush1.bf16.msra.mxu0 0
      %1317 = vmatprep.subr.bf16.mxu0 0
      %1318 = vmatpush1.bf16.msra.mxu0 0
      %1319 = vmatprep.subr.bf16.mxu0 0
      %1320 = vmatpush1.bf16.msra.mxu0 0
      %1321 = vmatprep.subr.bf16.mxu0 0
      %1322 = vmatpush1.bf16.msra.mxu0 0
      %1323 = vmatprep.subr.bf16.mxu0 0
      %1324 = vmatpush1.bf16.msra.mxu0 0
      %1325 = vmatprep.subr.bf16.mxu0 0
      %1326 = vmatpush1.bf16.msra.mxu0 0
      %1327 = vmatprep.subr.bf16.mxu0 0
      %1328 = vmatpush1.bf16.msra.mxu0 0
      %1329 = vmatprep.subr.bf16.mxu0 0
      %1330 = vmatpush1.bf16.msra.mxu0 0
      %1331 = vmatprep.subr.bf16.mxu0 0
      %1332 = vmatpush1.bf16.msra.mxu0 0
      %1333 = vmatprep.subr.bf16.mxu0 0
      %1334 = vmatpush1.bf16.msra.mxu0 0
      %1335 = vmatprep.subr.bf16.mxu0 0
      %1336 = vmatpush1.bf16.msra.mxu0 0
      %1337 = vmatprep.subr.bf16.mxu0 0
      %1338 = vmatpush1.bf16.msra.mxu0 0
      %1339 = vmatprep.subr.bf16.mxu0 0
      %1340 = vmatpush1.bf16.msra.mxu0 0
      %1341 = vmatprep.subr.bf16.mxu0 0
      %1342 = vmatpush1.bf16.msra.mxu0 0
      %1343 = vmatprep.mubr.bf16.mxu0 0
      %1344 = vmatmul.mubr.bf16.gmra.mrb[0].mxu0 %v442
      %v1345 = vpop.f32.mrb[0].mxu0
      %v1346 = vadd.f32 0.0, %v1345
      %v1347 = vpop.f32.mrb[0].mxu0
      %v1348 = vpop.f32.mrb[0].mxu0
      %v1349 = vadd.f32 0.0, %v1348
      %v1350 = vpop.f32.mrb[0].mxu0
      %1351 = vmatprep.mubr.bf16.mxu0 0
      %1352 = vmatmul.mubr.bf16.gmra.mrb[0].mxu0 %v445
      %v1353 = vpop.f32.mrb[0].mxu0
      %v1354 = vadd.f32 0.0, %v1353
      %v1355 = vpop.f32.mrb[0].mxu0
      %v1356 = vpop.f32.mrb[0].mxu0
      %v1357 = vadd.f32 0.0, %v1356
      %v1358 = vpop.f32.mrb[0].mxu0
      %1359 = vmatprep.mubr.bf16.mxu0 0
      %1360 = vmatmul.mubr.bf16.gmra.mrb[0].mxu0 %v448
      %v1361 = vpop.f32.mrb[0].mxu0
      %v1362 = vadd.f32 0.0, %v1361
      %v1363 = vpop.f32.mrb[0].mxu0
      %v1364 = vpop.f32.mrb[0].mxu0
      %v1365 = vadd.f32 0.0, %v1364
      %v1366 = vpop.f32.mrb[0].mxu0
      %1367 = vmatprep.mubr.bf16.mxu0 0
      %1368 = vmatmul.mubr.bf16.gmra.mrb[0].mxu0 %v1306
      %v1369 = vpop.f32.mrb[0].mxu0
      %v1370 = vadd.f32 0.0, %v1369
      %v1371 = vpop.f32.mrb[0].mxu0
      %v1372 = vpop.f32.mrb[0].mxu0
      %v1373 = vadd.f32 0.0, %v1372
      %v1374 = vpop.f32.mrb[0].mxu0
      %1375 = vdwg.mxu0
      %v1376 = vadd.f32 %v1286, %v1346
      %v1377 = vadd.f32 %v1287, %v1349
      %v1378 = vadd.f32 %v1288, %v1354
      %v1379 = vadd.f32 %v1289, %v1357
      %v1380 = vadd.f32 %v1290, %v1362
      %v1381 = vadd.f32 %v1291, %v1365
      %v1382 = vadd.f32 %v1292, %v1370
      %v1383 = vadd.f32 %v1293, %v1373
      %v1385 = vshrl.u32 %v190, 16
      %v1387 = vrot.slane %v1385, 4
      %v1388 = vshll.u32 %v190, 16
      %v1390 = vrot.slane %v1388, 5
      %v1391 = vor.u32 %v1387, %v1390
      %v1392 = vrot.slane %v1391, 4
      %v1394 = vshll.u32 %v191, 16
      %v1396 = vrot.slane %v1394, 5
      %v1397 = vsel %vm198, %v1392, %v1396
      %s1398 = scalar_lea.vmem %s1, 72
      %v1399 = vld [vmem:[%s1398] sm:$0xf]
      %v1400 = vld [vmem:[%s1398 + $0x4] sm:$0x3]
      %v1401 = vunpack.c.l.b16 %v1397
      %v1402 = vpack.c.b16 %v1401, %v979
      %v1405 = vunpack.c.l.b16 %v1399
      %v1406 = vunpack.c.l.b16 %v1400
      %v1407 = vpack.c.b16 %v1406, %v1405
      %v1409 = vsel %vm331, %v1402, 0
      %v1412 = vsel %vm344, %v1407, 0
      %1414 = vmatprep.subr.bf16.mxu0 0
      %1415 = vmatpush1.bf16.msra.mxu0 %v1412
      %1416 = vmatprep.subr.bf16.mxu0 0
      %1417 = vmatpush1.bf16.msra.mxu0 0
      %1418 = vmatprep.subr.bf16.mxu0 0
      %1419 = vmatpush1.bf16.msra.mxu0 0
      %1420 = vmatprep.subr.bf16.mxu0 0
      %1421 = vmatpush1.bf16.msra.mxu0 0
      %1422 = vmatprep.subr.bf16.mxu0 0
      %1423 = vmatpush1.bf16.msra.mxu0 0
      %1424 = vmatprep.subr.bf16.mxu0 0
      %1425 = vmatpush1.bf16.msra.mxu0 0
      %1426 = vmatprep.subr.bf16.mxu0 0
      %1427 = vmatpush1.bf16.msra.mxu0 0
      %1428 = vmatprep.subr.bf16.mxu0 0
      %1429 = vmatpush1.bf16.msra.mxu0 0
      %1430 = vmatprep.subr.bf16.mxu0 0
      %1431 = vmatpush1.bf16.msra.mxu0 0
      %1432 = vmatprep.subr.bf16.mxu0 0
      %1433 = vmatpush1.bf16.msra.mxu0 0
      %1434 = vmatprep.subr.bf16.mxu0 0
      %1435 = vmatpush1.bf16.msra.mxu0 0
      %1436 = vmatprep.subr.bf16.mxu0 0
      %1437 = vmatpush1.bf16.msra.mxu0 0
      %1438 = vmatprep.subr.bf16.mxu0 0
      %1439 = vmatpush1.bf16.msra.mxu0 0
      %1440 = vmatprep.subr.bf16.mxu0 0
      %1441 = vmatpush1.bf16.msra.mxu0 0
      %1442 = vmatprep.subr.bf16.mxu0 0
      %1443 = vmatpush1.bf16.msra.mxu0 0
      %1444 = vmatprep.subr.bf16.mxu0 0
      %1445 = vmatpush1.bf16.msra.mxu0 0
      %1446 = vmatprep.mubr.bf16.mxu0 0
      %1447 = vmatmul.mubr.bf16.gmra.mrb[0].mxu0 %v336
      %v1448 = vpop.f32.mrb[0].mxu0
      %v1449 = vadd.f32 0.0, %v1448
      %v1450 = vpop.f32.mrb[0].mxu0
      %v1451 = vpop.f32.mrb[0].mxu0
      %v1452 = vadd.f32 0.0, %v1451
      %v1453 = vpop.f32.mrb[0].mxu0
      %1454 = vmatprep.mubr.bf16.mxu0 0
      %1455 = vmatmul.mubr.bf16.gmra.mrb[0].mxu0 %v339
      %v1456 = vpop.f32.mrb[0].mxu0
      %v1457 = vadd.f32 0.0, %v1456
      %v1458 = vpop.f32.mrb[0].mxu0
      %v1459 = vpop.f32.mrb[0].mxu0
      %v1460 = vadd.f32 0.0, %v1459
      %v1461 = vpop.f32.mrb[0].mxu0
      %1462 = vmatprep.mubr.bf16.mxu0 0
      %1463 = vmatmul.mubr.bf16.gmra.mrb[0].mxu0 %v342
      %v1464 = vpop.f32.mrb[0].mxu0
      %v1465 = vadd.f32 0.0, %v1464
      %v1466 = vpop.f32.mrb[0].mxu0
      %v1467 = vpop.f32.mrb[0].mxu0
      %v1468 = vadd.f32 0.0, %v1467
      %v1469 = vpop.f32.mrb[0].mxu0
      %1470 = vmatprep.mubr.bf16.mxu0 0
      %1471 = vmatmul.mubr.bf16.gmra.mrb[0].mxu0 %v1409
      %v1472 = vpop.f32.mrb[0].mxu0
      %v1473 = vadd.f32 0.0, %v1472
      %v1474 = vpop.f32.mrb[0].mxu0
      %v1475 = vpop.f32.mrb[0].mxu0
      %v1476 = vadd.f32 0.0, %v1475
      %v1477 = vpop.f32.mrb[0].mxu0
      %1478 = vdwg.mxu0
      %v1479 = vadd.f32 %v1376, %v1449
      %v1480 = vadd.f32 %v1377, %v1452
      %v1481 = vadd.f32 %v1378, %v1457
      %v1482 = vadd.f32 %v1379, %v1460
      %v1483 = vadd.f32 %v1380, %v1465
      %v1484 = vadd.f32 %v1381, %v1468
      %v1485 = vadd.f32 %v1382, %v1473
      %v1486 = vadd.f32 %v1383, %v1476
      %v1488 = vrot.slane %v190, 5
      %v1489 = vrot.slane %v1488, 4
      %v1490 = vrot.slane %v191, 5
      %v1491 = vsel %vm528, %v1489, %v1490
      %s1492 = scalar_lea.vmem %s1, 80
      %v1493 = vld [vmem:[%s1492] sm:$0xf]
      %v1494 = vld [vmem:[%s1492 + $0x4] sm:$0x3]
      %v1495 = vunpack.c.l.b16 %v1491
      %v1496 = vpack.c.b16 %v1495, %v1085
      %v1499 = vunpack.c.l.b16 %v1493
      %v1500 = vunpack.c.l.b16 %v1494
      %v1501 = vpack.c.b16 %v1500, %v1499
      %v1503 = vsel %vm331, %v1496, 0
      %v1506 = vsel %vm344, %v1501, 0
      %1508 = vmatprep.subr.bf16.mxu0 0
      %1509 = vmatpush1.bf16.msra.mxu0 %v1506
      %1510 = vmatprep.subr.bf16.mxu0 0
      %1511 = vmatpush1.bf16.msra.mxu0 0
      %1512 = vmatprep.subr.bf16.mxu0 0
      %1513 = vmatpush1.bf16.msra.mxu0 0
      %1514 = vmatprep.subr.bf16.mxu0 0
      %1515 = vmatpush1.bf16.msra.mxu0 0
      %1516 = vmatprep.subr.bf16.mxu0 0
      %1517 = vmatpush1.bf16.msra.mxu0 0
      %1518 = vmatprep.subr.bf16.mxu0 0
      %1519 = vmatpush1.bf16.msra.mxu0 0
      %1520 = vmatprep.subr.bf16.mxu0 0
      %1521 = vmatpush1.bf16.msra.mxu0 0
      %1522 = vmatprep.subr.bf16.mxu0 0
      %1523 = vmatpush1.bf16.msra.mxu0 0
      %1524 = vmatprep.subr.bf16.mxu0 0
      %1525 = vmatpush1.bf16.msra.mxu0 0
      %1526 = vmatprep.subr.bf16.mxu0 0
      %1527 = vmatpush1.bf16.msra.mxu0 0
      %1528 = vmatprep.subr.bf16.mxu0 0
      %1529 = vmatpush1.bf16.msra.mxu0 0
      %1530 = vmatprep.subr.bf16.mxu0 0
      %1531 = vmatpush1.bf16.msra.mxu0 0
      %1532 = vmatprep.subr.bf16.mxu0 0
      %1533 = vmatpush1.bf16.msra.mxu0 0
      %1534 = vmatprep.subr.bf16.mxu0 0
      %1535 = vmatpush1.bf16.msra.mxu0 0
      %1536 = vmatprep.subr.bf16.mxu0 0
      %1537 = vmatpush1.bf16.msra.mxu0 0
      %1538 = vmatprep.subr.bf16.mxu0 0
      %1539 = vmatpush1.bf16.msra.mxu0 0
      %1540 = vmatprep.mubr.bf16.mxu0 0
      %1541 = vmatmul.mubr.bf16.gmra.mrb[0].mxu0 %v585
      %v1542 = vpop.f32.mrb[0].mxu0
      %v1543 = vadd.f32 0.0, %v1542
      %v1544 = vpop.f32.mrb[0].mxu0
      %v1545 = vpop.f32.mrb[0].mxu0
      %v1546 = vadd.f32 0.0, %v1545
      %v1547 = vpop.f32.mrb[0].mxu0
      %1548 = vmatprep.mubr.bf16.mxu0 0
      %1549 = vmatmul.mubr.bf16.gmra.mrb[0].mxu0 %v588
      %v1550 = vpop.f32.mrb[0].mxu0
      %v1551 = vadd.f32 0.0, %v1550
      %v1552 = vpop.f32.mrb[0].mxu0
      %v1553 = vpop.f32.mrb[0].mxu0
      %v1554 = vadd.f32 0.0, %v1553
      %v1555 = vpop.f32.mrb[0].mxu0
      %1556 = vmatprep.mubr.bf16.mxu0 0
      %1557 = vmatmul.mubr.bf16.gmra.mrb[0].mxu0 %v591
      %v1558 = vpop.f32.mrb[0].mxu0
      %v1559 = vadd.f32 0.0, %v1558
      %v1560 = vpop.f32.mrb[0].mxu0
      %v1561 = vpop.f32.mrb[0].mxu0
      %v1562 = vadd.f32 0.0, %v1561
      %v1563 = vpop.f32.mrb[0].mxu0
      %1564 = vmatprep.mubr.bf16.mxu0 0
      %1565 = vmatmul.mubr.bf16.gmra.mrb[0].mxu0 %v1503
      %v1566 = vpop.f32.mrb[0].mxu0
      %v1567 = vadd.f32 0.0, %v1566
      %v1568 = vpop.f32.mrb[0].mxu0
      %v1569 = vpop.f32.mrb[0].mxu0
      %v1570 = vadd.f32 0.0, %v1569
      %v1571 = vpop.f32.mrb[0].mxu0
      %1572 = vdwg.mxu0
      %v1573 = vadd.f32 %v1479, %v1543
      %v1574 = vadd.f32 %v1480, %v1546
      %v1575 = vadd.f32 %v1481, %v1551
      %v1576 = vadd.f32 %v1482, %v1554
      %v1577 = vadd.f32 %v1483, %v1559
      %v1578 = vadd.f32 %v1484, %v1562
      %v1579 = vadd.f32 %v1485, %v1567
      %v1580 = vadd.f32 %v1486, %v1570
      %v1581 = vrot.slane %v1385, 5
      %v1582 = vrot.slane %v1388, 6
      %v1583 = vor.u32 %v1581, %v1582
      %v1584 = vrot.slane %v1583, 4
      %v1585 = vshrl.u32 %v191, 16
      %v1587 = vrot.slane %v1585, 5
      %v1588 = vrot.slane %v1394, 6
      %v1589 = vor.u32 %v1587, %v1588
      %v1590 = vsel %vm671, %v1584, %v1589
      %s1591 = scalar_lea.vmem %s1, 88
      %v1592 = vld [vmem:[%s1591] sm:$0xf]
      %v1593 = vld [vmem:[%s1591 + $0x4] sm:$0x3]
      %v1594 = vunpack.c.l.b16 %v1590
      %v1595 = vpack.c.b16 %v1594, %v1196
      %v1598 = vunpack.c.l.b16 %v1592
      %v1599 = vunpack.c.l.b16 %v1593
      %v1600 = vpack.c.b16 %v1599, %v1598
      %v1602 = vsel %vm331, %v1595, 0
      %v1605 = vsel %vm344, %v1600, 0
      %1607 = vmatprep.subr.bf16.mxu0 0
      %1608 = vmatpush1.bf16.msra.mxu0 %v1605
      %1609 = vmatprep.subr.bf16.mxu0 0
      %1610 = vmatpush1.bf16.msra.mxu0 0
      %1611 = vmatprep.subr.bf16.mxu0 0
      %1612 = vmatpush1.bf16.msra.mxu0 0
      %1613 = vmatprep.subr.bf16.mxu0 0
      %1614 = vmatpush1.bf16.msra.mxu0 0
      %1615 = vmatprep.subr.bf16.mxu0 0
      %1616 = vmatpush1.bf16.msra.mxu0 0
      %1617 = vmatprep.subr.bf16.mxu0 0
      %1618 = vmatpush1.bf16.msra.mxu0 0
      %1619 = vmatprep.subr.bf16.mxu0 0
      %1620 = vmatpush1.bf16.msra.mxu0 0
      %1621 = vmatprep.subr.bf16.mxu0 0
      %1622 = vmatpush1.bf16.msra.mxu0 0
      %1623 = vmatprep.subr.bf16.mxu0 0
      %1624 = vmatpush1.bf16.msra.mxu0 0
      %1625 = vmatprep.subr.bf16.mxu0 0
      %1626 = vmatpush1.bf16.msra.mxu0 0
      %1627 = vmatprep.subr.bf16.mxu0 0
      %1628 = vmatpush1.bf16.msra.mxu0 0
      %1629 = vmatprep.subr.bf16.mxu0 0
      %1630 = vmatpush1.bf16.msra.mxu0 0
      %1631 = vmatprep.subr.bf16.mxu0 0
      %1632 = vmatpush1.bf16.msra.mxu0 0
      %1633 = vmatprep.subr.bf16.mxu0 0
      %1634 = vmatpush1.bf16.msra.mxu0 0
      %1635 = vmatprep.subr.bf16.mxu0 0
      %1636 = vmatpush1.bf16.msra.mxu0 0
      %1637 = vmatprep.subr.bf16.mxu0 0
      %1638 = vmatpush1.bf16.msra.mxu0 0
      %1639 = vmatprep.mubr.bf16.mxu0 0
      %1640 = vmatmul.mubr.bf16.gmra.mrb[0].mxu0 %v776
      %v1641 = vpop.f32.mrb[0].mxu0
      %v1642 = vadd.f32 0.0, %v1641
      %v1643 = vpop.f32.mrb[0].mxu0
      %v1644 = vpop.f32.mrb[0].mxu0
      %v1645 = vadd.f32 0.0, %v1644
      %v1646 = vpop.f32.mrb[0].mxu0
      %1647 = vmatprep.mubr.bf16.mxu0 0
      %1648 = vmatmul.mubr.bf16.gmra.mrb[0].mxu0 %v779
      %v1649 = vpop.f32.mrb[0].mxu0
      %v1650 = vadd.f32 0.0, %v1649
      %v1651 = vpop.f32.mrb[0].mxu0
      %v1652 = vpop.f32.mrb[0].mxu0
      %v1653 = vadd.f32 0.0, %v1652
      %v1654 = vpop.f32.mrb[0].mxu0
      %1655 = vmatprep.mubr.bf16.mxu0 0
      %1656 = vmatmul.mubr.bf16.gmra.mrb[0].mxu0 %v782
      %v1657 = vpop.f32.mrb[0].mxu0
      %v1658 = vadd.f32 0.0, %v1657
      %v1659 = vpop.f32.mrb[0].mxu0
      %v1660 = vpop.f32.mrb[0].mxu0
      %v1661 = vadd.f32 0.0, %v1660
      %v1662 = vpop.f32.mrb[0].mxu0
      %1663 = vmatprep.mubr.bf16.mxu0 0
      %1664 = vmatmul.mubr.bf16.gmra.mrb[0].mxu0 %v1602
      %v1665 = vpop.f32.mrb[0].mxu0
      %v1666 = vadd.f32 0.0, %v1665
      %v1667 = vpop.f32.mrb[0].mxu0
      %v1668 = vpop.f32.mrb[0].mxu0
      %v1669 = vadd.f32 0.0, %v1668
      %v1670 = vpop.f32.mrb[0].mxu0
      %1671 = vdwg.mxu0
      %v1672 = vadd.f32 %v1573, %v1642
      %v1673 = vadd.f32 %v1574, %v1645
      %v1674 = vadd.f32 %v1575, %v1650
      %v1675 = vadd.f32 %v1576, %v1653
      %v1676 = vadd.f32 %v1577, %v1658
      %v1677 = vadd.f32 %v1578, %v1661
      %v1678 = vadd.f32 %v1579, %v1666
      %v1679 = vadd.f32 %v1580, %v1669
      %s1680 = scalar_lea.vmem %s1, 96
      %v1681 = vld [vmem:[%s1680] sm:$0xf]
      %v1682 = vld [vmem:[%s1680 + $0x4] sm:$0x3]
      %v1684 = vunpack.c.l.b16 %v192
      %v1685 = vpack.c.b16 %v1684, %v1298
      %v1688 = vunpack.c.l.b16 %v1681
      %v1689 = vunpack.c.l.b16 %v1682
      %v1690 = vpack.c.b16 %v1689, %v1688
      %v1692 = vsel %vm331, %v1685, 0
      %v1695 = vsel %vm344, %v1690, 0
      %1697 = vmatprep.subr.bf16.mxu0 0
      %1698 = vmatpush1.bf16.msra.mxu0 %v1695
      %1699 = vmatprep.subr.bf16.mxu0 0
      %1700 = vmatpush1.bf16.msra.mxu0 0
      %1701 = vmatprep.subr.bf16.mxu0 0
      %1702 = vmatpush1.bf16.msra.mxu0 0
      %1703 = vmatprep.subr.bf16.mxu0 0
      %1704 = vmatpush1.bf16.msra.mxu0 0
      %1705 = vmatprep.subr.bf16.mxu0 0
      %1706 = vmatpush1.bf16.msra.mxu0 0
      %1707 = vmatprep.subr.bf16.mxu0 0
      %1708 = vmatpush1.bf16.msra.mxu0 0
      %1709 = vmatprep.subr.bf16.mxu0 0
      %1710 = vmatpush1.bf16.msra.mxu0 0
      %1711 = vmatprep.subr.bf16.mxu0 0
      %1712 = vmatpush1.bf16.msra.mxu0 0
      %1713 = vmatprep.subr.bf16.mxu0 0
      %1714 = vmatpush1.bf16.msra.mxu0 0
      %1715 = vmatprep.subr.bf16.mxu0 0
      %1716 = vmatpush1.bf16.msra.mxu0 0
      %1717 = vmatprep.subr.bf16.mxu0 0
      %1718 = vmatpush1.bf16.msra.mxu0 0
      %1719 = vmatprep.subr.bf16.mxu0 0
      %1720 = vmatpush1.bf16.msra.mxu0 0
      %1721 = vmatprep.subr.bf16.mxu0 0
      %1722 = vmatpush1.bf16.msra.mxu0 0
      %1723 = vmatprep.subr.bf16.mxu0 0
      %1724 = vmatpush1.bf16.msra.mxu0 0
      %1725 = vmatprep.subr.bf16.mxu0 0
      %1726 = vmatpush1.bf16.msra.mxu0 0
      %1727 = vmatprep.subr.bf16.mxu0 0
      %1728 = vmatpush1.bf16.msra.mxu0 0
      %1729 = vmatprep.mubr.bf16.mxu0 0
      %1730 = vmatmul.mubr.bf16.gmra.mrb[0].mxu0 %v878
      %v1731 = vpop.f32.mrb[0].mxu0
      %v1732 = vadd.f32 0.0, %v1731
      %v1733 = vpop.f32.mrb[0].mxu0
      %v1734 = vpop.f32.mrb[0].mxu0
      %v1735 = vadd.f32 0.0, %v1734
      %v1736 = vpop.f32.mrb[0].mxu0
      %1737 = vmatprep.mubr.bf16.mxu0 0
      %1738 = vmatmul.mubr.bf16.gmra.mrb[0].mxu0 %v881
      %v1739 = vpop.f32.mrb[0].mxu0
      %v1740 = vadd.f32 0.0, %v1739
      %v1741 = vpop.f32.mrb[0].mxu0
      %v1742 = vpop.f32.mrb[0].mxu0
      %v1743 = vadd.f32 0.0, %v1742
      %v1744 = vpop.f32.mrb[0].mxu0
      %1745 = vmatprep.mubr.bf16.mxu0 0
      %1746 = vmatmul.mubr.bf16.gmra.mrb[0].mxu0 %v884
      %v1747 = vpop.f32.mrb[0].mxu0
      %v1748 = vadd.f32 0.0, %v1747
      %v1749 = vpop.f32.mrb[0].mxu0
      %v1750 = vpop.f32.mrb[0].mxu0
      %v1751 = vadd.f32 0.0, %v1750
      %v1752 = vpop.f32.mrb[0].mxu0
      %1753 = vmatprep.mubr.bf16.mxu0 0
      %1754 = vmatmul.mubr.bf16.gmra.mrb[0].mxu0 %v1692
      %v1755 = vpop.f32.mrb[0].mxu0
      %v1756 = vadd.f32 0.0, %v1755
      %v1757 = vpop.f32.mrb[0].mxu0
      %v1758 = vpop.f32.mrb[0].mxu0
      %v1759 = vadd.f32 0.0, %v1758
      %v1760 = vpop.f32.mrb[0].mxu0
      %1761 = vdwg.mxu0
      %v1762 = vadd.f32 %v1672, %v1732
      %v1763 = vadd.f32 %v1673, %v1735
      %v1764 = vadd.f32 %v1674, %v1740
      %v1765 = vadd.f32 %v1675, %v1743
      %v1766 = vadd.f32 %v1676, %v1748
      %v1767 = vadd.f32 %v1677, %v1751
      %v1768 = vadd.f32 %v1678, %v1756
      %v1769 = vadd.f32 %v1679, %v1759
      %v1771 = vshrl.u32 %v192, 16
      %v1773 = vrot.slane %v1771, 4
      %v1774 = vshll.u32 %v192, 16
      %v1776 = vrot.slane %v1774, 5
      %v1777 = vor.u32 %v1773, %v1776
      %v1778 = vrot.slane %v1777, 4
      %v1780 = vshll.u32 %v193, 16
      %v1782 = vrot.slane %v1780, 5
      %v1783 = vsel %vm198, %v1778, %v1782
      %s1784 = scalar_lea.vmem %s1, 104
      %v1785 = vld [vmem:[%s1784] sm:$0xf]
      %v1786 = vld [vmem:[%s1784 + $0x4] sm:$0x3]
      %v1787 = vunpack.c.l.b16 %v1783
      %v1788 = vpack.c.b16 %v1787, %v1401
      %v1791 = vunpack.c.l.b16 %v1785
      %v1792 = vunpack.c.l.b16 %v1786
      %v1793 = vpack.c.b16 %v1792, %v1791
      %v1795 = vsel %vm331, %v1788, 0
      %v1798 = vsel %vm344, %v1793, 0
      %1800 = vmatprep.subr.bf16.mxu0 0
      %1801 = vmatpush1.bf16.msra.mxu0 %v1798
      %1802 = vmatprep.subr.bf16.mxu0 0
      %1803 = vmatpush1.bf16.msra.mxu0 0
      %1804 = vmatprep.subr.bf16.mxu0 0
      %1805 = vmatpush1.bf16.msra.mxu0 0
      %1806 = vmatprep.subr.bf16.mxu0 0
      %1807 = vmatpush1.bf16.msra.mxu0 0
      %1808 = vmatprep.subr.bf16.mxu0 0
      %1809 = vmatpush1.bf16.msra.mxu0 0
      %1810 = vmatprep.subr.bf16.mxu0 0
      %1811 = vmatpush1.bf16.msra.mxu0 0
      %1812 = vmatprep.subr.bf16.mxu0 0
      %1813 = vmatpush1.bf16.msra.mxu0 0
      %1814 = vmatprep.subr.bf16.mxu0 0
      %1815 = vmatpush1.bf16.msra.mxu0 0
      %1816 = vmatprep.subr.bf16.mxu0 0
      %1817 = vmatpush1.bf16.msra.mxu0 0
      %1818 = vmatprep.subr.bf16.mxu0 0
      %1819 = vmatpush1.bf16.msra.mxu0 0
      %1820 = vmatprep.subr.bf16.mxu0 0
      %1821 = vmatpush1.bf16.msra.mxu0 0
      %1822 = vmatprep.subr.bf16.mxu0 0
      %1823 = vmatpush1.bf16.msra.mxu0 0
      %1824 = vmatprep.subr.bf16.mxu0 0
      %1825 = vmatpush1.bf16.msra.mxu0 0
      %1826 = vmatprep.subr.bf16.mxu0 0
      %1827 = vmatpush1.bf16.msra.mxu0 0
      %1828 = vmatprep.subr.bf16.mxu0 0
      %1829 = vmatpush1.bf16.msra.mxu0 0
      %1830 = vmatprep.subr.bf16.mxu0 0
      %1831 = vmatpush1.bf16.msra.mxu0 0
      %1832 = vmatprep.mubr.bf16.mxu0 0
      %1833 = vmatmul.mubr.bf16.gmra.mrb[0].mxu0 %v993
      %v1834 = vpop.f32.mrb[0].mxu0
      %v1835 = vadd.f32 0.0, %v1834
      %v1836 = vpop.f32.mrb[0].mxu0
      %v1837 = vpop.f32.mrb[0].mxu0
      %v1838 = vadd.f32 0.0, %v1837
      %v1839 = vpop.f32.mrb[0].mxu0
      %1840 = vmatprep.mubr.bf16.mxu0 0
      %1841 = vmatmul.mubr.bf16.gmra.mrb[0].mxu0 %v996
      %v1842 = vpop.f32.mrb[0].mxu0
      %v1843 = vadd.f32 0.0, %v1842
      %v1844 = vpop.f32.mrb[0].mxu0
      %v1845 = vpop.f32.mrb[0].mxu0
      %v1846 = vadd.f32 0.0, %v1845
      %v1847 = vpop.f32.mrb[0].mxu0
      %1848 = vmatprep.mubr.bf16.mxu0 0
      %1849 = vmatmul.mubr.bf16.gmra.mrb[0].mxu0 %v999
      %v1850 = vpop.f32.mrb[0].mxu0
      %v1851 = vadd.f32 0.0, %v1850
      %v1852 = vpop.f32.mrb[0].mxu0
      %v1853 = vpop.f32.mrb[0].mxu0
      %v1854 = vadd.f32 0.0, %v1853
      %v1855 = vpop.f32.mrb[0].mxu0
      %1856 = vmatprep.mubr.bf16.mxu0 0
      %1857 = vmatmul.mubr.bf16.gmra.mrb[0].mxu0 %v1795
      %v1858 = vpop.f32.mrb[0].mxu0
      %v1859 = vadd.f32 0.0, %v1858
      %v1860 = vpop.f32.mrb[0].mxu0
      %v1861 = vpop.f32.mrb[0].mxu0
      %v1862 = vadd.f32 0.0, %v1861
      %v1863 = vpop.f32.mrb[0].mxu0
      %1864 = vdwg.mxu0
      %v1865 = vadd.f32 %v1762, %v1835
      %v1866 = vadd.f32 %v1763, %v1838
      %v1867 = vadd.f32 %v1764, %v1843
      %v1868 = vadd.f32 %v1765, %v1846
      %v1869 = vadd.f32 %v1766, %v1851
      %v1870 = vadd.f32 %v1767, %v1854
      %v1871 = vadd.f32 %v1768, %v1859
      %v1872 = vadd.f32 %v1769, %v1862
      %v1874 = vrot.slane %v192, 5
      %v1875 = vrot.slane %v1874, 4
      %v1876 = vrot.slane %v193, 5
      %v1877 = vsel %vm528, %v1875, %v1876
      %s1878 = scalar_lea.vmem %s1, 112
      %v1879 = vld [vmem:[%s1878] sm:$0xf]
      %v1880 = vld [vmem:[%s1878 + $0x4] sm:$0x3]
      %v1881 = vunpack.c.l.b16 %v1877
      %v1882 = vpack.c.b16 %v1881, %v1495
      %v1885 = vunpack.c.l.b16 %v1879
      %v1886 = vunpack.c.l.b16 %v1880
      %v1887 = vpack.c.b16 %v1886, %v1885
      %v1889 = vsel %vm331, %v1882, 0
      %v1892 = vsel %vm344, %v1887, 0
      %1894 = vmatprep.subr.bf16.mxu0 0
      %1895 = vmatpush1.bf16.msra.mxu0 %v1892
      %1896 = vmatprep.subr.bf16.mxu0 0
      %1897 = vmatpush1.bf16.msra.mxu0 0
      %1898 = vmatprep.subr.bf16.mxu0 0
      %1899 = vmatpush1.bf16.msra.mxu0 0
      %1900 = vmatprep.subr.bf16.mxu0 0
      %1901 = vmatpush1.bf16.msra.mxu0 0
      %1902 = vmatprep.subr.bf16.mxu0 0
      %1903 = vmatpush1.bf16.msra.mxu0 0
      %1904 = vmatprep.subr.bf16.mxu0 0
      %1905 = vmatpush1.bf16.msra.mxu0 0
      %1906 = vmatprep.subr.bf16.mxu0 0
      %1907 = vmatpush1.bf16.msra.mxu0 0
      %1908 = vmatprep.subr.bf16.mxu0 0
      %1909 = vmatpush1.bf16.msra.mxu0 0
      %1910 = vmatprep.subr.bf16.mxu0 0
      %1911 = vmatpush1.bf16.msra.mxu0 0
      %1912 = vmatprep.subr.bf16.mxu0 0
      %1913 = vmatpush1.bf16.msra.mxu0 0
      %1914 = vmatprep.subr.bf16.mxu0 0
      %1915 = vmatpush1.bf16.msra.mxu0 0
      %1916 = vmatprep.subr.bf16.mxu0 0
      %1917 = vmatpush1.bf16.msra.mxu0 0
      %1918 = vmatprep.subr.bf16.mxu0 0
      %1919 = vmatpush1.bf16.msra.mxu0 0
      %1920 = vmatprep.subr.bf16.mxu0 0
      %1921 = vmatpush1.bf16.msra.mxu0 0
      %1922 = vmatprep.subr.bf16.mxu0 0
      %1923 = vmatpush1.bf16.msra.mxu0 0
      %1924 = vmatprep.subr.bf16.mxu0 0
      %1925 = vmatpush1.bf16.msra.mxu0 0
      %1926 = vmatprep.mubr.bf16.mxu0 0
      %1927 = vmatmul.mubr.bf16.gmra.mrb[0].mxu0 %v1099
      %v1928 = vpop.f32.mrb[0].mxu0
      %v1929 = vadd.f32 0.0, %v1928
      %v1930 = vpop.f32.mrb[0].mxu0
      %v1931 = vpop.f32.mrb[0].mxu0
      %v1932 = vadd.f32 0.0, %v1931
      %v1933 = vpop.f32.mrb[0].mxu0
      %1934 = vmatprep.mubr.bf16.mxu0 0
      %1935 = vmatmul.mubr.bf16.gmra.mrb[0].mxu0 %v1102
      %v1936 = vpop.f32.mrb[0].mxu0
      %v1937 = vadd.f32 0.0, %v1936
      %v1938 = vpop.f32.mrb[0].mxu0
      %v1939 = vpop.f32.mrb[0].mxu0
      %v1940 = vadd.f32 0.0, %v1939
      %v1941 = vpop.f32.mrb[0].mxu0
      %1942 = vmatprep.mubr.bf16.mxu0 0
      %1943 = vmatmul.mubr.bf16.gmra.mrb[0].mxu0 %v1105
      %v1944 = vpop.f32.mrb[0].mxu0
      %v1945 = vadd.f32 0.0, %v1944
      %v1946 = vpop.f32.mrb[0].mxu0
      %v1947 = vpop.f32.mrb[0].mxu0
      %v1948 = vadd.f32 0.0, %v1947
      %v1949 = vpop.f32.mrb[0].mxu0
      %1950 = vmatprep.mubr.bf16.mxu0 0
      %1951 = vmatmul.mubr.bf16.gmra.mrb[0].mxu0 %v1889
      %v1952 = vpop.f32.mrb[0].mxu0
      %v1953 = vadd.f32 0.0, %v1952
      %v1954 = vpop.f32.mrb[0].mxu0
      %v1955 = vpop.f32.mrb[0].mxu0
      %v1956 = vadd.f32 0.0, %v1955
      %v1957 = vpop.f32.mrb[0].mxu0
      %1958 = vdwg.mxu0
      %v1959 = vadd.f32 %v1865, %v1929
      %v1960 = vadd.f32 %v1866, %v1932
      %v1961 = vadd.f32 %v1867, %v1937
      %v1962 = vadd.f32 %v1868, %v1940
      %v1963 = vadd.f32 %v1869, %v1945
      %v1964 = vadd.f32 %v1870, %v1948
      %v1965 = vadd.f32 %v1871, %v1953
      %v1966 = vadd.f32 %v1872, %v1956
      %v1967 = vrot.slane %v1771, 5
      %v1968 = vrot.slane %v1774, 6
      %v1969 = vor.u32 %v1967, %v1968
      %v1970 = vrot.slane %v1969, 4
      %v1971 = vshrl.u32 %v193, 16
      %v1973 = vrot.slane %v1971, 5
      %v1974 = vrot.slane %v1780, 6
      %v1975 = vor.u32 %v1973, %v1974
      %v1976 = vsel %vm671, %v1970, %v1975
      %s1977 = scalar_lea.vmem %s1, 120
      %v1978 = vld [vmem:[%s1977] sm:$0xf]
      %v1979 = vld [vmem:[%s1977 + $0x4] sm:$0x3]
      %v1980 = vunpack.c.l.b16 %v1976
      %v1981 = vpack.c.b16 %v1980, %v1594
      %v1984 = vunpack.c.l.b16 %v1978
      %v1985 = vunpack.c.l.b16 %v1979
      %v1986 = vpack.c.b16 %v1985, %v1984
      %v1988 = vsel %vm331, %v1981, 0
      %v1991 = vsel %vm344, %v1986, 0
      %1993 = vmatprep.subr.bf16.mxu0 0
      %1994 = vmatpush1.bf16.msra.mxu0 %v1991
      %1995 = vmatprep.subr.bf16.mxu0 0
      %1996 = vmatpush1.bf16.msra.mxu0 0
      %1997 = vmatprep.subr.bf16.mxu0 0
      %1998 = vmatpush1.bf16.msra.mxu0 0
      %1999 = vmatprep.subr.bf16.mxu0 0
      %2000 = vmatpush1.bf16.msra.mxu0 0
      %2001 = vmatprep.subr.bf16.mxu0 0
      %2002 = vmatpush1.bf16.msra.mxu0 0
      %2003 = vmatprep.subr.bf16.mxu0 0
      %2004 = vmatpush1.bf16.msra.mxu0 0
      %2005 = vmatprep.subr.bf16.mxu0 0
      %2006 = vmatpush1.bf16.msra.mxu0 0
      %2007 = vmatprep.subr.bf16.mxu0 0
      %2008 = vmatpush1.bf16.msra.mxu0 0
      %2009 = vmatprep.subr.bf16.mxu0 0
      %2010 = vmatpush1.bf16.msra.mxu0 0
      %2011 = vmatprep.subr.bf16.mxu0 0
      %2012 = vmatpush1.bf16.msra.mxu0 0
      %2013 = vmatprep.subr.bf16.mxu0 0
      %2014 = vmatpush1.bf16.msra.mxu0 0
      %2015 = vmatprep.subr.bf16.mxu0 0
      %2016 = vmatpush1.bf16.msra.mxu0 0
      %2017 = vmatprep.subr.bf16.mxu0 0
      %2018 = vmatpush1.bf16.msra.mxu0 0
      %2019 = vmatprep.subr.bf16.mxu0 0
      %2020 = vmatpush1.bf16.msra.mxu0 0
      %2021 = vmatprep.subr.bf16.mxu0 0
      %2022 = vmatpush1.bf16.msra.mxu0 0
      %2023 = vmatprep.subr.bf16.mxu0 0
      %2024 = vmatpush1.bf16.msra.mxu0 0
      %2025 = vmatprep.mubr.bf16.mxu0 0
      %2026 = vmatmul.mubr.bf16.gmra.mrb[0].mxu0 %v1210
      %v2027 = vpop.f32.mrb[0].mxu0
      %v2028 = vadd.f32 0.0, %v2027
      %v2029 = vpop.f32.mrb[0].mxu0
      %v2030 = vpop.f32.mrb[0].mxu0
      %v2031 = vadd.f32 0.0, %v2030
      %v2032 = vpop.f32.mrb[0].mxu0
      %2033 = vmatprep.mubr.bf16.mxu0 0
      %2034 = vmatmul.mubr.bf16.gmra.mrb[0].mxu0 %v1213
      %v2035 = vpop.f32.mrb[0].mxu0
      %v2036 = vadd.f32 0.0, %v2035
      %v2037 = vpop.f32.mrb[0].mxu0
      %v2038 = vpop.f32.mrb[0].mxu0
      %v2039 = vadd.f32 0.0, %v2038
      %v2040 = vpop.f32.mrb[0].mxu0
      %2041 = vmatprep.mubr.bf16.mxu0 0
      %2042 = vmatmul.mubr.bf16.gmra.mrb[0].mxu0 %v1216
      %v2043 = vpop.f32.mrb[0].mxu0
      %v2044 = vadd.f32 0.0, %v2043
      %v2045 = vpop.f32.mrb[0].mxu0
      %v2046 = vpop.f32.mrb[0].mxu0
      %v2047 = vadd.f32 0.0, %v2046
      %v2048 = vpop.f32.mrb[0].mxu0
      %2049 = vmatprep.mubr.bf16.mxu0 0
      %2050 = vmatmul.mubr.bf16.gmra.mrb[0].mxu0 %v1988
      %v2051 = vpop.f32.mrb[0].mxu0
      %v2052 = vadd.f32 0.0, %v2051
      %v2053 = vpop.f32.mrb[0].mxu0
      %v2054 = vpop.f32.mrb[0].mxu0
      %v2055 = vadd.f32 0.0, %v2054
      %v2056 = vpop.f32.mrb[0].mxu0
      %2057 = vdwg.mxu0
      %v2058 = vadd.f32 %v1959, %v2028
      %v2059 = vadd.f32 %v1960, %v2031
      %v2060 = vadd.f32 %v1961, %v2036
      %v2061 = vadd.f32 %v1962, %v2039
      %v2062 = vadd.f32 %v1963, %v2044
      %v2063 = vadd.f32 %v1964, %v2047
      %v2064 = vadd.f32 %v1965, %v2052
      %v2065 = vadd.f32 %v1966, %v2055
      %v2066 = vld [vmem:[%s2] sm:$0x1]
      %v2068 = vlaneseq
      %v2069 = vshrl.u32 %v2068, 7
      %v2070 = vsub.s32 0, %v2069
      %v2071 = vrot.slane %v2066, %v2070
      %v2073 = vadd.f32 %v2058, %v2071
      %v2074 = vadd.f32 %v2059, %v2071
      %v2075 = vadd.f32 %v2060, %v2071
      %v2076 = vadd.f32 %v2061, %v2071
      %v2077 = vadd.f32 %v2062, %v2071
      %v2078 = vadd.f32 %v2063, %v2071
      %v2079 = vadd.f32 %v2064, %v2071
      %v2080 = vadd.f32 %v2065, %v2071
      %v2081 = vmax.f32 %v2073, 0.0
      %v2082 = vmax.f32 %v2074, 0.0
      %v2083 = vmax.f32 %v2075, 0.0
      %v2084 = vmax.f32 %v2076, 0.0
      %v2085 = vmax.f32 %v2077, 0.0
      %v2086 = vmax.f32 %v2078, 0.0
      %v2087 = vmax.f32 %v2079, 0.0
      %v2088 = vmax.f32 %v2080, 0.0
      %v2089 = vpack.c.bf16 %v2082, %v2081
      %v2090 = vpack.c.bf16 %v2084, %v2083
      %v2091 = vpack.c.bf16 %v2086, %v2085
      %v2092 = vpack.c.bf16 %v2088, %v2087
      %v2097 = vunpack.c.l.b16 %v2089
      %v2098 = vunpack.c.h.b16 %v2089
      %v2099 = vunpack.c.l.b16 %v2090
      %v2100 = vunpack.c.h.b16 %v2090
      %v2101 = vunpack.c.l.b16 %v2091
      %v2102 = vunpack.c.h.b16 %v2091
      %v2103 = vunpack.c.l.b16 %v2092
      %v2104 = vunpack.c.h.b16 %v2092
      %v2105 = vpack.c.b16 %v2097, %v2097
      %v2106 = vpack.c.b16 %v2098, %v2098
      %v2107 = vpack.c.b16 %v2099, %v2099
      %v2108 = vpack.c.b16 %v2100, %v2100
      %v2109 = vpack.c.b16 %v2101, %v2101
      %v2110 = vpack.c.b16 %v2102, %v2102
      %v2111 = vpack.c.b16 %v2103, %v2103
      %v2112 = vpack.c.b16 %v2104, %v2104
      %vm2121 = vcmask 519168
      %2122 = vst.msk [vmem:[%s170] sm:$0xf] %vm2121, %v2105
      %2123 = vst.msk [vmem:[%s170 + $0x4] sm:$0xf] %vm2121, %v2106
      %2124 = vst.msk [vmem:[%s170 + $0x8] sm:$0xf] %vm2121, %v2107
      %2125 = vst.msk [vmem:[%s170 + $0xc] sm:$0xf] %vm2121, %v2108
      %2126 = vst.msk [vmem:[%s170 + $0x10] sm:$0xf] %vm2121, %v2109
      %2127 = vst.msk [vmem:[%s170 + $0x14] sm:$0xf] %vm2121, %v2110
      %2128 = vst.msk [vmem:[%s170 + $0x18] sm:$0xf] %vm2121, %v2111
      %2129 = vst.msk [vmem:[%s170 + $0x1c] sm:$0xf] %vm2121, %v2112
      %p2130 = scmp.lt.s32.totalorder %s14, 15
      %s2131 = scalar_select %p2130, %s14, 15
      %s2132 = smul.addr %s2131, 8
      %s2133 = smul.addr %s2132, 4
      %s2134 = scalar_lea.vmem %s3, %s2133
      // Predicated region
      $region33: #{mvnetwork_forward.3} parent=31 // pred_check
        %p2135 = pneg %p100
      $region34: #{mvnetwork_forward.3} parent=31 // pred_check_branch
        %2137 = sbr.rel (%p2135) target = $region36
      $region35: #{mvnetwork_forward.3} parent=31 // pred_region
        _
      $region36: #{mvnetwork_forward.3} parent=31 // pred_fallthru
        _
    $region32: #{mvnetwork_forward.3} parent=5 // pred_fallthru
      _
    %p2138 = scmp.le.s32.totalorder 2, %s9
    // Predicated region
    $region37: #{mvnetwork_forward.3} parent=5 // pred_check
      %p2139 = pneg %p2138
    $region38: #{mvnetwork_forward.3} parent=5 // pred_check_branch
      %2141 = sbr.rel (%p2139) target = $region40
    $region39: #{mvnetwork_forward.3} parent=5 // pred_region
      %s2142 = ssub.s32 %s9, 2
      // Predicated region
      $region41: #{mvnetwork_forward.3} parent=39 // pred_check
        %p2143 = pneg %p106
      $region42: #{mvnetwork_forward.3} parent=39 // pred_check_branch
        %2145 = sbr.rel (%p2143) target = $region44
      $region43: #{mvnetwork_forward.3} parent=39 // pred_region
        %p2146 = scmp.lt.s32.totalorder %s15, 15
        %s2147 = scalar_select %p2146, %s15, 15
        %s2148 = smul.addr %s2147, 8
        %s2149 = smul.addr %s2148, 4
        %s2150 = scalar_lea.vmem %s3, %s2149
      $region44: #{mvnetwork_forward.3} parent=39 // pred_fallthru
        _
    $region40: #{mvnetwork_forward.3} parent=5 // pred_fallthru
      _
  $region6: #{mvnetwork_forward.3} parent=0 // loop_footer
    %s13 = sadd.s32 1, %s9
  $region7: #{mvnetwork_forward.3} parent=0 // loop_footer_branch
    %8 = sbr.rel target = $region3
  $region8: #{mvnetwork_forward.3} parent=0 // loop_exit
    _

// kernel: mvnetwork_forward.4
$region0: #{mvnetwork_forward.4}
  #allocation0 [shape = 'u32[]', space=smem, size = 0x4, offset = 0x4, fixed_abs, tag = 'smem constant byte address 0x4 - core index']
  #allocation1 [shape = 'u32[144,128]{1,0:T(1,128)}', space=vmem, size = 0x12000, scoped, tag = 'internal scratch']
  #allocation2 [shape = 'f32[64,64]{1,0:T(8,128)}', space=vmem, size = 0x8000, scoped, tag = 'scratch operand']
  #allocation3 [shape = 'f32[1,64]{1,0:T(1,128)}', space=vmem, size = 0x200, scoped, tag = 'scratch operand']
  %s0 = inlined_call_operand.vmem [shape: bf16[4,4,64,64], index: 0, kind: input, shape index: {}]
  %s1 = inlined_call_operand.vmem [shape: bf16[3,64,64], index: 1, kind: input, shape index: {}]
  %s2 = inlined_call_operand.vmem [shape: f32[1,64], index: 2, kind: input, shape index: {}]
  %s3 = inlined_call_operand.vmem [shape: f32[64,512], index: 3, kind: input, shape index: {}]
  %s4 = inlined_call_operand.vmem [shape: f32[1,512], index: 4, kind: input, shape index: {}]
  %s5 = inlined_call_operand.vmem [shape: f32[4,1,512], index: 5, kind: output, shape index: {}]
  %s6 = sld [smem:[#allocation0]]
  $region73: #{mvnetwork_forward.4} parent=0
    _
  %s8 = ssub.s32 1, %s6
  %s9 = scalar_select 0, %s8, %s6
  loop: start=0, step=1, limit=50
  $region2: #{mvnetwork_forward.4} parent=0 // loop_pre_header
    _
  $region3: #{mvnetwork_forward.4} parent=0 // loop_header
    %s11 = sphi 0, %s15
    %p12 = scmp.ge.s32.totalorder %s11, 50
    %s18 = sphi 0, %s37
    %s19 = sphi 0, %s33
    %s20 = sphi 0, %s29
    %s21 = sphi 0, %s18
    %s22 = sphi 0, %s19
    %s23 = sphi 0, %s20
    %s24 = sphi 0, %s21
    %s25 = sphi 0, %s22
    %s26 = sphi 0, %s23
    %s54 = sphi 0, %s56
    %s57 = sphi 0, %s54
    %s58 = sphi 0, %s57
    %s74 = sphi 0, %s58
    %s78 = sphi 0, %s78
    %s80 = sphi 0, %s78
    %s81 = sphi 0, %s80
    %s95 = sphi 0, %s81
    %s99 = sphi 0, %s99
    %s101 = sphi 0, %s99
    %s102 = sphi 0, %s101
    %s116 = sphi 0, %s102
    %s120 = sphi 0, %s120
    %s122 = sphi 0, %s120
    %s123 = sphi 0, %s122
    %s137 = sphi 0, %s123
    %s141 = sphi 0, %s141
    %s143 = sphi 0, %s141
    %s144 = sphi 0, %s143
    %s158 = sphi 0, %s144
    %s164 = sphi 0, %s166
    %s167 = sphi 0, %s164
    %s168 = sphi 0, %s167
    %s184 = sphi 0, %s168
  $region4: #{mvnetwork_forward.4} parent=0 // loop_header_branch
    %14 = sbr.rel (%p12) target = $region8
  $region5: #{mvnetwork_forward.4} parent=0 // loop_body
    %s16 = ssub.s32 %s11, 1
    %s17 = ssub.s32 %s11, 2
    %s27 = sadd.s32 1, %s20
    %p28 = scmp.ge.s32.totalorder %s27, 3
    %s29 = scalar_select %p28, 0, %s27
    %s30 = sadd.s32 1, %s19
    %s31 = scalar_select %p28, %s30, %s19
    %p32 = scmp.ge.s32.totalorder %s31, 4
    %s33 = scalar_select %p32, 0, %s31
    %s34 = sadd.s32 1, %s18
    %s35 = scalar_select %p32, %s34, %s18
    %p36 = scmp.ge.s32.totalorder %s35, 4
    %s37 = scalar_select %p36, 0, %s35
    %s38 = sadd.s32 %s19, %s20
    %s39 = ssub.s32 %s38, 1
    %p40 = scmp.gt.s32.totalorder %s39, 0
    %s41 = scalar_select %p40, %s39, 0
    %p42 = scmp.lt.s32.totalorder %s41, 3
    %s43 = scalar_select %p42, %s41, 3
    %s44 = sadd.s32 %s33, %s29
    %s45 = ssub.s32 %s44, 1
    %p46 = scmp.gt.s32.totalorder %s45, 0
    %s47 = scalar_select %p46, %s45, 0
    %p48 = scmp.lt.s32.totalorder %s47, 3
    %s49 = scalar_select %p48, %s47, 3
    %s50 = ssub.s32 %s18, %s37
    %s51 = ssub.s32 %s43, %s49
    %s52 = sor.u32 %s50, %s51
    %p53 = scmp.eq.s32.totalorder %s52, 0
    %s55 = sadd.s32 %s54, 1
    %s56 = scalar_select %p53, %s54, %s55
    %p59 = pneg %p53
    %p60 = scmp.eq.s32.totalorder %s11, 47
    %p61 = por %p59, %p60
    %p62 = scmp.ne.s32.totalorder %s54, %s57
    %p63 = scmp.eq.s32.totalorder %s11, 0
    %p64 = por %p62, %p63
    %p65 = scmp.ne.s32.totalorder %s54, %s57
    %p66 = scmp.eq.s32.totalorder %s16, 47
    %p67 = por %p65, %p66
    %p68 = scmp.ne.s32.totalorder %s57, %s58
    %p69 = scmp.eq.s32.totalorder %s16, 0
    %p70 = por %p68, %p69
    %p71 = scmp.ne.s32.totalorder %s57, %s58
    %p72 = scmp.eq.s32.totalorder %s17, 47
    %p73 = por %p71, %p72
    %p75 = scmp.ne.s32.totalorder %s58, %s74
    %p76 = scmp.eq.s32.totalorder %s17, 0
    %p77 = por %p75, %p76
    %s79 = sadd.s32 %s78, 1
    %p82 = scmp.eq.s32.totalorder %s11, 47
    %p83 = scmp.ne.s32.totalorder %s78, %s80
    %p84 = scmp.eq.s32.totalorder %s11, 0
    %p85 = por %p83, %p84
    %p86 = scmp.ne.s32.totalorder %s78, %s80
    %p87 = scmp.eq.s32.totalorder %s16, 47
    %p88 = por %p86, %p87
    %p89 = scmp.ne.s32.totalorder %s80, %s81
    %p90 = scmp.eq.s32.totalorder %s16, 0
    %p91 = por %p89, %p90
    %p92 = scmp.ne.s32.totalorder %s80, %s81
    %p93 = scmp.eq.s32.totalorder %s17, 47
    %p94 = por %p92, %p93
    %p96 = scmp.ne.s32.totalorder %s81, %s95
    %p97 = scmp.eq.s32.totalorder %s17, 0
    %p98 = por %p96, %p97
    %s100 = sadd.s32 %s99, 1
    %p103 = scmp.eq.s32.totalorder %s11, 47
    %p104 = scmp.ne.s32.totalorder %s99, %s101
    %p105 = scmp.eq.s32.totalorder %s11, 0
    %p106 = por %p104, %p105
    %p107 = scmp.ne.s32.totalorder %s99, %s101
    %p108 = scmp.eq.s32.totalorder %s16, 47
    %p109 = por %p107, %p108
    %p110 = scmp.ne.s32.totalorder %s101, %s102
    %p111 = scmp.eq.s32.totalorder %s16, 0
    %p112 = por %p110, %p111
    %p113 = scmp.ne.s32.totalorder %s101, %s102
    %p114 = scmp.eq.s32.totalorder %s17, 47
    %p115 = por %p113, %p114
    %p117 = scmp.ne.s32.totalorder %s102, %s116
    %p118 = scmp.eq.s32.totalorder %s17, 0
    %p119 = por %p117, %p118
    %s121 = sadd.s32 %s120, 1
    %p124 = scmp.eq.s32.totalorder %s11, 47
    %p125 = scmp.ne.s32.totalorder %s120, %s122
    %p126 = scmp.eq.s32.totalorder %s11, 0
    %p127 = por %p125, %p126
    %p128 = scmp.ne.s32.totalorder %s120, %s122
    %p129 = scmp.eq.s32.totalorder %s16, 47
    %p130 = por %p128, %p129
    %p131 = scmp.ne.s32.totalorder %s122, %s123
    %p132 = scmp.eq.s32.totalorder %s16, 0
    %p133 = por %p131, %p132
    %p134 = scmp.ne.s32.totalorder %s122, %s123
    %p135 = scmp.eq.s32.totalorder %s17, 47
    %p136 = por %p134, %p135
    %p138 = scmp.ne.s32.totalorder %s123, %s137
    %p139 = scmp.eq.s32.totalorder %s17, 0
    %p140 = por %p138, %p139
    %s142 = sadd.s32 %s141, 1
    %p145 = scmp.eq.s32.totalorder %s11, 47
    %p146 = scmp.ne.s32.totalorder %s141, %s143
    %p147 = scmp.eq.s32.totalorder %s11, 0
    %p148 = por %p146, %p147
    %p149 = scmp.ne.s32.totalorder %s141, %s143
    %p150 = scmp.eq.s32.totalorder %s16, 47
    %p151 = por %p149, %p150
    %p152 = scmp.ne.s32.totalorder %s143, %s144
    %p153 = scmp.eq.s32.totalorder %s16, 0
    %p154 = por %p152, %p153
    %p155 = scmp.ne.s32.totalorder %s143, %s144
    %p156 = scmp.eq.s32.totalorder %s17, 47
    %p157 = por %p155, %p156
    %p159 = scmp.ne.s32.totalorder %s144, %s158
    %p160 = scmp.eq.s32.totalorder %s17, 0
    %p161 = por %p159, %p160
    %s162 = ssub.s32 %s18, %s37
    %p163 = scmp.eq.s32.totalorder %s162, 0
    %s165 = sadd.s32 %s164, 1
    %s166 = scalar_select %p163, %s164, %s165
    %p169 = pneg %p163
    %p170 = scmp.eq.s32.totalorder %s11, 47
    %p171 = por %p169, %p170
    %p172 = scmp.ne.s32.totalorder %s164, %s167
    %p173 = scmp.eq.s32.totalorder %s11, 0
    %p174 = por %p172, %p173
    %p175 = scmp.ne.s32.totalorder %s164, %s167
    %p176 = scmp.eq.s32.totalorder %s16, 47
    %p177 = por %p175, %p176
    %p178 = scmp.ne.s32.totalorder %s167, %s168
    %p179 = scmp.eq.s32.totalorder %s16, 0
    %p180 = por %p178, %p179
    %p181 = scmp.ne.s32.totalorder %s167, %s168
    %p182 = scmp.eq.s32.totalorder %s17, 47
    %p183 = por %p181, %p182
    %p185 = scmp.ne.s32.totalorder %s168, %s184
    %p186 = scmp.eq.s32.totalorder %s17, 0
    %p187 = por %p185, %p186
    %p188 = scmp.le.s32.totalorder 1, %s11
    %p189 = scmp.lt.s32.totalorder %s11, 49
    %p190 = pnand %p188, %p189
    %p191 = pneg %p190
    // Predicated region
    $region9: #{mvnetwork_forward.4} parent=5 // pred_check
      _
    $region10: #{mvnetwork_forward.4} parent=5 // pred_check_branch
      %193 = sbr.rel (%p190) target = $region12
    $region11: #{mvnetwork_forward.4} parent=5 // pred_region
      %s194 = ssub.s32 %s11, 1
      // Predicated region
      $region13: #{mvnetwork_forward.4} parent=11 // pred_check
        %p195 = pneg %p91
      $region14: #{mvnetwork_forward.4} parent=11 // pred_check_branch
        %197 = sbr.rel (%p195) target = $region16
      $region15: #{mvnetwork_forward.4} parent=11 // pred_region
        _
      $region16: #{mvnetwork_forward.4} parent=11 // pred_fallthru
        _
      // Predicated region
      $region17: #{mvnetwork_forward.4} parent=11 // pred_check
        %p198 = pneg %p112
      $region18: #{mvnetwork_forward.4} parent=11 // pred_check_branch
        %200 = sbr.rel (%p198) target = $region20
      $region19: #{mvnetwork_forward.4} parent=11 // pred_region
        _
      $region20: #{mvnetwork_forward.4} parent=11 // pred_fallthru
        _
      // Predicated region
      $region21: #{mvnetwork_forward.4} parent=11 // pred_check
        %p201 = pneg %p133
      $region22: #{mvnetwork_forward.4} parent=11 // pred_check_branch
        %203 = sbr.rel (%p201) target = $region24
      $region23: #{mvnetwork_forward.4} parent=11 // pred_region
        _
      $region24: #{mvnetwork_forward.4} parent=11 // pred_fallthru
        _
      // Predicated region
      $region25: #{mvnetwork_forward.4} parent=11 // pred_check
        %p204 = pneg %p154
      $region26: #{mvnetwork_forward.4} parent=11 // pred_check_branch
        %206 = sbr.rel (%p204) target = $region28
      $region27: #{mvnetwork_forward.4} parent=11 // pred_region
        _
      $region28: #{mvnetwork_forward.4} parent=11 // pred_fallthru
        _
    $region12: #{mvnetwork_forward.4} parent=5 // pred_fallthru
      _
    %p207 = scmp.lt.s32.totalorder %s11, 48
    // Predicated region
    $region29: #{mvnetwork_forward.4} parent=5 // pred_check
      %p208 = pneg %p207
    $region30: #{mvnetwork_forward.4} parent=5 // pred_check_branch
      %210 = sbr.rel (%p208) target = $region32
    $region31: #{mvnetwork_forward.4} parent=5 // pred_region
      // Predicated region
      $region33: #{mvnetwork_forward.4} parent=31 // pred_check
        %p211 = pneg %p64
      $region34: #{mvnetwork_forward.4} parent=31 // pred_check_branch
        %213 = sbr.rel (%p211) target = $region36
      $region35: #{mvnetwork_forward.4} parent=31 // pred_region
        %s214 = sadd.s32 %s19, %s20
        %s215 = ssub.s32 %s214, 1
        %p216 = scmp.gt.s32.totalorder %s215, 0
        %s217 = scalar_select %p216, %s215, 0
        %p218 = scmp.lt.s32.totalorder %s217, 3
        %s219 = scalar_select %p218, %s217, 3
        %p220 = scmp.lt.s32.totalorder %s18, 3
        %s221 = scalar_select %p220, %s18, 3
        %p222 = scmp.lt.s32.totalorder %s219, 3
        %s223 = scalar_select %p222, %s219, 3
        %s224 = smul.addr %s223, 8
        %s225 = smul.addr %s221, 32
        %s226 = sadd.s32 %s224, %s225
        %s227 = smul.addr %s226, 4
        %s228 = scalar_lea.vmem %s0, %s227
        %s229 = sadd.s32 %s19, %s20
        %s230 = ssub.s32 %s229, 1
        %p231 = scmp.gt.s32.totalorder %s230, 0
        %s232 = scalar_select %p231, %s230, 0
        %p233 = scmp.lt.s32.totalorder %s232, 3
        %s234 = scalar_select %p233, %s232, 3
      $region36: #{mvnetwork_forward.4} parent=31 // pred_fallthru
        _
    $region32: #{mvnetwork_forward.4} parent=5 // pred_fallthru
      _
    %p235 = scmp.le.s32.totalorder 1, %s11
    %p236 = scmp.lt.s32.totalorder %s11, 49
    %p237 = pnand %p235, %p236
    %p238 = pneg %p237
    // Predicated region
    $region37: #{mvnetwork_forward.4} parent=5 // pred_check
      _
    $region38: #{mvnetwork_forward.4} parent=5 // pred_check_branch
      %240 = sbr.rel (%p237) target = $region40
    $region39: #{mvnetwork_forward.4} parent=5 // pred_region
      %s241 = ssub.s32 %s11, 1
      %s242 = sadd.s32 %s22, %s23
      %s243 = ssub.s32 %s242, 1
      %p244 = scmp.gt.s32.totalorder %s243, 0
      %s245 = scalar_select %p244, %s243, 0
      %p246 = scmp.lt.s32.totalorder %s245, 3
      %s247 = scalar_select %p246, %s245, 3
      %p248 = scmp.lt.s32.totalorder %s21, 3
      %s249 = scalar_select %p248, %s21, 3
      %p250 = scmp.lt.s32.totalorder %s247, 3
      %s251 = scalar_select %p250, %s247, 3
      %s252 = smul.addr %s251, 8
      %s253 = smul.addr %s249, 32
      %s254 = sadd.s32 %s252, %s253
      %s255 = smul.addr %s254, 4
      %s256 = scalar_lea.vmem %s0, %s255
      %p257 = pneg %p70
      %p258 = pneg %p67
      %p259 = pneg %p91
      %p260 = pneg %p88
      %p261 = pneg %p112
      %p262 = pneg %p109
      %p263 = pneg %p133
      %p264 = pneg %p130
      %p265 = pneg %p154
      %p266 = pneg %p151
      %p267 = pneg %p180
      %p268 = pneg %p177
      %p269 = scmp.lt.s32.totalorder %s21, 3
      %s270 = scalar_select %p269, %s21, 3
      %s271 = smul.addr %s270, 4
      %s272 = scalar_lea.vmem %s5, %s271
      %s273 = sadd.s32 %s22, %s23
      %s274 = ssub.s32 %s273, 1
      %p275 = scmp.gt.s32.totalorder %s274, 0
      %s276 = scalar_select %p275, %s274, 0
      %p277 = scmp.lt.s32.totalorder %s276, 3
      %s278 = scalar_select %p277, %s276, 3
      %p279 = scmp.lt.s32.totalorder %s21, 3
      %s280 = scalar_select %p279, %s21, 3
      %p281 = scmp.lt.s32.totalorder %s278, 3
      %s282 = scalar_select %p281, %s278, 3
      %s283 = smul.addr %s282, 8
      %s284 = smul.addr %s280, 32
      %s285 = sadd.s32 %s283, %s284
      %s286 = smul.addr %s285, 4
      %s287 = scalar_lea.vmem %s0, %s286
      %s288 = sadd.s32 %s22, %s23
      %s289 = ssub.s32 %s288, 1
      %p290 = scmp.gt.s32.totalorder %s289, 0
      %s291 = scalar_select %p290, %s289, 0
      %p292 = scmp.lt.s32.totalorder %s291, 3
      %s293 = scalar_select %p292, %s291, 3
      %p294 = scmp.lt.s32.totalorder %s21, 3
      %s295 = scalar_select %p294, %s21, 3
      %s296 = smul.addr %s295, 4
      %s297 = scalar_lea.vmem %s5, %s296
      %p299 = scmp.eq.s32.totalorder %s23, 0
      // Predicated region
      $region41: #{mvnetwork_forward.4} parent=39 // pred_check
        %p300 = pneg %p299
      $region42: #{mvnetwork_forward.4} parent=39 // pred_check_branch
        %302 = sbr.rel (%p300) target = $region44
      $region43: #{mvnetwork_forward.4} parent=39 // pred_region
        %vm303 = vcmask 523264
        %304 = vst.msk [vmem:[#allocation2] sm:$0xff] %vm303, 0.0
        %305 = vst.msk [vmem:[#allocation2 + $0x8] sm:$0xff] %vm303, 0.0
        %306 = vst.msk [vmem:[#allocation2 + $0x10] sm:$0xff] %vm303, 0.0
        %307 = vst.msk [vmem:[#allocation2 + $0x18] sm:$0xff] %vm303, 0.0
        %308 = vst.msk [vmem:[#allocation2 + $0x20] sm:$0xff] %vm303, 0.0
        %309 = vst.msk [vmem:[#allocation2 + $0x28] sm:$0xff] %vm303, 0.0
        %310 = vst.msk [vmem:[#allocation2 + $0x30] sm:$0xff] %vm303, 0.0
        %311 = vst.msk [vmem:[#allocation2 + $0x38] sm:$0xff] %vm303, 0.0
      $region44: #{mvnetwork_forward.4} parent=39 // pred_fallthru
        _
      %s312 = sadd.s32 %s22, %s23
      %s313 = ssub.s32 %s312, 1
      %p314 = scmp.ge.s32.totalorder %s313, 0
      %p315 = scmp.lt.s32.totalorder %s313, 4
      %p316 = pnand %p314, %p315
      %p317 = pneg %p316
      // Predicated region
      $region45: #{mvnetwork_forward.4} parent=39 // pred_check
        _
      $region46: #{mvnetwork_forward.4} parent=39 // pred_check_branch
        %319 = sbr.rel (%p316) target = $region48
      $region47: #{mvnetwork_forward.4} parent=39 // pred_region
        %v320 = vld [vmem:[%s287] sm:$0xf]
        %v321 = vld [vmem:[%s287 + $0x4] sm:$0xf]
        %v322 = vld [vmem:[%s287 + $0x8] sm:$0xf]
        %v323 = vld [vmem:[%s287 + $0xc] sm:$0xf]
        %v324 = vld [vmem:[%s287 + $0x10] sm:$0xf]
        %v325 = vld [vmem:[%s287 + $0x14] sm:$0xf]
        %v326 = vld [vmem:[%s287 + $0x18] sm:$0xf]
        %v327 = vld [vmem:[%s287 + $0x1c] sm:$0xf]
        %v328 = vld [vmem:[#allocation2] sm:$0xff]
        %v329 = vld [vmem:[#allocation2 + $0x8] sm:$0xff]
        %v330 = vld [vmem:[#allocation2 + $0x10] sm:$0xff]
        %v331 = vld [vmem:[#allocation2 + $0x18] sm:$0xff]
        %v332 = vld [vmem:[#allocation2 + $0x20] sm:$0xff]
        %v333 = vld [vmem:[#allocation2 + $0x28] sm:$0xff]
        %v334 = vld [vmem:[#allocation2 + $0x30] sm:$0xff]
        %v335 = vld [vmem:[#allocation2 + $0x38] sm:$0xff]
        %s336 = smul.u32 %s23, 8
        %s337 = smul.addr %s336, 4
        %s338 = scalar_lea.vmem %s1, %s337
        %v339 = vld [vmem:[%s338] sm:$0xf]
        %v340 = vld [vmem:[%s338 + $0x4] sm:$0xf]
        %v341 = vld [vmem:[%s338 + $0x8] sm:$0xf]
        %v342 = vld [vmem:[%s338 + $0xc] sm:$0xf]
        %v343 = vld [vmem:[%s338 + $0x10] sm:$0xf]
        %v344 = vld [vmem:[%s338 + $0x14] sm:$0xf]
        %v345 = vld [vmem:[%s338 + $0x18] sm:$0xf]
        %v346 = vld [vmem:[%s338 + $0x1c] sm:$0xf]
        %v355 = vunpack.c.l.b16 %v320
        %v356 = vunpack.c.l.b16 %v321
        %v357 = vunpack.c.l.b16 %v322
        %v358 = vunpack.c.l.b16 %v323
        %v359 = vunpack.c.l.b16 %v324
        %v360 = vunpack.c.l.b16 %v325
        %v361 = vunpack.c.l.b16 %v326
        %v362 = vunpack.c.l.b16 %v327
        %v363 = vpack.c.b16 %v356, %v355
        %v364 = vpack.c.b16 %v358, %v357
        %v365 = vpack.c.b16 %v360, %v359
        %v366 = vpack.c.b16 %v362, %v361
        %v375 = vunpack.c.l.b16 %v339
        %v376 = vunpack.c.l.b16 %v340
        %v377 = vunpack.c.l.b16 %v341
        %v378 = vunpack.c.l.b16 %v342
        %v379 = vunpack.c.l.b16 %v343
        %v380 = vunpack.c.l.b16 %v344
        %v381 = vunpack.c.l.b16 %v345
        %v382 = vunpack.c.l.b16 %v346
        %v383 = vpack.c.b16 %v376, %v375
        %v384 = vpack.c.b16 %v378, %v377
        %v385 = vpack.c.b16 %v380, %v379
        %v386 = vpack.c.b16 %v382, %v381
        %vm391 = vcmask 523264
        %v393 = vsel %vm391, %v363, 0
        %v396 = vsel %vm391, %v364, 0
        %v399 = vsel %vm391, %v365, 0
        %v402 = vsel %vm391, %v366, 0
        %404 = vmatprep.subr.bf16.mxu0 0
        %405 = vmatpush1.bf16.msra.mxu0 %v383
        %406 = vmatprep.subr.bf16.mxu0 0
        %407 = vmatpush1.bf16.msra.mxu0 %v384
        %408 = vmatprep.subr.bf16.mxu0 0
        %409 = vmatpush1.bf16.msra.mxu0 %v385
        %410 = vmatprep.subr.bf16.mxu0 0
        %411 = vmatpush1.bf16.msra.mxu0 %v386
        %412 = vmatprep.subr.bf16.mxu0 0
        %413 = vmatpush1.bf16.msra.mxu0 0
        %414 = vmatprep.subr.bf16.mxu0 0
        %415 = vmatpush1.bf16.msra.mxu0 0
        %416 = vmatprep.subr.bf16.mxu0 0
        %417 = vmatpush1.bf16.msra.mxu0 0
        %418 = vmatprep.subr.bf16.mxu0 0
        %419 = vmatpush1.bf16.msra.mxu0 0
        %420 = vmatprep.subr.bf16.mxu0 0
        %421 = vmatpush1.bf16.msra.mxu0 0
        %422 = vmatprep.subr.bf16.mxu0 0
        %423 = vmatpush1.bf16.msra.mxu0 0
        %424 = vmatprep.subr.bf16.mxu0 0
        %425 = vmatpush1.bf16.msra.mxu0 0
        %426 = vmatprep.subr.bf16.mxu0 0
        %427 = vmatpush1.bf16.msra.mxu0 0
        %428 = vmatprep.subr.bf16.mxu0 0
        %429 = vmatpush1.bf16.msra.mxu0 0
        %430 = vmatprep.subr.bf16.mxu0 0
        %431 = vmatpush1.bf16.msra.mxu0 0
        %432 = vmatprep.subr.bf16.mxu0 0
        %433 = vmatpush1.bf16.msra.mxu0 0
        %434 = vmatprep.subr.bf16.mxu0 0
        %435 = vmatpush1.bf16.msra.mxu0 0
        %436 = vmatprep.mubr.bf16.mxu0 0
        %437 = vmatmul.mubr.bf16.gmra.mrb[0].mxu0 %v393
        %v438 = vpop.f32.mrb[0].mxu0
        %v439 = vadd.f32 0.0, %v438
        %v440 = vpop.f32.mrb[0].mxu0
        %v441 = vpop.f32.mrb[0].mxu0
        %v442 = vadd.f32 0.0, %v441
        %v443 = vpop.f32.mrb[0].mxu0
        %444 = vmatprep.mubr.bf16.mxu0 0
        %445 = vmatmul.mubr.bf16.gmra.mrb[0].mxu0 %v396
        %v446 = vpop.f32.mrb[0].mxu0
        %v447 = vadd.f32 0.0, %v446
        %v448 = vpop.f32.mrb[0].mxu0
        %v449 = vpop.f32.mrb[0].mxu0
        %v450 = vadd.f32 0.0, %v449
        %v451 = vpop.f32.mrb[0].mxu0
        %452 = vmatprep.mubr.bf16.mxu0 0
        %453 = vmatmul.mubr.bf16.gmra.mrb[0].mxu0 %v399
        %v454 = vpop.f32.mrb[0].mxu0
        %v455 = vadd.f32 0.0, %v454
        %v456 = vpop.f32.mrb[0].mxu0
        %v457 = vpop.f32.mrb[0].mxu0
        %v458 = vadd.f32 0.0, %v457
        %v459 = vpop.f32.mrb[0].mxu0
        %460 = vmatprep.mubr.bf16.mxu0 0
        %461 = vmatmul.mubr.bf16.gmra.mrb[0].mxu0 %v402
        %v462 = vpop.f32.mrb[0].mxu0
        %v463 = vadd.f32 0.0, %v462
        %v464 = vpop.f32.mrb[0].mxu0
        %v465 = vpop.f32.mrb[0].mxu0
        %v466 = vadd.f32 0.0, %v465
        %v467 = vpop.f32.mrb[0].mxu0
        %468 = vdwg.mxu0
        %v469 = vadd.f32 %v328, %v439
        %v470 = vadd.f32 %v329, %v442
        %v471 = vadd.f32 %v330, %v447
        %v472 = vadd.f32 %v331, %v450
        %v473 = vadd.f32 %v332, %v455
        %v474 = vadd.f32 %v333, %v458
        %v475 = vadd.f32 %v334, %v463
        %v476 = vadd.f32 %v335, %v466
        %477 = vst.msk [vmem:[#allocation2] sm:$0xff] %vm391, %v469
        %478 = vst.msk [vmem:[#allocation2 + $0x8] sm:$0xff] %vm391, %v470
        %479 = vst.msk [vmem:[#allocation2 + $0x10] sm:$0xff] %vm391, %v471
        %480 = vst.msk [vmem:[#allocation2 + $0x18] sm:$0xff] %vm391, %v472
        %481 = vst.msk [vmem:[#allocation2 + $0x20] sm:$0xff] %vm391, %v473
        %482 = vst.msk [vmem:[#allocation2 + $0x28] sm:$0xff] %vm391, %v474
        %483 = vst.msk [vmem:[#allocation2 + $0x30] sm:$0xff] %vm391, %v475
        %484 = vst.msk [vmem:[#allocation2 + $0x38] sm:$0xff] %vm391, %v476
      $region48: #{mvnetwork_forward.4} parent=39 // pred_fallthru
        _
      %p485 = scmp.eq.s32.totalorder %s23, 2
      %p486 = scmp.eq.s32.totalorder %s22, 0
      %p487 = pnand %p485, %p486
      %p488 = pneg %p487
      // Predicated region
      $region49: #{mvnetwork_forward.4} parent=39 // pred_check
        _
      $region50: #{mvnetwork_forward.4} parent=39 // pred_check_branch
        %490 = sbr.rel (%p487) target = $region52
      $region51: #{mvnetwork_forward.4} parent=39 // pred_region
        %vm491 = vcmask 516096
        %492 = vst.msk [vmem:[#allocation3] sm:$0x1] %vm491, 0.0
      $region52: #{mvnetwork_forward.4} parent=39 // pred_fallthru
        _
      // Predicated region
      $region53: #{mvnetwork_forward.4} parent=39 // pred_check
        %p493 = pneg %p485
      $region54: #{mvnetwork_forward.4} parent=39 // pred_check_branch
        %495 = sbr.rel (%p493) target = $region56
      $region55: #{mvnetwork_forward.4} parent=39 // pred_region
        %v496 = vld [vmem:[#allocation2] sm:$0xff]
        %v497 = vld [vmem:[#allocation2 + $0x8] sm:$0xff]
        %v498 = vld [vmem:[#allocation2 + $0x10] sm:$0xff]
        %v499 = vld [vmem:[#allocation2 + $0x18] sm:$0xff]
        %v500 = vld [vmem:[#allocation2 + $0x20] sm:$0xff]
        %v501 = vld [vmem:[#allocation2 + $0x28] sm:$0xff]
        %v502 = vld [vmem:[#allocation2 + $0x30] sm:$0xff]
        %v503 = vld [vmem:[#allocation2 + $0x38] sm:$0xff]
        %v504 = vld [vmem:[%s2] sm:$0x1]
        %v506 = vlaneseq
        %v507 = vshrl.u32 %v506, 7
        %v508 = vsub.s32 0, %v507
        %v509 = vrot.slane %v504, %v508
        %v511 = vadd.f32 %v496, %v509
        %v512 = vadd.f32 %v497, %v509
        %v513 = vadd.f32 %v498, %v509
        %v514 = vadd.f32 %v499, %v509
        %v515 = vadd.f32 %v500, %v509
        %v516 = vadd.f32 %v501, %v509
        %v517 = vadd.f32 %v502, %v509
        %v518 = vadd.f32 %v503, %v509
        %v519 = vmax.f32 %v511, 0.0
        %v520 = vmax.f32 %v512, 0.0
        %v521 = vmax.f32 %v513, 0.0
        %v522 = vmax.f32 %v514, 0.0
        %v523 = vmax.f32 %v515, 0.0
        %v524 = vmax.f32 %v516, 0.0
        %v525 = vmax.f32 %v517, 0.0
        %v526 = vmax.f32 %v518, 0.0
        %v527 = vld [vmem:[#allocation3] sm:$0x1]
        %vm528 = vcmask 523264
        %v529 = vsel %vm528, %v519, 0.0
        %v530 = vsel %vm528, %v520, 0.0
        %v531 = vadd.f32 %v529, %v530
        %v532 = vsel %vm528, %v521, 0.0
        %v533 = vadd.f32 %v531, %v532
        %v534 = vsel %vm528, %v522, 0.0
        %v535 = vadd.f32 %v533, %v534
        %v536 = vsel %vm528, %v523, 0.0
        %v537 = vadd.f32 %v535, %v536
        %v538 = vsel %vm528, %v524, 0.0
        %v539 = vadd.f32 %v537, %v538
        %v540 = vsel %vm528, %v525, 0.0
        %v541 = vadd.f32 %v539, %v540
        %v542 = vsel %vm528, %v526, 0.0
        %v543 = vadd.f32 %v541, %v542
        %v544 = vrot.slane %v543, 4
        %v545 = vadd.f32 %v543, %v544
        %v546 = vrot.slane %v545, 2
        %v547 = vadd.f32 %v545, %v546
        %v548 = vrot.slane %v547, 1
        %v549 = vadd.f32 %v547, %v548
        %v550 = vadd.f32 %v527, %v549
        %vm551 = vcmask 516096
        %552 = vst.msk [vmem:[#allocation3] sm:$0x1] %vm551, %v550
      $region56: #{mvnetwork_forward.4} parent=39 // pred_fallthru
        _
      %p553 = scmp.eq.s32.totalorder %s22, 3
      %p554 = pnand %p485, %p553
      %p555 = pneg %p554
      // Predicated region
      $region57: #{mvnetwork_forward.4} parent=39 // pred_check
        _
      $region58: #{mvnetwork_forward.4} parent=39 // pred_check_branch
        %557 = sbr.rel (%p554) target = $region60
      $region59: #{mvnetwork_forward.4} parent=39 // pred_region
        %v558 = vld [vmem:[#allocation3] sm:$0x1]
        %v559 = vmul.f32 %v558, 0.00390625
        %v560 = vld [vmem:[%s3] sm:$0xff]
        %v561 = vld [vmem:[%s3 + $0x8] sm:$0xff]
        %v562 = vld [vmem:[%s3 + $0x10] sm:$0xff]
        %v563 = vld [vmem:[%s3 + $0x18] sm:$0xff]
        %v564 = vld [vmem:[%s3 + $0x20] sm:$0xff]
        %v565 = vld [vmem:[%s3 + $0x28] sm:$0xff]
        %v566 = vld [vmem:[%s3 + $0x30] sm:$0xff]
        %v567 = vld [vmem:[%s3 + $0x38] sm:$0xff]
        %v568 = vld [vmem:[%s3 + $0x40] sm:$0xff]
        %v569 = vld [vmem:[%s3 + $0x48] sm:$0xff]
        %v570 = vld [vmem:[%s3 + $0x50] sm:$0xff]
        %v571 = vld [vmem:[%s3 + $0x58] sm:$0xff]
        %v572 = vld [vmem:[%s3 + $0x60] sm:$0xff]
        %v573 = vld [vmem:[%s3 + $0x68] sm:$0xff]
        %v574 = vld [vmem:[%s3 + $0x70] sm:$0xff]
        %v575 = vld [vmem:[%s3 + $0x78] sm:$0xff]
        %v576 = vld [vmem:[%s3 + $0x80] sm:$0xff]
        %v577 = vld [vmem:[%s3 + $0x88] sm:$0xff]
        %v578 = vld [vmem:[%s3 + $0x90] sm:$0xff]
        %v579 = vld [vmem:[%s3 + $0x98] sm:$0xff]
        %v580 = vld [vmem:[%s3 + $0xa0] sm:$0xff]
        %v581 = vld [vmem:[%s3 + $0xa8] sm:$0xff]
        %v582 = vld [vmem:[%s3 + $0xb0] sm:$0xff]
        %v583 = vld [vmem:[%s3 + $0xb8] sm:$0xff]
        %v584 = vld [vmem:[%s3 + $0xc0] sm:$0xff]
        %v585 = vld [vmem:[%s3 + $0xc8] sm:$0xff]
        %v586 = vld [vmem:[%s3 + $0xd0] sm:$0xff]
        %v587 = vld [vmem:[%s3 + $0xd8] sm:$0xff]
        %v588 = vld [vmem:[%s3 + $0xe0] sm:$0xff]
        %v589 = vld [vmem:[%s3 + $0xe8] sm:$0xff]
        %v590 = vld [vmem:[%s3 + $0xf0] sm:$0xff]
        %v591 = vld [vmem:[%s3 + $0xf8] sm:$0xff]
        %v592 = vld [vmem:[%s4] sm:$0xf]
        %v594 = vlaneseq
        %v595 = vshrl.u32 %v594, 7
        %v596 = vsub.s32 0, %v595
        %v597 = vrot.slane %v592, %v596
        %v598 = vlaneseq
        %v599 = vshrl.u32 %v598, 7
        %v600 = vsub.s32 1, %v599
        %v601 = vrot.slane %v592, %v600
        %v602 = vlaneseq
        %v603 = vshrl.u32 %v602, 7
        %v604 = vsub.s32 2, %v603
        %v605 = vrot.slane %v592, %v604
        %v606 = vlaneseq
        %v607 = vshrl.u32 %v606, 7
        %v608 = vsub.s32 3, %v607
        %v609 = vrot.slane %v592, %v608
        %vm614 = vcmask 523264
        %v616 = vsel %vm614, %v559, 0
        %618 = vmatprep.subr.mxu0 %v561
        %619 = vmatpush1.msra.mxu0 %v560
        %620 = vmatprep.subr.mxu0 %v565
        %621 = vmatpush1.msra.mxu0 %v564
        %622 = vmatprep.subr.mxu0 %v569
        %623 = vmatpush1.msra.mxu0 %v568
        %624 = vmatprep.subr.mxu0 %v573
        %625 = vmatpush1.msra.mxu0 %v572
        %626 = vmatprep.subr.mxu0 %v577
        %627 = vmatpush1.msra.mxu0 %v576
        %628 = vmatprep.subr.mxu0 %v581
        %629 = vmatpush1.msra.mxu0 %v580
        %630 = vmatprep.subr.mxu0 %v585
        %631 = vmatpush1.msra.mxu0 %v584
        %632 = vmatprep.subr.mxu0 %v589
        %633 = vmatpush1.msra.mxu0 %v588
        %634 = vmatprep.subr.mxu0 0.0
        %635 = vmatpush1.msra.mxu0 0.0
        %636 = vmatprep.subr.mxu0 0.0
        %637 = vmatpush1.msra.mxu0 0.0
        %638 = vmatprep.subr.mxu0 0.0
        %639 = vmatpush1.msra.mxu0 0.0
        %640 = vmatprep.subr.mxu0 0.0
        %641 = vmatpush1.msra.mxu0 0.0
        %642 = vmatprep.subr.mxu0 0.0
        %643 = vmatpush1.msra.mxu0 0.0
        %644 = vmatprep.subr.mxu0 0.0
        %645 = vmatpush1.msra.mxu0 0.0
        %646 = vmatprep.subr.mxu0 0.0
        %647 = vmatpush1.msra.mxu0 0.0
        %648 = vmatprep.subr.mxu0 0.0
        %649 = vmatpush1.msra.mxu0 0.0
        %650 = vmatprep.subr.mxu0 0.0
        %651 = vmatpush1.msra.mxu0 0.0
        %652 = vmatprep.subr.mxu0 0.0
        %653 = vmatpush1.msra.mxu0 0.0
        %654 = vmatprep.subr.mxu0 0.0
        %655 = vmatpush1.msra.mxu0 0.0
        %656 = vmatprep.subr.mxu0 0.0
        %657 = vmatpush1.msra.mxu0 0.0
        %658 = vmatprep.subr.mxu0 0.0
        %659 = vmatpush1.msra.mxu0 0.0
        %660 = vmatprep.subr.mxu0 0.0
        %661 = vmatpush1.msra.mxu0 0.0
        %662 = vmatprep.subr.mxu0 0.0
        %663 = vmatpush1.msra.mxu0 0.0
        %664 = vmatprep.subr.mxu0 0.0
        %665 = vmatpush1.msra.mxu0 0.0
        %666 = vmatprep.subr.mxu0 0.0
        %667 = vmatpush1.msra.mxu0 0.0
        %668 = vmatprep.subr.mxu0 0.0
        %669 = vmatpush1.msra.mxu0 0.0
        %670 = vmatprep.subr.mxu0 0.0
        %671 = vmatpush1.msra.mxu0 0.0
        %672 = vmatprep.subr.mxu0 0.0
        %673 = vmatpush1.msra.mxu0 0.0
        %674 = vmatprep.subr.mxu0 0.0
        %675 = vmatpush1.msra.mxu0 0.0
        %676 = vmatprep.subr.mxu0 0.0
        %677 = vmatpush1.msra.mxu0 0.0
        %678 = vmatprep.subr.mxu0 0.0
        %679 = vmatpush1.msra.mxu0 0.0
        %680 = vmatprep.subr.mxu0 0.0
        %681 = vmatpush1.msra.mxu0 0.0
        %682 = vmatprep.mubr.f32.mxu0 0.0
        %683 = vmatmul.mubr.f32.gmra.mrb[0].mxu0 %v616
        %v684 = vpop.f32.mrb[0].mxu0
        %v685 = vadd.f32 %v597, %v684
        %v686 = vpop.f32.mrb[0].mxu0
        %v687 = vadd.f32 %v601, %v686
        %688 = vdwg.mxu0
        %689 = vmatprep.subr.mxu0 %v563
        %690 = vmatpush1.msra.mxu0 %v562
        %691 = vmatprep.subr.mxu0 %v567
        %692 = vmatpush1.msra.mxu0 %v566
        %693 = vmatprep.subr.mxu0 %v571
        %694 = vmatpush1.msra.mxu0 %v570
        %695 = vmatprep.subr.mxu0 %v575
        %696 = vmatpush1.msra.mxu0 %v574
        %697 = vmatprep.subr.mxu0 %v579
        %698 = vmatpush1.msra.mxu0 %v578
        %699 = vmatprep.subr.mxu0 %v583
        %700 = vmatpush1.msra.mxu0 %v582
        %701 = vmatprep.subr.mxu0 %v587
        %702 = vmatpush1.msra.mxu0 %v586
        %703 = vmatprep.subr.mxu0 %v591
        %704 = vmatpush1.msra.mxu0 %v590
        %705 = vmatprep.subr.mxu0 0.0
        %706 = vmatpush1.msra.mxu0 0.0
        %707 = vmatprep.subr.mxu0 0.0
        %708 = vmatpush1.msra.mxu0 0.0
        %709 = vmatprep.subr.mxu0 0.0
        %710 = vmatpush1.msra.mxu0 0.0
        %711 = vmatprep.subr.mxu0 0.0
        %712 = vmatpush1.msra.mxu0 0.0
        %713 = vmatprep.subr.mxu0 0.0
        %714 = vmatpush1.msra.mxu0 0.0
        %715 = vmatprep.subr.mxu0 0.0
        %716 = vmatpush1.msra.mxu0 0.0
        %717 = vmatprep.subr.mxu0 0.0
        %718 = vmatpush1.msra.mxu0 0.0
        %719 = vmatprep.subr.mxu0 0.0
        %720 = vmatpush1.msra.mxu0 0.0
        %721 = vmatprep.subr.mxu0 0.0
        %722 = vmatpush1.msra.mxu0 0.0
        %723 = vmatprep.subr.mxu0 0.0
        %724 = vmatpush1.msra.mxu0 0.0
        %725 = vmatprep.subr.mxu0 0.0
        %726 = vmatpush1.msra.mxu0 0.0
        %727 = vmatprep.subr.mxu0 0.0
        %728 = vmatpush1.msra.mxu0 0.0
        %729 = vmatprep.subr.mxu0 0.0
        %730 = vmatpush1.msra.mxu0 0.0
        %731 = vmatprep.subr.mxu0 0.0
        %732 = vmatpush1.msra.mxu0 0.0
        %733 = vmatprep.subr.mxu0 0.0
        %734 = vmatpush1.msra.mxu0 0.0
        %735 = vmatprep.subr.mxu0 0.0
        %736 = vmatpush1.msra.mxu0 0.0
        %737 = vmatprep.subr.mxu0 0.0
        %738 = vmatpush1.msra.mxu0 0.0
        %739 = vmatprep.subr.mxu0 0.0
        %740 = vmatpush1.msra.mxu0 0.0
        %741 = vmatprep.subr.mxu0 0.0
        %742 = vmatpush1.msra.mxu0 0.0
        %743 = vmatprep.subr.mxu0 0.0
        %744 = vmatpush1.msra.mxu0 0.0
        %745 = vmatprep.subr.mxu0 0.0
        %746 = vmatpush1.msra.mxu0 0.0
        %747 = vmatprep.subr.mxu0 0.0
        %748 = vmatpush1.msra.mxu0 0.0
        %749 = vmatprep.subr.mxu0 0.0
        %750 = vmatpush1.msra.mxu0 0.0
        %751 = vmatprep.subr.mxu0 0.0
        %752 = vmatpush1.msra.mxu0 0.0
        %753 = vmatprep.mubr.f32.mxu0 0.0
        %754 = vmatmul.mubr.f32.gmra.mrb[0].mxu0 %v616
        %v755 = vpop.f32.mrb[0].mxu0
        %v756 = vadd.f32 %v605, %v755
        %v757 = vpop.f32.mrb[0].mxu0
        %v758 = vadd.f32 %v609, %v757
        %759 = vdwg.mxu0
        %v764 = vcombine.low %v685, %v687
        %v765 = vcombine.low %v756, %v758
        %v767 = vunpack.c.l.s4 1966171168
        %v768 = vunpack.c.0.s8 %v767
        %v769 = vlaneseq
        %v770 = vshrl.u32 %v769, 7
        %v771 = vsub.s32 %v768, %v770
        %v772 = vrot.slane %v764, %v771
        %v774 = vunpack.c.l.s4 1966171168
        %v775 = vunpack.c.0.s8 %v774
        %v776 = vlaneseq
        %v777 = vshrl.u32 %v776, 7
        %v778 = vsub.s32 %v775, %v777
        %v779 = vrot.slane %v765, %v778
        %v780 = vcombine.low %v772, %v779
        %v782 = vunpack.c.l.s4 1966171168
        %v783 = vunpack.c.0.s8 %v782
        %v784 = vlaneseq
        %v785 = vshrl.u32 %v784, 7
        %v786 = vsub.s32 %v783, %v785
        %v787 = vrot.slane %v780, %v786
        %v789 = vlaneseq
        %vm790 = vcmp.ge.s32.totalorder %v789, 0
        %vm791 = vcmp.lt.s32.totalorder %v789, 512
        %vm792 = vmand %vm790, %vm791
        %793 = vst.msk [vmem:[%s297] sm:$0xf] %vm792, %v787
      $region60: #{mvnetwork_forward.4} parent=39 // pred_fallthru
        _
      %p794 = scmp.lt.s32.totalorder %s21, 3
      %s795 = scalar_select %p794, %s21, 3
      %s796 = smul.addr %s795, 4
      %s797 = scalar_lea.vmem %s5, %s796
      // Predicated region
      $region61: #{mvnetwork_forward.4} parent=39 // pred_check
        %p798 = pneg %p177
      $region62: #{mvnetwork_forward.4} parent=39 // pred_check_branch
        %800 = sbr.rel (%p798) target = $region64
      $region63: #{mvnetwork_forward.4} parent=39 // pred_region
        _
      $region64: #{mvnetwork_forward.4} parent=39 // pred_fallthru
        _
    $region40: #{mvnetwork_forward.4} parent=5 // pred_fallthru
      _
    %p801 = scmp.le.s32.totalorder 2, %s11
    // Predicated region
    $region65: #{mvnetwork_forward.4} parent=5 // pred_check
      %p802 = pneg %p801
    $region66: #{mvnetwork_forward.4} parent=5 // pred_check_branch
      %804 = sbr.rel (%p802) target = $region68
    $region67: #{mvnetwork_forward.4} parent=5 // pred_region
      %s805 = ssub.s32 %s11, 2
      // Predicated region
      $region69: #{mvnetwork_forward.4} parent=67 // pred_check
        %p806 = pneg %p183
      $region70: #{mvnetwork_forward.4} parent=67 // pred_check_branch
        %808 = sbr.rel (%p806) target = $region72
      $region71: #{mvnetwork_forward.4} parent=67 // pred_region
        %p809 = scmp.lt.s32.totalorder %s24, 3
        %s810 = scalar_select %p809, %s24, 3
        %s811 = smul.addr %s810, 4
        %s812 = scalar_lea.vmem %s5, %s811
      $region72: #{mvnetwork_forward.4} parent=67 // pred_fallthru
        _
    $region68: #{mvnetwork_forward.4} parent=5 // pred_fallthru
      _
  $region6: #{mvnetwork_forward.4} parent=0 // loop_footer
    %s15 = sadd.s32 1, %s11
  $region7: #{mvnetwork_forward.4} parent=0 // loop_footer_branch
    %10 = sbr.rel target = $region3
  $region8: #{mvnetwork_forward.4} parent=0 // loop_exit
    _

// kernel: mvnetwork_forward.5
$region0: #{mvnetwork_forward.5}
  #allocation0 [shape = 'u32[]', space=smem, size = 0x4, offset = 0x4, fixed_abs, tag = 'smem constant byte address 0x4 - core index']
  #allocation1 [shape = 'u32[144,128]{1,0:T(1,128)}', space=vmem, size = 0x12000, scoped, tag = 'internal scratch']
  %s0 = inlined_call_operand.vmem [shape: f32[2,2,512], index: 0, kind: input, shape index: {}]
  %s1 = inlined_call_operand.vmem [shape: f32[1,512], index: 1, kind: input, shape index: {}]
  %s2 = inlined_call_operand.vmem [shape: f32[1,512], index: 2, kind: input, shape index: {}]
  %s3 = inlined_call_operand.vmem [shape: bf16[512,512], index: 3, kind: input, shape index: {}]
  %s4 = inlined_call_operand.vmem [shape: f32[1,512], index: 4, kind: input, shape index: {}]
  %s5 = inlined_call_operand.vmem [shape: bf16[512,512], index: 5, kind: input, shape index: {}]
  %s6 = inlined_call_operand.vmem [shape: f32[1,512], index: 6, kind: input, shape index: {}]
  %s7 = inlined_call_operand.vmem [shape: f32[1,512], index: 7, kind: input, shape index: {}]
  %s8 = inlined_call_operand.vmem [shape: f32[1,512], index: 8, kind: input, shape index: {}]
  %s9 = inlined_call_operand.vmem [shape: bf16[512,512], index: 9, kind: input, shape index: {}]
  %s10 = inlined_call_operand.vmem [shape: f32[1,512], index: 10, kind: input, shape index: {}]
  %s11 = inlined_call_operand.vmem [shape: f32[1,512], index: 11, kind: input, shape index: {}]
  %s12 = inlined_call_operand.vmem [shape: f32[1,512], index: 12, kind: input, shape index: {}]
  %s13 = inlined_call_operand.vmem [shape: bf16[512,512], index: 13, kind: input, shape index: {}]
  %s14 = inlined_call_operand.vmem [shape: f32[1,512], index: 14, kind: input, shape index: {}]
  %s15 = inlined_call_operand.vmem [shape: bf16[1024,128], index: 15, kind: input, shape index: {}]
  %s16 = inlined_call_operand.vmem [shape: f32[1,128], index: 16, kind: input, shape index: {}]
  %s17 = inlined_call_operand.vmem [shape: f32[2,128], index: 17, kind: output, shape index: {}]
  %s18 = sld [smem:[#allocation0]]
  $region78: #{mvnetwork_forward.5} parent=0
    _
  %s20 = ssub.s32 1, %s18
  %s21 = scalar_select 0, %s20, %s18
  // Predicated region
  $region2: #{mvnetwork_forward.5} parent=0 // pred_check
    _
  $region3: #{mvnetwork_forward.5} parent=0 // pred_check_branch
    %23 = sbr.rel (0) target = $region5
  $region4: #{mvnetwork_forward.5} parent=0 // pred_region
    _
  $region5: #{mvnetwork_forward.5} parent=0 // pred_fallthru
    _
  // Predicated region
  $region6: #{mvnetwork_forward.5} parent=0 // pred_check
    _
  $region7: #{mvnetwork_forward.5} parent=0 // pred_check_branch
    %25 = sbr.rel (0) target = $region9
  $region8: #{mvnetwork_forward.5} parent=0 // pred_region
    _
  $region9: #{mvnetwork_forward.5} parent=0 // pred_fallthru
    _
  // Predicated region
  $region10: #{mvnetwork_forward.5} parent=0 // pred_check
    _
  $region11: #{mvnetwork_forward.5} parent=0 // pred_check_branch
    %27 = sbr.rel (0) target = $region13
  $region12: #{mvnetwork_forward.5} parent=0 // pred_region
    _
  $region13: #{mvnetwork_forward.5} parent=0 // pred_fallthru
    _
  // Predicated region
  $region14: #{mvnetwork_forward.5} parent=0 // pred_check
    _
  $region15: #{mvnetwork_forward.5} parent=0 // pred_check_branch
    %29 = sbr.rel (0) target = $region17
  $region16: #{mvnetwork_forward.5} parent=0 // pred_region
    _
  $region17: #{mvnetwork_forward.5} parent=0 // pred_fallthru
    _
  // Predicated region
  $region18: #{mvnetwork_forward.5} parent=0 // pred_check
    _
  $region19: #{mvnetwork_forward.5} parent=0 // pred_check_branch
    %31 = sbr.rel (0) target = $region21
  $region20: #{mvnetwork_forward.5} parent=0 // pred_region
    _
  $region21: #{mvnetwork_forward.5} parent=0 // pred_fallthru
    _
  // Predicated region
  $region22: #{mvnetwork_forward.5} parent=0 // pred_check
    _
  $region23: #{mvnetwork_forward.5} parent=0 // pred_check_branch
    %33 = sbr.rel (0) target = $region25
  $region24: #{mvnetwork_forward.5} parent=0 // pred_region
    _
  $region25: #{mvnetwork_forward.5} parent=0 // pred_fallthru
    _
  // Predicated region
  $region26: #{mvnetwork_forward.5} parent=0 // pred_check
    _
  $region27: #{mvnetwork_forward.5} parent=0 // pred_check_branch
    %35 = sbr.rel (0) target = $region29
  $region28: #{mvnetwork_forward.5} parent=0 // pred_region
    _
  $region29: #{mvnetwork_forward.5} parent=0 // pred_fallthru
    _
  // Predicated region
  $region30: #{mvnetwork_forward.5} parent=0 // pred_check
    _
  $region31: #{mvnetwork_forward.5} parent=0 // pred_check_branch
    %37 = sbr.rel (0) target = $region33
  $region32: #{mvnetwork_forward.5} parent=0 // pred_region
    _
  $region33: #{mvnetwork_forward.5} parent=0 // pred_fallthru
    _
  // Predicated region
  $region34: #{mvnetwork_forward.5} parent=0 // pred_check
    _
  $region35: #{mvnetwork_forward.5} parent=0 // pred_check_branch
    %39 = sbr.rel (0) target = $region37
  $region36: #{mvnetwork_forward.5} parent=0 // pred_region
    _
  $region37: #{mvnetwork_forward.5} parent=0 // pred_fallthru
    _
  // Predicated region
  $region38: #{mvnetwork_forward.5} parent=0 // pred_check
    _
  $region39: #{mvnetwork_forward.5} parent=0 // pred_check_branch
    %41 = sbr.rel (0) target = $region41
  $region40: #{mvnetwork_forward.5} parent=0 // pred_region
    _
  $region41: #{mvnetwork_forward.5} parent=0 // pred_fallthru
    _
  // Predicated region
  $region42: #{mvnetwork_forward.5} parent=0 // pred_check
    _
  $region43: #{mvnetwork_forward.5} parent=0 // pred_check_branch
    %43 = sbr.rel (0) target = $region45
  $region44: #{mvnetwork_forward.5} parent=0 // pred_region
    _
  $region45: #{mvnetwork_forward.5} parent=0 // pred_fallthru
    _
  // Predicated region
  $region46: #{mvnetwork_forward.5} parent=0 // pred_check
    _
  $region47: #{mvnetwork_forward.5} parent=0 // pred_check_branch
    %45 = sbr.rel (0) target = $region49
  $region48: #{mvnetwork_forward.5} parent=0 // pred_region
    _
  $region49: #{mvnetwork_forward.5} parent=0 // pred_fallthru
    _
  // Predicated region
  $region50: #{mvnetwork_forward.5} parent=0 // pred_check
    _
  $region51: #{mvnetwork_forward.5} parent=0 // pred_check_branch
    %47 = sbr.rel (0) target = $region53
  $region52: #{mvnetwork_forward.5} parent=0 // pred_region
    _
  $region53: #{mvnetwork_forward.5} parent=0 // pred_fallthru
    _
  // Predicated region
  $region54: #{mvnetwork_forward.5} parent=0 // pred_check
    _
  $region55: #{mvnetwork_forward.5} parent=0 // pred_check_branch
    %49 = sbr.rel (0) target = $region57
  $region56: #{mvnetwork_forward.5} parent=0 // pred_region
    _
  $region57: #{mvnetwork_forward.5} parent=0 // pred_fallthru
    _
  // Predicated region
  $region58: #{mvnetwork_forward.5} parent=0 // pred_check
    _
  $region59: #{mvnetwork_forward.5} parent=0 // pred_check_branch
    %51 = sbr.rel (0) target = $region61
  $region60: #{mvnetwork_forward.5} parent=0 // pred_region
    _
  $region61: #{mvnetwork_forward.5} parent=0 // pred_fallthru
    _
  // Predicated region
  $region62: #{mvnetwork_forward.5} parent=0 // pred_check
    _
  $region63: #{mvnetwork_forward.5} parent=0 // pred_check_branch
    %53 = sbr.rel (0) target = $region65
  $region64: #{mvnetwork_forward.5} parent=0 // pred_region
    _
  $region65: #{mvnetwork_forward.5} parent=0 // pred_fallthru
    _
  // Predicated region
  $region66: #{mvnetwork_forward.5} parent=0 // pred_check
    _
  $region67: #{mvnetwork_forward.5} parent=0 // pred_check_branch
    %55 = sbr.rel (0) target = $region69
  $region68: #{mvnetwork_forward.5} parent=0 // pred_region
    _
  $region69: #{mvnetwork_forward.5} parent=0 // pred_fallthru
    _
  %v57 = vld [vmem:[%s0] sm:$0xff]
  %v58 = vld [vmem:[%s0 + $0x8] sm:$0xff]
  %v61 = vcombine.high %v57, %v57
  %v63 = vunpack.c.l.s4 1983009808
  %v64 = vunpack.c.0.s8 %v63
  %v65 = vlaneseq
  %v66 = vshrl.u32 %v65, 7
  %v67 = vsub.s32 %v64, %v66
  %v68 = vrot.slane %v57, %v67
  %v70 = vunpack.c.l.s4 1983009808
  %v71 = vunpack.c.0.s8 %v70
  %v72 = vlaneseq
  %v73 = vshrl.u32 %v72, 7
  %v74 = vsub.s32 %v71, %v73
  %v75 = vrot.slane %v61, %v74
  %v76 = vcombine.high %v68, %v68
  %v77 = vcombine.high %v75, %v75
  %v78 = vcombine.high %v58, %v58
  %v80 = vunpack.c.l.s4 1983009808
  %v81 = vunpack.c.0.s8 %v80
  %v82 = vlaneseq
  %v83 = vshrl.u32 %v82, 7
  %v84 = vsub.s32 %v81, %v83
  %v85 = vrot.slane %v58, %v84
  %v87 = vunpack.c.l.s4 1983009808
  %v88 = vunpack.c.0.s8 %v87
  %v89 = vlaneseq
  %v90 = vshrl.u32 %v89, 7
  %v91 = vsub.s32 %v88, %v90
  %v92 = vrot.slane %v78, %v91
  %v93 = vcombine.high %v85, %v85
  %v94 = vcombine.high %v92, %v92
  %vm103 = vcmask 1041408
  %v104 = vsel %vm103, %v68, -inf
  %v105 = vrot.slane %v104, 4
  %v106 = vmax.f32 %v104, %v105
  %v107 = vrot.slane %v106, 2
  %v108 = vmax.f32 %v106, %v107
  %v109 = vrot.slane %v108, 1
  %v110 = vmax.f32 %v108, %v109
  %v111 = vsel %vm103, %v76, -inf
  %v112 = vrot.slane %v111, 4
  %v113 = vmax.f32 %v111, %v112
  %v114 = vrot.slane %v113, 2
  %v115 = vmax.f32 %v113, %v114
  %v116 = vrot.slane %v115, 1
  %v117 = vmax.f32 %v115, %v116
  %v118 = vsel %vm103, %v75, -inf
  %v119 = vrot.slane %v118, 4
  %v120 = vmax.f32 %v118, %v119
  %v121 = vrot.slane %v120, 2
  %v122 = vmax.f32 %v120, %v121
  %v123 = vrot.slane %v122, 1
  %v124 = vmax.f32 %v122, %v123
  %v125 = vsel %vm103, %v77, -inf
  %v126 = vrot.slane %v125, 4
  %v127 = vmax.f32 %v125, %v126
  %v128 = vrot.slane %v127, 2
  %v129 = vmax.f32 %v127, %v128
  %v130 = vrot.slane %v129, 1
  %v131 = vmax.f32 %v129, %v130
  %v132 = vsel %vm103, %v85, -inf
  %v133 = vrot.slane %v132, 4
  %v134 = vmax.f32 %v132, %v133
  %v135 = vrot.slane %v134, 2
  %v136 = vmax.f32 %v134, %v135
  %v137 = vrot.slane %v136, 1
  %v138 = vmax.f32 %v136, %v137
  %v139 = vsel %vm103, %v93, -inf
  %v140 = vrot.slane %v139, 4
  %v141 = vmax.f32 %v139, %v140
  %v142 = vrot.slane %v141, 2
  %v143 = vmax.f32 %v141, %v142
  %v144 = vrot.slane %v143, 1
  %v145 = vmax.f32 %v143, %v144
  %v146 = vsel %vm103, %v92, -inf
  %v147 = vrot.slane %v146, 4
  %v148 = vmax.f32 %v146, %v147
  %v149 = vrot.slane %v148, 2
  %v150 = vmax.f32 %v148, %v149
  %v151 = vrot.slane %v150, 1
  %v152 = vmax.f32 %v150, %v151
  %v153 = vsel %vm103, %v94, -inf
  %v154 = vrot.slane %v153, 4
  %v155 = vmax.f32 %v153, %v154
  %v156 = vrot.slane %v155, 2
  %v157 = vmax.f32 %v155, %v156
  %v158 = vrot.slane %v157, 1
  %v159 = vmax.f32 %v157, %v158
  %v160 = vld [vmem:[%s1] sm:$0xf]
  %v161 = vld [vmem:[%s2] sm:$0xf]
  %vm170 = vcmask 1041409
  %v171 = vsel %vm170, %v138, %v110
  %v172 = vsel %vm170, %v145, %v117
  %v173 = vsel %vm170, %v152, %v124
  %v174 = vsel %vm170, %v159, %v131
  %v179 = vsel %vm103, %v171, 0.0
  %v180 = vsel %vm103, %v172, 0.0
  %v181 = vadd.f32 %v179, %v180
  %v182 = vsel %vm103, %v173, 0.0
  %v183 = vadd.f32 %v181, %v182
  %v184 = vsel %vm103, %v174, 0.0
  %v185 = vadd.f32 %v183, %v184
  %186 = vadd.xlane.f32.xlu0 %v185
  %v187 = vpop.xlane.xlu0 %186
  %v188 = vrcp.pop 512.0
  %v189 = vmul.f32 %v187, %v188
  %v191 = vrot.slane %v189, 1
  %v194 = vsub.f32 %v110, %v189
  %v195 = vsub.f32 %v117, %v189
  %v196 = vsub.f32 %v124, %v189
  %v197 = vsub.f32 %v131, %v189
  %v198 = vsub.f32 %v138, %v191
  %v199 = vsub.f32 %v145, %v191
  %v200 = vsub.f32 %v152, %v191
  %v201 = vsub.f32 %v159, %v191
  %v202 = vmul.f32 %v194, %v194
  %v203 = vmul.f32 %v195, %v195
  %v204 = vmul.f32 %v196, %v196
  %v205 = vmul.f32 %v197, %v197
  %v206 = vmul.f32 %v198, %v198
  %v207 = vmul.f32 %v199, %v199
  %v208 = vmul.f32 %v200, %v200
  %v209 = vmul.f32 %v201, %v201
  %v218 = vrot.slane %v206, 7
  %v219 = vsel %vm170, %v218, %v202
  %v220 = vrot.slane %v207, 7
  %v221 = vsel %vm170, %v220, %v203
  %v222 = vrot.slane %v208, 7
  %v223 = vsel %vm170, %v222, %v204
  %v224 = vrot.slane %v209, 7
  %v225 = vsel %vm170, %v224, %v205
  %v230 = vsel %vm103, %v219, 0.0
  %v231 = vsel %vm103, %v221, 0.0
  %v232 = vadd.f32 %v230, %v231
  %v233 = vsel %vm103, %v223, 0.0
  %v234 = vadd.f32 %v232, %v233
  %v235 = vsel %vm103, %v225, 0.0
  %v236 = vadd.f32 %v234, %v235
  %237 = vadd.xlane.f32.xlu0 %v236
  %v238 = vpop.xlane.xlu0 %237
  %v239 = vmul.f32 %v238, %v188
  %v240 = vadd.f32 %v239, 1e-05
  %v241 = vrsqrt.pop %v240
  %v243 = vrot.slane %v241, 1
  %v246 = vmul.f32 %v194, %v241
  %v247 = vmul.f32 %v195, %v241
  %v248 = vmul.f32 %v196, %v241
  %v249 = vmul.f32 %v197, %v241
  %v250 = vmul.f32 %v198, %v243
  %v251 = vmul.f32 %v199, %v243
  %v252 = vmul.f32 %v200, %v243
  %v253 = vmul.f32 %v201, %v243
  %v255 = vlaneseq
  %v256 = vshrl.u32 %v255, 7
  %v257 = vsub.s32 0, %v256
  %v258 = vrot.slane %v160, %v257
  %v259 = vlaneseq
  %v260 = vshrl.u32 %v259, 7
  %v261 = vsub.s32 1, %v260
  %v262 = vrot.slane %v160, %v261
  %v263 = vlaneseq
  %v264 = vshrl.u32 %v263, 7
  %v265 = vsub.s32 2, %v264
  %v266 = vrot.slane %v160, %v265
  %v267 = vlaneseq
  %v268 = vshrl.u32 %v267, 7
  %v269 = vsub.s32 3, %v268
  %v270 = vrot.slane %v160, %v269
  %v275 = vmul.f32 %v246, %v258
  %v276 = vmul.f32 %v247, %v262
  %v277 = vmul.f32 %v248, %v266
  %v278 = vmul.f32 %v249, %v270
  %v279 = vmul.f32 %v250, %v258
  %v280 = vmul.f32 %v251, %v262
  %v281 = vmul.f32 %v252, %v266
  %v282 = vmul.f32 %v253, %v270
  %v284 = vlaneseq
  %v285 = vshrl.u32 %v284, 7
  %v286 = vsub.s32 0, %v285
  %v287 = vrot.slane %v161, %v286
  %v288 = vlaneseq
  %v289 = vshrl.u32 %v288, 7
  %v290 = vsub.s32 1, %v289
  %v291 = vrot.slane %v161, %v290
  %v292 = vlaneseq
  %v293 = vshrl.u32 %v292, 7
  %v294 = vsub.s32 2, %v293
  %v295 = vrot.slane %v161, %v294
  %v296 = vlaneseq
  %v297 = vshrl.u32 %v296, 7
  %v298 = vsub.s32 3, %v297
  %v299 = vrot.slane %v161, %v298
  %v304 = vadd.f32 %v275, %v287
  %v305 = vadd.f32 %v276, %v291
  %v306 = vadd.f32 %v277, %v295
  %v307 = vadd.f32 %v278, %v299
  %v308 = vadd.f32 %v279, %v287
  %v309 = vadd.f32 %v280, %v291
  %v310 = vadd.f32 %v281, %v295
  %v311 = vadd.f32 %v282, %v299
  %v312 = vpack.c.bf16 %v304, %v304
  %v313 = vpack.c.bf16 %v305, %v305
  %v314 = vpack.c.bf16 %v306, %v306
  %v315 = vpack.c.bf16 %v307, %v307
  %v316 = vpack.c.bf16 %v308, %v308
  %v317 = vpack.c.bf16 %v309, %v309
  %v318 = vpack.c.bf16 %v310, %v310
  %v319 = vpack.c.bf16 %v311, %v311
  %v320 = vld [vmem:[%s3] sm:$0xff]
  %v321 = vld [vmem:[%s3 + $0x8] sm:$0xff]
  %v322 = vld [vmem:[%s3 + $0x10] sm:$0xff]
  %v323 = vld [vmem:[%s3 + $0x18] sm:$0xff]
  %v324 = vld [vmem:[%s3 + $0x20] sm:$0xff]
  %v325 = vld [vmem:[%s3 + $0x28] sm:$0xff]
  %v326 = vld [vmem:[%s3 + $0x30] sm:$0xff]
  %v327 = vld [vmem:[%s3 + $0x38] sm:$0xff]
  %v328 = vld [vmem:[%s3 + $0x40] sm:$0xff]
  %v329 = vld [vmem:[%s3 + $0x48] sm:$0xff]
  %v330 = vld [vmem:[%s3 + $0x50] sm:$0xff]
  %v331 = vld [vmem:[%s3 + $0x58] sm:$0xff]
  %v332 = vld [vmem:[%s3 + $0x60] sm:$0xff]
  %v333 = vld [vmem:[%s3 + $0x68] sm:$0xff]
  %v334 = vld [vmem:[%s3 + $0x70] sm:$0xff]
  %v335 = vld [vmem:[%s3 + $0x78] sm:$0xff]
  %v336 = vld [vmem:[%s3 + $0x80] sm:$0xff]
  %v337 = vld [vmem:[%s3 + $0x88] sm:$0xff]
  %v338 = vld [vmem:[%s3 + $0x90] sm:$0xff]
  %v339 = vld [vmem:[%s3 + $0x98] sm:$0xff]
  %v340 = vld [vmem:[%s3 + $0xa0] sm:$0xff]
  %v341 = vld [vmem:[%s3 + $0xa8] sm:$0xff]
  %v342 = vld [vmem:[%s3 + $0xb0] sm:$0xff]
  %v343 = vld [vmem:[%s3 + $0xb8] sm:$0xff]
  %v344 = vld [vmem:[%s3 + $0xc0] sm:$0xff]
  %v345 = vld [vmem:[%s3 + $0xc8] sm:$0xff]
  %v346 = vld [vmem:[%s3 + $0xd0] sm:$0xff]
  %v347 = vld [vmem:[%s3 + $0xd8] sm:$0xff]
  %v348 = vld [vmem:[%s3 + $0xe0] sm:$0xff]
  %v349 = vld [vmem:[%s3 + $0xe8] sm:$0xff]
  %v350 = vld [vmem:[%s3 + $0xf0] sm:$0xff]
  %v351 = vld [vmem:[%s3 + $0xf8] sm:$0xff]
  %v352 = vld [vmem:[%s3 + $0x100] sm:$0xff]
  %v353 = vld [vmem:[%s3 + $0x108] sm:$0xff]
  %v354 = vld [vmem:[%s3 + $0x110] sm:$0xff]
  %v355 = vld [vmem:[%s3 + $0x118] sm:$0xff]
  %v356 = vld [vmem:[%s3 + $0x120] sm:$0xff]
  %v357 = vld [vmem:[%s3 + $0x128] sm:$0xff]
  %v358 = vld [vmem:[%s3 + $0x130] sm:$0xff]
  %v359 = vld [vmem:[%s3 + $0x138] sm:$0xff]
  %v360 = vld [vmem:[%s3 + $0x140] sm:$0xff]
  %v361 = vld [vmem:[%s3 + $0x148] sm:$0xff]
  %v362 = vld [vmem:[%s3 + $0x150] sm:$0xff]
  %v363 = vld [vmem:[%s3 + $0x158] sm:$0xff]
  %v364 = vld [vmem:[%s3 + $0x160] sm:$0xff]
  %v365 = vld [vmem:[%s3 + $0x168] sm:$0xff]
  %v366 = vld [vmem:[%s3 + $0x170] sm:$0xff]
  %v367 = vld [vmem:[%s3 + $0x178] sm:$0xff]
  %v368 = vld [vmem:[%s3 + $0x180] sm:$0xff]
  %v369 = vld [vmem:[%s3 + $0x188] sm:$0xff]
  %v370 = vld [vmem:[%s3 + $0x190] sm:$0xff]
  %v371 = vld [vmem:[%s3 + $0x198] sm:$0xff]
  %v372 = vld [vmem:[%s3 + $0x1a0] sm:$0xff]
  %v373 = vld [vmem:[%s3 + $0x1a8] sm:$0xff]
  %v374 = vld [vmem:[%s3 + $0x1b0] sm:$0xff]
  %v375 = vld [vmem:[%s3 + $0x1b8] sm:$0xff]
  %v376 = vld [vmem:[%s3 + $0x1c0] sm:$0xff]
  %v377 = vld [vmem:[%s3 + $0x1c8] sm:$0xff]
  %v378 = vld [vmem:[%s3 + $0x1d0] sm:$0xff]
  %v379 = vld [vmem:[%s3 + $0x1d8] sm:$0xff]
  %v380 = vld [vmem:[%s3 + $0x1e0] sm:$0xff]
  %v381 = vld [vmem:[%s3 + $0x1e8] sm:$0xff]
  %v382 = vld [vmem:[%s3 + $0x1f0] sm:$0xff]
  %v383 = vld [vmem:[%s3 + $0x1f8] sm:$0xff]
  %v384 = vld [vmem:[%s3 + $0x200] sm:$0xff]
  %v385 = vld [vmem:[%s3 + $0x208] sm:$0xff]
  %v386 = vld [vmem:[%s3 + $0x210] sm:$0xff]
  %v387 = vld [vmem:[%s3 + $0x218] sm:$0xff]
  %v388 = vld [vmem:[%s3 + $0x220] sm:$0xff]
  %v389 = vld [vmem:[%s3 + $0x228] sm:$0xff]
  %v390 = vld [vmem:[%s3 + $0x230] sm:$0xff]
  %v391 = vld [vmem:[%s3 + $0x238] sm:$0xff]
  %v392 = vld [vmem:[%s3 + $0x240] sm:$0xff]
  %v393 = vld [vmem:[%s3 + $0x248] sm:$0xff]
  %v394 = vld [vmem:[%s3 + $0x250] sm:$0xff]
  %v395 = vld [vmem:[%s3 + $0x258] sm:$0xff]
  %v396 = vld [vmem:[%s3 + $0x260] sm:$0xff]
  %v397 = vld [vmem:[%s3 + $0x268] sm:$0xff]
  %v398 = vld [vmem:[%s3 + $0x270] sm:$0xff]
  %v399 = vld [vmem:[%s3 + $0x278] sm:$0xff]
  %v400 = vld [vmem:[%s3 + $0x280] sm:$0xff]
  %v401 = vld [vmem:[%s3 + $0x288] sm:$0xff]
  %v402 = vld [vmem:[%s3 + $0x290] sm:$0xff]
  %v403 = vld [vmem:[%s3 + $0x298] sm:$0xff]
  %v404 = vld [vmem:[%s3 + $0x2a0] sm:$0xff]
  %v405 = vld [vmem:[%s3 + $0x2a8] sm:$0xff]
  %v406 = vld [vmem:[%s3 + $0x2b0] sm:$0xff]
  %v407 = vld [vmem:[%s3 + $0x2b8] sm:$0xff]
  %v408 = vld [vmem:[%s3 + $0x2c0] sm:$0xff]
  %v409 = vld [vmem:[%s3 + $0x2c8] sm:$0xff]
  %v410 = vld [vmem:[%s3 + $0x2d0] sm:$0xff]
  %v411 = vld [vmem:[%s3 + $0x2d8] sm:$0xff]
  %v412 = vld [vmem:[%s3 + $0x2e0] sm:$0xff]
  %v413 = vld [vmem:[%s3 + $0x2e8] sm:$0xff]
  %v414 = vld [vmem:[%s3 + $0x2f0] sm:$0xff]
  %v415 = vld [vmem:[%s3 + $0x2f8] sm:$0xff]
  %v416 = vld [vmem:[%s3 + $0x300] sm:$0xff]
  %v417 = vld [vmem:[%s3 + $0x308] sm:$0xff]
  %v418 = vld [vmem:[%s3 + $0x310] sm:$0xff]
  %v419 = vld [vmem:[%s3 + $0x318] sm:$0xff]
  %v420 = vld [vmem:[%s3 + $0x320] sm:$0xff]
  %v421 = vld [vmem:[%s3 + $0x328] sm:$0xff]
  %v422 = vld [vmem:[%s3 + $0x330] sm:$0xff]
  %v423 = vld [vmem:[%s3 + $0x338] sm:$0xff]
  %v424 = vld [vmem:[%s3 + $0x340] sm:$0xff]
  %v425 = vld [vmem:[%s3 + $0x348] sm:$0xff]
  %v426 = vld [vmem:[%s3 + $0x350] sm:$0xff]
  %v427 = vld [vmem:[%s3 + $0x358] sm:$0xff]
  %v428 = vld [vmem:[%s3 + $0x360] sm:$0xff]
  %v429 = vld [vmem:[%s3 + $0x368] sm:$0xff]
  %v430 = vld [vmem:[%s3 + $0x370] sm:$0xff]
  %v431 = vld [vmem:[%s3 + $0x378] sm:$0xff]
  %v432 = vld [vmem:[%s3 + $0x380] sm:$0xff]
  %v433 = vld [vmem:[%s3 + $0x388] sm:$0xff]
  %v434 = vld [vmem:[%s3 + $0x390] sm:$0xff]
  %v435 = vld [vmem:[%s3 + $0x398] sm:$0xff]
  %v436 = vld [vmem:[%s3 + $0x3a0] sm:$0xff]
  %v437 = vld [vmem:[%s3 + $0x3a8] sm:$0xff]
  %v438 = vld [vmem:[%s3 + $0x3b0] sm:$0xff]
  %v439 = vld [vmem:[%s3 + $0x3b8] sm:$0xff]
  %v440 = vld [vmem:[%s3 + $0x3c0] sm:$0xff]
  %v441 = vld [vmem:[%s3 + $0x3c8] sm:$0xff]
  %v442 = vld [vmem:[%s3 + $0x3d0] sm:$0xff]
  %v443 = vld [vmem:[%s3 + $0x3d8] sm:$0xff]
  %v444 = vld [vmem:[%s3 + $0x3e0] sm:$0xff]
  %v445 = vld [vmem:[%s3 + $0x3e8] sm:$0xff]
  %v446 = vld [vmem:[%s3 + $0x3f0] sm:$0xff]
  %v447 = vld [vmem:[%s3 + $0x3f8] sm:$0xff]
  %v448 = vld [vmem:[%s4] sm:$0xf]
  %v450 = vlaneseq
  %v451 = vshrl.u32 %v450, 7
  %v452 = vsub.s32 0, %v451
  %v453 = vrot.slane %v448, %v452
  %v454 = vlaneseq
  %v455 = vshrl.u32 %v454, 7
  %v456 = vsub.s32 1, %v455
  %v457 = vrot.slane %v448, %v456
  %v458 = vlaneseq
  %v459 = vshrl.u32 %v458, 7
  %v460 = vsub.s32 2, %v459
  %v461 = vrot.slane %v448, %v460
  %v462 = vlaneseq
  %v463 = vshrl.u32 %v462, 7
  %v464 = vsub.s32 3, %v463
  %v465 = vrot.slane %v448, %v464
  %v478 = vunpack.c.l.b16 %v312
  %v479 = vunpack.c.l.b16 %v313
  %v480 = vunpack.c.l.b16 %v314
  %v481 = vunpack.c.l.b16 %v315
  %v482 = vunpack.c.l.b16 %v316
  %v483 = vunpack.c.l.b16 %v317
  %v484 = vunpack.c.l.b16 %v318
  %v485 = vunpack.c.l.b16 %v319
  %v486 = vrot.slane %v482, 7
  %v487 = vsel %vm170, %v486, %v478
  %v488 = vrot.slane %v483, 7
  %v489 = vsel %vm170, %v488, %v479
  %v490 = vrot.slane %v484, 7
  %v491 = vsel %vm170, %v490, %v480
  %v492 = vrot.slane %v485, 7
  %v493 = vsel %vm170, %v492, %v481
  %v494 = vpack.c.b16 %v487, %v487
  %v495 = vpack.c.b16 %v489, %v489
  %v496 = vpack.c.b16 %v491, %v491
  %v497 = vpack.c.b16 %v493, %v493
  %v630 = vunpack.c.l.b16 %v320
  %v631 = vunpack.c.h.b16 %v320
  %v632 = vunpack.c.l.b16 %v321
  %v633 = vunpack.c.h.b16 %v321
  %v634 = vunpack.c.l.b16 %v322
  %v635 = vunpack.c.h.b16 %v322
  %v636 = vunpack.c.l.b16 %v323
  %v637 = vunpack.c.h.b16 %v323
  %v638 = vunpack.c.l.b16 %v324
  %v639 = vunpack.c.h.b16 %v324
  %v640 = vunpack.c.l.b16 %v325
  %v641 = vunpack.c.h.b16 %v325
  %v642 = vunpack.c.l.b16 %v326
  %v643 = vunpack.c.h.b16 %v326
  %v644 = vunpack.c.l.b16 %v327
  %v645 = vunpack.c.h.b16 %v327
  %v646 = vunpack.c.l.b16 %v328
  %v647 = vunpack.c.h.b16 %v328
  %v648 = vunpack.c.l.b16 %v329
  %v649 = vunpack.c.h.b16 %v329
  %v650 = vunpack.c.l.b16 %v330
  %v651 = vunpack.c.h.b16 %v330
  %v652 = vunpack.c.l.b16 %v331
  %v653 = vunpack.c.h.b16 %v331
  %v654 = vunpack.c.l.b16 %v332
  %v655 = vunpack.c.h.b16 %v332
  %v656 = vunpack.c.l.b16 %v333
  %v657 = vunpack.c.h.b16 %v333
  %v658 = vunpack.c.l.b16 %v334
  %v659 = vunpack.c.h.b16 %v334
  %v660 = vunpack.c.l.b16 %v335
  %v661 = vunpack.c.h.b16 %v335
  %v662 = vunpack.c.l.b16 %v336
  %v663 = vunpack.c.h.b16 %v336
  %v664 = vunpack.c.l.b16 %v337
  %v665 = vunpack.c.h.b16 %v337
  %v666 = vunpack.c.l.b16 %v338
  %v667 = vunpack.c.h.b16 %v338
  %v668 = vunpack.c.l.b16 %v339
  %v669 = vunpack.c.h.b16 %v339
  %v670 = vunpack.c.l.b16 %v340
  %v671 = vunpack.c.h.b16 %v340
  %v672 = vunpack.c.l.b16 %v341
  %v673 = vunpack.c.h.b16 %v341
  %v674 = vunpack.c.l.b16 %v342
  %v675 = vunpack.c.h.b16 %v342
  %v676 = vunpack.c.l.b16 %v343
  %v677 = vunpack.c.h.b16 %v343
  %v678 = vunpack.c.l.b16 %v344
  %v679 = vunpack.c.h.b16 %v344
  %v680 = vunpack.c.l.b16 %v345
  %v681 = vunpack.c.h.b16 %v345
  %v682 = vunpack.c.l.b16 %v346
  %v683 = vunpack.c.h.b16 %v346
  %v684 = vunpack.c.l.b16 %v347
  %v685 = vunpack.c.h.b16 %v347
  %v686 = vunpack.c.l.b16 %v348
  %v687 = vunpack.c.h.b16 %v348
  %v688 = vunpack.c.l.b16 %v349
  %v689 = vunpack.c.h.b16 %v349
  %v690 = vunpack.c.l.b16 %v350
  %v691 = vunpack.c.h.b16 %v350
  %v692 = vunpack.c.l.b16 %v351
  %v693 = vunpack.c.h.b16 %v351
  %v694 = vunpack.c.l.b16 %v352
  %v695 = vunpack.c.h.b16 %v352
  %v696 = vunpack.c.l.b16 %v353
  %v697 = vunpack.c.h.b16 %v353
  %v698 = vunpack.c.l.b16 %v354
  %v699 = vunpack.c.h.b16 %v354
  %v700 = vunpack.c.l.b16 %v355
  %v701 = vunpack.c.h.b16 %v355
  %v702 = vunpack.c.l.b16 %v356
  %v703 = vunpack.c.h.b16 %v356
  %v704 = vunpack.c.l.b16 %v357
  %v705 = vunpack.c.h.b16 %v357
  %v706 = vunpack.c.l.b16 %v358
  %v707 = vunpack.c.h.b16 %v358
  %v708 = vunpack.c.l.b16 %v359
  %v709 = vunpack.c.h.b16 %v359
  %v710 = vunpack.c.l.b16 %v360
  %v711 = vunpack.c.h.b16 %v360
  %v712 = vunpack.c.l.b16 %v361
  %v713 = vunpack.c.h.b16 %v361
  %v714 = vunpack.c.l.b16 %v362
  %v715 = vunpack.c.h.b16 %v362
  %v716 = vunpack.c.l.b16 %v363
  %v717 = vunpack.c.h.b16 %v363
  %v718 = vunpack.c.l.b16 %v364
  %v719 = vunpack.c.h.b16 %v364
  %v720 = vunpack.c.l.b16 %v365
  %v721 = vunpack.c.h.b16 %v365
  %v722 = vunpack.c.l.b16 %v366
  %v723 = vunpack.c.h.b16 %v366
  %v724 = vunpack.c.l.b16 %v367
  %v725 = vunpack.c.h.b16 %v367
  %v726 = vunpack.c.l.b16 %v368
  %v727 = vunpack.c.h.b16 %v368
  %v728 = vunpack.c.l.b16 %v369
  %v729 = vunpack.c.h.b16 %v369
  %v730 = vunpack.c.l.b16 %v370
  %v731 = vunpack.c.h.b16 %v370
  %v732 = vunpack.c.l.b16 %v371
  %v733 = vunpack.c.h.b16 %v371
  %v734 = vunpack.c.l.b16 %v372
  %v735 = vunpack.c.h.b16 %v372
  %v736 = vunpack.c.l.b16 %v373
  %v737 = vunpack.c.h.b16 %v373
  %v738 = vunpack.c.l.b16 %v374
  %v739 = vunpack.c.h.b16 %v374
  %v740 = vunpack.c.l.b16 %v375
  %v741 = vunpack.c.h.b16 %v375
  %v742 = vunpack.c.l.b16 %v376
  %v743 = vunpack.c.h.b16 %v376
  %v744 = vunpack.c.l.b16 %v377
  %v745 = vunpack.c.h.b16 %v377
  %v746 = vunpack.c.l.b16 %v378
  %v747 = vunpack.c.h.b16 %v378
  %v748 = vunpack.c.l.b16 %v379
  %v749 = vunpack.c.h.b16 %v379
  %v750 = vunpack.c.l.b16 %v380
  %v751 = vunpack.c.h.b16 %v380
  %v752 = vunpack.c.l.b16 %v381
  %v753 = vunpack.c.h.b16 %v381
  %v754 = vunpack.c.l.b16 %v382
  %v755 = vunpack.c.h.b16 %v382
  %v756 = vunpack.c.l.b16 %v383
  %v757 = vunpack.c.h.b16 %v383
  %v758 = vunpack.c.l.b16 %v384
  %v759 = vunpack.c.h.b16 %v384
  %v760 = vunpack.c.l.b16 %v385
  %v761 = vunpack.c.h.b16 %v385
  %v762 = vunpack.c.l.b16 %v386
  %v763 = vunpack.c.h.b16 %v386
  %v764 = vunpack.c.l.b16 %v387
  %v765 = vunpack.c.h.b16 %v387
  %v766 = vunpack.c.l.b16 %v388
  %v767 = vunpack.c.h.b16 %v388
  %v768 = vunpack.c.l.b16 %v389
  %v769 = vunpack.c.h.b16 %v389
  %v770 = vunpack.c.l.b16 %v390
  %v771 = vunpack.c.h.b16 %v390
  %v772 = vunpack.c.l.b16 %v391
  %v773 = vunpack.c.h.b16 %v391
  %v774 = vunpack.c.l.b16 %v392
  %v775 = vunpack.c.h.b16 %v392
  %v776 = vunpack.c.l.b16 %v393
  %v777 = vunpack.c.h.b16 %v393
  %v778 = vunpack.c.l.b16 %v394
  %v779 = vunpack.c.h.b16 %v394
  %v780 = vunpack.c.l.b16 %v395
  %v781 = vunpack.c.h.b16 %v395
  %v782 = vunpack.c.l.b16 %v396
  %v783 = vunpack.c.h.b16 %v396
  %v784 = vunpack.c.l.b16 %v397
  %v785 = vunpack.c.h.b16 %v397
  %v786 = vunpack.c.l.b16 %v398
  %v787 = vunpack.c.h.b16 %v398
  %v788 = vunpack.c.l.b16 %v399
  %v789 = vunpack.c.h.b16 %v399
  %v790 = vunpack.c.l.b16 %v400
  %v791 = vunpack.c.h.b16 %v400
  %v792 = vunpack.c.l.b16 %v401
  %v793 = vunpack.c.h.b16 %v401
  %v794 = vunpack.c.l.b16 %v402
  %v795 = vunpack.c.h.b16 %v402
  %v796 = vunpack.c.l.b16 %v403
  %v797 = vunpack.c.h.b16 %v403
  %v798 = vunpack.c.l.b16 %v404
  %v799 = vunpack.c.h.b16 %v404
  %v800 = vunpack.c.l.b16 %v405
  %v801 = vunpack.c.h.b16 %v405
  %v802 = vunpack.c.l.b16 %v406
  %v803 = vunpack.c.h.b16 %v406
  %v804 = vunpack.c.l.b16 %v407
  %v805 = vunpack.c.h.b16 %v407
  %v806 = vunpack.c.l.b16 %v408
  %v807 = vunpack.c.h.b16 %v408
  %v808 = vunpack.c.l.b16 %v409
  %v809 = vunpack.c.h.b16 %v409
  %v810 = vunpack.c.l.b16 %v410
  %v811 = vunpack.c.h.b16 %v410
  %v812 = vunpack.c.l.b16 %v411
  %v813 = vunpack.c.h.b16 %v411
  %v814 = vunpack.c.l.b16 %v412
  %v815 = vunpack.c.h.b16 %v412
  %v816 = vunpack.c.l.b16 %v413
  %v817 = vunpack.c.h.b16 %v413
  %v818 = vunpack.c.l.b16 %v414
  %v819 = vunpack.c.h.b16 %v414
  %v820 = vunpack.c.l.b16 %v415
  %v821 = vunpack.c.h.b16 %v415
  %v822 = vunpack.c.l.b16 %v416
  %v823 = vunpack.c.h.b16 %v416
  %v824 = vunpack.c.l.b16 %v417
  %v825 = vunpack.c.h.b16 %v417
  %v826 = vunpack.c.l.b16 %v418
  %v827 = vunpack.c.h.b16 %v418
  %v828 = vunpack.c.l.b16 %v419
  %v829 = vunpack.c.h.b16 %v419
  %v830 = vunpack.c.l.b16 %v420
  %v831 = vunpack.c.h.b16 %v420
  %v832 = vunpack.c.l.b16 %v421
  %v833 = vunpack.c.h.b16 %v421
  %v834 = vunpack.c.l.b16 %v422
  %v835 = vunpack.c.h.b16 %v422
  %v836 = vunpack.c.l.b16 %v423
  %v837 = vunpack.c.h.b16 %v423
  %v838 = vunpack.c.l.b16 %v424
  %v839 = vunpack.c.h.b16 %v424
  %v840 = vunpack.c.l.b16 %v425
  %v841 = vunpack.c.h.b16 %v425
  %v842 = vunpack.c.l.b16 %v426
  %v843 = vunpack.c.h.b16 %v426
  %v844 = vunpack.c.l.b16 %v427
  %v845 = vunpack.c.h.b16 %v427
  %v846 = vunpack.c.l.b16 %v428
  %v847 = vunpack.c.h.b16 %v428
  %v848 = vunpack.c.l.b16 %v429
  %v849 = vunpack.c.h.b16 %v429
  %v850 = vunpack.c.l.b16 %v430
  %v851 = vunpack.c.h.b16 %v430
  %v852 = vunpack.c.l.b16 %v431
  %v853 = vunpack.c.h.b16 %v431
  %v854 = vunpack.c.l.b16 %v432
  %v855 = vunpack.c.h.b16 %v432
  %v856 = vunpack.c.l.b16 %v433
  %v857 = vunpack.c.h.b16 %v433
  %v858 = vunpack.c.l.b16 %v434
  %v859 = vunpack.c.h.b16 %v434
  %v860 = vunpack.c.l.b16 %v435
  %v861 = vunpack.c.h.b16 %v435
  %v862 = vunpack.c.l.b16 %v436
  %v863 = vunpack.c.h.b16 %v436
  %v864 = vunpack.c.l.b16 %v437
  %v865 = vunpack.c.h.b16 %v437
  %v866 = vunpack.c.l.b16 %v438
  %v867 = vunpack.c.h.b16 %v438
  %v868 = vunpack.c.l.b16 %v439
  %v869 = vunpack.c.h.b16 %v439
  %v870 = vunpack.c.l.b16 %v440
  %v871 = vunpack.c.h.b16 %v440
  %v872 = vunpack.c.l.b16 %v441
  %v873 = vunpack.c.h.b16 %v441
  %v874 = vunpack.c.l.b16 %v442
  %v875 = vunpack.c.h.b16 %v442
  %v876 = vunpack.c.l.b16 %v443
  %v877 = vunpack.c.h.b16 %v443
  %v878 = vunpack.c.l.b16 %v444
  %v879 = vunpack.c.h.b16 %v444
  %v880 = vunpack.c.l.b16 %v445
  %v881 = vunpack.c.h.b16 %v445
  %v882 = vunpack.c.l.b16 %v446
  %v883 = vunpack.c.h.b16 %v446
  %v884 = vunpack.c.l.b16 %v447
  %v885 = vunpack.c.h.b16 %v447
  %v886 = vpack.c.b16 %v634, %v630
  %v887 = vpack.c.b16 %v635, %v631
  %v888 = vpack.c.b16 %v636, %v632
  %v889 = vpack.c.b16 %v637, %v633
  %v890 = vpack.c.b16 %v642, %v638
  %v891 = vpack.c.b16 %v643, %v639
  %v892 = vpack.c.b16 %v644, %v640
  %v893 = vpack.c.b16 %v645, %v641
  %v894 = vpack.c.b16 %v650, %v646
  %v895 = vpack.c.b16 %v651, %v647
  %v896 = vpack.c.b16 %v652, %v648
  %v897 = vpack.c.b16 %v653, %v649
  %v898 = vpack.c.b16 %v658, %v654
  %v899 = vpack.c.b16 %v659, %v655
  %v900 = vpack.c.b16 %v660, %v656
  %v901 = vpack.c.b16 %v661, %v657
  %v902 = vpack.c.b16 %v666, %v662
  %v903 = vpack.c.b16 %v667, %v663
  %v904 = vpack.c.b16 %v668, %v664
  %v905 = vpack.c.b16 %v669, %v665
  %v906 = vpack.c.b16 %v674, %v670
  %v907 = vpack.c.b16 %v675, %v671
  %v908 = vpack.c.b16 %v676, %v672
  %v909 = vpack.c.b16 %v677, %v673
  %v910 = vpack.c.b16 %v682, %v678
  %v911 = vpack.c.b16 %v683, %v679
  %v912 = vpack.c.b16 %v684, %v680
  %v913 = vpack.c.b16 %v685, %v681
  %v914 = vpack.c.b16 %v690, %v686
  %v915 = vpack.c.b16 %v691, %v687
  %v916 = vpack.c.b16 %v692, %v688
  %v917 = vpack.c.b16 %v693, %v689
  %v918 = vpack.c.b16 %v698, %v694
  %v919 = vpack.c.b16 %v699, %v695
  %v920 = vpack.c.b16 %v700, %v696
  %v921 = vpack.c.b16 %v701, %v697
  %v922 = vpack.c.b16 %v706, %v702
  %v923 = vpack.c.b16 %v707, %v703
  %v924 = vpack.c.b16 %v708, %v704
  %v925 = vpack.c.b16 %v709, %v705
  %v926 = vpack.c.b16 %v714, %v710
  %v927 = vpack.c.b16 %v715, %v711
  %v928 = vpack.c.b16 %v716, %v712
  %v929 = vpack.c.b16 %v717, %v713
  %v930 = vpack.c.b16 %v722, %v718
  %v931 = vpack.c.b16 %v723, %v719
  %v932 = vpack.c.b16 %v724, %v720
  %v933 = vpack.c.b16 %v725, %v721
  %v934 = vpack.c.b16 %v730, %v726
  %v935 = vpack.c.b16 %v731, %v727
  %v936 = vpack.c.b16 %v732, %v728
  %v937 = vpack.c.b16 %v733, %v729
  %v938 = vpack.c.b16 %v738, %v734
  %v939 = vpack.c.b16 %v739, %v735
  %v940 = vpack.c.b16 %v740, %v736
  %v941 = vpack.c.b16 %v741, %v737
  %v942 = vpack.c.b16 %v746, %v742
  %v943 = vpack.c.b16 %v747, %v743
  %v944 = vpack.c.b16 %v748, %v744
  %v945 = vpack.c.b16 %v749, %v745
  %v946 = vpack.c.b16 %v754, %v750
  %v947 = vpack.c.b16 %v755, %v751
  %v948 = vpack.c.b16 %v756, %v752
  %v949 = vpack.c.b16 %v757, %v753
  %v950 = vpack.c.b16 %v762, %v758
  %v951 = vpack.c.b16 %v763, %v759
  %v952 = vpack.c.b16 %v764, %v760
  %v953 = vpack.c.b16 %v765, %v761
  %v954 = vpack.c.b16 %v770, %v766
  %v955 = vpack.c.b16 %v771, %v767
  %v956 = vpack.c.b16 %v772, %v768
  %v957 = vpack.c.b16 %v773, %v769
  %v958 = vpack.c.b16 %v778, %v774
  %v959 = vpack.c.b16 %v779, %v775
  %v960 = vpack.c.b16 %v780, %v776
  %v961 = vpack.c.b16 %v781, %v777
  %v962 = vpack.c.b16 %v786, %v782
  %v963 = vpack.c.b16 %v787, %v783
  %v964 = vpack.c.b16 %v788, %v784
  %v965 = vpack.c.b16 %v789, %v785
  %v966 = vpack.c.b16 %v794, %v790
  %v967 = vpack.c.b16 %v795, %v791
  %v968 = vpack.c.b16 %v796, %v792
  %v969 = vpack.c.b16 %v797, %v793
  %v970 = vpack.c.b16 %v802, %v798
  %v971 = vpack.c.b16 %v803, %v799
  %v972 = vpack.c.b16 %v804, %v800
  %v973 = vpack.c.b16 %v805, %v801
  %v974 = vpack.c.b16 %v810, %v806
  %v975 = vpack.c.b16 %v811, %v807
  %v976 = vpack.c.b16 %v812, %v808
  %v977 = vpack.c.b16 %v813, %v809
  %v978 = vpack.c.b16 %v818, %v814
  %v979 = vpack.c.b16 %v819, %v815
  %v980 = vpack.c.b16 %v820, %v816
  %v981 = vpack.c.b16 %v821, %v817
  %v982 = vpack.c.b16 %v826, %v822
  %v983 = vpack.c.b16 %v827, %v823
  %v984 = vpack.c.b16 %v828, %v824
  %v985 = vpack.c.b16 %v829, %v825
  %v986 = vpack.c.b16 %v834, %v830
  %v987 = vpack.c.b16 %v835, %v831
  %v988 = vpack.c.b16 %v836, %v832
  %v989 = vpack.c.b16 %v837, %v833
  %v990 = vpack.c.b16 %v842, %v838
  %v991 = vpack.c.b16 %v843, %v839
  %v992 = vpack.c.b16 %v844, %v840
  %v993 = vpack.c.b16 %v845, %v841
  %v994 = vpack.c.b16 %v850, %v846
  %v995 = vpack.c.b16 %v851, %v847
  %v996 = vpack.c.b16 %v852, %v848
  %v997 = vpack.c.b16 %v853, %v849
  %v998 = vpack.c.b16 %v858, %v854
  %v999 = vpack.c.b16 %v859, %v855
  %v1000 = vpack.c.b16 %v860, %v856
  %v1001 = vpack.c.b16 %v861, %v857
  %v1002 = vpack.c.b16 %v866, %v862
  %v1003 = vpack.c.b16 %v867, %v863
  %v1004 = vpack.c.b16 %v868, %v864
  %v1005 = vpack.c.b16 %v869, %v865
  %v1006 = vpack.c.b16 %v874, %v870
  %v1007 = vpack.c.b16 %v875, %v871
  %v1008 = vpack.c.b16 %v876, %v872
  %v1009 = vpack.c.b16 %v877, %v873
  %v1010 = vpack.c.b16 %v882, %v878
  %v1011 = vpack.c.b16 %v883, %v879
  %v1012 = vpack.c.b16 %v884, %v880
  %v1013 = vpack.c.b16 %v885, %v881
  %1142 = vmatprep.subr.bf16.mxu0 %v887
  %1143 = vmatpush1.bf16.msra.mxu0 %v886
  %1144 = vmatprep.subr.bf16.mxu0 %v891
  %1145 = vmatpush1.bf16.msra.mxu0 %v890
  %1146 = vmatprep.subr.bf16.mxu0 %v895
  %1147 = vmatpush1.bf16.msra.mxu0 %v894
  %1148 = vmatprep.subr.bf16.mxu0 %v899
  %1149 = vmatpush1.bf16.msra.mxu0 %v898
  %1150 = vmatprep.subr.bf16.mxu0 %v903
  %1151 = vmatpush1.bf16.msra.mxu0 %v902
  %1152 = vmatprep.subr.bf16.mxu0 %v907
  %1153 = vmatpush1.bf16.msra.mxu0 %v906
  %1154 = vmatprep.subr.bf16.mxu0 %v911
  %1155 = vmatpush1.bf16.msra.mxu0 %v910
  %1156 = vmatprep.subr.bf16.mxu0 %v915
  %1157 = vmatpush1.bf16.msra.mxu0 %v914
  %1158 = vmatprep.subr.bf16.mxu0 %v919
  %1159 = vmatpush1.bf16.msra.mxu0 %v918
  %1160 = vmatprep.subr.bf16.mxu0 %v923
  %1161 = vmatpush1.bf16.msra.mxu0 %v922
  %1162 = vmatprep.subr.bf16.mxu0 %v927
  %1163 = vmatpush1.bf16.msra.mxu0 %v926
  %1164 = vmatprep.subr.bf16.mxu0 %v931
  %1165 = vmatpush1.bf16.msra.mxu0 %v930
  %1166 = vmatprep.subr.bf16.mxu0 %v935
  %1167 = vmatpush1.bf16.msra.mxu0 %v934
  %1168 = vmatprep.subr.bf16.mxu0 %v939
  %1169 = vmatpush1.bf16.msra.mxu0 %v938
  %1170 = vmatprep.subr.bf16.mxu0 %v943
  %1171 = vmatpush1.bf16.msra.mxu0 %v942
  %1172 = vmatprep.subr.bf16.mxu0 %v947
  %1173 = vmatpush1.bf16.msra.mxu0 %v946
  %1174 = vmatprep.mubr.bf16.mxu0 %v495
  %1175 = vmatmul.mubr.bf16.gmra.mrb[0].mxu0 %v494
  %v1176 = vpop.f32.mrb[0].mxu0
  %v1177 = vadd.f32 %v453, %v1176
  %v1178 = vpop.f32.mrb[0].mxu0
  %v1179 = vadd.f32 %v457, %v1178
  %v1180 = vpop.f32.mrb[0].mxu0
  %v1181 = vpop.f32.mrb[0].mxu0
  %1182 = vdwg.mxu0
  %1183 = vmatprep.subr.bf16.mxu0 %v951
  %1184 = vmatpush1.bf16.msra.mxu0 %v950
  %1185 = vmatprep.subr.bf16.mxu0 %v955
  %1186 = vmatpush1.bf16.msra.mxu0 %v954
  %1187 = vmatprep.subr.bf16.mxu0 %v959
  %1188 = vmatpush1.bf16.msra.mxu0 %v958
  %1189 = vmatprep.subr.bf16.mxu0 %v963
  %1190 = vmatpush1.bf16.msra.mxu0 %v962
  %1191 = vmatprep.subr.bf16.mxu0 %v967
  %1192 = vmatpush1.bf16.msra.mxu0 %v966
  %1193 = vmatprep.subr.bf16.mxu0 %v971
  %1194 = vmatpush1.bf16.msra.mxu0 %v970
  %1195 = vmatprep.subr.bf16.mxu0 %v975
  %1196 = vmatpush1.bf16.msra.mxu0 %v974
  %1197 = vmatprep.subr.bf16.mxu0 %v979
  %1198 = vmatpush1.bf16.msra.mxu0 %v978
  %1199 = vmatprep.subr.bf16.mxu0 %v983
  %1200 = vmatpush1.bf16.msra.mxu0 %v982
  %1201 = vmatprep.subr.bf16.mxu0 %v987
  %1202 = vmatpush1.bf16.msra.mxu0 %v986
  %1203 = vmatprep.subr.bf16.mxu0 %v991
  %1204 = vmatpush1.bf16.msra.mxu0 %v990
  %1205 = vmatprep.subr.bf16.mxu0 %v995
  %1206 = vmatpush1.bf16.msra.mxu0 %v994
  %1207 = vmatprep.subr.bf16.mxu0 %v999
  %1208 = vmatpush1.bf16.msra.mxu0 %v998
  %1209 = vmatprep.subr.bf16.mxu0 %v1003
  %1210 = vmatpush1.bf16.msra.mxu0 %v1002
  %1211 = vmatprep.subr.bf16.mxu0 %v1007
  %1212 = vmatpush1.bf16.msra.mxu0 %v1006
  %1213 = vmatprep.subr.bf16.mxu0 %v1011
  %1214 = vmatpush1.bf16.msra.mxu0 %v1010
  %1215 = vmatprep.mubr.bf16.mxu0 %v497
  %1216 = vmatmul.mubr.bf16.gmra.mrb[0].mxu0 %v496
  %v1217 = vpop.f32.mrb[0].mxu0
  %v1218 = vadd.f32 %v1177, %v1217
  %v1219 = vpop.f32.mrb[0].mxu0
  %v1220 = vadd.f32 %v1179, %v1219
  %v1221 = vpop.f32.mrb[0].mxu0
  %v1222 = vpop.f32.mrb[0].mxu0
  %1223 = vdwg.mxu0
  %1224 = vmatprep.subr.bf16.mxu0 %v889
  %1225 = vmatpush1.bf16.msra.mxu0 %v888
  %1226 = vmatprep.subr.bf16.mxu0 %v893
  %1227 = vmatpush1.bf16.msra.mxu0 %v892
  %1228 = vmatprep.subr.bf16.mxu0 %v897
  %1229 = vmatpush1.bf16.msra.mxu0 %v896
  %1230 = vmatprep.subr.bf16.mxu0 %v901
  %1231 = vmatpush1.bf16.msra.mxu0 %v900
  %1232 = vmatprep.subr.bf16.mxu0 %v905
  %1233 = vmatpush1.bf16.msra.mxu0 %v904
  %1234 = vmatprep.subr.bf16.mxu0 %v909
  %1235 = vmatpush1.bf16.msra.mxu0 %v908
  %1236 = vmatprep.subr.bf16.mxu0 %v913
  %1237 = vmatpush1.bf16.msra.mxu0 %v912
  %1238 = vmatprep.subr.bf16.mxu0 %v917
  %1239 = vmatpush1.bf16.msra.mxu0 %v916
  %1240 = vmatprep.subr.bf16.mxu0 %v921
  %1241 = vmatpush1.bf16.msra.mxu0 %v920
  %1242 = vmatprep.subr.bf16.mxu0 %v925
  %1243 = vmatpush1.bf16.msra.mxu0 %v924
  %1244 = vmatprep.subr.bf16.mxu0 %v929
  %1245 = vmatpush1.bf16.msra.mxu0 %v928
  %1246 = vmatprep.subr.bf16.mxu0 %v933
  %1247 = vmatpush1.bf16.msra.mxu0 %v932
  %1248 = vmatprep.subr.bf16.mxu0 %v937
  %1249 = vmatpush1.bf16.msra.mxu0 %v936
  %1250 = vmatprep.subr.bf16.mxu0 %v941
  %1251 = vmatpush1.bf16.msra.mxu0 %v940
  %1252 = vmatprep.subr.bf16.mxu0 %v945
  %1253 = vmatpush1.bf16.msra.mxu0 %v944
  %1254 = vmatprep.subr.bf16.mxu0 %v949
  %1255 = vmatpush1.bf16.msra.mxu0 %v948
  %1256 = vmatprep.mubr.bf16.mxu0 %v495
  %1257 = vmatmul.mubr.bf16.gmra.mrb[0].mxu0 %v494
  %v1258 = vpop.f32.mrb[0].mxu0
  %v1259 = vadd.f32 %v461, %v1258
  %v1260 = vpop.f32.mrb[0].mxu0
  %v1261 = vadd.f32 %v465, %v1260
  %v1262 = vpop.f32.mrb[0].mxu0
  %v1263 = vpop.f32.mrb[0].mxu0
  %1264 = vdwg.mxu0
  %1265 = vmatprep.subr.bf16.mxu0 %v953
  %1266 = vmatpush1.bf16.msra.mxu0 %v952
  %1267 = vmatprep.subr.bf16.mxu0 %v957
  %1268 = vmatpush1.bf16.msra.mxu0 %v956
  %1269 = vmatprep.subr.bf16.mxu0 %v961
  %1270 = vmatpush1.bf16.msra.mxu0 %v960
  %1271 = vmatprep.subr.bf16.mxu0 %v965
  %1272 = vmatpush1.bf16.msra.mxu0 %v964
  %1273 = vmatprep.subr.bf16.mxu0 %v969
  %1274 = vmatpush1.bf16.msra.mxu0 %v968
  %1275 = vmatprep.subr.bf16.mxu0 %v973
  %1276 = vmatpush1.bf16.msra.mxu0 %v972
  %1277 = vmatprep.subr.bf16.mxu0 %v977
  %1278 = vmatpush1.bf16.msra.mxu0 %v976
  %1279 = vmatprep.subr.bf16.mxu0 %v981
  %1280 = vmatpush1.bf16.msra.mxu0 %v980
  %1281 = vmatprep.subr.bf16.mxu0 %v985
  %1282 = vmatpush1.bf16.msra.mxu0 %v984
  %1283 = vmatprep.subr.bf16.mxu0 %v989
  %1284 = vmatpush1.bf16.msra.mxu0 %v988
  %1285 = vmatprep.subr.bf16.mxu0 %v993
  %1286 = vmatpush1.bf16.msra.mxu0 %v992
  %1287 = vmatprep.subr.bf16.mxu0 %v997
  %1288 = vmatpush1.bf16.msra.mxu0 %v996
  %1289 = vmatprep.subr.bf16.mxu0 %v1001
  %1290 = vmatpush1.bf16.msra.mxu0 %v1000
  %1291 = vmatprep.subr.bf16.mxu0 %v1005
  %1292 = vmatpush1.bf16.msra.mxu0 %v1004
  %1293 = vmatprep.subr.bf16.mxu0 %v1009
  %1294 = vmatpush1.bf16.msra.mxu0 %v1008
  %1295 = vmatprep.subr.bf16.mxu0 %v1013
  %1296 = vmatpush1.bf16.msra.mxu0 %v1012
  %1297 = vmatprep.mubr.bf16.mxu0 %v497
  %1298 = vmatmul.mubr.bf16.gmra.mrb[0].mxu0 %v496
  %v1299 = vpop.f32.mrb[0].mxu0
  %v1300 = vadd.f32 %v1259, %v1299
  %v1301 = vpop.f32.mrb[0].mxu0
  %v1302 = vadd.f32 %v1261, %v1301
  %v1303 = vpop.f32.mrb[0].mxu0
  %v1304 = vpop.f32.mrb[0].mxu0
  %1305 = vdwg.mxu0
  %v1306 = vpack.c.bf16 %v1218, %v1218
  %v1307 = vpack.c.bf16 %v1220, %v1220
  %v1308 = vpack.c.bf16 %v1300, %v1300
  %v1309 = vpack.c.bf16 %v1302, %v1302
  %v1310 = vld [vmem:[%s5] sm:$0xff]
  %v1311 = vld [vmem:[%s5 + $0x8] sm:$0xff]
  %v1312 = vld [vmem:[%s5 + $0x10] sm:$0xff]
  %v1313 = vld [vmem:[%s5 + $0x18] sm:$0xff]
  %v1314 = vld [vmem:[%s5 + $0x20] sm:$0xff]
  %v1315 = vld [vmem:[%s5 + $0x28] sm:$0xff]
  %v1316 = vld [vmem:[%s5 + $0x30] sm:$0xff]
  %v1317 = vld [vmem:[%s5 + $0x38] sm:$0xff]
  %v1318 = vld [vmem:[%s5 + $0x40] sm:$0xff]
  %v1319 = vld [vmem:[%s5 + $0x48] sm:$0xff]
  %v1320 = vld [vmem:[%s5 + $0x50] sm:$0xff]
  %v1321 = vld [vmem:[%s5 + $0x58] sm:$0xff]
  %v1322 = vld [vmem:[%s5 + $0x60] sm:$0xff]
  %v1323 = vld [vmem:[%s5 + $0x68] sm:$0xff]
  %v1324 = vld [vmem:[%s5 + $0x70] sm:$0xff]
  %v1325 = vld [vmem:[%s5 + $0x78] sm:$0xff]
  %v1326 = vld [vmem:[%s5 + $0x80] sm:$0xff]
  %v1327 = vld [vmem:[%s5 + $0x88] sm:$0xff]
  %v1328 = vld [vmem:[%s5 + $0x90] sm:$0xff]
  %v1329 = vld [vmem:[%s5 + $0x98] sm:$0xff]
  %v1330 = vld [vmem:[%s5 + $0xa0] sm:$0xff]
  %v1331 = vld [vmem:[%s5 + $0xa8] sm:$0xff]
  %v1332 = vld [vmem:[%s5 + $0xb0] sm:$0xff]
  %v1333 = vld [vmem:[%s5 + $0xb8] sm:$0xff]
  %v1334 = vld [vmem:[%s5 + $0xc0] sm:$0xff]
  %v1335 = vld [vmem:[%s5 + $0xc8] sm:$0xff]
  %v1336 = vld [vmem:[%s5 + $0xd0] sm:$0xff]
  %v1337 = vld [vmem:[%s5 + $0xd8] sm:$0xff]
  %v1338 = vld [vmem:[%s5 + $0xe0] sm:$0xff]
  %v1339 = vld [vmem:[%s5 + $0xe8] sm:$0xff]
  %v1340 = vld [vmem:[%s5 + $0xf0] sm:$0xff]
  %v1341 = vld [vmem:[%s5 + $0xf8] sm:$0xff]
  %v1342 = vld [vmem:[%s5 + $0x100] sm:$0xff]
  %v1343 = vld [vmem:[%s5 + $0x108] sm:$0xff]
  %v1344 = vld [vmem:[%s5 + $0x110] sm:$0xff]
  %v1345 = vld [vmem:[%s5 + $0x118] sm:$0xff]
  %v1346 = vld [vmem:[%s5 + $0x120] sm:$0xff]
  %v1347 = vld [vmem:[%s5 + $0x128] sm:$0xff]
  %v1348 = vld [vmem:[%s5 + $0x130] sm:$0xff]
  %v1349 = vld [vmem:[%s5 + $0x138] sm:$0xff]
  %v1350 = vld [vmem:[%s5 + $0x140] sm:$0xff]
  %v1351 = vld [vmem:[%s5 + $0x148] sm:$0xff]
  %v1352 = vld [vmem:[%s5 + $0x150] sm:$0xff]
  %v1353 = vld [vmem:[%s5 + $0x158] sm:$0xff]
  %v1354 = vld [vmem:[%s5 + $0x160] sm:$0xff]
  %v1355 = vld [vmem:[%s5 + $0x168] sm:$0xff]
  %v1356 = vld [vmem:[%s5 + $0x170] sm:$0xff]
  %v1357 = vld [vmem:[%s5 + $0x178] sm:$0xff]
  %v1358 = vld [vmem:[%s5 + $0x180] sm:$0xff]
  %v1359 = vld [vmem:[%s5 + $0x188] sm:$0xff]
  %v1360 = vld [vmem:[%s5 + $0x190] sm:$0xff]
  %v1361 = vld [vmem:[%s5 + $0x198] sm:$0xff]
  %v1362 = vld [vmem:[%s5 + $0x1a0] sm:$0xff]
  %v1363 = vld [vmem:[%s5 + $0x1a8] sm:$0xff]
  %v1364 = vld [vmem:[%s5 + $0x1b0] sm:$0xff]
  %v1365 = vld [vmem:[%s5 + $0x1b8] sm:$0xff]
  %v1366 = vld [vmem:[%s5 + $0x1c0] sm:$0xff]
  %v1367 = vld [vmem:[%s5 + $0x1c8] sm:$0xff]
  %v1368 = vld [vmem:[%s5 + $0x1d0] sm:$0xff]
  %v1369 = vld [vmem:[%s5 + $0x1d8] sm:$0xff]
  %v1370 = vld [vmem:[%s5 + $0x1e0] sm:$0xff]
  %v1371 = vld [vmem:[%s5 + $0x1e8] sm:$0xff]
  %v1372 = vld [vmem:[%s5 + $0x1f0] sm:$0xff]
  %v1373 = vld [vmem:[%s5 + $0x1f8] sm:$0xff]
  %v1374 = vld [vmem:[%s5 + $0x200] sm:$0xff]
  %v1375 = vld [vmem:[%s5 + $0x208] sm:$0xff]
  %v1376 = vld [vmem:[%s5 + $0x210] sm:$0xff]
  %v1377 = vld [vmem:[%s5 + $0x218] sm:$0xff]
  %v1378 = vld [vmem:[%s5 + $0x220] sm:$0xff]
  %v1379 = vld [vmem:[%s5 + $0x228] sm:$0xff]
  %v1380 = vld [vmem:[%s5 + $0x230] sm:$0xff]
  %v1381 = vld [vmem:[%s5 + $0x238] sm:$0xff]
  %v1382 = vld [vmem:[%s5 + $0x240] sm:$0xff]
  %v1383 = vld [vmem:[%s5 + $0x248] sm:$0xff]
  %v1384 = vld [vmem:[%s5 + $0x250] sm:$0xff]
  %v1385 = vld [vmem:[%s5 + $0x258] sm:$0xff]
  %v1386 = vld [vmem:[%s5 + $0x260] sm:$0xff]
  %v1387 = vld [vmem:[%s5 + $0x268] sm:$0xff]
  %v1388 = vld [vmem:[%s5 + $0x270] sm:$0xff]
  %v1389 = vld [vmem:[%s5 + $0x278] sm:$0xff]
  %v1390 = vld [vmem:[%s5 + $0x280] sm:$0xff]
  %v1391 = vld [vmem:[%s5 + $0x288] sm:$0xff]
  %v1392 = vld [vmem:[%s5 + $0x290] sm:$0xff]
  %v1393 = vld [vmem:[%s5 + $0x298] sm:$0xff]
  %v1394 = vld [vmem:[%s5 + $0x2a0] sm:$0xff]
  %v1395 = vld [vmem:[%s5 + $0x2a8] sm:$0xff]
  %v1396 = vld [vmem:[%s5 + $0x2b0] sm:$0xff]
  %v1397 = vld [vmem:[%s5 + $0x2b8] sm:$0xff]
  %v1398 = vld [vmem:[%s5 + $0x2c0] sm:$0xff]
  %v1399 = vld [vmem:[%s5 + $0x2c8] sm:$0xff]
  %v1400 = vld [vmem:[%s5 + $0x2d0] sm:$0xff]
  %v1401 = vld [vmem:[%s5 + $0x2d8] sm:$0xff]
  %v1402 = vld [vmem:[%s5 + $0x2e0] sm:$0xff]
  %v1403 = vld [vmem:[%s5 + $0x2e8] sm:$0xff]
  %v1404 = vld [vmem:[%s5 + $0x2f0] sm:$0xff]
  %v1405 = vld [vmem:[%s5 + $0x2f8] sm:$0xff]
  %v1406 = vld [vmem:[%s5 + $0x300] sm:$0xff]
  %v1407 = vld [vmem:[%s5 + $0x308] sm:$0xff]
  %v1408 = vld [vmem:[%s5 + $0x310] sm:$0xff]
  %v1409 = vld [vmem:[%s5 + $0x318] sm:$0xff]
  %v1410 = vld [vmem:[%s5 + $0x320] sm:$0xff]
  %v1411 = vld [vmem:[%s5 + $0x328] sm:$0xff]
  %v1412 = vld [vmem:[%s5 + $0x330] sm:$0xff]
  %v1413 = vld [vmem:[%s5 + $0x338] sm:$0xff]
  %v1414 = vld [vmem:[%s5 + $0x340] sm:$0xff]
  %v1415 = vld [vmem:[%s5 + $0x348] sm:$0xff]
  %v1416 = vld [vmem:[%s5 + $0x350] sm:$0xff]
  %v1417 = vld [vmem:[%s5 + $0x358] sm:$0xff]
  %v1418 = vld [vmem:[%s5 + $0x360] sm:$0xff]
  %v1419 = vld [vmem:[%s5 + $0x368] sm:$0xff]
  %v1420 = vld [vmem:[%s5 + $0x370] sm:$0xff]
  %v1421 = vld [vmem:[%s5 + $0x378] sm:$0xff]
  %v1422 = vld [vmem:[%s5 + $0x380] sm:$0xff]
  %v1423 = vld [vmem:[%s5 + $0x388] sm:$0xff]
  %v1424 = vld [vmem:[%s5 + $0x390] sm:$0xff]
  %v1425 = vld [vmem:[%s5 + $0x398] sm:$0xff]
  %v1426 = vld [vmem:[%s5 + $0x3a0] sm:$0xff]
  %v1427 = vld [vmem:[%s5 + $0x3a8] sm:$0xff]
  %v1428 = vld [vmem:[%s5 + $0x3b0] sm:$0xff]
  %v1429 = vld [vmem:[%s5 + $0x3b8] sm:$0xff]
  %v1430 = vld [vmem:[%s5 + $0x3c0] sm:$0xff]
  %v1431 = vld [vmem:[%s5 + $0x3c8] sm:$0xff]
  %v1432 = vld [vmem:[%s5 + $0x3d0] sm:$0xff]
  %v1433 = vld [vmem:[%s5 + $0x3d8] sm:$0xff]
  %v1434 = vld [vmem:[%s5 + $0x3e0] sm:$0xff]
  %v1435 = vld [vmem:[%s5 + $0x3e8] sm:$0xff]
  %v1436 = vld [vmem:[%s5 + $0x3f0] sm:$0xff]
  %v1437 = vld [vmem:[%s5 + $0x3f8] sm:$0xff]
  %v1438 = vld [vmem:[%s6] sm:$0xf]
  %v1440 = vlaneseq
  %v1441 = vshrl.u32 %v1440, 7
  %v1442 = vsub.s32 0, %v1441
  %v1443 = vrot.slane %v1438, %v1442
  %v1444 = vlaneseq
  %v1445 = vshrl.u32 %v1444, 7
  %v1446 = vsub.s32 1, %v1445
  %v1447 = vrot.slane %v1438, %v1446
  %v1448 = vlaneseq
  %v1449 = vshrl.u32 %v1448, 7
  %v1450 = vsub.s32 2, %v1449
  %v1451 = vrot.slane %v1438, %v1450
  %v1452 = vlaneseq
  %v1453 = vshrl.u32 %v1452, 7
  %v1454 = vsub.s32 3, %v1453
  %v1455 = vrot.slane %v1438, %v1454
  %v1588 = vunpack.c.l.b16 %v1310
  %v1589 = vunpack.c.h.b16 %v1310
  %v1590 = vunpack.c.l.b16 %v1311
  %v1591 = vunpack.c.h.b16 %v1311
  %v1592 = vunpack.c.l.b16 %v1312
  %v1593 = vunpack.c.h.b16 %v1312
  %v1594 = vunpack.c.l.b16 %v1313
  %v1595 = vunpack.c.h.b16 %v1313
  %v1596 = vunpack.c.l.b16 %v1314
  %v1597 = vunpack.c.h.b16 %v1314
  %v1598 = vunpack.c.l.b16 %v1315
  %v1599 = vunpack.c.h.b16 %v1315
  %v1600 = vunpack.c.l.b16 %v1316
  %v1601 = vunpack.c.h.b16 %v1316
  %v1602 = vunpack.c.l.b16 %v1317
  %v1603 = vunpack.c.h.b16 %v1317
  %v1604 = vunpack.c.l.b16 %v1318
  %v1605 = vunpack.c.h.b16 %v1318
  %v1606 = vunpack.c.l.b16 %v1319
  %v1607 = vunpack.c.h.b16 %v1319
  %v1608 = vunpack.c.l.b16 %v1320
  %v1609 = vunpack.c.h.b16 %v1320
  %v1610 = vunpack.c.l.b16 %v1321
  %v1611 = vunpack.c.h.b16 %v1321
  %v1612 = vunpack.c.l.b16 %v1322
  %v1613 = vunpack.c.h.b16 %v1322
  %v1614 = vunpack.c.l.b16 %v1323
  %v1615 = vunpack.c.h.b16 %v1323
  %v1616 = vunpack.c.l.b16 %v1324
  %v1617 = vunpack.c.h.b16 %v1324
  %v1618 = vunpack.c.l.b16 %v1325
  %v1619 = vunpack.c.h.b16 %v1325
  %v1620 = vunpack.c.l.b16 %v1326
  %v1621 = vunpack.c.h.b16 %v1326
  %v1622 = vunpack.c.l.b16 %v1327
  %v1623 = vunpack.c.h.b16 %v1327
  %v1624 = vunpack.c.l.b16 %v1328
  %v1625 = vunpack.c.h.b16 %v1328
  %v1626 = vunpack.c.l.b16 %v1329
  %v1627 = vunpack.c.h.b16 %v1329
  %v1628 = vunpack.c.l.b16 %v1330
  %v1629 = vunpack.c.h.b16 %v1330
  %v1630 = vunpack.c.l.b16 %v1331
  %v1631 = vunpack.c.h.b16 %v1331
  %v1632 = vunpack.c.l.b16 %v1332
  %v1633 = vunpack.c.h.b16 %v1332
  %v1634 = vunpack.c.l.b16 %v1333
  %v1635 = vunpack.c.h.b16 %v1333
  %v1636 = vunpack.c.l.b16 %v1334
  %v1637 = vunpack.c.h.b16 %v1334
  %v1638 = vunpack.c.l.b16 %v1335
  %v1639 = vunpack.c.h.b16 %v1335
  %v1640 = vunpack.c.l.b16 %v1336
  %v1641 = vunpack.c.h.b16 %v1336
  %v1642 = vunpack.c.l.b16 %v1337
  %v1643 = vunpack.c.h.b16 %v1337
  %v1644 = vunpack.c.l.b16 %v1338
  %v1645 = vunpack.c.h.b16 %v1338
  %v1646 = vunpack.c.l.b16 %v1339
  %v1647 = vunpack.c.h.b16 %v1339
  %v1648 = vunpack.c.l.b16 %v1340
  %v1649 = vunpack.c.h.b16 %v1340
  %v1650 = vunpack.c.l.b16 %v1341
  %v1651 = vunpack.c.h.b16 %v1341
  %v1652 = vunpack.c.l.b16 %v1342
  %v1653 = vunpack.c.h.b16 %v1342
  %v1654 = vunpack.c.l.b16 %v1343
  %v1655 = vunpack.c.h.b16 %v1343
  %v1656 = vunpack.c.l.b16 %v1344
  %v1657 = vunpack.c.h.b16 %v1344
  %v1658 = vunpack.c.l.b16 %v1345
  %v1659 = vunpack.c.h.b16 %v1345
  %v1660 = vunpack.c.l.b16 %v1346
  %v1661 = vunpack.c.h.b16 %v1346
  %v1662 = vunpack.c.l.b16 %v1347
  %v1663 = vunpack.c.h.b16 %v1347
  %v1664 = vunpack.c.l.b16 %v1348
  %v1665 = vunpack.c.h.b16 %v1348
  %v1666 = vunpack.c.l.b16 %v1349
  %v1667 = vunpack.c.h.b16 %v1349
  %v1668 = vunpack.c.l.b16 %v1350
  %v1669 = vunpack.c.h.b16 %v1350
  %v1670 = vunpack.c.l.b16 %v1351
  %v1671 = vunpack.c.h.b16 %v1351
  %v1672 = vunpack.c.l.b16 %v1352
  %v1673 = vunpack.c.h.b16 %v1352
  %v1674 = vunpack.c.l.b16 %v1353
  %v1675 = vunpack.c.h.b16 %v1353
  %v1676 = vunpack.c.l.b16 %v1354
  %v1677 = vunpack.c.h.b16 %v1354
  %v1678 = vunpack.c.l.b16 %v1355
  %v1679 = vunpack.c.h.b16 %v1355
  %v1680 = vunpack.c.l.b16 %v1356
  %v1681 = vunpack.c.h.b16 %v1356
  %v1682 = vunpack.c.l.b16 %v1357
  %v1683 = vunpack.c.h.b16 %v1357
  %v1684 = vunpack.c.l.b16 %v1358
  %v1685 = vunpack.c.h.b16 %v1358
  %v1686 = vunpack.c.l.b16 %v1359
  %v1687 = vunpack.c.h.b16 %v1359
  %v1688 = vunpack.c.l.b16 %v1360
  %v1689 = vunpack.c.h.b16 %v1360
  %v1690 = vunpack.c.l.b16 %v1361
  %v1691 = vunpack.c.h.b16 %v1361
  %v1692 = vunpack.c.l.b16 %v1362
  %v1693 = vunpack.c.h.b16 %v1362
  %v1694 = vunpack.c.l.b16 %v1363
  %v1695 = vunpack.c.h.b16 %v1363
  %v1696 = vunpack.c.l.b16 %v1364
  %v1697 = vunpack.c.h.b16 %v1364
  %v1698 = vunpack.c.l.b16 %v1365
  %v1699 = vunpack.c.h.b16 %v1365
  %v1700 = vunpack.c.l.b16 %v1366
  %v1701 = vunpack.c.h.b16 %v1366
  %v1702 = vunpack.c.l.b16 %v1367
  %v1703 = vunpack.c.h.b16 %v1367
  %v1704 = vunpack.c.l.b16 %v1368
  %v1705 = vunpack.c.h.b16 %v1368
  %v1706 = vunpack.c.l.b16 %v1369
  %v1707 = vunpack.c.h.b16 %v1369
  %v1708 = vunpack.c.l.b16 %v1370
  %v1709 = vunpack.c.h.b16 %v1370
  %v1710 = vunpack.c.l.b16 %v1371
  %v1711 = vunpack.c.h.b16 %v1371
  %v1712 = vunpack.c.l.b16 %v1372
  %v1713 = vunpack.c.h.b16 %v1372
  %v1714 = vunpack.c.l.b16 %v1373
  %v1715 = vunpack.c.h.b16 %v1373
  %v1716 = vunpack.c.l.b16 %v1374
  %v1717 = vunpack.c.h.b16 %v1374
  %v1718 = vunpack.c.l.b16 %v1375
  %v1719 = vunpack.c.h.b16 %v1375
  %v1720 = vunpack.c.l.b16 %v1376
  %v1721 = vunpack.c.h.b16 %v1376
  %v1722 = vunpack.c.l.b16 %v1377
  %v1723 = vunpack.c.h.b16 %v1377
  %v1724 = vunpack.c.l.b16 %v1378
  %v1725 = vunpack.c.h.b16 %v1378
  %v1726 = vunpack.c.l.b16 %v1379
  %v1727 = vunpack.c.h.b16 %v1379
  %v1728 = vunpack.c.l.b16 %v1380
  %v1729 = vunpack.c.h.b16 %v1380
  %v1730 = vunpack.c.l.b16 %v1381
  %v1731 = vunpack.c.h.b16 %v1381
  %v1732 = vunpack.c.l.b16 %v1382
  %v1733 = vunpack.c.h.b16 %v1382
  %v1734 = vunpack.c.l.b16 %v1383
  %v1735 = vunpack.c.h.b16 %v1383
  %v1736 = vunpack.c.l.b16 %v1384
  %v1737 = vunpack.c.h.b16 %v1384
  %v1738 = vunpack.c.l.b16 %v1385
  %v1739 = vunpack.c.h.b16 %v1385
  %v1740 = vunpack.c.l.b16 %v1386
  %v1741 = vunpack.c.h.b16 %v1386
  %v1742 = vunpack.c.l.b16 %v1387
  %v1743 = vunpack.c.h.b16 %v1387
  %v1744 = vunpack.c.l.b16 %v1388
  %v1745 = vunpack.c.h.b16 %v1388
  %v1746 = vunpack.c.l.b16 %v1389
  %v1747 = vunpack.c.h.b16 %v1389
  %v1748 = vunpack.c.l.b16 %v1390
  %v1749 = vunpack.c.h.b16 %v1390
  %v1750 = vunpack.c.l.b16 %v1391
  %v1751 = vunpack.c.h.b16 %v1391
  %v1752 = vunpack.c.l.b16 %v1392
  %v1753 = vunpack.c.h.b16 %v1392
  %v1754 = vunpack.c.l.b16 %v1393
  %v1755 = vunpack.c.h.b16 %v1393
  %v1756 = vunpack.c.l.b16 %v1394
  %v1757 = vunpack.c.h.b16 %v1394
  %v1758 = vunpack.c.l.b16 %v1395
  %v1759 = vunpack.c.h.b16 %v1395
  %v1760 = vunpack.c.l.b16 %v1396
  %v1761 = vunpack.c.h.b16 %v1396
  %v1762 = vunpack.c.l.b16 %v1397
  %v1763 = vunpack.c.h.b16 %v1397
  %v1764 = vunpack.c.l.b16 %v1398
  %v1765 = vunpack.c.h.b16 %v1398
  %v1766 = vunpack.c.l.b16 %v1399
  %v1767 = vunpack.c.h.b16 %v1399
  %v1768 = vunpack.c.l.b16 %v1400
  %v1769 = vunpack.c.h.b16 %v1400
  %v1770 = vunpack.c.l.b16 %v1401
  %v1771 = vunpack.c.h.b16 %v1401
  %v1772 = vunpack.c.l.b16 %v1402
  %v1773 = vunpack.c.h.b16 %v1402
  %v1774 = vunpack.c.l.b16 %v1403
  %v1775 = vunpack.c.h.b16 %v1403
  %v1776 = vunpack.c.l.b16 %v1404
  %v1777 = vunpack.c.h.b16 %v1404
  %v1778 = vunpack.c.l.b16 %v1405
  %v1779 = vunpack.c.h.b16 %v1405
  %v1780 = vunpack.c.l.b16 %v1406
  %v1781 = vunpack.c.h.b16 %v1406
  %v1782 = vunpack.c.l.b16 %v1407
  %v1783 = vunpack.c.h.b16 %v1407
  %v1784 = vunpack.c.l.b16 %v1408
  %v1785 = vunpack.c.h.b16 %v1408
  %v1786 = vunpack.c.l.b16 %v1409
  %v1787 = vunpack.c.h.b16 %v1409
  %v1788 = vunpack.c.l.b16 %v1410
  %v1789 = vunpack.c.h.b16 %v1410
  %v1790 = vunpack.c.l.b16 %v1411
  %v1791 = vunpack.c.h.b16 %v1411
  %v1792 = vunpack.c.l.b16 %v1412
  %v1793 = vunpack.c.h.b16 %v1412
  %v1794 = vunpack.c.l.b16 %v1413
  %v1795 = vunpack.c.h.b16 %v1413
  %v1796 = vunpack.c.l.b16 %v1414
  %v1797 = vunpack.c.h.b16 %v1414
  %v1798 = vunpack.c.l.b16 %v1415
  %v1799 = vunpack.c.h.b16 %v1415
  %v1800 = vunpack.c.l.b16 %v1416
  %v1801 = vunpack.c.h.b16 %v1416
  %v1802 = vunpack.c.l.b16 %v1417
  %v1803 = vunpack.c.h.b16 %v1417
  %v1804 = vunpack.c.l.b16 %v1418
  %v1805 = vunpack.c.h.b16 %v1418
  %v1806 = vunpack.c.l.b16 %v1419
  %v1807 = vunpack.c.h.b16 %v1419
  %v1808 = vunpack.c.l.b16 %v1420
  %v1809 = vunpack.c.h.b16 %v1420
  %v1810 = vunpack.c.l.b16 %v1421
  %v1811 = vunpack.c.h.b16 %v1421
  %v1812 = vunpack.c.l.b16 %v1422
  %v1813 = vunpack.c.h.b16 %v1422
  %v1814 = vunpack.c.l.b16 %v1423
  %v1815 = vunpack.c.h.b16 %v1423
  %v1816 = vunpack.c.l.b16 %v1424
  %v1817 = vunpack.c.h.b16 %v1424
  %v1818 = vunpack.c.l.b16 %v1425
  %v1819 = vunpack.c.h.b16 %v1425
  %v1820 = vunpack.c.l.b16 %v1426
  %v1821 = vunpack.c.h.b16 %v1426
  %v1822 = vunpack.c.l.b16 %v1427
  %v1823 = vunpack.c.h.b16 %v1427
  %v1824 = vunpack.c.l.b16 %v1428
  %v1825 = vunpack.c.h.b16 %v1428
  %v1826 = vunpack.c.l.b16 %v1429
  %v1827 = vunpack.c.h.b16 %v1429
  %v1828 = vunpack.c.l.b16 %v1430
  %v1829 = vunpack.c.h.b16 %v1430
  %v1830 = vunpack.c.l.b16 %v1431
  %v1831 = vunpack.c.h.b16 %v1431
  %v1832 = vunpack.c.l.b16 %v1432
  %v1833 = vunpack.c.h.b16 %v1432
  %v1834 = vunpack.c.l.b16 %v1433
  %v1835 = vunpack.c.h.b16 %v1433
  %v1836 = vunpack.c.l.b16 %v1434
  %v1837 = vunpack.c.h.b16 %v1434
  %v1838 = vunpack.c.l.b16 %v1435
  %v1839 = vunpack.c.h.b16 %v1435
  %v1840 = vunpack.c.l.b16 %v1436
  %v1841 = vunpack.c.h.b16 %v1436
  %v1842 = vunpack.c.l.b16 %v1437
  %v1843 = vunpack.c.h.b16 %v1437
  %v1844 = vpack.c.b16 %v1592, %v1588
  %v1845 = vpack.c.b16 %v1593, %v1589
  %v1846 = vpack.c.b16 %v1594, %v1590
  %v1847 = vpack.c.b16 %v1595, %v1591
  %v1848 = vpack.c.b16 %v1600, %v1596
  %v1849 = vpack.c.b16 %v1601, %v1597
  %v1850 = vpack.c.b16 %v1602, %v1598
  %v1851 = vpack.c.b16 %v1603, %v1599
  %v1852 = vpack.c.b16 %v1608, %v1604
  %v1853 = vpack.c.b16 %v1609, %v1605
  %v1854 = vpack.c.b16 %v1610, %v1606
  %v1855 = vpack.c.b16 %v1611, %v1607
  %v1856 = vpack.c.b16 %v1616, %v1612
  %v1857 = vpack.c.b16 %v1617, %v1613
  %v1858 = vpack.c.b16 %v1618, %v1614
  %v1859 = vpack.c.b16 %v1619, %v1615
  %v1860 = vpack.c.b16 %v1624, %v1620
  %v1861 = vpack.c.b16 %v1625, %v1621
  %v1862 = vpack.c.b16 %v1626, %v1622
  %v1863 = vpack.c.b16 %v1627, %v1623
  %v1864 = vpack.c.b16 %v1632, %v1628
  %v1865 = vpack.c.b16 %v1633, %v1629
  %v1866 = vpack.c.b16 %v1634, %v1630
  %v1867 = vpack.c.b16 %v1635, %v1631
  %v1868 = vpack.c.b16 %v1640, %v1636
  %v1869 = vpack.c.b16 %v1641, %v1637
  %v1870 = vpack.c.b16 %v1642, %v1638
  %v1871 = vpack.c.b16 %v1643, %v1639
  %v1872 = vpack.c.b16 %v1648, %v1644
  %v1873 = vpack.c.b16 %v1649, %v1645
  %v1874 = vpack.c.b16 %v1650, %v1646
  %v1875 = vpack.c.b16 %v1651, %v1647
  %v1876 = vpack.c.b16 %v1656, %v1652
  %v1877 = vpack.c.b16 %v1657, %v1653
  %v1878 = vpack.c.b16 %v1658, %v1654
  %v1879 = vpack.c.b16 %v1659, %v1655
  %v1880 = vpack.c.b16 %v1664, %v1660
  %v1881 = vpack.c.b16 %v1665, %v1661
  %v1882 = vpack.c.b16 %v1666, %v1662
  %v1883 = vpack.c.b16 %v1667, %v1663
  %v1884 = vpack.c.b16 %v1672, %v1668
  %v1885 = vpack.c.b16 %v1673, %v1669
  %v1886 = vpack.c.b16 %v1674, %v1670
  %v1887 = vpack.c.b16 %v1675, %v1671
  %v1888 = vpack.c.b16 %v1680, %v1676
  %v1889 = vpack.c.b16 %v1681, %v1677
  %v1890 = vpack.c.b16 %v1682, %v1678
  %v1891 = vpack.c.b16 %v1683, %v1679
  %v1892 = vpack.c.b16 %v1688, %v1684
  %v1893 = vpack.c.b16 %v1689, %v1685
  %v1894 = vpack.c.b16 %v1690, %v1686
  %v1895 = vpack.c.b16 %v1691, %v1687
  %v1896 = vpack.c.b16 %v1696, %v1692
  %v1897 = vpack.c.b16 %v1697, %v1693
  %v1898 = vpack.c.b16 %v1698, %v1694
  %v1899 = vpack.c.b16 %v1699, %v1695
  %v1900 = vpack.c.b16 %v1704, %v1700
  %v1901 = vpack.c.b16 %v1705, %v1701
  %v1902 = vpack.c.b16 %v1706, %v1702
  %v1903 = vpack.c.b16 %v1707, %v1703
  %v1904 = vpack.c.b16 %v1712, %v1708
  %v1905 = vpack.c.b16 %v1713, %v1709
  %v1906 = vpack.c.b16 %v1714, %v1710
  %v1907 = vpack.c.b16 %v1715, %v1711
  %v1908 = vpack.c.b16 %v1720, %v1716
  %v1909 = vpack.c.b16 %v1721, %v1717
  %v1910 = vpack.c.b16 %v1722, %v1718
  %v1911 = vpack.c.b16 %v1723, %v1719
  %v1912 = vpack.c.b16 %v1728, %v1724
  %v1913 = vpack.c.b16 %v1729, %v1725
  %v1914 = vpack.c.b16 %v1730, %v1726
  %v1915 = vpack.c.b16 %v1731, %v1727
  %v1916 = vpack.c.b16 %v1736, %v1732
  %v1917 = vpack.c.b16 %v1737, %v1733
  %v1918 = vpack.c.b16 %v1738, %v1734
  %v1919 = vpack.c.b16 %v1739, %v1735
  %v1920 = vpack.c.b16 %v1744, %v1740
  %v1921 = vpack.c.b16 %v1745, %v1741
  %v1922 = vpack.c.b16 %v1746, %v1742
  %v1923 = vpack.c.b16 %v1747, %v1743
  %v1924 = vpack.c.b16 %v1752, %v1748
  %v1925 = vpack.c.b16 %v1753, %v1749
  %v1926 = vpack.c.b16 %v1754, %v1750
  %v1927 = vpack.c.b16 %v1755, %v1751
  %v1928 = vpack.c.b16 %v1760, %v1756
  %v1929 = vpack.c.b16 %v1761, %v1757
  %v1930 = vpack.c.b16 %v1762, %v1758
  %v1931 = vpack.c.b16 %v1763, %v1759
  %v1932 = vpack.c.b16 %v1768, %v1764
  %v1933 = vpack.c.b16 %v1769, %v1765
  %v1934 = vpack.c.b16 %v1770, %v1766
  %v1935 = vpack.c.b16 %v1771, %v1767
  %v1936 = vpack.c.b16 %v1776, %v1772
  %v1937 = vpack.c.b16 %v1777, %v1773
  %v1938 = vpack.c.b16 %v1778, %v1774
  %v1939 = vpack.c.b16 %v1779, %v1775
  %v1940 = vpack.c.b16 %v1784, %v1780
  %v1941 = vpack.c.b16 %v1785, %v1781
  %v1942 = vpack.c.b16 %v1786, %v1782
  %v1943 = vpack.c.b16 %v1787, %v1783
  %v1944 = vpack.c.b16 %v1792, %v1788
  %v1945 = vpack.c.b16 %v1793, %v1789
  %v1946 = vpack.c.b16 %v1794, %v1790
  %v1947 = vpack.c.b16 %v1795, %v1791
  %v1948 = vpack.c.b16 %v1800, %v1796
  %v1949 = vpack.c.b16 %v1801, %v1797
  %v1950 = vpack.c.b16 %v1802, %v1798
  %v1951 = vpack.c.b16 %v1803, %v1799
  %v1952 = vpack.c.b16 %v1808, %v1804
  %v1953 = vpack.c.b16 %v1809, %v1805
  %v1954 = vpack.c.b16 %v1810, %v1806
  %v1955 = vpack.c.b16 %v1811, %v1807
  %v1956 = vpack.c.b16 %v1816, %v1812
  %v1957 = vpack.c.b16 %v1817, %v1813
  %v1958 = vpack.c.b16 %v1818, %v1814
  %v1959 = vpack.c.b16 %v1819, %v1815
  %v1960 = vpack.c.b16 %v1824, %v1820
  %v1961 = vpack.c.b16 %v1825, %v1821
  %v1962 = vpack.c.b16 %v1826, %v1822
  %v1963 = vpack.c.b16 %v1827, %v1823
  %v1964 = vpack.c.b16 %v1832, %v1828
  %v1965 = vpack.c.b16 %v1833, %v1829
  %v1966 = vpack.c.b16 %v1834, %v1830
  %v1967 = vpack.c.b16 %v1835, %v1831
  %v1968 = vpack.c.b16 %v1840, %v1836
  %v1969 = vpack.c.b16 %v1841, %v1837
  %v1970 = vpack.c.b16 %v1842, %v1838
  %v1971 = vpack.c.b16 %v1843, %v1839
  %2100 = vmatprep.subr.bf16.mxu0 %v1845
  %2101 = vmatpush1.bf16.msra.mxu0 %v1844
  %2102 = vmatprep.subr.bf16.mxu0 %v1849
  %2103 = vmatpush1.bf16.msra.mxu0 %v1848
  %2104 = vmatprep.subr.bf16.mxu0 %v1853
  %2105 = vmatpush1.bf16.msra.mxu0 %v1852
  %2106 = vmatprep.subr.bf16.mxu0 %v1857
  %2107 = vmatpush1.bf16.msra.mxu0 %v1856
  %2108 = vmatprep.subr.bf16.mxu0 %v1861
  %2109 = vmatpush1.bf16.msra.mxu0 %v1860
  %2110 = vmatprep.subr.bf16.mxu0 %v1865
  %2111 = vmatpush1.bf16.msra.mxu0 %v1864
  %2112 = vmatprep.subr.bf16.mxu0 %v1869
  %2113 = vmatpush1.bf16.msra.mxu0 %v1868
  %2114 = vmatprep.subr.bf16.mxu0 %v1873
  %2115 = vmatpush1.bf16.msra.mxu0 %v1872
  %2116 = vmatprep.subr.bf16.mxu0 %v1877
  %2117 = vmatpush1.bf16.msra.mxu0 %v1876
  %2118 = vmatprep.subr.bf16.mxu0 %v1881
  %2119 = vmatpush1.bf16.msra.mxu0 %v1880
  %2120 = vmatprep.subr.bf16.mxu0 %v1885
  %2121 = vmatpush1.bf16.msra.mxu0 %v1884
  %2122 = vmatprep.subr.bf16.mxu0 %v1889
  %2123 = vmatpush1.bf16.msra.mxu0 %v1888
  %2124 = vmatprep.subr.bf16.mxu0 %v1893
  %2125 = vmatpush1.bf16.msra.mxu0 %v1892
  %2126 = vmatprep.subr.bf16.mxu0 %v1897
  %2127 = vmatpush1.bf16.msra.mxu0 %v1896
  %2128 = vmatprep.subr.bf16.mxu0 %v1901
  %2129 = vmatpush1.bf16.msra.mxu0 %v1900
  %2130 = vmatprep.subr.bf16.mxu0 %v1905
  %2131 = vmatpush1.bf16.msra.mxu0 %v1904
  %2132 = vmatprep.mubr.bf16.mxu0 %v1307
  %2133 = vmatmul.mubr.bf16.gmra.mrb[0].mxu0 %v1306
  %v2134 = vpop.f32.mrb[0].mxu0
  %v2135 = vadd.f32 %v1443, %v2134
  %v2136 = vpop.f32.mrb[0].mxu0
  %v2137 = vadd.f32 %v1447, %v2136
  %v2138 = vpop.f32.mrb[0].mxu0
  %v2139 = vpop.f32.mrb[0].mxu0
  %2140 = vdwg.mxu0
  %2141 = vmatprep.subr.bf16.mxu0 %v1909
  %2142 = vmatpush1.bf16.msra.mxu0 %v1908
  %2143 = vmatprep.subr.bf16.mxu0 %v1913
  %2144 = vmatpush1.bf16.msra.mxu0 %v1912
  %2145 = vmatprep.subr.bf16.mxu0 %v1917
  %2146 = vmatpush1.bf16.msra.mxu0 %v1916
  %2147 = vmatprep.subr.bf16.mxu0 %v1921
  %2148 = vmatpush1.bf16.msra.mxu0 %v1920
  %2149 = vmatprep.subr.bf16.mxu0 %v1925
  %2150 = vmatpush1.bf16.msra.mxu0 %v1924
  %2151 = vmatprep.subr.bf16.mxu0 %v1929
  %2152 = vmatpush1.bf16.msra.mxu0 %v1928
  %2153 = vmatprep.subr.bf16.mxu0 %v1933
  %2154 = vmatpush1.bf16.msra.mxu0 %v1932
  %2155 = vmatprep.subr.bf16.mxu0 %v1937
  %2156 = vmatpush1.bf16.msra.mxu0 %v1936
  %2157 = vmatprep.subr.bf16.mxu0 %v1941
  %2158 = vmatpush1.bf16.msra.mxu0 %v1940
  %2159 = vmatprep.subr.bf16.mxu0 %v1945
  %2160 = vmatpush1.bf16.msra.mxu0 %v1944
  %2161 = vmatprep.subr.bf16.mxu0 %v1949
  %2162 = vmatpush1.bf16.msra.mxu0 %v1948
  %2163 = vmatprep.subr.bf16.mxu0 %v1953
  %2164 = vmatpush1.bf16.msra.mxu0 %v1952
  %2165 = vmatprep.subr.bf16.mxu0 %v1957
  %2166 = vmatpush1.bf16.msra.mxu0 %v1956
  %2167 = vmatprep.subr.bf16.mxu0 %v1961
  %2168 = vmatpush1.bf16.msra.mxu0 %v1960
  %2169 = vmatprep.subr.bf16.mxu0 %v1965
  %2170 = vmatpush1.bf16.msra.mxu0 %v1964
  %2171 = vmatprep.subr.bf16.mxu0 %v1969
  %2172 = vmatpush1.bf16.msra.mxu0 %v1968
  %2173 = vmatprep.mubr.bf16.mxu0 %v1309
  %2174 = vmatmul.mubr.bf16.gmra.mrb[0].mxu0 %v1308
  %v2175 = vpop.f32.mrb[0].mxu0
  %v2176 = vadd.f32 %v2135, %v2175
  %v2177 = vpop.f32.mrb[0].mxu0
  %v2178 = vadd.f32 %v2137, %v2177
  %v2179 = vpop.f32.mrb[0].mxu0
  %v2180 = vpop.f32.mrb[0].mxu0
  %2181 = vdwg.mxu0
  %2182 = vmatprep.subr.bf16.mxu0 %v1847
  %2183 = vmatpush1.bf16.msra.mxu0 %v1846
  %2184 = vmatprep.subr.bf16.mxu0 %v1851
  %2185 = vmatpush1.bf16.msra.mxu0 %v1850
  %2186 = vmatprep.subr.bf16.mxu0 %v1855
  %2187 = vmatpush1.bf16.msra.mxu0 %v1854
  %2188 = vmatprep.subr.bf16.mxu0 %v1859
  %2189 = vmatpush1.bf16.msra.mxu0 %v1858
  %2190 = vmatprep.subr.bf16.mxu0 %v1863
  %2191 = vmatpush1.bf16.msra.mxu0 %v1862
  %2192 = vmatprep.subr.bf16.mxu0 %v1867
  %2193 = vmatpush1.bf16.msra.mxu0 %v1866
  %2194 = vmatprep.subr.bf16.mxu0 %v1871
  %2195 = vmatpush1.bf16.msra.mxu0 %v1870
  %2196 = vmatprep.subr.bf16.mxu0 %v1875
  %2197 = vmatpush1.bf16.msra.mxu0 %v1874
  %2198 = vmatprep.subr.bf16.mxu0 %v1879
  %2199 = vmatpush1.bf16.msra.mxu0 %v1878
  %2200 = vmatprep.subr.bf16.mxu0 %v1883
  %2201 = vmatpush1.bf16.msra.mxu0 %v1882
  %2202 = vmatprep.subr.bf16.mxu0 %v1887
  %2203 = vmatpush1.bf16.msra.mxu0 %v1886
  %2204 = vmatprep.subr.bf16.mxu0 %v1891
  %2205 = vmatpush1.bf16.msra.mxu0 %v1890
  %2206 = vmatprep.subr.bf16.mxu0 %v1895
  %2207 = vmatpush1.bf16.msra.mxu0 %v1894
  %2208 = vmatprep.subr.bf16.mxu0 %v1899
  %2209 = vmatpush1.bf16.msra.mxu0 %v1898
  %2210 = vmatprep.subr.bf16.mxu0 %v1903
  %2211 = vmatpush1.bf16.msra.mxu0 %v1902
  %2212 = vmatprep.subr.bf16.mxu0 %v1907
  %2213 = vmatpush1.bf16.msra.mxu0 %v1906
  %2214 = vmatprep.mubr.bf16.mxu0 %v1307
  %2215 = vmatmul.mubr.bf16.gmra.mrb[0].mxu0 %v1306
  %v2216 = vpop.f32.mrb[0].mxu0
  %v2217 = vadd.f32 %v1451, %v2216
  %v2218 = vpop.f32.mrb[0].mxu0
  %v2219 = vadd.f32 %v1455, %v2218
  %v2220 = vpop.f32.mrb[0].mxu0
  %v2221 = vpop.f32.mrb[0].mxu0
  %2222 = vdwg.mxu0
  %2223 = vmatprep.subr.bf16.mxu0 %v1911
  %2224 = vmatpush1.bf16.msra.mxu0 %v1910
  %2225 = vmatprep.subr.bf16.mxu0 %v1915
  %2226 = vmatpush1.bf16.msra.mxu0 %v1914
  %2227 = vmatprep.subr.bf16.mxu0 %v1919
  %2228 = vmatpush1.bf16.msra.mxu0 %v1918
  %2229 = vmatprep.subr.bf16.mxu0 %v1923
  %2230 = vmatpush1.bf16.msra.mxu0 %v1922
  %2231 = vmatprep.subr.bf16.mxu0 %v1927
  %2232 = vmatpush1.bf16.msra.mxu0 %v1926
  %2233 = vmatprep.subr.bf16.mxu0 %v1931
  %2234 = vmatpush1.bf16.msra.mxu0 %v1930
  %2235 = vmatprep.subr.bf16.mxu0 %v1935
  %2236 = vmatpush1.bf16.msra.mxu0 %v1934
  %2237 = vmatprep.subr.bf16.mxu0 %v1939
  %2238 = vmatpush1.bf16.msra.mxu0 %v1938
  %2239 = vmatprep.subr.bf16.mxu0 %v1943
  %2240 = vmatpush1.bf16.msra.mxu0 %v1942
  %2241 = vmatprep.subr.bf16.mxu0 %v1947
  %2242 = vmatpush1.bf16.msra.mxu0 %v1946
  %2243 = vmatprep.subr.bf16.mxu0 %v1951
  %2244 = vmatpush1.bf16.msra.mxu0 %v1950
  %2245 = vmatprep.subr.bf16.mxu0 %v1955
  %2246 = vmatpush1.bf16.msra.mxu0 %v1954
  %2247 = vmatprep.subr.bf16.mxu0 %v1959
  %2248 = vmatpush1.bf16.msra.mxu0 %v1958
  %2249 = vmatprep.subr.bf16.mxu0 %v1963
  %2250 = vmatpush1.bf16.msra.mxu0 %v1962
  %2251 = vmatprep.subr.bf16.mxu0 %v1967
  %2252 = vmatpush1.bf16.msra.mxu0 %v1966
  %2253 = vmatprep.subr.bf16.mxu0 %v1971
  %2254 = vmatpush1.bf16.msra.mxu0 %v1970
  %2255 = vmatprep.mubr.bf16.mxu0 %v1309
  %2256 = vmatmul.mubr.bf16.gmra.mrb[0].mxu0 %v1308
  %v2257 = vpop.f32.mrb[0].mxu0
  %v2258 = vadd.f32 %v2217, %v2257
  %v2259 = vpop.f32.mrb[0].mxu0
  %v2260 = vadd.f32 %v2219, %v2259
  %v2261 = vpop.f32.mrb[0].mxu0
  %v2262 = vpop.f32.mrb[0].mxu0
  %2263 = vdwg.mxu0
  %v2264 = vld [vmem:[%s7] sm:$0xf]
  %v2265 = vld [vmem:[%s8] sm:$0xf]
  %v2266 = vsel %vm103, %v2176, 0.0
  %v2267 = vsel %vm103, %v2178, 0.0
  %v2268 = vadd.f32 %v2266, %v2267
  %v2269 = vsel %vm103, %v2258, 0.0
  %v2270 = vadd.f32 %v2268, %v2269
  %v2271 = vsel %vm103, %v2260, 0.0
  %v2272 = vadd.f32 %v2270, %v2271
  %2273 = vadd.xlane.f32.xlu0 %v2272
  %v2274 = vpop.xlane.xlu0 %2273
  %v2275 = vmul.f32 %v2274, %v188
  %v2276 = vsub.f32 %v2176, %v2275
  %v2277 = vsub.f32 %v2178, %v2275
  %v2278 = vsub.f32 %v2258, %v2275
  %v2279 = vsub.f32 %v2260, %v2275
  %v2280 = vmul.f32 %v2276, %v2276
  %v2281 = vmul.f32 %v2277, %v2277
  %v2282 = vmul.f32 %v2278, %v2278
  %v2283 = vmul.f32 %v2279, %v2279
  %v2284 = vsel %vm103, %v2280, 0.0
  %v2285 = vsel %vm103, %v2281, 0.0
  %v2286 = vadd.f32 %v2284, %v2285
  %v2287 = vsel %vm103, %v2282, 0.0
  %v2288 = vadd.f32 %v2286, %v2287
  %v2289 = vsel %vm103, %v2283, 0.0
  %v2290 = vadd.f32 %v2288, %v2289
  %2291 = vadd.xlane.f32.xlu0 %v2290
  %v2292 = vpop.xlane.xlu0 %2291
  %v2293 = vmul.f32 %v2292, %v188
  %v2294 = vadd.f32 %v2293, 1e-05
  %v2295 = vrsqrt.pop %v2294
  %v2296 = vmul.f32 %v2276, %v2295
  %v2297 = vmul.f32 %v2277, %v2295
  %v2298 = vmul.f32 %v2278, %v2295
  %v2299 = vmul.f32 %v2279, %v2295
  %v2301 = vlaneseq
  %v2302 = vshrl.u32 %v2301, 7
  %v2303 = vsub.s32 0, %v2302
  %v2304 = vrot.slane %v2264, %v2303
  %v2305 = vlaneseq
  %v2306 = vshrl.u32 %v2305, 7
  %v2307 = vsub.s32 1, %v2306
  %v2308 = vrot.slane %v2264, %v2307
  %v2309 = vlaneseq
  %v2310 = vshrl.u32 %v2309, 7
  %v2311 = vsub.s32 2, %v2310
  %v2312 = vrot.slane %v2264, %v2311
  %v2313 = vlaneseq
  %v2314 = vshrl.u32 %v2313, 7
  %v2315 = vsub.s32 3, %v2314
  %v2316 = vrot.slane %v2264, %v2315
  %v2321 = vmul.f32 %v2296, %v2304
  %v2322 = vmul.f32 %v2297, %v2308
  %v2323 = vmul.f32 %v2298, %v2312
  %v2324 = vmul.f32 %v2299, %v2316
  %v2326 = vlaneseq
  %v2327 = vshrl.u32 %v2326, 7
  %v2328 = vsub.s32 0, %v2327
  %v2329 = vrot.slane %v2265, %v2328
  %v2330 = vlaneseq
  %v2331 = vshrl.u32 %v2330, 7
  %v2332 = vsub.s32 1, %v2331
  %v2333 = vrot.slane %v2265, %v2332
  %v2334 = vlaneseq
  %v2335 = vshrl.u32 %v2334, 7
  %v2336 = vsub.s32 2, %v2335
  %v2337 = vrot.slane %v2265, %v2336
  %v2338 = vlaneseq
  %v2339 = vshrl.u32 %v2338, 7
  %v2340 = vsub.s32 3, %v2339
  %v2341 = vrot.slane %v2265, %v2340
  %v2346 = vadd.f32 %v2321, %v2329
  %v2347 = vadd.f32 %v2322, %v2333
  %v2348 = vadd.f32 %v2323, %v2337
  %v2349 = vadd.f32 %v2324, %v2341
  %v2350 = vpack.c.bf16 %v2346, %v2346
  %v2351 = vpack.c.bf16 %v2347, %v2347
  %v2352 = vpack.c.bf16 %v2348, %v2348
  %v2353 = vpack.c.bf16 %v2349, %v2349
  %v2354 = vld [vmem:[%s9] sm:$0xff]
  %v2355 = vld [vmem:[%s9 + $0x8] sm:$0xff]
  %v2356 = vld [vmem:[%s9 + $0x10] sm:$0xff]
  %v2357 = vld [vmem:[%s9 + $0x18] sm:$0xff]
  %v2358 = vld [vmem:[%s9 + $0x20] sm:$0xff]
  %v2359 = vld [vmem:[%s9 + $0x28] sm:$0xff]
  %v2360 = vld [vmem:[%s9 + $0x30] sm:$0xff]
  %v2361 = vld [vmem:[%s9 + $0x38] sm:$0xff]
  %v2362 = vld [vmem:[%s9 + $0x40] sm:$0xff]
  %v2363 = vld [vmem:[%s9 + $0x48] sm:$0xff]
  %v2364 = vld [vmem:[%s9 + $0x50] sm:$0xff]
  %v2365 = vld [vmem:[%s9 + $0x58] sm:$0xff]
  %v2366 = vld [vmem:[%s9 + $0x60] sm:$0xff]
  %v2367 = vld [vmem:[%s9 + $0x68] sm:$0xff]
  %v2368 = vld [vmem:[%s9 + $0x70] sm:$0xff]
  %v2369 = vld [vmem:[%s9 + $0x78] sm:$0xff]
  %v2370 = vld [vmem:[%s9 + $0x80] sm:$0xff]
  %v2371 = vld [vmem:[%s9 + $0x88] sm:$0xff]
  %v2372 = vld [vmem:[%s9 + $0x90] sm:$0xff]
  %v2373 = vld [vmem:[%s9 + $0x98] sm:$0xff]
  %v2374 = vld [vmem:[%s9 + $0xa0] sm:$0xff]
  %v2375 = vld [vmem:[%s9 + $0xa8] sm:$0xff]
  %v2376 = vld [vmem:[%s9 + $0xb0] sm:$0xff]
  %v2377 = vld [vmem:[%s9 + $0xb8] sm:$0xff]
  %v2378 = vld [vmem:[%s9 + $0xc0] sm:$0xff]
  %v2379 = vld [vmem:[%s9 + $0xc8] sm:$0xff]
  %v2380 = vld [vmem:[%s9 + $0xd0] sm:$0xff]
  %v2381 = vld [vmem:[%s9 + $0xd8] sm:$0xff]
  %v2382 = vld [vmem:[%s9 + $0xe0] sm:$0xff]
  %v2383 = vld [vmem:[%s9 + $0xe8] sm:$0xff]
  %v2384 = vld [vmem:[%s9 + $0xf0] sm:$0xff]
  %v2385 = vld [vmem:[%s9 + $0xf8] sm:$0xff]
  %v2386 = vld [vmem:[%s9 + $0x100] sm:$0xff]
  %v2387 = vld [vmem:[%s9 + $0x108] sm:$0xff]
  %v2388 = vld [vmem:[%s9 + $0x110] sm:$0xff]
  %v2389 = vld [vmem:[%s9 + $0x118] sm:$0xff]
  %v2390 = vld [vmem:[%s9 + $0x120] sm:$0xff]
  %v2391 = vld [vmem:[%s9 + $0x128] sm:$0xff]
  %v2392 = vld [vmem:[%s9 + $0x130] sm:$0xff]
  %v2393 = vld [vmem:[%s9 + $0x138] sm:$0xff]
  %v2394 = vld [vmem:[%s9 + $0x140] sm:$0xff]
  %v2395 = vld [vmem:[%s9 + $0x148] sm:$0xff]
  %v2396 = vld [vmem:[%s9 + $0x150] sm:$0xff]
  %v2397 = vld [vmem:[%s9 + $0x158] sm:$0xff]
  %v2398 = vld [vmem:[%s9 + $0x160] sm:$0xff]
  %v2399 = vld [vmem:[%s9 + $0x168] sm:$0xff]
  %v2400 = vld [vmem:[%s9 + $0x170] sm:$0xff]
  %v2401 = vld [vmem:[%s9 + $0x178] sm:$0xff]
  %v2402 = vld [vmem:[%s9 + $0x180] sm:$0xff]
  %v2403 = vld [vmem:[%s9 + $0x188] sm:$0xff]
  %v2404 = vld [vmem:[%s9 + $0x190] sm:$0xff]
  %v2405 = vld [vmem:[%s9 + $0x198] sm:$0xff]
  %v2406 = vld [vmem:[%s9 + $0x1a0] sm:$0xff]
  %v2407 = vld [vmem:[%s9 + $0x1a8] sm:$0xff]
  %v2408 = vld [vmem:[%s9 + $0x1b0] sm:$0xff]
  %v2409 = vld [vmem:[%s9 + $0x1b8] sm:$0xff]
  %v2410 = vld [vmem:[%s9 + $0x1c0] sm:$0xff]
  %v2411 = vld [vmem:[%s9 + $0x1c8] sm:$0xff]
  %v2412 = vld [vmem:[%s9 + $0x1d0] sm:$0xff]
  %v2413 = vld [vmem:[%s9 + $0x1d8] sm:$0xff]
  %v2414 = vld [vmem:[%s9 + $0x1e0] sm:$0xff]
  %v2415 = vld [vmem:[%s9 + $0x1e8] sm:$0xff]
  %v2416 = vld [vmem:[%s9 + $0x1f0] sm:$0xff]
  %v2417 = vld [vmem:[%s9 + $0x1f8] sm:$0xff]
  %v2418 = vld [vmem:[%s9 + $0x200] sm:$0xff]
  %v2419 = vld [vmem:[%s9 + $0x208] sm:$0xff]
  %v2420 = vld [vmem:[%s9 + $0x210] sm:$0xff]
  %v2421 = vld [vmem:[%s9 + $0x218] sm:$0xff]
  %v2422 = vld [vmem:[%s9 + $0x220] sm:$0xff]
  %v2423 = vld [vmem:[%s9 + $0x228] sm:$0xff]
  %v2424 = vld [vmem:[%s9 + $0x230] sm:$0xff]
  %v2425 = vld [vmem:[%s9 + $0x238] sm:$0xff]
  %v2426 = vld [vmem:[%s9 + $0x240] sm:$0xff]
  %v2427 = vld [vmem:[%s9 + $0x248] sm:$0xff]
  %v2428 = vld [vmem:[%s9 + $0x250] sm:$0xff]
  %v2429 = vld [vmem:[%s9 + $0x258] sm:$0xff]
  %v2430 = vld [vmem:[%s9 + $0x260] sm:$0xff]
  %v2431 = vld [vmem:[%s9 + $0x268] sm:$0xff]
  %v2432 = vld [vmem:[%s9 + $0x270] sm:$0xff]
  %v2433 = vld [vmem:[%s9 + $0x278] sm:$0xff]
  %v2434 = vld [vmem:[%s9 + $0x280] sm:$0xff]
  %v2435 = vld [vmem:[%s9 + $0x288] sm:$0xff]
  %v2436 = vld [vmem:[%s9 + $0x290] sm:$0xff]
  %v2437 = vld [vmem:[%s9 + $0x298] sm:$0xff]
  %v2438 = vld [vmem:[%s9 + $0x2a0] sm:$0xff]
  %v2439 = vld [vmem:[%s9 + $0x2a8] sm:$0xff]
  %v2440 = vld [vmem:[%s9 + $0x2b0] sm:$0xff]
  %v2441 = vld [vmem:[%s9 + $0x2b8] sm:$0xff]
  %v2442 = vld [vmem:[%s9 + $0x2c0] sm:$0xff]
  %v2443 = vld [vmem:[%s9 + $0x2c8] sm:$0xff]
  %v2444 = vld [vmem:[%s9 + $0x2d0] sm:$0xff]
  %v2445 = vld [vmem:[%s9 + $0x2d8] sm:$0xff]
  %v2446 = vld [vmem:[%s9 + $0x2e0] sm:$0xff]
  %v2447 = vld [vmem:[%s9 + $0x2e8] sm:$0xff]
  %v2448 = vld [vmem:[%s9 + $0x2f0] sm:$0xff]
  %v2449 = vld [vmem:[%s9 + $0x2f8] sm:$0xff]
  %v2450 = vld [vmem:[%s9 + $0x300] sm:$0xff]
  %v2451 = vld [vmem:[%s9 + $0x308] sm:$0xff]
  %v2452 = vld [vmem:[%s9 + $0x310] sm:$0xff]
  %v2453 = vld [vmem:[%s9 + $0x318] sm:$0xff]
  %v2454 = vld [vmem:[%s9 + $0x320] sm:$0xff]
  %v2455 = vld [vmem:[%s9 + $0x328] sm:$0xff]
  %v2456 = vld [vmem:[%s9 + $0x330] sm:$0xff]
  %v2457 = vld [vmem:[%s9 + $0x338] sm:$0xff]
  %v2458 = vld [vmem:[%s9 + $0x340] sm:$0xff]
  %v2459 = vld [vmem:[%s9 + $0x348] sm:$0xff]
  %v2460 = vld [vmem:[%s9 + $0x350] sm:$0xff]
  %v2461 = vld [vmem:[%s9 + $0x358] sm:$0xff]
  %v2462 = vld [vmem:[%s9 + $0x360] sm:$0xff]
  %v2463 = vld [vmem:[%s9 + $0x368] sm:$0xff]
  %v2464 = vld [vmem:[%s9 + $0x370] sm:$0xff]
  %v2465 = vld [vmem:[%s9 + $0x378] sm:$0xff]
  %v2466 = vld [vmem:[%s9 + $0x380] sm:$0xff]
  %v2467 = vld [vmem:[%s9 + $0x388] sm:$0xff]
  %v2468 = vld [vmem:[%s9 + $0x390] sm:$0xff]
  %v2469 = vld [vmem:[%s9 + $0x398] sm:$0xff]
  %v2470 = vld [vmem:[%s9 + $0x3a0] sm:$0xff]
  %v2471 = vld [vmem:[%s9 + $0x3a8] sm:$0xff]
  %v2472 = vld [vmem:[%s9 + $0x3b0] sm:$0xff]
  %v2473 = vld [vmem:[%s9 + $0x3b8] sm:$0xff]
  %v2474 = vld [vmem:[%s9 + $0x3c0] sm:$0xff]
  %v2475 = vld [vmem:[%s9 + $0x3c8] sm:$0xff]
  %v2476 = vld [vmem:[%s9 + $0x3d0] sm:$0xff]
  %v2477 = vld [vmem:[%s9 + $0x3d8] sm:$0xff]
  %v2478 = vld [vmem:[%s9 + $0x3e0] sm:$0xff]
  %v2479 = vld [vmem:[%s9 + $0x3e8] sm:$0xff]
  %v2480 = vld [vmem:[%s9 + $0x3f0] sm:$0xff]
  %v2481 = vld [vmem:[%s9 + $0x3f8] sm:$0xff]
  %v2482 = vld [vmem:[%s10] sm:$0xf]
  %v2484 = vlaneseq
  %v2485 = vshrl.u32 %v2484, 7
  %v2486 = vsub.s32 0, %v2485
  %v2487 = vrot.slane %v2482, %v2486
  %v2488 = vlaneseq
  %v2489 = vshrl.u32 %v2488, 7
  %v2490 = vsub.s32 1, %v2489
  %v2491 = vrot.slane %v2482, %v2490
  %v2492 = vlaneseq
  %v2493 = vshrl.u32 %v2492, 7
  %v2494 = vsub.s32 2, %v2493
  %v2495 = vrot.slane %v2482, %v2494
  %v2496 = vlaneseq
  %v2497 = vshrl.u32 %v2496, 7
  %v2498 = vsub.s32 3, %v2497
  %v2499 = vrot.slane %v2482, %v2498
  %v2632 = vunpack.c.l.b16 %v2354
  %v2633 = vunpack.c.h.b16 %v2354
  %v2634 = vunpack.c.l.b16 %v2355
  %v2635 = vunpack.c.h.b16 %v2355
  %v2636 = vunpack.c.l.b16 %v2356
  %v2637 = vunpack.c.h.b16 %v2356
  %v2638 = vunpack.c.l.b16 %v2357
  %v2639 = vunpack.c.h.b16 %v2357
  %v2640 = vunpack.c.l.b16 %v2358
  %v2641 = vunpack.c.h.b16 %v2358
  %v2642 = vunpack.c.l.b16 %v2359
  %v2643 = vunpack.c.h.b16 %v2359
  %v2644 = vunpack.c.l.b16 %v2360
  %v2645 = vunpack.c.h.b16 %v2360
  %v2646 = vunpack.c.l.b16 %v2361
  %v2647 = vunpack.c.h.b16 %v2361
  %v2648 = vunpack.c.l.b16 %v2362
  %v2649 = vunpack.c.h.b16 %v2362
  %v2650 = vunpack.c.l.b16 %v2363
  %v2651 = vunpack.c.h.b16 %v2363
  %v2652 = vunpack.c.l.b16 %v2364
  %v2653 = vunpack.c.h.b16 %v2364
  %v2654 = vunpack.c.l.b16 %v2365
  %v2655 = vunpack.c.h.b16 %v2365
  %v2656 = vunpack.c.l.b16 %v2366
  %v2657 = vunpack.c.h.b16 %v2366
  %v2658 = vunpack.c.l.b16 %v2367
  %v2659 = vunpack.c.h.b16 %v2367
  %v2660 = vunpack.c.l.b16 %v2368
  %v2661 = vunpack.c.h.b16 %v2368
  %v2662 = vunpack.c.l.b16 %v2369
  %v2663 = vunpack.c.h.b16 %v2369
  %v2664 = vunpack.c.l.b16 %v2370
  %v2665 = vunpack.c.h.b16 %v2370
  %v2666 = vunpack.c.l.b16 %v2371
  %v2667 = vunpack.c.h.b16 %v2371
  %v2668 = vunpack.c.l.b16 %v2372
  %v2669 = vunpack.c.h.b16 %v2372
  %v2670 = vunpack.c.l.b16 %v2373
  %v2671 = vunpack.c.h.b16 %v2373
  %v2672 = vunpack.c.l.b16 %v2374
  %v2673 = vunpack.c.h.b16 %v2374
  %v2674 = vunpack.c.l.b16 %v2375
  %v2675 = vunpack.c.h.b16 %v2375
  %v2676 = vunpack.c.l.b16 %v2376
  %v2677 = vunpack.c.h.b16 %v2376
  %v2678 = vunpack.c.l.b16 %v2377
  %v2679 = vunpack.c.h.b16 %v2377
  %v2680 = vunpack.c.l.b16 %v2378
  %v2681 = vunpack.c.h.b16 %v2378
  %v2682 = vunpack.c.l.b16 %v2379
  %v2683 = vunpack.c.h.b16 %v2379
  %v2684 = vunpack.c.l.b16 %v2380
  %v2685 = vunpack.c.h.b16 %v2380
  %v2686 = vunpack.c.l.b16 %v2381
  %v2687 = vunpack.c.h.b16 %v2381
  %v2688 = vunpack.c.l.b16 %v2382
  %v2689 = vunpack.c.h.b16 %v2382
  %v2690 = vunpack.c.l.b16 %v2383
  %v2691 = vunpack.c.h.b16 %v2383
  %v2692 = vunpack.c.l.b16 %v2384
  %v2693 = vunpack.c.h.b16 %v2384
  %v2694 = vunpack.c.l.b16 %v2385
  %v2695 = vunpack.c.h.b16 %v2385
  %v2696 = vunpack.c.l.b16 %v2386
  %v2697 = vunpack.c.h.b16 %v2386
  %v2698 = vunpack.c.l.b16 %v2387
  %v2699 = vunpack.c.h.b16 %v2387
  %v2700 = vunpack.c.l.b16 %v2388
  %v2701 = vunpack.c.h.b16 %v2388
  %v2702 = vunpack.c.l.b16 %v2389
  %v2703 = vunpack.c.h.b16 %v2389
  %v2704 = vunpack.c.l.b16 %v2390
  %v2705 = vunpack.c.h.b16 %v2390
  %v2706 = vunpack.c.l.b16 %v2391
  %v2707 = vunpack.c.h.b16 %v2391
  %v2708 = vunpack.c.l.b16 %v2392
  %v2709 = vunpack.c.h.b16 %v2392
  %v2710 = vunpack.c.l.b16 %v2393
  %v2711 = vunpack.c.h.b16 %v2393
  %v2712 = vunpack.c.l.b16 %v2394
  %v2713 = vunpack.c.h.b16 %v2394
  %v2714 = vunpack.c.l.b16 %v2395
  %v2715 = vunpack.c.h.b16 %v2395
  %v2716 = vunpack.c.l.b16 %v2396
  %v2717 = vunpack.c.h.b16 %v2396
  %v2718 = vunpack.c.l.b16 %v2397
  %v2719 = vunpack.c.h.b16 %v2397
  %v2720 = vunpack.c.l.b16 %v2398
  %v2721 = vunpack.c.h.b16 %v2398
  %v2722 = vunpack.c.l.b16 %v2399
  %v2723 = vunpack.c.h.b16 %v2399
  %v2724 = vunpack.c.l.b16 %v2400
  %v2725 = vunpack.c.h.b16 %v2400
  %v2726 = vunpack.c.l.b16 %v2401
  %v2727 = vunpack.c.h.b16 %v2401
  %v2728 = vunpack.c.l.b16 %v2402
  %v2729 = vunpack.c.h.b16 %v2402
  %v2730 = vunpack.c.l.b16 %v2403
  %v2731 = vunpack.c.h.b16 %v2403
  %v2732 = vunpack.c.l.b16 %v2404
  %v2733 = vunpack.c.h.b16 %v2404
  %v2734 = vunpack.c.l.b16 %v2405
  %v2735 = vunpack.c.h.b16 %v2405
  %v2736 = vunpack.c.l.b16 %v2406
  %v2737 = vunpack.c.h.b16 %v2406
  %v2738 = vunpack.c.l.b16 %v2407
  %v2739 = vunpack.c.h.b16 %v2407
  %v2740 = vunpack.c.l.b16 %v2408
  %v2741 = vunpack.c.h.b16 %v2408
  %v2742 = vunpack.c.l.b16 %v2409
  %v2743 = vunpack.c.h.b16 %v2409
  %v2744 = vunpack.c.l.b16 %v2410
  %v2745 = vunpack.c.h.b16 %v2410
  %v2746 = vunpack.c.l.b16 %v2411
  %v2747 = vunpack.c.h.b16 %v2411
  %v2748 = vunpack.c.l.b16 %v2412
  %v2749 = vunpack.c.h.b16 %v2412
  %v2750 = vunpack.c.l.b16 %v2413
  %v2751 = vunpack.c.h.b16 %v2413
  %v2752 = vunpack.c.l.b16 %v2414
  %v2753 = vunpack.c.h.b16 %v2414
  %v2754 = vunpack.c.l.b16 %v2415
  %v2755 = vunpack.c.h.b16 %v2415
  %v2756 = vunpack.c.l.b16 %v2416
  %v2757 = vunpack.c.h.b16 %v2416
  %v2758 = vunpack.c.l.b16 %v2417
  %v2759 = vunpack.c.h.b16 %v2417
  %v2760 = vunpack.c.l.b16 %v2418
  %v2761 = vunpack.c.h.b16 %v2418
  %v2762 = vunpack.c.l.b16 %v2419
  %v2763 = vunpack.c.h.b16 %v2419
  %v2764 = vunpack.c.l.b16 %v2420
  %v2765 = vunpack.c.h.b16 %v2420
  %v2766 = vunpack.c.l.b16 %v2421
  %v2767 = vunpack.c.h.b16 %v2421
  %v2768 = vunpack.c.l.b16 %v2422
  %v2769 = vunpack.c.h.b16 %v2422
  %v2770 = vunpack.c.l.b16 %v2423
  %v2771 = vunpack.c.h.b16 %v2423
  %v2772 = vunpack.c.l.b16 %v2424
  %v2773 = vunpack.c.h.b16 %v2424
  %v2774 = vunpack.c.l.b16 %v2425
  %v2775 = vunpack.c.h.b16 %v2425
  %v2776 = vunpack.c.l.b16 %v2426
  %v2777 = vunpack.c.h.b16 %v2426
  %v2778 = vunpack.c.l.b16 %v2427
  %v2779 = vunpack.c.h.b16 %v2427
  %v2780 = vunpack.c.l.b16 %v2428
  %v2781 = vunpack.c.h.b16 %v2428
  %v2782 = vunpack.c.l.b16 %v2429
  %v2783 = vunpack.c.h.b16 %v2429
  %v2784 = vunpack.c.l.b16 %v2430
  %v2785 = vunpack.c.h.b16 %v2430
  %v2786 = vunpack.c.l.b16 %v2431
  %v2787 = vunpack.c.h.b16 %v2431
  %v2788 = vunpack.c.l.b16 %v2432
  %v2789 = vunpack.c.h.b16 %v2432
  %v2790 = vunpack.c.l.b16 %v2433
  %v2791 = vunpack.c.h.b16 %v2433
  %v2792 = vunpack.c.l.b16 %v2434
  %v2793 = vunpack.c.h.b16 %v2434
  %v2794 = vunpack.c.l.b16 %v2435
  %v2795 = vunpack.c.h.b16 %v2435
  %v2796 = vunpack.c.l.b16 %v2436
  %v2797 = vunpack.c.h.b16 %v2436
  %v2798 = vunpack.c.l.b16 %v2437
  %v2799 = vunpack.c.h.b16 %v2437
  %v2800 = vunpack.c.l.b16 %v2438
  %v2801 = vunpack.c.h.b16 %v2438
  %v2802 = vunpack.c.l.b16 %v2439
  %v2803 = vunpack.c.h.b16 %v2439
  %v2804 = vunpack.c.l.b16 %v2440
  %v2805 = vunpack.c.h.b16 %v2440
  %v2806 = vunpack.c.l.b16 %v2441
  %v2807 = vunpack.c.h.b16 %v2441
  %v2808 = vunpack.c.l.b16 %v2442
  %v2809 = vunpack.c.h.b16 %v2442
  %v2810 = vunpack.c.l.b16 %v2443
  %v2811 = vunpack.c.h.b16 %v2443
  %v2812 = vunpack.c.l.b16 %v2444
  %v2813 = vunpack.c.h.b16 %v2444
  %v2814 = vunpack.c.l.b16 %v2445
  %v2815 = vunpack.c.h.b16 %v2445
  %v2816 = vunpack.c.l.b16 %v2446
  %v2817 = vunpack.c.h.b16 %v2446
  %v2818 = vunpack.c.l.b16 %v2447
  %v2819 = vunpack.c.h.b16 %v2447
  %v2820 = vunpack.c.l.b16 %v2448
  %v2821 = vunpack.c.h.b16 %v2448
  %v2822 = vunpack.c.l.b16 %v2449
  %v2823 = vunpack.c.h.b16 %v2449
  %v2824 = vunpack.c.l.b16 %v2450
  %v2825 = vunpack.c.h.b16 %v2450
  %v2826 = vunpack.c.l.b16 %v2451
  %v2827 = vunpack.c.h.b16 %v2451
  %v2828 = vunpack.c.l.b16 %v2452
  %v2829 = vunpack.c.h.b16 %v2452
  %v2830 = vunpack.c.l.b16 %v2453
  %v2831 = vunpack.c.h.b16 %v2453
  %v2832 = vunpack.c.l.b16 %v2454
  %v2833 = vunpack.c.h.b16 %v2454
  %v2834 = vunpack.c.l.b16 %v2455
  %v2835 = vunpack.c.h.b16 %v2455
  %v2836 = vunpack.c.l.b16 %v2456
  %v2837 = vunpack.c.h.b16 %v2456
  %v2838 = vunpack.c.l.b16 %v2457
  %v2839 = vunpack.c.h.b16 %v2457
  %v2840 = vunpack.c.l.b16 %v2458
  %v2841 = vunpack.c.h.b16 %v2458
  %v2842 = vunpack.c.l.b16 %v2459
  %v2843 = vunpack.c.h.b16 %v2459
  %v2844 = vunpack.c.l.b16 %v2460
  %v2845 = vunpack.c.h.b16 %v2460
  %v2846 = vunpack.c.l.b16 %v2461
  %v2847 = vunpack.c.h.b16 %v2461
  %v2848 = vunpack.c.l.b16 %v2462
  %v2849 = vunpack.c.h.b16 %v2462
  %v2850 = vunpack.c.l.b16 %v2463
  %v2851 = vunpack.c.h.b16 %v2463
  %v2852 = vunpack.c.l.b16 %v2464
  %v2853 = vunpack.c.h.b16 %v2464
  %v2854 = vunpack.c.l.b16 %v2465
  %v2855 = vunpack.c.h.b16 %v2465
  %v2856 = vunpack.c.l.b16 %v2466
  %v2857 = vunpack.c.h.b16 %v2466
  %v2858 = vunpack.c.l.b16 %v2467
  %v2859 = vunpack.c.h.b16 %v2467
  %v2860 = vunpack.c.l.b16 %v2468
  %v2861 = vunpack.c.h.b16 %v2468
  %v2862 = vunpack.c.l.b16 %v2469
  %v2863 = vunpack.c.h.b16 %v2469
  %v2864 = vunpack.c.l.b16 %v2470
  %v2865 = vunpack.c.h.b16 %v2470
  %v2866 = vunpack.c.l.b16 %v2471
  %v2867 = vunpack.c.h.b16 %v2471
  %v2868 = vunpack.c.l.b16 %v2472
  %v2869 = vunpack.c.h.b16 %v2472
  %v2870 = vunpack.c.l.b16 %v2473
  %v2871 = vunpack.c.h.b16 %v2473
  %v2872 = vunpack.c.l.b16 %v2474
  %v2873 = vunpack.c.h.b16 %v2474
  %v2874 = vunpack.c.l.b16 %v2475
  %v2875 = vunpack.c.h.b16 %v2475
  %v2876 = vunpack.c.l.b16 %v2476
  %v2877 = vunpack.c.h.b16 %v2476
  %v2878 = vunpack.c.l.b16 %v2477
  %v2879 = vunpack.c.h.b16 %v2477
  %v2880 = vunpack.c.l.b16 %v2478
  %v2881 = vunpack.c.h.b16 %v2478
  %v2882 = vunpack.c.l.b16 %v2479
  %v2883 = vunpack.c.h.b16 %v2479
  %v2884 = vunpack.c.l.b16 %v2480
  %v2885 = vunpack.c.h.b16 %v2480
  %v2886 = vunpack.c.l.b16 %v2481
  %v2887 = vunpack.c.h.b16 %v2481
  %v2888 = vpack.c.b16 %v2636, %v2632
  %v2889 = vpack.c.b16 %v2637, %v2633
  %v2890 = vpack.c.b16 %v2638, %v2634
  %v2891 = vpack.c.b16 %v2639, %v2635
  %v2892 = vpack.c.b16 %v2644, %v2640
  %v2893 = vpack.c.b16 %v2645, %v2641
  %v2894 = vpack.c.b16 %v2646, %v2642
  %v2895 = vpack.c.b16 %v2647, %v2643
  %v2896 = vpack.c.b16 %v2652, %v2648
  %v2897 = vpack.c.b16 %v2653, %v2649
  %v2898 = vpack.c.b16 %v2654, %v2650
  %v2899 = vpack.c.b16 %v2655, %v2651
  %v2900 = vpack.c.b16 %v2660, %v2656
  %v2901 = vpack.c.b16 %v2661, %v2657
  %v2902 = vpack.c.b16 %v2662, %v2658
  %v2903 = vpack.c.b16 %v2663, %v2659
  %v2904 = vpack.c.b16 %v2668, %v2664
  %v2905 = vpack.c.b16 %v2669, %v2665
  %v2906 = vpack.c.b16 %v2670, %v2666
  %v2907 = vpack.c.b16 %v2671, %v2667
  %v2908 = vpack.c.b16 %v2676, %v2672
  %v2909 = vpack.c.b16 %v2677, %v2673
  %v2910 = vpack.c.b16 %v2678, %v2674
  %v2911 = vpack.c.b16 %v2679, %v2675
  %v2912 = vpack.c.b16 %v2684, %v2680
  %v2913 = vpack.c.b16 %v2685, %v2681
  %v2914 = vpack.c.b16 %v2686, %v2682
  %v2915 = vpack.c.b16 %v2687, %v2683
  %v2916 = vpack.c.b16 %v2692, %v2688
  %v2917 = vpack.c.b16 %v2693, %v2689
  %v2918 = vpack.c.b16 %v2694, %v2690
  %v2919 = vpack.c.b16 %v2695, %v2691
  %v2920 = vpack.c.b16 %v2700, %v2696
  %v2921 = vpack.c.b16 %v2701, %v2697
  %v2922 = vpack.c.b16 %v2702, %v2698
  %v2923 = vpack.c.b16 %v2703, %v2699
  %v2924 = vpack.c.b16 %v2708, %v2704
  %v2925 = vpack.c.b16 %v2709, %v2705
  %v2926 = vpack.c.b16 %v2710, %v2706
  %v2927 = vpack.c.b16 %v2711, %v2707
  %v2928 = vpack.c.b16 %v2716, %v2712
  %v2929 = vpack.c.b16 %v2717, %v2713
  %v2930 = vpack.c.b16 %v2718, %v2714
  %v2931 = vpack.c.b16 %v2719, %v2715
  %v2932 = vpack.c.b16 %v2724, %v2720
  %v2933 = vpack.c.b16 %v2725, %v2721
  %v2934 = vpack.c.b16 %v2726, %v2722
  %v2935 = vpack.c.b16 %v2727, %v2723
  %v2936 = vpack.c.b16 %v2732, %v2728
  %v2937 = vpack.c.b16 %v2733, %v2729
  %v2938 = vpack.c.b16 %v2734, %v2730
  %v2939 = vpack.c.b16 %v2735, %v2731
  %v2940 = vpack.c.b16 %v2740, %v2736
  %v2941 = vpack.c.b16 %v2741, %v2737
  %v2942 = vpack.c.b16 %v2742, %v2738
  %v2943 = vpack.c.b16 %v2743, %v2739
  %v2944 = vpack.c.b16 %v2748, %v2744
  %v2945 = vpack.c.b16 %v2749, %v2745
  %v2946 = vpack.c.b16 %v2750, %v2746
  %v2947 = vpack.c.b16 %v2751, %v2747
  %v2948 = vpack.c.b16 %v2756, %v2752
  %v2949 = vpack.c.b16 %v2757, %v2753
  %v2950 = vpack.c.b16 %v2758, %v2754
  %v2951 = vpack.c.b16 %v2759, %v2755
  %v2952 = vpack.c.b16 %v2764, %v2760
  %v2953 = vpack.c.b16 %v2765, %v2761
  %v2954 = vpack.c.b16 %v2766, %v2762
  %v2955 = vpack.c.b16 %v2767, %v2763
  %v2956 = vpack.c.b16 %v2772, %v2768
  %v2957 = vpack.c.b16 %v2773, %v2769
  %v2958 = vpack.c.b16 %v2774, %v2770
  %v2959 = vpack.c.b16 %v2775, %v2771
  %v2960 = vpack.c.b16 %v2780, %v2776
  %v2961 = vpack.c.b16 %v2781, %v2777
  %v2962 = vpack.c.b16 %v2782, %v2778
  %v2963 = vpack.c.b16 %v2783, %v2779
  %v2964 = vpack.c.b16 %v2788, %v2784
  %v2965 = vpack.c.b16 %v2789, %v2785
  %v2966 = vpack.c.b16 %v2790, %v2786
  %v2967 = vpack.c.b16 %v2791, %v2787
  %v2968 = vpack.c.b16 %v2796, %v2792
  %v2969 = vpack.c.b16 %v2797, %v2793
  %v2970 = vpack.c.b16 %v2798, %v2794
  %v2971 = vpack.c.b16 %v2799, %v2795
  %v2972 = vpack.c.b16 %v2804, %v2800
  %v2973 = vpack.c.b16 %v2805, %v2801
  %v2974 = vpack.c.b16 %v2806, %v2802
  %v2975 = vpack.c.b16 %v2807, %v2803
  %v2976 = vpack.c.b16 %v2812, %v2808
  %v2977 = vpack.c.b16 %v2813, %v2809
  %v2978 = vpack.c.b16 %v2814, %v2810
  %v2979 = vpack.c.b16 %v2815, %v2811
  %v2980 = vpack.c.b16 %v2820, %v2816
  %v2981 = vpack.c.b16 %v2821, %v2817
  %v2982 = vpack.c.b16 %v2822, %v2818
  %v2983 = vpack.c.b16 %v2823, %v2819
  %v2984 = vpack.c.b16 %v2828, %v2824
  %v2985 = vpack.c.b16 %v2829, %v2825
  %v2986 = vpack.c.b16 %v2830, %v2826
  %v2987 = vpack.c.b16 %v2831, %v2827
  %v2988 = vpack.c.b16 %v2836, %v2832
  %v2989 = vpack.c.b16 %v2837, %v2833
  %v2990 = vpack.c.b16 %v2838, %v2834
  %v2991 = vpack.c.b16 %v2839, %v2835
  %v2992 = vpack.c.b16 %v2844, %v2840
  %v2993 = vpack.c.b16 %v2845, %v2841
  %v2994 = vpack.c.b16 %v2846, %v2842
  %v2995 = vpack.c.b16 %v2847, %v2843
  %v2996 = vpack.c.b16 %v2852, %v2848
  %v2997 = vpack.c.b16 %v2853, %v2849
  %v2998 = vpack.c.b16 %v2854, %v2850
  %v2999 = vpack.c.b16 %v2855, %v2851
  %v3000 = vpack.c.b16 %v2860, %v2856
  %v3001 = vpack.c.b16 %v2861, %v2857
  %v3002 = vpack.c.b16 %v2862, %v2858
  %v3003 = vpack.c.b16 %v2863, %v2859
  %v3004 = vpack.c.b16 %v2868, %v2864
  %v3005 = vpack.c.b16 %v2869, %v2865
  %v3006 = vpack.c.b16 %v2870, %v2866
  %v3007 = vpack.c.b16 %v2871, %v2867
  %v3008 = vpack.c.b16 %v2876, %v2872
  %v3009 = vpack.c.b16 %v2877, %v2873
  %v3010 = vpack.c.b16 %v2878, %v2874
  %v3011 = vpack.c.b16 %v2879, %v2875
  %v3012 = vpack.c.b16 %v2884, %v2880
  %v3013 = vpack.c.b16 %v2885, %v2881
  %v3014 = vpack.c.b16 %v2886, %v2882
  %v3015 = vpack.c.b16 %v2887, %v2883
  %3144 = vmatprep.subr.bf16.mxu0 %v2889
  %3145 = vmatpush1.bf16.msra.mxu0 %v2888
  %3146 = vmatprep.subr.bf16.mxu0 %v2893
  %3147 = vmatpush1.bf16.msra.mxu0 %v2892
  %3148 = vmatprep.subr.bf16.mxu0 %v2897
  %3149 = vmatpush1.bf16.msra.mxu0 %v2896
  %3150 = vmatprep.subr.bf16.mxu0 %v2901
  %3151 = vmatpush1.bf16.msra.mxu0 %v2900
  %3152 = vmatprep.subr.bf16.mxu0 %v2905
  %3153 = vmatpush1.bf16.msra.mxu0 %v2904
  %3154 = vmatprep.subr.bf16.mxu0 %v2909
  %3155 = vmatpush1.bf16.msra.mxu0 %v2908
  %3156 = vmatprep.subr.bf16.mxu0 %v2913
  %3157 = vmatpush1.bf16.msra.mxu0 %v2912
  %3158 = vmatprep.subr.bf16.mxu0 %v2917
  %3159 = vmatpush1.bf16.msra.mxu0 %v2916
  %3160 = vmatprep.subr.bf16.mxu0 %v2921
  %3161 = vmatpush1.bf16.msra.mxu0 %v2920
  %3162 = vmatprep.subr.bf16.mxu0 %v2925
  %3163 = vmatpush1.bf16.msra.mxu0 %v2924
  %3164 = vmatprep.subr.bf16.mxu0 %v2929
  %3165 = vmatpush1.bf16.msra.mxu0 %v2928
  %3166 = vmatprep.subr.bf16.mxu0 %v2933
  %3167 = vmatpush1.bf16.msra.mxu0 %v2932
  %3168 = vmatprep.subr.bf16.mxu0 %v2937
  %3169 = vmatpush1.bf16.msra.mxu0 %v2936
  %3170 = vmatprep.subr.bf16.mxu0 %v2941
  %3171 = vmatpush1.bf16.msra.mxu0 %v2940
  %3172 = vmatprep.subr.bf16.mxu0 %v2945
  %3173 = vmatpush1.bf16.msra.mxu0 %v2944
  %3174 = vmatprep.subr.bf16.mxu0 %v2949
  %3175 = vmatpush1.bf16.msra.mxu0 %v2948
  %3176 = vmatprep.mubr.bf16.mxu0 %v2351
  %3177 = vmatmul.mubr.bf16.gmra.mrb[0].mxu0 %v2350
  %v3178 = vpop.f32.mrb[0].mxu0
  %v3179 = vadd.f32 %v2487, %v3178
  %v3180 = vpop.f32.mrb[0].mxu0
  %v3181 = vadd.f32 %v2491, %v3180
  %v3182 = vpop.f32.mrb[0].mxu0
  %v3183 = vpop.f32.mrb[0].mxu0
  %3184 = vdwg.mxu0
  %3185 = vmatprep.subr.bf16.mxu0 %v2953
  %3186 = vmatpush1.bf16.msra.mxu0 %v2952
  %3187 = vmatprep.subr.bf16.mxu0 %v2957
  %3188 = vmatpush1.bf16.msra.mxu0 %v2956
  %3189 = vmatprep.subr.bf16.mxu0 %v2961
  %3190 = vmatpush1.bf16.msra.mxu0 %v2960
  %3191 = vmatprep.subr.bf16.mxu0 %v2965
  %3192 = vmatpush1.bf16.msra.mxu0 %v2964
  %3193 = vmatprep.subr.bf16.mxu0 %v2969
  %3194 = vmatpush1.bf16.msra.mxu0 %v2968
  %3195 = vmatprep.subr.bf16.mxu0 %v2973
  %3196 = vmatpush1.bf16.msra.mxu0 %v2972
  %3197 = vmatprep.subr.bf16.mxu0 %v2977
  %3198 = vmatpush1.bf16.msra.mxu0 %v2976
  %3199 = vmatprep.subr.bf16.mxu0 %v2981
  %3200 = vmatpush1.bf16.msra.mxu0 %v2980
  %3201 = vmatprep.subr.bf16.mxu0 %v2985
  %3202 = vmatpush1.bf16.msra.mxu0 %v2984
  %3203 = vmatprep.subr.bf16.mxu0 %v2989
  %3204 = vmatpush1.bf16.msra.mxu0 %v2988
  %3205 = vmatprep.subr.bf16.mxu0 %v2993
  %3206 = vmatpush1.bf16.msra.mxu0 %v2992
  %3207 = vmatprep.subr.bf16.mxu0 %v2997
  %3208 = vmatpush1.bf16.msra.mxu0 %v2996
  %3209 = vmatprep.subr.bf16.mxu0 %v3001
  %3210 = vmatpush1.bf16.msra.mxu0 %v3000
  %3211 = vmatprep.subr.bf16.mxu0 %v3005
  %3212 = vmatpush1.bf16.msra.mxu0 %v3004
  %3213 = vmatprep.subr.bf16.mxu0 %v3009
  %3214 = vmatpush1.bf16.msra.mxu0 %v3008
  %3215 = vmatprep.subr.bf16.mxu0 %v3013
  %3216 = vmatpush1.bf16.msra.mxu0 %v3012
  %3217 = vmatprep.mubr.bf16.mxu0 %v2353
  %3218 = vmatmul.mubr.bf16.gmra.mrb[0].mxu0 %v2352
  %v3219 = vpop.f32.mrb[0].mxu0
  %v3220 = vadd.f32 %v3179, %v3219
  %v3221 = vpop.f32.mrb[0].mxu0
  %v3222 = vadd.f32 %v3181, %v3221
  %v3223 = vpop.f32.mrb[0].mxu0
  %v3224 = vpop.f32.mrb[0].mxu0
  %3225 = vdwg.mxu0
  %3226 = vmatprep.subr.bf16.mxu0 %v2891
  %3227 = vmatpush1.bf16.msra.mxu0 %v2890
  %3228 = vmatprep.subr.bf16.mxu0 %v2895
  %3229 = vmatpush1.bf16.msra.mxu0 %v2894
  %3230 = vmatprep.subr.bf16.mxu0 %v2899
  %3231 = vmatpush1.bf16.msra.mxu0 %v2898
  %3232 = vmatprep.subr.bf16.mxu0 %v2903
  %3233 = vmatpush1.bf16.msra.mxu0 %v2902
  %3234 = vmatprep.subr.bf16.mxu0 %v2907
  %3235 = vmatpush1.bf16.msra.mxu0 %v2906
  %3236 = vmatprep.subr.bf16.mxu0 %v2911
  %3237 = vmatpush1.bf16.msra.mxu0 %v2910
  %3238 = vmatprep.subr.bf16.mxu0 %v2915
  %3239 = vmatpush1.bf16.msra.mxu0 %v2914
  %3240 = vmatprep.subr.bf16.mxu0 %v2919
  %3241 = vmatpush1.bf16.msra.mxu0 %v2918
  %3242 = vmatprep.subr.bf16.mxu0 %v2923
  %3243 = vmatpush1.bf16.msra.mxu0 %v2922
  %3244 = vmatprep.subr.bf16.mxu0 %v2927
  %3245 = vmatpush1.bf16.msra.mxu0 %v2926
  %3246 = vmatprep.subr.bf16.mxu0 %v2931
  %3247 = vmatpush1.bf16.msra.mxu0 %v2930
  %3248 = vmatprep.subr.bf16.mxu0 %v2935
  %3249 = vmatpush1.bf16.msra.mxu0 %v2934
  %3250 = vmatprep.subr.bf16.mxu0 %v2939
  %3251 = vmatpush1.bf16.msra.mxu0 %v2938
  %3252 = vmatprep.subr.bf16.mxu0 %v2943
  %3253 = vmatpush1.bf16.msra.mxu0 %v2942
  %3254 = vmatprep.subr.bf16.mxu0 %v2947
  %3255 = vmatpush1.bf16.msra.mxu0 %v2946
  %3256 = vmatprep.subr.bf16.mxu0 %v2951
  %3257 = vmatpush1.bf16.msra.mxu0 %v2950
  %3258 = vmatprep.mubr.bf16.mxu0 %v2351
  %3259 = vmatmul.mubr.bf16.gmra.mrb[0].mxu0 %v2350
  %v3260 = vpop.f32.mrb[0].mxu0
  %v3261 = vadd.f32 %v2495, %v3260
  %v3262 = vpop.f32.mrb[0].mxu0
  %v3263 = vadd.f32 %v2499, %v3262
  %v3264 = vpop.f32.mrb[0].mxu0
  %v3265 = vpop.f32.mrb[0].mxu0
  %3266 = vdwg.mxu0
  %3267 = vmatprep.subr.bf16.mxu0 %v2955
  %3268 = vmatpush1.bf16.msra.mxu0 %v2954
  %3269 = vmatprep.subr.bf16.mxu0 %v2959
  %3270 = vmatpush1.bf16.msra.mxu0 %v2958
  %3271 = vmatprep.subr.bf16.mxu0 %v2963
  %3272 = vmatpush1.bf16.msra.mxu0 %v2962
  %3273 = vmatprep.subr.bf16.mxu0 %v2967
  %3274 = vmatpush1.bf16.msra.mxu0 %v2966
  %3275 = vmatprep.subr.bf16.mxu0 %v2971
  %3276 = vmatpush1.bf16.msra.mxu0 %v2970
  %3277 = vmatprep.subr.bf16.mxu0 %v2975
  %3278 = vmatpush1.bf16.msra.mxu0 %v2974
  %3279 = vmatprep.subr.bf16.mxu0 %v2979
  %3280 = vmatpush1.bf16.msra.mxu0 %v2978
  %3281 = vmatprep.subr.bf16.mxu0 %v2983
  %3282 = vmatpush1.bf16.msra.mxu0 %v2982
  %3283 = vmatprep.subr.bf16.mxu0 %v2987
  %3284 = vmatpush1.bf16.msra.mxu0 %v2986
  %3285 = vmatprep.subr.bf16.mxu0 %v2991
  %3286 = vmatpush1.bf16.msra.mxu0 %v2990
  %3287 = vmatprep.subr.bf16.mxu0 %v2995
  %3288 = vmatpush1.bf16.msra.mxu0 %v2994
  %3289 = vmatprep.subr.bf16.mxu0 %v2999
  %3290 = vmatpush1.bf16.msra.mxu0 %v2998
  %3291 = vmatprep.subr.bf16.mxu0 %v3003
  %3292 = vmatpush1.bf16.msra.mxu0 %v3002
  %3293 = vmatprep.subr.bf16.mxu0 %v3007
  %3294 = vmatpush1.bf16.msra.mxu0 %v3006
  %3295 = vmatprep.subr.bf16.mxu0 %v3011
  %3296 = vmatpush1.bf16.msra.mxu0 %v3010
  %3297 = vmatprep.subr.bf16.mxu0 %v3015
  %3298 = vmatpush1.bf16.msra.mxu0 %v3014
  %3299 = vmatprep.mubr.bf16.mxu0 %v2353
  %3300 = vmatmul.mubr.bf16.gmra.mrb[0].mxu0 %v2352
  %v3301 = vpop.f32.mrb[0].mxu0
  %v3302 = vadd.f32 %v3261, %v3301
  %v3303 = vpop.f32.mrb[0].mxu0
  %v3304 = vadd.f32 %v3263, %v3303
  %v3305 = vpop.f32.mrb[0].mxu0
  %v3306 = vpop.f32.mrb[0].mxu0
  %3307 = vdwg.mxu0
  %v3308 = vld [vmem:[%s11] sm:$0xf]
  %v3309 = vld [vmem:[%s12] sm:$0xf]
  %v3311 = vlaneseq
  %v3312 = vshrl.u32 %v3311, 7
  %v3313 = vsub.s32 0, %v3312
  %v3314 = vrot.slane %v3308, %v3313
  %v3315 = vlaneseq
  %v3316 = vshrl.u32 %v3315, 7
  %v3317 = vsub.s32 1, %v3316
  %v3318 = vrot.slane %v3308, %v3317
  %v3319 = vlaneseq
  %v3320 = vshrl.u32 %v3319, 7
  %v3321 = vsub.s32 2, %v3320
  %v3322 = vrot.slane %v3308, %v3321
  %v3323 = vlaneseq
  %v3324 = vshrl.u32 %v3323, 7
  %v3325 = vsub.s32 3, %v3324
  %v3326 = vrot.slane %v3308, %v3325
  %v3331 = vmul.f32 %v2296, %v3314
  %v3332 = vmul.f32 %v2297, %v3318
  %v3333 = vmul.f32 %v2298, %v3322
  %v3334 = vmul.f32 %v2299, %v3326
  %v3336 = vlaneseq
  %v3337 = vshrl.u32 %v3336, 7
  %v3338 = vsub.s32 0, %v3337
  %v3339 = vrot.slane %v3309, %v3338
  %v3340 = vlaneseq
  %v3341 = vshrl.u32 %v3340, 7
  %v3342 = vsub.s32 1, %v3341
  %v3343 = vrot.slane %v3309, %v3342
  %v3344 = vlaneseq
  %v3345 = vshrl.u32 %v3344, 7
  %v3346 = vsub.s32 2, %v3345
  %v3347 = vrot.slane %v3309, %v3346
  %v3348 = vlaneseq
  %v3349 = vshrl.u32 %v3348, 7
  %v3350 = vsub.s32 3, %v3349
  %v3351 = vrot.slane %v3309, %v3350
  %v3356 = vadd.f32 %v3331, %v3339
  %v3357 = vadd.f32 %v3332, %v3343
  %v3358 = vadd.f32 %v3333, %v3347
  %v3359 = vadd.f32 %v3334, %v3351
  %v3360 = vpack.c.bf16 %v3356, %v3356
  %v3361 = vpack.c.bf16 %v3357, %v3357
  %v3362 = vpack.c.bf16 %v3358, %v3358
  %v3363 = vpack.c.bf16 %v3359, %v3359
  %v3364 = vld [vmem:[%s13] sm:$0xff]
  %v3365 = vld [vmem:[%s13 + $0x8] sm:$0xff]
  %v3366 = vld [vmem:[%s13 + $0x10] sm:$0xff]
  %v3367 = vld [vmem:[%s13 + $0x18] sm:$0xff]
  %v3368 = vld [vmem:[%s13 + $0x20] sm:$0xff]
  %v3369 = vld [vmem:[%s13 + $0x28] sm:$0xff]
  %v3370 = vld [vmem:[%s13 + $0x30] sm:$0xff]
  %v3371 = vld [vmem:[%s13 + $0x38] sm:$0xff]
  %v3372 = vld [vmem:[%s13 + $0x40] sm:$0xff]
  %v3373 = vld [vmem:[%s13 + $0x48] sm:$0xff]
  %v3374 = vld [vmem:[%s13 + $0x50] sm:$0xff]
  %v3375 = vld [vmem:[%s13 + $0x58] sm:$0xff]
  %v3376 = vld [vmem:[%s13 + $0x60] sm:$0xff]
  %v3377 = vld [vmem:[%s13 + $0x68] sm:$0xff]
  %v3378 = vld [vmem:[%s13 + $0x70] sm:$0xff]
  %v3379 = vld [vmem:[%s13 + $0x78] sm:$0xff]
  %v3380 = vld [vmem:[%s13 + $0x80] sm:$0xff]
  %v3381 = vld [vmem:[%s13 + $0x88] sm:$0xff]
  %v3382 = vld [vmem:[%s13 + $0x90] sm:$0xff]
  %v3383 = vld [vmem:[%s13 + $0x98] sm:$0xff]
  %v3384 = vld [vmem:[%s13 + $0xa0] sm:$0xff]
  %v3385 = vld [vmem:[%s13 + $0xa8] sm:$0xff]
  %v3386 = vld [vmem:[%s13 + $0xb0] sm:$0xff]
  %v3387 = vld [vmem:[%s13 + $0xb8] sm:$0xff]
  %v3388 = vld [vmem:[%s13 + $0xc0] sm:$0xff]
  %v3389 = vld [vmem:[%s13 + $0xc8] sm:$0xff]
  %v3390 = vld [vmem:[%s13 + $0xd0] sm:$0xff]
  %v3391 = vld [vmem:[%s13 + $0xd8] sm:$0xff]
  %v3392 = vld [vmem:[%s13 + $0xe0] sm:$0xff]
  %v3393 = vld [vmem:[%s13 + $0xe8] sm:$0xff]
  %v3394 = vld [vmem:[%s13 + $0xf0] sm:$0xff]
  %v3395 = vld [vmem:[%s13 + $0xf8] sm:$0xff]
  %v3396 = vld [vmem:[%s13 + $0x100] sm:$0xff]
  %v3397 = vld [vmem:[%s13 + $0x108] sm:$0xff]
  %v3398 = vld [vmem:[%s13 + $0x110] sm:$0xff]
  %v3399 = vld [vmem:[%s13 + $0x118] sm:$0xff]
  %v3400 = vld [vmem:[%s13 + $0x120] sm:$0xff]
  %v3401 = vld [vmem:[%s13 + $0x128] sm:$0xff]
  %v3402 = vld [vmem:[%s13 + $0x130] sm:$0xff]
  %v3403 = vld [vmem:[%s13 + $0x138] sm:$0xff]
  %v3404 = vld [vmem:[%s13 + $0x140] sm:$0xff]
  %v3405 = vld [vmem:[%s13 + $0x148] sm:$0xff]
  %v3406 = vld [vmem:[%s13 + $0x150] sm:$0xff]
  %v3407 = vld [vmem:[%s13 + $0x158] sm:$0xff]
  %v3408 = vld [vmem:[%s13 + $0x160] sm:$0xff]
  %v3409 = vld [vmem:[%s13 + $0x168] sm:$0xff]
  %v3410 = vld [vmem:[%s13 + $0x170] sm:$0xff]
  %v3411 = vld [vmem:[%s13 + $0x178] sm:$0xff]
  %v3412 = vld [vmem:[%s13 + $0x180] sm:$0xff]
  %v3413 = vld [vmem:[%s13 + $0x188] sm:$0xff]
  %v3414 = vld [vmem:[%s13 + $0x190] sm:$0xff]
  %v3415 = vld [vmem:[%s13 + $0x198] sm:$0xff]
  %v3416 = vld [vmem:[%s13 + $0x1a0] sm:$0xff]
  %v3417 = vld [vmem:[%s13 + $0x1a8] sm:$0xff]
  %v3418 = vld [vmem:[%s13 + $0x1b0] sm:$0xff]
  %v3419 = vld [vmem:[%s13 + $0x1b8] sm:$0xff]
  %v3420 = vld [vmem:[%s13 + $0x1c0] sm:$0xff]
  %v3421 = vld [vmem:[%s13 + $0x1c8] sm:$0xff]
  %v3422 = vld [vmem:[%s13 + $0x1d0] sm:$0xff]
  %v3423 = vld [vmem:[%s13 + $0x1d8] sm:$0xff]
  %v3424 = vld [vmem:[%s13 + $0x1e0] sm:$0xff]
  %v3425 = vld [vmem:[%s13 + $0x1e8] sm:$0xff]
  %v3426 = vld [vmem:[%s13 + $0x1f0] sm:$0xff]
  %v3427 = vld [vmem:[%s13 + $0x1f8] sm:$0xff]
  %v3428 = vld [vmem:[%s13 + $0x200] sm:$0xff]
  %v3429 = vld [vmem:[%s13 + $0x208] sm:$0xff]
  %v3430 = vld [vmem:[%s13 + $0x210] sm:$0xff]
  %v3431 = vld [vmem:[%s13 + $0x218] sm:$0xff]
  %v3432 = vld [vmem:[%s13 + $0x220] sm:$0xff]
  %v3433 = vld [vmem:[%s13 + $0x228] sm:$0xff]
  %v3434 = vld [vmem:[%s13 + $0x230] sm:$0xff]
  %v3435 = vld [vmem:[%s13 + $0x238] sm:$0xff]
  %v3436 = vld [vmem:[%s13 + $0x240] sm:$0xff]
  %v3437 = vld [vmem:[%s13 + $0x248] sm:$0xff]
  %v3438 = vld [vmem:[%s13 + $0x250] sm:$0xff]
  %v3439 = vld [vmem:[%s13 + $0x258] sm:$0xff]
  %v3440 = vld [vmem:[%s13 + $0x260] sm:$0xff]
  %v3441 = vld [vmem:[%s13 + $0x268] sm:$0xff]
  %v3442 = vld [vmem:[%s13 + $0x270] sm:$0xff]
  %v3443 = vld [vmem:[%s13 + $0x278] sm:$0xff]
  %v3444 = vld [vmem:[%s13 + $0x280] sm:$0xff]
  %v3445 = vld [vmem:[%s13 + $0x288] sm:$0xff]
  %v3446 = vld [vmem:[%s13 + $0x290] sm:$0xff]
  %v3447 = vld [vmem:[%s13 + $0x298] sm:$0xff]
  %v3448 = vld [vmem:[%s13 + $0x2a0] sm:$0xff]
  %v3449 = vld [vmem:[%s13 + $0x2a8] sm:$0xff]
  %v3450 = vld [vmem:[%s13 + $0x2b0] sm:$0xff]
  %v3451 = vld [vmem:[%s13 + $0x2b8] sm:$0xff]
  %v3452 = vld [vmem:[%s13 + $0x2c0] sm:$0xff]
  %v3453 = vld [vmem:[%s13 + $0x2c8] sm:$0xff]
  %v3454 = vld [vmem:[%s13 + $0x2d0] sm:$0xff]
  %v3455 = vld [vmem:[%s13 + $0x2d8] sm:$0xff]
  %v3456 = vld [vmem:[%s13 + $0x2e0] sm:$0xff]
  %v3457 = vld [vmem:[%s13 + $0x2e8] sm:$0xff]
  %v3458 = vld [vmem:[%s13 + $0x2f0] sm:$0xff]
  %v3459 = vld [vmem:[%s13 + $0x2f8] sm:$0xff]
  %v3460 = vld [vmem:[%s13 + $0x300] sm:$0xff]
  %v3461 = vld [vmem:[%s13 + $0x308] sm:$0xff]
  %v3462 = vld [vmem:[%s13 + $0x310] sm:$0xff]
  %v3463 = vld [vmem:[%s13 + $0x318] sm:$0xff]
  %v3464 = vld [vmem:[%s13 + $0x320] sm:$0xff]
  %v3465 = vld [vmem:[%s13 + $0x328] sm:$0xff]
  %v3466 = vld [vmem:[%s13 + $0x330] sm:$0xff]
  %v3467 = vld [vmem:[%s13 + $0x338] sm:$0xff]
  %v3468 = vld [vmem:[%s13 + $0x340] sm:$0xff]
  %v3469 = vld [vmem:[%s13 + $0x348] sm:$0xff]
  %v3470 = vld [vmem:[%s13 + $0x350] sm:$0xff]
  %v3471 = vld [vmem:[%s13 + $0x358] sm:$0xff]
  %v3472 = vld [vmem:[%s13 + $0x360] sm:$0xff]
  %v3473 = vld [vmem:[%s13 + $0x368] sm:$0xff]
  %v3474 = vld [vmem:[%s13 + $0x370] sm:$0xff]
  %v3475 = vld [vmem:[%s13 + $0x378] sm:$0xff]
  %v3476 = vld [vmem:[%s13 + $0x380] sm:$0xff]
  %v3477 = vld [vmem:[%s13 + $0x388] sm:$0xff]
  %v3478 = vld [vmem:[%s13 + $0x390] sm:$0xff]
  %v3479 = vld [vmem:[%s13 + $0x398] sm:$0xff]
  %v3480 = vld [vmem:[%s13 + $0x3a0] sm:$0xff]
  %v3481 = vld [vmem:[%s13 + $0x3a8] sm:$0xff]
  %v3482 = vld [vmem:[%s13 + $0x3b0] sm:$0xff]
  %v3483 = vld [vmem:[%s13 + $0x3b8] sm:$0xff]
  %v3484 = vld [vmem:[%s13 + $0x3c0] sm:$0xff]
  %v3485 = vld [vmem:[%s13 + $0x3c8] sm:$0xff]
  %v3486 = vld [vmem:[%s13 + $0x3d0] sm:$0xff]
  %v3487 = vld [vmem:[%s13 + $0x3d8] sm:$0xff]
  %v3488 = vld [vmem:[%s13 + $0x3e0] sm:$0xff]
  %v3489 = vld [vmem:[%s13 + $0x3e8] sm:$0xff]
  %v3490 = vld [vmem:[%s13 + $0x3f0] sm:$0xff]
  %v3491 = vld [vmem:[%s13 + $0x3f8] sm:$0xff]
  %v3492 = vld [vmem:[%s14] sm:$0xf]
  %v3494 = vlaneseq
  %v3495 = vshrl.u32 %v3494, 7
  %v3496 = vsub.s32 0, %v3495
  %v3497 = vrot.slane %v3492, %v3496
  %v3498 = vlaneseq
  %v3499 = vshrl.u32 %v3498, 7
  %v3500 = vsub.s32 1, %v3499
  %v3501 = vrot.slane %v3492, %v3500
  %v3502 = vlaneseq
  %v3503 = vshrl.u32 %v3502, 7
  %v3504 = vsub.s32 2, %v3503
  %v3505 = vrot.slane %v3492, %v3504
  %v3506 = vlaneseq
  %v3507 = vshrl.u32 %v3506, 7
  %v3508 = vsub.s32 3, %v3507
  %v3509 = vrot.slane %v3492, %v3508
  %v3642 = vunpack.c.l.b16 %v3364
  %v3643 = vunpack.c.h.b16 %v3364
  %v3644 = vunpack.c.l.b16 %v3365
  %v3645 = vunpack.c.h.b16 %v3365
  %v3646 = vunpack.c.l.b16 %v3366
  %v3647 = vunpack.c.h.b16 %v3366
  %v3648 = vunpack.c.l.b16 %v3367
  %v3649 = vunpack.c.h.b16 %v3367
  %v3650 = vunpack.c.l.b16 %v3368
  %v3651 = vunpack.c.h.b16 %v3368
  %v3652 = vunpack.c.l.b16 %v3369
  %v3653 = vunpack.c.h.b16 %v3369
  %v3654 = vunpack.c.l.b16 %v3370
  %v3655 = vunpack.c.h.b16 %v3370
  %v3656 = vunpack.c.l.b16 %v3371
  %v3657 = vunpack.c.h.b16 %v3371
  %v3658 = vunpack.c.l.b16 %v3372
  %v3659 = vunpack.c.h.b16 %v3372
  %v3660 = vunpack.c.l.b16 %v3373
  %v3661 = vunpack.c.h.b16 %v3373
  %v3662 = vunpack.c.l.b16 %v3374
  %v3663 = vunpack.c.h.b16 %v3374
  %v3664 = vunpack.c.l.b16 %v3375
  %v3665 = vunpack.c.h.b16 %v3375
  %v3666 = vunpack.c.l.b16 %v3376
  %v3667 = vunpack.c.h.b16 %v3376
  %v3668 = vunpack.c.l.b16 %v3377
  %v3669 = vunpack.c.h.b16 %v3377
  %v3670 = vunpack.c.l.b16 %v3378
  %v3671 = vunpack.c.h.b16 %v3378
  %v3672 = vunpack.c.l.b16 %v3379
  %v3673 = vunpack.c.h.b16 %v3379
  %v3674 = vunpack.c.l.b16 %v3380
  %v3675 = vunpack.c.h.b16 %v3380
  %v3676 = vunpack.c.l.b16 %v3381
  %v3677 = vunpack.c.h.b16 %v3381
  %v3678 = vunpack.c.l.b16 %v3382
  %v3679 = vunpack.c.h.b16 %v3382
  %v3680 = vunpack.c.l.b16 %v3383
  %v3681 = vunpack.c.h.b16 %v3383
  %v3682 = vunpack.c.l.b16 %v3384
  %v3683 = vunpack.c.h.b16 %v3384
  %v3684 = vunpack.c.l.b16 %v3385
  %v3685 = vunpack.c.h.b16 %v3385
  %v3686 = vunpack.c.l.b16 %v3386
  %v3687 = vunpack.c.h.b16 %v3386
  %v3688 = vunpack.c.l.b16 %v3387
  %v3689 = vunpack.c.h.b16 %v3387
  %v3690 = vunpack.c.l.b16 %v3388
  %v3691 = vunpack.c.h.b16 %v3388
  %v3692 = vunpack.c.l.b16 %v3389
  %v3693 = vunpack.c.h.b16 %v3389
  %v3694 = vunpack.c.l.b16 %v3390
  %v3695 = vunpack.c.h.b16 %v3390
  %v3696 = vunpack.c.l.b16 %v3391
  %v3697 = vunpack.c.h.b16 %v3391
  %v3698 = vunpack.c.l.b16 %v3392
  %v3699 = vunpack.c.h.b16 %v3392
  %v3700 = vunpack.c.l.b16 %v3393
  %v3701 = vunpack.c.h.b16 %v3393
  %v3702 = vunpack.c.l.b16 %v3394
  %v3703 = vunpack.c.h.b16 %v3394
  %v3704 = vunpack.c.l.b16 %v3395
  %v3705 = vunpack.c.h.b16 %v3395
  %v3706 = vunpack.c.l.b16 %v3396
  %v3707 = vunpack.c.h.b16 %v3396
  %v3708 = vunpack.c.l.b16 %v3397
  %v3709 = vunpack.c.h.b16 %v3397
  %v3710 = vunpack.c.l.b16 %v3398
  %v3711 = vunpack.c.h.b16 %v3398
  %v3712 = vunpack.c.l.b16 %v3399
  %v3713 = vunpack.c.h.b16 %v3399
  %v3714 = vunpack.c.l.b16 %v3400
  %v3715 = vunpack.c.h.b16 %v3400
  %v3716 = vunpack.c.l.b16 %v3401
  %v3717 = vunpack.c.h.b16 %v3401
  %v3718 = vunpack.c.l.b16 %v3402
  %v3719 = vunpack.c.h.b16 %v3402
  %v3720 = vunpack.c.l.b16 %v3403
  %v3721 = vunpack.c.h.b16 %v3403
  %v3722 = vunpack.c.l.b16 %v3404
  %v3723 = vunpack.c.h.b16 %v3404
  %v3724 = vunpack.c.l.b16 %v3405
  %v3725 = vunpack.c.h.b16 %v3405
  %v3726 = vunpack.c.l.b16 %v3406
  %v3727 = vunpack.c.h.b16 %v3406
  %v3728 = vunpack.c.l.b16 %v3407
  %v3729 = vunpack.c.h.b16 %v3407
  %v3730 = vunpack.c.l.b16 %v3408
  %v3731 = vunpack.c.h.b16 %v3408
  %v3732 = vunpack.c.l.b16 %v3409
  %v3733 = vunpack.c.h.b16 %v3409
  %v3734 = vunpack.c.l.b16 %v3410
  %v3735 = vunpack.c.h.b16 %v3410
  %v3736 = vunpack.c.l.b16 %v3411
  %v3737 = vunpack.c.h.b16 %v3411
  %v3738 = vunpack.c.l.b16 %v3412
  %v3739 = vunpack.c.h.b16 %v3412
  %v3740 = vunpack.c.l.b16 %v3413
  %v3741 = vunpack.c.h.b16 %v3413
  %v3742 = vunpack.c.l.b16 %v3414
  %v3743 = vunpack.c.h.b16 %v3414
  %v3744 = vunpack.c.l.b16 %v3415
  %v3745 = vunpack.c.h.b16 %v3415
  %v3746 = vunpack.c.l.b16 %v3416
  %v3747 = vunpack.c.h.b16 %v3416
  %v3748 = vunpack.c.l.b16 %v3417
  %v3749 = vunpack.c.h.b16 %v3417
  %v3750 = vunpack.c.l.b16 %v3418
  %v3751 = vunpack.c.h.b16 %v3418
  %v3752 = vunpack.c.l.b16 %v3419
  %v3753 = vunpack.c.h.b16 %v3419
  %v3754 = vunpack.c.l.b16 %v3420
  %v3755 = vunpack.c.h.b16 %v3420
  %v3756 = vunpack.c.l.b16 %v3421
  %v3757 = vunpack.c.h.b16 %v3421
  %v3758 = vunpack.c.l.b16 %v3422
  %v3759 = vunpack.c.h.b16 %v3422
  %v3760 = vunpack.c.l.b16 %v3423
  %v3761 = vunpack.c.h.b16 %v3423
  %v3762 = vunpack.c.l.b16 %v3424
  %v3763 = vunpack.c.h.b16 %v3424
  %v3764 = vunpack.c.l.b16 %v3425
  %v3765 = vunpack.c.h.b16 %v3425
  %v3766 = vunpack.c.l.b16 %v3426
  %v3767 = vunpack.c.h.b16 %v3426
  %v3768 = vunpack.c.l.b16 %v3427
  %v3769 = vunpack.c.h.b16 %v3427
  %v3770 = vunpack.c.l.b16 %v3428
  %v3771 = vunpack.c.h.b16 %v3428
  %v3772 = vunpack.c.l.b16 %v3429
  %v3773 = vunpack.c.h.b16 %v3429
  %v3774 = vunpack.c.l.b16 %v3430
  %v3775 = vunpack.c.h.b16 %v3430
  %v3776 = vunpack.c.l.b16 %v3431
  %v3777 = vunpack.c.h.b16 %v3431
  %v3778 = vunpack.c.l.b16 %v3432
  %v3779 = vunpack.c.h.b16 %v3432
  %v3780 = vunpack.c.l.b16 %v3433
  %v3781 = vunpack.c.h.b16 %v3433
  %v3782 = vunpack.c.l.b16 %v3434
  %v3783 = vunpack.c.h.b16 %v3434
  %v3784 = vunpack.c.l.b16 %v3435
  %v3785 = vunpack.c.h.b16 %v3435
  %v3786 = vunpack.c.l.b16 %v3436
  %v3787 = vunpack.c.h.b16 %v3436
  %v3788 = vunpack.c.l.b16 %v3437
  %v3789 = vunpack.c.h.b16 %v3437
  %v3790 = vunpack.c.l.b16 %v3438
  %v3791 = vunpack.c.h.b16 %v3438
  %v3792 = vunpack.c.l.b16 %v3439
  %v3793 = vunpack.c.h.b16 %v3439
  %v3794 = vunpack.c.l.b16 %v3440
  %v3795 = vunpack.c.h.b16 %v3440
  %v3796 = vunpack.c.l.b16 %v3441
  %v3797 = vunpack.c.h.b16 %v3441
  %v3798 = vunpack.c.l.b16 %v3442
  %v3799 = vunpack.c.h.b16 %v3442
  %v3800 = vunpack.c.l.b16 %v3443
  %v3801 = vunpack.c.h.b16 %v3443
  %v3802 = vunpack.c.l.b16 %v3444
  %v3803 = vunpack.c.h.b16 %v3444
  %v3804 = vunpack.c.l.b16 %v3445
  %v3805 = vunpack.c.h.b16 %v3445
  %v3806 = vunpack.c.l.b16 %v3446
  %v3807 = vunpack.c.h.b16 %v3446
  %v3808 = vunpack.c.l.b16 %v3447
  %v3809 = vunpack.c.h.b16 %v3447
  %v3810 = vunpack.c.l.b16 %v3448
  %v3811 = vunpack.c.h.b16 %v3448
  %v3812 = vunpack.c.l.b16 %v3449
  %v3813 = vunpack.c.h.b16 %v3449
  %v3814 = vunpack.c.l.b16 %v3450
  %v3815 = vunpack.c.h.b16 %v3450
  %v3816 = vunpack.c.l.b16 %v3451
  %v3817 = vunpack.c.h.b16 %v3451
  %v3818 = vunpack.c.l.b16 %v3452
  %v3819 = vunpack.c.h.b16 %v3452
  %v3820 = vunpack.c.l.b16 %v3453
  %v3821 = vunpack.c.h.b16 %v3453
  %v3822 = vunpack.c.l.b16 %v3454
  %v3823 = vunpack.c.h.b16 %v3454
  %v3824 = vunpack.c.l.b16 %v3455
  %v3825 = vunpack.c.h.b16 %v3455
  %v3826 = vunpack.c.l.b16 %v3456
  %v3827 = vunpack.c.h.b16 %v3456
  %v3828 = vunpack.c.l.b16 %v3457
  %v3829 = vunpack.c.h.b16 %v3457
  %v3830 = vunpack.c.l.b16 %v3458
  %v3831 = vunpack.c.h.b16 %v3458
  %v3832 = vunpack.c.l.b16 %v3459
  %v3833 = vunpack.c.h.b16 %v3459
  %v3834 = vunpack.c.l.b16 %v3460
  %v3835 = vunpack.c.h.b16 %v3460
  %v3836 = vunpack.c.l.b16 %v3461
  %v3837 = vunpack.c.h.b16 %v3461
  %v3838 = vunpack.c.l.b16 %v3462
  %v3839 = vunpack.c.h.b16 %v3462
  %v3840 = vunpack.c.l.b16 %v3463
  %v3841 = vunpack.c.h.b16 %v3463
  %v3842 = vunpack.c.l.b16 %v3464
  %v3843 = vunpack.c.h.b16 %v3464
  %v3844 = vunpack.c.l.b16 %v3465
  %v3845 = vunpack.c.h.b16 %v3465
  %v3846 = vunpack.c.l.b16 %v3466
  %v3847 = vunpack.c.h.b16 %v3466
  %v3848 = vunpack.c.l.b16 %v3467
  %v3849 = vunpack.c.h.b16 %v3467
  %v3850 = vunpack.c.l.b16 %v3468
  %v3851 = vunpack.c.h.b16 %v3468
  %v3852 = vunpack.c.l.b16 %v3469
  %v3853 = vunpack.c.h.b16 %v3469
  %v3854 = vunpack.c.l.b16 %v3470
  %v3855 = vunpack.c.h.b16 %v3470
  %v3856 = vunpack.c.l.b16 %v3471
  %v3857 = vunpack.c.h.b16 %v3471
  %v3858 = vunpack.c.l.b16 %v3472
  %v3859 = vunpack.c.h.b16 %v3472
  %v3860 = vunpack.c.l.b16 %v3473
  %v3861 = vunpack.c.h.b16 %v3473
  %v3862 = vunpack.c.l.b16 %v3474
  %v3863 = vunpack.c.h.b16 %v3474
  %v3864 = vunpack.c.l.b16 %v3475
  %v3865 = vunpack.c.h.b16 %v3475
  %v3866 = vunpack.c.l.b16 %v3476
  %v3867 = vunpack.c.h.b16 %v3476
  %v3868 = vunpack.c.l.b16 %v3477
  %v3869 = vunpack.c.h.b16 %v3477
  %v3870 = vunpack.c.l.b16 %v3478
  %v3871 = vunpack.c.h.b16 %v3478
  %v3872 = vunpack.c.l.b16 %v3479
  %v3873 = vunpack.c.h.b16 %v3479
  %v3874 = vunpack.c.l.b16 %v3480
  %v3875 = vunpack.c.h.b16 %v3480
  %v3876 = vunpack.c.l.b16 %v3481
  %v3877 = vunpack.c.h.b16 %v3481
  %v3878 = vunpack.c.l.b16 %v3482
  %v3879 = vunpack.c.h.b16 %v3482
  %v3880 = vunpack.c.l.b16 %v3483
  %v3881 = vunpack.c.h.b16 %v3483
  %v3882 = vunpack.c.l.b16 %v3484
  %v3883 = vunpack.c.h.b16 %v3484
  %v3884 = vunpack.c.l.b16 %v3485
  %v3885 = vunpack.c.h.b16 %v3485
  %v3886 = vunpack.c.l.b16 %v3486
  %v3887 = vunpack.c.h.b16 %v3486
  %v3888 = vunpack.c.l.b16 %v3487
  %v3889 = vunpack.c.h.b16 %v3487
  %v3890 = vunpack.c.l.b16 %v3488
  %v3891 = vunpack.c.h.b16 %v3488
  %v3892 = vunpack.c.l.b16 %v3489
  %v3893 = vunpack.c.h.b16 %v3489
  %v3894 = vunpack.c.l.b16 %v3490
  %v3895 = vunpack.c.h.b16 %v3490
  %v3896 = vunpack.c.l.b16 %v3491
  %v3897 = vunpack.c.h.b16 %v3491
  %v3898 = vpack.c.b16 %v3646, %v3642
  %v3899 = vpack.c.b16 %v3647, %v3643
  %v3900 = vpack.c.b16 %v3648, %v3644
  %v3901 = vpack.c.b16 %v3649, %v3645
  %v3902 = vpack.c.b16 %v3654, %v3650
  %v3903 = vpack.c.b16 %v3655, %v3651
  %v3904 = vpack.c.b16 %v3656, %v3652
  %v3905 = vpack.c.b16 %v3657, %v3653
  %v3906 = vpack.c.b16 %v3662, %v3658
  %v3907 = vpack.c.b16 %v3663, %v3659
  %v3908 = vpack.c.b16 %v3664, %v3660
  %v3909 = vpack.c.b16 %v3665, %v3661
  %v3910 = vpack.c.b16 %v3670, %v3666
  %v3911 = vpack.c.b16 %v3671, %v3667
  %v3912 = vpack.c.b16 %v3672, %v3668
  %v3913 = vpack.c.b16 %v3673, %v3669
  %v3914 = vpack.c.b16 %v3678, %v3674
  %v3915 = vpack.c.b16 %v3679, %v3675
  %v3916 = vpack.c.b16 %v3680, %v3676
  %v3917 = vpack.c.b16 %v3681, %v3677
  %v3918 = vpack.c.b16 %v3686, %v3682
  %v3919 = vpack.c.b16 %v3687, %v3683
  %v3920 = vpack.c.b16 %v3688, %v3684
  %v3921 = vpack.c.b16 %v3689, %v3685
  %v3922 = vpack.c.b16 %v3694, %v3690
  %v3923 = vpack.c.b16 %v3695, %v3691
  %v3924 = vpack.c.b16 %v3696, %v3692
  %v3925 = vpack.c.b16 %v3697, %v3693
  %v3926 = vpack.c.b16 %v3702, %v3698
  %v3927 = vpack.c.b16 %v3703, %v3699
  %v3928 = vpack.c.b16 %v3704, %v3700
  %v3929 = vpack.c.b16 %v3705, %v3701
  %v3930 = vpack.c.b16 %v3710, %v3706
  %v3931 = vpack.c.b16 %v3711, %v3707
  %v3932 = vpack.c.b16 %v3712, %v3708
  %v3933 = vpack.c.b16 %v3713, %v3709
  %v3934 = vpack.c.b16 %v3718, %v3714
  %v3935 = vpack.c.b16 %v3719, %v3715
  %v3936 = vpack.c.b16 %v3720, %v3716
  %v3937 = vpack.c.b16 %v3721, %v3717
  %v3938 = vpack.c.b16 %v3726, %v3722
  %v3939 = vpack.c.b16 %v3727, %v3723
  %v3940 = vpack.c.b16 %v3728, %v3724
  %v3941 = vpack.c.b16 %v3729, %v3725
  %v3942 = vpack.c.b16 %v3734, %v3730
  %v3943 = vpack.c.b16 %v3735, %v3731
  %v3944 = vpack.c.b16 %v3736, %v3732
  %v3945 = vpack.c.b16 %v3737, %v3733
  %v3946 = vpack.c.b16 %v3742, %v3738
  %v3947 = vpack.c.b16 %v3743, %v3739
  %v3948 = vpack.c.b16 %v3744, %v3740
  %v3949 = vpack.c.b16 %v3745, %v3741
  %v3950 = vpack.c.b16 %v3750, %v3746
  %v3951 = vpack.c.b16 %v3751, %v3747
  %v3952 = vpack.c.b16 %v3752, %v3748
  %v3953 = vpack.c.b16 %v3753, %v3749
  %v3954 = vpack.c.b16 %v3758, %v3754
  %v3955 = vpack.c.b16 %v3759, %v3755
  %v3956 = vpack.c.b16 %v3760, %v3756
  %v3957 = vpack.c.b16 %v3761, %v3757
  %v3958 = vpack.c.b16 %v3766, %v3762
  %v3959 = vpack.c.b16 %v3767, %v3763
  %v3960 = vpack.c.b16 %v3768, %v3764
  %v3961 = vpack.c.b16 %v3769, %v3765
  %v3962 = vpack.c.b16 %v3774, %v3770
  %v3963 = vpack.c.b16 %v3775, %v3771
  %v3964 = vpack.c.b16 %v3776, %v3772
  %v3965 = vpack.c.b16 %v3777, %v3773
  %v3966 = vpack.c.b16 %v3782, %v3778
  %v3967 = vpack.c.b16 %v3783, %v3779
  %v3968 = vpack.c.b16 %v3784, %v3780
  %v3969 = vpack.c.b16 %v3785, %v3781
  %v3970 = vpack.c.b16 %v3790, %v3786
  %v3971 = vpack.c.b16 %v3791, %v3787
  %v3972 = vpack.c.b16 %v3792, %v3788
  %v3973 = vpack.c.b16 %v3793, %v3789
  %v3974 = vpack.c.b16 %v3798, %v3794
  %v3975 = vpack.c.b16 %v3799, %v3795
  %v3976 = vpack.c.b16 %v3800, %v3796
  %v3977 = vpack.c.b16 %v3801, %v3797
  %v3978 = vpack.c.b16 %v3806, %v3802
  %v3979 = vpack.c.b16 %v3807, %v3803
  %v3980 = vpack.c.b16 %v3808, %v3804
  %v3981 = vpack.c.b16 %v3809, %v3805
  %v3982 = vpack.c.b16 %v3814, %v3810
  %v3983 = vpack.c.b16 %v3815, %v3811
  %v3984 = vpack.c.b16 %v3816, %v3812
  %v3985 = vpack.c.b16 %v3817, %v3813
  %v3986 = vpack.c.b16 %v3822, %v3818
  %v3987 = vpack.c.b16 %v3823, %v3819
  %v3988 = vpack.c.b16 %v3824, %v3820
  %v3989 = vpack.c.b16 %v3825, %v3821
  %v3990 = vpack.c.b16 %v3830, %v3826
  %v3991 = vpack.c.b16 %v3831, %v3827
  %v3992 = vpack.c.b16 %v3832, %v3828
  %v3993 = vpack.c.b16 %v3833, %v3829
  %v3994 = vpack.c.b16 %v3838, %v3834
  %v3995 = vpack.c.b16 %v3839, %v3835
  %v3996 = vpack.c.b16 %v3840, %v3836
  %v3997 = vpack.c.b16 %v3841, %v3837
  %v3998 = vpack.c.b16 %v3846, %v3842
  %v3999 = vpack.c.b16 %v3847, %v3843
  %v4000 = vpack.c.b16 %v3848, %v3844
  %v4001 = vpack.c.b16 %v3849, %v3845
  %v4002 = vpack.c.b16 %v3854, %v3850
  %v4003 = vpack.c.b16 %v3855, %v3851
  %v4004 = vpack.c.b16 %v3856, %v3852
  %v4005 = vpack.c.b16 %v3857, %v3853
  %v4006 = vpack.c.b16 %v3862, %v3858
  %v4007 = vpack.c.b16 %v3863, %v3859
  %v4008 = vpack.c.b16 %v3864, %v3860
  %v4009 = vpack.c.b16 %v3865, %v3861
  %v4010 = vpack.c.b16 %v3870, %v3866
  %v4011 = vpack.c.b16 %v3871, %v3867
  %v4012 = vpack.c.b16 %v3872, %v3868
  %v4013 = vpack.c.b16 %v3873, %v3869
  %v4014 = vpack.c.b16 %v3878, %v3874
  %v4015 = vpack.c.b16 %v3879, %v3875
  %v4016 = vpack.c.b16 %v3880, %v3876
  %v4017 = vpack.c.b16 %v3881, %v3877
  %v4018 = vpack.c.b16 %v3886, %v3882
  %v4019 = vpack.c.b16 %v3887, %v3883
  %v4020 = vpack.c.b16 %v3888, %v3884
  %v4021 = vpack.c.b16 %v3889, %v3885
  %v4022 = vpack.c.b16 %v3894, %v3890
  %v4023 = vpack.c.b16 %v3895, %v3891
  %v4024 = vpack.c.b16 %v3896, %v3892
  %v4025 = vpack.c.b16 %v3897, %v3893
  %4154 = vmatprep.subr.bf16.mxu0 %v3899
  %4155 = vmatpush1.bf16.msra.mxu0 %v3898
  %4156 = vmatprep.subr.bf16.mxu0 %v3903
  %4157 = vmatpush1.bf16.msra.mxu0 %v3902
  %4158 = vmatprep.subr.bf16.mxu0 %v3907
  %4159 = vmatpush1.bf16.msra.mxu0 %v3906
  %4160 = vmatprep.subr.bf16.mxu0 %v3911
  %4161 = vmatpush1.bf16.msra.mxu0 %v3910
  %4162 = vmatprep.subr.bf16.mxu0 %v3915
  %4163 = vmatpush1.bf16.msra.mxu0 %v3914
  %4164 = vmatprep.subr.bf16.mxu0 %v3919
  %4165 = vmatpush1.bf16.msra.mxu0 %v3918
  %4166 = vmatprep.subr.bf16.mxu0 %v3923
  %4167 = vmatpush1.bf16.msra.mxu0 %v3922
  %4168 = vmatprep.subr.bf16.mxu0 %v3927
  %4169 = vmatpush1.bf16.msra.mxu0 %v3926
  %4170 = vmatprep.subr.bf16.mxu0 %v3931
  %4171 = vmatpush1.bf16.msra.mxu0 %v3930
  %4172 = vmatprep.subr.bf16.mxu0 %v3935
  %4173 = vmatpush1.bf16.msra.mxu0 %v3934
  %4174 = vmatprep.subr.bf16.mxu0 %v3939
  %4175 = vmatpush1.bf16.msra.mxu0 %v3938
  %4176 = vmatprep.subr.bf16.mxu0 %v3943
  %4177 = vmatpush1.bf16.msra.mxu0 %v3942
  %4178 = vmatprep.subr.bf16.mxu0 %v3947
  %4179 = vmatpush1.bf16.msra.mxu0 %v3946
  %4180 = vmatprep.subr.bf16.mxu0 %v3951
  %4181 = vmatpush1.bf16.msra.mxu0 %v3950
  %4182 = vmatprep.subr.bf16.mxu0 %v3955
  %4183 = vmatpush1.bf16.msra.mxu0 %v3954
  %4184 = vmatprep.subr.bf16.mxu0 %v3959
  %4185 = vmatpush1.bf16.msra.mxu0 %v3958
  %4186 = vmatprep.mubr.bf16.mxu0 %v3361
  %4187 = vmatmul.mubr.bf16.gmra.mrb[0].mxu0 %v3360
  %v4188 = vpop.f32.mrb[0].mxu0
  %v4189 = vadd.f32 %v3497, %v4188
  %v4190 = vpop.f32.mrb[0].mxu0
  %v4191 = vadd.f32 %v3501, %v4190
  %v4192 = vpop.f32.mrb[0].mxu0
  %v4193 = vpop.f32.mrb[0].mxu0
  %4194 = vdwg.mxu0
  %4195 = vmatprep.subr.bf16.mxu0 %v3963
  %4196 = vmatpush1.bf16.msra.mxu0 %v3962
  %4197 = vmatprep.subr.bf16.mxu0 %v3967
  %4198 = vmatpush1.bf16.msra.mxu0 %v3966
  %4199 = vmatprep.subr.bf16.mxu0 %v3971
  %4200 = vmatpush1.bf16.msra.mxu0 %v3970
  %4201 = vmatprep.subr.bf16.mxu0 %v3975
  %4202 = vmatpush1.bf16.msra.mxu0 %v3974
  %4203 = vmatprep.subr.bf16.mxu0 %v3979
  %4204 = vmatpush1.bf16.msra.mxu0 %v3978
  %4205 = vmatprep.subr.bf16.mxu0 %v3983
  %4206 = vmatpush1.bf16.msra.mxu0 %v3982
  %4207 = vmatprep.subr.bf16.mxu0 %v3987
  %4208 = vmatpush1.bf16.msra.mxu0 %v3986
  %4209 = vmatprep.subr.bf16.mxu0 %v3991
  %4210 = vmatpush1.bf16.msra.mxu0 %v3990
  %4211 = vmatprep.subr.bf16.mxu0 %v3995
  %4212 = vmatpush1.bf16.msra.mxu0 %v3994
  %4213 = vmatprep.subr.bf16.mxu0 %v3999
  %4214 = vmatpush1.bf16.msra.mxu0 %v3998
  %4215 = vmatprep.subr.bf16.mxu0 %v4003
  %4216 = vmatpush1.bf16.msra.mxu0 %v4002
  %4217 = vmatprep.subr.bf16.mxu0 %v4007
  %4218 = vmatpush1.bf16.msra.mxu0 %v4006
  %4219 = vmatprep.subr.bf16.mxu0 %v4011
  %4220 = vmatpush1.bf16.msra.mxu0 %v4010
  %4221 = vmatprep.subr.bf16.mxu0 %v4015
  %4222 = vmatpush1.bf16.msra.mxu0 %v4014
  %4223 = vmatprep.subr.bf16.mxu0 %v4019
  %4224 = vmatpush1.bf16.msra.mxu0 %v4018
  %4225 = vmatprep.subr.bf16.mxu0 %v4023
  %4226 = vmatpush1.bf16.msra.mxu0 %v4022
  %4227 = vmatprep.mubr.bf16.mxu0 %v3363
  %4228 = vmatmul.mubr.bf16.gmra.mrb[0].mxu0 %v3362
  %v4229 = vpop.f32.mrb[0].mxu0
  %v4230 = vadd.f32 %v4189, %v4229
  %v4231 = vpop.f32.mrb[0].mxu0
  %v4232 = vadd.f32 %v4191, %v4231
  %v4233 = vpop.f32.mrb[0].mxu0
  %v4234 = vpop.f32.mrb[0].mxu0
  %4235 = vdwg.mxu0
  %4236 = vmatprep.subr.bf16.mxu0 %v3901
  %4237 = vmatpush1.bf16.msra.mxu0 %v3900
  %4238 = vmatprep.subr.bf16.mxu0 %v3905
  %4239 = vmatpush1.bf16.msra.mxu0 %v3904
  %4240 = vmatprep.subr.bf16.mxu0 %v3909
  %4241 = vmatpush1.bf16.msra.mxu0 %v3908
  %4242 = vmatprep.subr.bf16.mxu0 %v3913
  %4243 = vmatpush1.bf16.msra.mxu0 %v3912
  %4244 = vmatprep.subr.bf16.mxu0 %v3917
  %4245 = vmatpush1.bf16.msra.mxu0 %v3916
  %4246 = vmatprep.subr.bf16.mxu0 %v3921
  %4247 = vmatpush1.bf16.msra.mxu0 %v3920
  %4248 = vmatprep.subr.bf16.mxu0 %v3925
  %4249 = vmatpush1.bf16.msra.mxu0 %v3924
  %4250 = vmatprep.subr.bf16.mxu0 %v3929
  %4251 = vmatpush1.bf16.msra.mxu0 %v3928
  %4252 = vmatprep.subr.bf16.mxu0 %v3933
  %4253 = vmatpush1.bf16.msra.mxu0 %v3932
  %4254 = vmatprep.subr.bf16.mxu0 %v3937
  %4255 = vmatpush1.bf16.msra.mxu0 %v3936
  %4256 = vmatprep.subr.bf16.mxu0 %v3941
  %4257 = vmatpush1.bf16.msra.mxu0 %v3940
  %4258 = vmatprep.subr.bf16.mxu0 %v3945
  %4259 = vmatpush1.bf16.msra.mxu0 %v3944
  %4260 = vmatprep.subr.bf16.mxu0 %v3949
  %4261 = vmatpush1.bf16.msra.mxu0 %v3948
  %4262 = vmatprep.subr.bf16.mxu0 %v3953
  %4263 = vmatpush1.bf16.msra.mxu0 %v3952
  %4264 = vmatprep.subr.bf16.mxu0 %v3957
  %4265 = vmatpush1.bf16.msra.mxu0 %v3956
  %4266 = vmatprep.subr.bf16.mxu0 %v3961
  %4267 = vmatpush1.bf16.msra.mxu0 %v3960
  %4268 = vmatprep.mubr.bf16.mxu0 %v3361
  %4269 = vmatmul.mubr.bf16.gmra.mrb[0].mxu0 %v3360
  %v4270 = vpop.f32.mrb[0].mxu0
  %v4271 = vadd.f32 %v3505, %v4270
  %v4272 = vpop.f32.mrb[0].mxu0
  %v4273 = vadd.f32 %v3509, %v4272
  %v4274 = vpop.f32.mrb[0].mxu0
  %v4275 = vpop.f32.mrb[0].mxu0
  %4276 = vdwg.mxu0
  %4277 = vmatprep.subr.bf16.mxu0 %v3965
  %4278 = vmatpush1.bf16.msra.mxu0 %v3964
  %4279 = vmatprep.subr.bf16.mxu0 %v3969
  %4280 = vmatpush1.bf16.msra.mxu0 %v3968
  %4281 = vmatprep.subr.bf16.mxu0 %v3973
  %4282 = vmatpush1.bf16.msra.mxu0 %v3972
  %4283 = vmatprep.subr.bf16.mxu0 %v3977
  %4284 = vmatpush1.bf16.msra.mxu0 %v3976
  %4285 = vmatprep.subr.bf16.mxu0 %v3981
  %4286 = vmatpush1.bf16.msra.mxu0 %v3980
  %4287 = vmatprep.subr.bf16.mxu0 %v3985
  %4288 = vmatpush1.bf16.msra.mxu0 %v3984
  %4289 = vmatprep.subr.bf16.mxu0 %v3989
  %4290 = vmatpush1.bf16.msra.mxu0 %v3988
  %4291 = vmatprep.subr.bf16.mxu0 %v3993
  %4292 = vmatpush1.bf16.msra.mxu0 %v3992
  %4293 = vmatprep.subr.bf16.mxu0 %v3997
  %4294 = vmatpush1.bf16.msra.mxu0 %v3996
  %4295 = vmatprep.subr.bf16.mxu0 %v4001
  %4296 = vmatpush1.bf16.msra.mxu0 %v4000
  %4297 = vmatprep.subr.bf16.mxu0 %v4005
  %4298 = vmatpush1.bf16.msra.mxu0 %v4004
  %4299 = vmatprep.subr.bf16.mxu0 %v4009
  %4300 = vmatpush1.bf16.msra.mxu0 %v4008
  %4301 = vmatprep.subr.bf16.mxu0 %v4013
  %4302 = vmatpush1.bf16.msra.mxu0 %v4012
  %4303 = vmatprep.subr.bf16.mxu0 %v4017
  %4304 = vmatpush1.bf16.msra.mxu0 %v4016
  %4305 = vmatprep.subr.bf16.mxu0 %v4021
  %4306 = vmatpush1.bf16.msra.mxu0 %v4020
  %4307 = vmatprep.subr.bf16.mxu0 %v4025
  %4308 = vmatpush1.bf16.msra.mxu0 %v4024
  %4309 = vmatprep.mubr.bf16.mxu0 %v3363
  %4310 = vmatmul.mubr.bf16.gmra.mrb[0].mxu0 %v3362
  %v4311 = vpop.f32.mrb[0].mxu0
  %v4312 = vadd.f32 %v4271, %v4311
  %v4313 = vpop.f32.mrb[0].mxu0
  %v4314 = vadd.f32 %v4273, %v4313
  %v4315 = vpop.f32.mrb[0].mxu0
  %v4316 = vpop.f32.mrb[0].mxu0
  %4317 = vdwg.mxu0
  %v4318 = vpack.c.bf16 %v3220, %v3220
  %v4319 = vpack.c.bf16 %v3222, %v3222
  %v4320 = vpack.c.bf16 %v3302, %v3302
  %v4321 = vpack.c.bf16 %v3304, %v3304
  %v4322 = vpack.c.bf16 %v4230, %v4230
  %v4323 = vpack.c.bf16 %v4232, %v4232
  %v4324 = vpack.c.bf16 %v4312, %v4312
  %v4325 = vpack.c.bf16 %v4314, %v4314
  %v4326 = vld [vmem:[%s15] sm:$0xf]
  %v4327 = vld [vmem:[%s15 + $0x4] sm:$0xf]
  %v4328 = vld [vmem:[%s15 + $0x8] sm:$0xf]
  %v4329 = vld [vmem:[%s15 + $0xc] sm:$0xf]
  %v4330 = vld [vmem:[%s15 + $0x10] sm:$0xf]
  %v4331 = vld [vmem:[%s15 + $0x14] sm:$0xf]
  %v4332 = vld [vmem:[%s15 + $0x18] sm:$0xf]
  %v4333 = vld [vmem:[%s15 + $0x1c] sm:$0xf]
  %v4334 = vld [vmem:[%s15 + $0x20] sm:$0xf]
  %v4335 = vld [vmem:[%s15 + $0x24] sm:$0xf]
  %v4336 = vld [vmem:[%s15 + $0x28] sm:$0xf]
  %v4337 = vld [vmem:[%s15 + $0x2c] sm:$0xf]
  %v4338 = vld [vmem:[%s15 + $0x30] sm:$0xf]
  %v4339 = vld [vmem:[%s15 + $0x34] sm:$0xf]
  %v4340 = vld [vmem:[%s15 + $0x38] sm:$0xf]
  %v4341 = vld [vmem:[%s15 + $0x3c] sm:$0xf]
  %v4342 = vld [vmem:[%s15 + $0x40] sm:$0xf]
  %v4343 = vld [vmem:[%s15 + $0x44] sm:$0xf]
  %v4344 = vld [vmem:[%s15 + $0x48] sm:$0xf]
  %v4345 = vld [vmem:[%s15 + $0x4c] sm:$0xf]
  %v4346 = vld [vmem:[%s15 + $0x50] sm:$0xf]
  %v4347 = vld [vmem:[%s15 + $0x54] sm:$0xf]
  %v4348 = vld [vmem:[%s15 + $0x58] sm:$0xf]
  %v4349 = vld [vmem:[%s15 + $0x5c] sm:$0xf]
  %v4350 = vld [vmem:[%s15 + $0x60] sm:$0xf]
  %v4351 = vld [vmem:[%s15 + $0x64] sm:$0xf]
  %v4352 = vld [vmem:[%s15 + $0x68] sm:$0xf]
  %v4353 = vld [vmem:[%s15 + $0x6c] sm:$0xf]
  %v4354 = vld [vmem:[%s15 + $0x70] sm:$0xf]
  %v4355 = vld [vmem:[%s15 + $0x74] sm:$0xf]
  %v4356 = vld [vmem:[%s15 + $0x78] sm:$0xf]
  %v4357 = vld [vmem:[%s15 + $0x7c] sm:$0xf]
  %v4358 = vld [vmem:[%s15 + $0x80] sm:$0xf]
  %v4359 = vld [vmem:[%s15 + $0x84] sm:$0xf]
  %v4360 = vld [vmem:[%s15 + $0x88] sm:$0xf]
  %v4361 = vld [vmem:[%s15 + $0x8c] sm:$0xf]
  %v4362 = vld [vmem:[%s15 + $0x90] sm:$0xf]
  %v4363 = vld [vmem:[%s15 + $0x94] sm:$0xf]
  %v4364 = vld [vmem:[%s15 + $0x98] sm:$0xf]
  %v4365 = vld [vmem:[%s15 + $0x9c] sm:$0xf]
  %v4366 = vld [vmem:[%s15 + $0xa0] sm:$0xf]
  %v4367 = vld [vmem:[%s15 + $0xa4] sm:$0xf]
  %v4368 = vld [vmem:[%s15 + $0xa8] sm:$0xf]
  %v4369 = vld [vmem:[%s15 + $0xac] sm:$0xf]
  %v4370 = vld [vmem:[%s15 + $0xb0] sm:$0xf]
  %v4371 = vld [vmem:[%s15 + $0xb4] sm:$0xf]
  %v4372 = vld [vmem:[%s15 + $0xb8] sm:$0xf]
  %v4373 = vld [vmem:[%s15 + $0xbc] sm:$0xf]
  %v4374 = vld [vmem:[%s15 + $0xc0] sm:$0xf]
  %v4375 = vld [vmem:[%s15 + $0xc4] sm:$0xf]
  %v4376 = vld [vmem:[%s15 + $0xc8] sm:$0xf]
  %v4377 = vld [vmem:[%s15 + $0xcc] sm:$0xf]
  %v4378 = vld [vmem:[%s15 + $0xd0] sm:$0xf]
  %v4379 = vld [vmem:[%s15 + $0xd4] sm:$0xf]
  %v4380 = vld [vmem:[%s15 + $0xd8] sm:$0xf]
  %v4381 = vld [vmem:[%s15 + $0xdc] sm:$0xf]
  %v4382 = vld [vmem:[%s15 + $0xe0] sm:$0xf]
  %v4383 = vld [vmem:[%s15 + $0xe4] sm:$0xf]
  %v4384 = vld [vmem:[%s15 + $0xe8] sm:$0xf]
  %v4385 = vld [vmem:[%s15 + $0xec] sm:$0xf]
  %v4386 = vld [vmem:[%s15 + $0xf0] sm:$0xf]
  %v4387 = vld [vmem:[%s15 + $0xf4] sm:$0xf]
  %v4388 = vld [vmem:[%s15 + $0xf8] sm:$0xf]
  %v4389 = vld [vmem:[%s15 + $0xfc] sm:$0xf]
  %v4390 = vld [vmem:[%s15 + $0x100] sm:$0xf]
  %v4391 = vld [vmem:[%s15 + $0x104] sm:$0xf]
  %v4392 = vld [vmem:[%s15 + $0x108] sm:$0xf]
  %v4393 = vld [vmem:[%s15 + $0x10c] sm:$0xf]
  %v4394 = vld [vmem:[%s15 + $0x110] sm:$0xf]
  %v4395 = vld [vmem:[%s15 + $0x114] sm:$0xf]
  %v4396 = vld [vmem:[%s15 + $0x118] sm:$0xf]
  %v4397 = vld [vmem:[%s15 + $0x11c] sm:$0xf]
  %v4398 = vld [vmem:[%s15 + $0x120] sm:$0xf]
  %v4399 = vld [vmem:[%s15 + $0x124] sm:$0xf]
  %v4400 = vld [vmem:[%s15 + $0x128] sm:$0xf]
  %v4401 = vld [vmem:[%s15 + $0x12c] sm:$0xf]
  %v4402 = vld [vmem:[%s15 + $0x130] sm:$0xf]
  %v4403 = vld [vmem:[%s15 + $0x134] sm:$0xf]
  %v4404 = vld [vmem:[%s15 + $0x138] sm:$0xf]
  %v4405 = vld [vmem:[%s15 + $0x13c] sm:$0xf]
  %v4406 = vld [vmem:[%s15 + $0x140] sm:$0xf]
  %v4407 = vld [vmem:[%s15 + $0x144] sm:$0xf]
  %v4408 = vld [vmem:[%s15 + $0x148] sm:$0xf]
  %v4409 = vld [vmem:[%s15 + $0x14c] sm:$0xf]
  %v4410 = vld [vmem:[%s15 + $0x150] sm:$0xf]
  %v4411 = vld [vmem:[%s15 + $0x154] sm:$0xf]
  %v4412 = vld [vmem:[%s15 + $0x158] sm:$0xf]
  %v4413 = vld [vmem:[%s15 + $0x15c] sm:$0xf]
  %v4414 = vld [vmem:[%s15 + $0x160] sm:$0xf]
  %v4415 = vld [vmem:[%s15 + $0x164] sm:$0xf]
  %v4416 = vld [vmem:[%s15 + $0x168] sm:$0xf]
  %v4417 = vld [vmem:[%s15 + $0x16c] sm:$0xf]
  %v4418 = vld [vmem:[%s15 + $0x170] sm:$0xf]
  %v4419 = vld [vmem:[%s15 + $0x174] sm:$0xf]
  %v4420 = vld [vmem:[%s15 + $0x178] sm:$0xf]
  %v4421 = vld [vmem:[%s15 + $0x17c] sm:$0xf]
  %v4422 = vld [vmem:[%s15 + $0x180] sm:$0xf]
  %v4423 = vld [vmem:[%s15 + $0x184] sm:$0xf]
  %v4424 = vld [vmem:[%s15 + $0x188] sm:$0xf]
  %v4425 = vld [vmem:[%s15 + $0x18c] sm:$0xf]
  %v4426 = vld [vmem:[%s15 + $0x190] sm:$0xf]
  %v4427 = vld [vmem:[%s15 + $0x194] sm:$0xf]
  %v4428 = vld [vmem:[%s15 + $0x198] sm:$0xf]
  %v4429 = vld [vmem:[%s15 + $0x19c] sm:$0xf]
  %v4430 = vld [vmem:[%s15 + $0x1a0] sm:$0xf]
  %v4431 = vld [vmem:[%s15 + $0x1a4] sm:$0xf]
  %v4432 = vld [vmem:[%s15 + $0x1a8] sm:$0xf]
  %v4433 = vld [vmem:[%s15 + $0x1ac] sm:$0xf]
  %v4434 = vld [vmem:[%s15 + $0x1b0] sm:$0xf]
  %v4435 = vld [vmem:[%s15 + $0x1b4] sm:$0xf]
  %v4436 = vld [vmem:[%s15 + $0x1b8] sm:$0xf]
  %v4437 = vld [vmem:[%s15 + $0x1bc] sm:$0xf]
  %v4438 = vld [vmem:[%s15 + $0x1c0] sm:$0xf]
  %v4439 = vld [vmem:[%s15 + $0x1c4] sm:$0xf]
  %v4440 = vld [vmem:[%s15 + $0x1c8] sm:$0xf]
  %v4441 = vld [vmem:[%s15 + $0x1cc] sm:$0xf]
  %v4442 = vld [vmem:[%s15 + $0x1d0] sm:$0xf]
  %v4443 = vld [vmem:[%s15 + $0x1d4] sm:$0xf]
  %v4444 = vld [vmem:[%s15 + $0x1d8] sm:$0xf]
  %v4445 = vld [vmem:[%s15 + $0x1dc] sm:$0xf]
  %v4446 = vld [vmem:[%s15 + $0x1e0] sm:$0xf]
  %v4447 = vld [vmem:[%s15 + $0x1e4] sm:$0xf]
  %v4448 = vld [vmem:[%s15 + $0x1e8] sm:$0xf]
  %v4449 = vld [vmem:[%s15 + $0x1ec] sm:$0xf]
  %v4450 = vld [vmem:[%s15 + $0x1f0] sm:$0xf]
  %v4451 = vld [vmem:[%s15 + $0x1f4] sm:$0xf]
  %v4452 = vld [vmem:[%s15 + $0x1f8] sm:$0xf]
  %v4453 = vld [vmem:[%s15 + $0x1fc] sm:$0xf]
  %v4454 = vld [vmem:[%s16] sm:$0x1]
  %v4456 = vlaneseq
  %v4457 = vshrl.u32 %v4456, 7
  %v4458 = vsub.s32 0, %v4457
  %v4459 = vrot.slane %v4454, %v4458
  %v4589 = vunpack.c.l.b16 %v4326
  %v4590 = vunpack.c.l.b16 %v4327
  %v4591 = vunpack.c.l.b16 %v4328
  %v4592 = vunpack.c.l.b16 %v4329
  %v4593 = vunpack.c.l.b16 %v4330
  %v4594 = vunpack.c.l.b16 %v4331
  %v4595 = vunpack.c.l.b16 %v4332
  %v4596 = vunpack.c.l.b16 %v4333
  %v4597 = vunpack.c.l.b16 %v4334
  %v4598 = vunpack.c.l.b16 %v4335
  %v4599 = vunpack.c.l.b16 %v4336
  %v4600 = vunpack.c.l.b16 %v4337
  %v4601 = vunpack.c.l.b16 %v4338
  %v4602 = vunpack.c.l.b16 %v4339
  %v4603 = vunpack.c.l.b16 %v4340
  %v4604 = vunpack.c.l.b16 %v4341
  %v4605 = vunpack.c.l.b16 %v4342
  %v4606 = vunpack.c.l.b16 %v4343
  %v4607 = vunpack.c.l.b16 %v4344
  %v4608 = vunpack.c.l.b16 %v4345
  %v4609 = vunpack.c.l.b16 %v4346
  %v4610 = vunpack.c.l.b16 %v4347
  %v4611 = vunpack.c.l.b16 %v4348
  %v4612 = vunpack.c.l.b16 %v4349
  %v4613 = vunpack.c.l.b16 %v4350
  %v4614 = vunpack.c.l.b16 %v4351
  %v4615 = vunpack.c.l.b16 %v4352
  %v4616 = vunpack.c.l.b16 %v4353
  %v4617 = vunpack.c.l.b16 %v4354
  %v4618 = vunpack.c.l.b16 %v4355
  %v4619 = vunpack.c.l.b16 %v4356
  %v4620 = vunpack.c.l.b16 %v4357
  %v4621 = vunpack.c.l.b16 %v4358
  %v4622 = vunpack.c.l.b16 %v4359
  %v4623 = vunpack.c.l.b16 %v4360
  %v4624 = vunpack.c.l.b16 %v4361
  %v4625 = vunpack.c.l.b16 %v4362
  %v4626 = vunpack.c.l.b16 %v4363
  %v4627 = vunpack.c.l.b16 %v4364
  %v4628 = vunpack.c.l.b16 %v4365
  %v4629 = vunpack.c.l.b16 %v4366
  %v4630 = vunpack.c.l.b16 %v4367
  %v4631 = vunpack.c.l.b16 %v4368
  %v4632 = vunpack.c.l.b16 %v4369
  %v4633 = vunpack.c.l.b16 %v4370
  %v4634 = vunpack.c.l.b16 %v4371
  %v4635 = vunpack.c.l.b16 %v4372
  %v4636 = vunpack.c.l.b16 %v4373
  %v4637 = vunpack.c.l.b16 %v4374
  %v4638 = vunpack.c.l.b16 %v4375
  %v4639 = vunpack.c.l.b16 %v4376
  %v4640 = vunpack.c.l.b16 %v4377
  %v4641 = vunpack.c.l.b16 %v4378
  %v4642 = vunpack.c.l.b16 %v4379
  %v4643 = vunpack.c.l.b16 %v4380
  %v4644 = vunpack.c.l.b16 %v4381
  %v4645 = vunpack.c.l.b16 %v4382
  %v4646 = vunpack.c.l.b16 %v4383
  %v4647 = vunpack.c.l.b16 %v4384
  %v4648 = vunpack.c.l.b16 %v4385
  %v4649 = vunpack.c.l.b16 %v4386
  %v4650 = vunpack.c.l.b16 %v4387
  %v4651 = vunpack.c.l.b16 %v4388
  %v4652 = vunpack.c.l.b16 %v4389
  %v4653 = vunpack.c.l.b16 %v4390
  %v4654 = vunpack.c.l.b16 %v4391
  %v4655 = vunpack.c.l.b16 %v4392
  %v4656 = vunpack.c.l.b16 %v4393
  %v4657 = vunpack.c.l.b16 %v4394
  %v4658 = vunpack.c.l.b16 %v4395
  %v4659 = vunpack.c.l.b16 %v4396
  %v4660 = vunpack.c.l.b16 %v4397
  %v4661 = vunpack.c.l.b16 %v4398
  %v4662 = vunpack.c.l.b16 %v4399
  %v4663 = vunpack.c.l.b16 %v4400
  %v4664 = vunpack.c.l.b16 %v4401
  %v4665 = vunpack.c.l.b16 %v4402
  %v4666 = vunpack.c.l.b16 %v4403
  %v4667 = vunpack.c.l.b16 %v4404
  %v4668 = vunpack.c.l.b16 %v4405
  %v4669 = vunpack.c.l.b16 %v4406
  %v4670 = vunpack.c.l.b16 %v4407
  %v4671 = vunpack.c.l.b16 %v4408
  %v4672 = vunpack.c.l.b16 %v4409
  %v4673 = vunpack.c.l.b16 %v4410
  %v4674 = vunpack.c.l.b16 %v4411
  %v4675 = vunpack.c.l.b16 %v4412
  %v4676 = vunpack.c.l.b16 %v4413
  %v4677 = vunpack.c.l.b16 %v4414
  %v4678 = vunpack.c.l.b16 %v4415
  %v4679 = vunpack.c.l.b16 %v4416
  %v4680 = vunpack.c.l.b16 %v4417
  %v4681 = vunpack.c.l.b16 %v4418
  %v4682 = vunpack.c.l.b16 %v4419
  %v4683 = vunpack.c.l.b16 %v4420
  %v4684 = vunpack.c.l.b16 %v4421
  %v4685 = vunpack.c.l.b16 %v4422
  %v4686 = vunpack.c.l.b16 %v4423
  %v4687 = vunpack.c.l.b16 %v4424
  %v4688 = vunpack.c.l.b16 %v4425
  %v4689 = vunpack.c.l.b16 %v4426
  %v4690 = vunpack.c.l.b16 %v4427
  %v4691 = vunpack.c.l.b16 %v4428
  %v4692 = vunpack.c.l.b16 %v4429
  %v4693 = vunpack.c.l.b16 %v4430
  %v4694 = vunpack.c.l.b16 %v4431
  %v4695 = vunpack.c.l.b16 %v4432
  %v4696 = vunpack.c.l.b16 %v4433
  %v4697 = vunpack.c.l.b16 %v4434
  %v4698 = vunpack.c.l.b16 %v4435
  %v4699 = vunpack.c.l.b16 %v4436
  %v4700 = vunpack.c.l.b16 %v4437
  %v4701 = vunpack.c.l.b16 %v4438
  %v4702 = vunpack.c.l.b16 %v4439
  %v4703 = vunpack.c.l.b16 %v4440
  %v4704 = vunpack.c.l.b16 %v4441
  %v4705 = vunpack.c.l.b16 %v4442
  %v4706 = vunpack.c.l.b16 %v4443
  %v4707 = vunpack.c.l.b16 %v4444
  %v4708 = vunpack.c.l.b16 %v4445
  %v4709 = vunpack.c.l.b16 %v4446
  %v4710 = vunpack.c.l.b16 %v4447
  %v4711 = vunpack.c.l.b16 %v4448
  %v4712 = vunpack.c.l.b16 %v4449
  %v4713 = vunpack.c.l.b16 %v4450
  %v4714 = vunpack.c.l.b16 %v4451
  %v4715 = vunpack.c.l.b16 %v4452
  %v4716 = vunpack.c.l.b16 %v4453
  %v4717 = vpack.c.b16 %v4590, %v4589
  %v4718 = vpack.c.b16 %v4592, %v4591
  %v4719 = vpack.c.b16 %v4594, %v4593
  %v4720 = vpack.c.b16 %v4596, %v4595
  %v4721 = vpack.c.b16 %v4598, %v4597
  %v4722 = vpack.c.b16 %v4600, %v4599
  %v4723 = vpack.c.b16 %v4602, %v4601
  %v4724 = vpack.c.b16 %v4604, %v4603
  %v4725 = vpack.c.b16 %v4606, %v4605
  %v4726 = vpack.c.b16 %v4608, %v4607
  %v4727 = vpack.c.b16 %v4610, %v4609
  %v4728 = vpack.c.b16 %v4612, %v4611
  %v4729 = vpack.c.b16 %v4614, %v4613
  %v4730 = vpack.c.b16 %v4616, %v4615
  %v4731 = vpack.c.b16 %v4618, %v4617
  %v4732 = vpack.c.b16 %v4620, %v4619
  %v4733 = vpack.c.b16 %v4622, %v4621
  %v4734 = vpack.c.b16 %v4624, %v4623
  %v4735 = vpack.c.b16 %v4626, %v4625
  %v4736 = vpack.c.b16 %v4628, %v4627
  %v4737 = vpack.c.b16 %v4630, %v4629
  %v4738 = vpack.c.b16 %v4632, %v4631
  %v4739 = vpack.c.b16 %v4634, %v4633
  %v4740 = vpack.c.b16 %v4636, %v4635
  %v4741 = vpack.c.b16 %v4638, %v4637
  %v4742 = vpack.c.b16 %v4640, %v4639
  %v4743 = vpack.c.b16 %v4642, %v4641
  %v4744 = vpack.c.b16 %v4644, %v4643
  %v4745 = vpack.c.b16 %v4646, %v4645
  %v4746 = vpack.c.b16 %v4648, %v4647
  %v4747 = vpack.c.b16 %v4650, %v4649
  %v4748 = vpack.c.b16 %v4652, %v4651
  %v4749 = vpack.c.b16 %v4654, %v4653
  %v4750 = vpack.c.b16 %v4656, %v4655
  %v4751 = vpack.c.b16 %v4658, %v4657
  %v4752 = vpack.c.b16 %v4660, %v4659
  %v4753 = vpack.c.b16 %v4662, %v4661
  %v4754 = vpack.c.b16 %v4664, %v4663
  %v4755 = vpack.c.b16 %v4666, %v4665
  %v4756 = vpack.c.b16 %v4668, %v4667
  %v4757 = vpack.c.b16 %v4670, %v4669
  %v4758 = vpack.c.b16 %v4672, %v4671
  %v4759 = vpack.c.b16 %v4674, %v4673
  %v4760 = vpack.c.b16 %v4676, %v4675
  %v4761 = vpack.c.b16 %v4678, %v4677
  %v4762 = vpack.c.b16 %v4680, %v4679
  %v4763 = vpack.c.b16 %v4682, %v4681
  %v4764 = vpack.c.b16 %v4684, %v4683
  %v4765 = vpack.c.b16 %v4686, %v4685
  %v4766 = vpack.c.b16 %v4688, %v4687
  %v4767 = vpack.c.b16 %v4690, %v4689
  %v4768 = vpack.c.b16 %v4692, %v4691
  %v4769 = vpack.c.b16 %v4694, %v4693
  %v4770 = vpack.c.b16 %v4696, %v4695
  %v4771 = vpack.c.b16 %v4698, %v4697
  %v4772 = vpack.c.b16 %v4700, %v4699
  %v4773 = vpack.c.b16 %v4702, %v4701
  %v4774 = vpack.c.b16 %v4704, %v4703
  %v4775 = vpack.c.b16 %v4706, %v4705
  %v4776 = vpack.c.b16 %v4708, %v4707
  %v4777 = vpack.c.b16 %v4710, %v4709
  %v4778 = vpack.c.b16 %v4712, %v4711
  %v4779 = vpack.c.b16 %v4714, %v4713
  %v4780 = vpack.c.b16 %v4716, %v4715
  %4845 = vmatprep.subr.bf16.mxu0 0
  %4846 = vmatpush1.bf16.msra.mxu0 %v4717
  %4847 = vmatprep.subr.bf16.mxu0 0
  %4848 = vmatpush1.bf16.msra.mxu0 %v4718
  %4849 = vmatprep.subr.bf16.mxu0 0
  %4850 = vmatpush1.bf16.msra.mxu0 %v4719
  %4851 = vmatprep.subr.bf16.mxu0 0
  %4852 = vmatpush1.bf16.msra.mxu0 %v4720
  %4853 = vmatprep.subr.bf16.mxu0 0
  %4854 = vmatpush1.bf16.msra.mxu0 %v4721
  %4855 = vmatprep.subr.bf16.mxu0 0
  %4856 = vmatpush1.bf16.msra.mxu0 %v4722
  %4857 = vmatprep.subr.bf16.mxu0 0
  %4858 = vmatpush1.bf16.msra.mxu0 %v4723
  %4859 = vmatprep.subr.bf16.mxu0 0
  %4860 = vmatpush1.bf16.msra.mxu0 %v4724
  %4861 = vmatprep.subr.bf16.mxu0 0
  %4862 = vmatpush1.bf16.msra.mxu0 %v4725
  %4863 = vmatprep.subr.bf16.mxu0 0
  %4864 = vmatpush1.bf16.msra.mxu0 %v4726
  %4865 = vmatprep.subr.bf16.mxu0 0
  %4866 = vmatpush1.bf16.msra.mxu0 %v4727
  %4867 = vmatprep.subr.bf16.mxu0 0
  %4868 = vmatpush1.bf16.msra.mxu0 %v4728
  %4869 = vmatprep.subr.bf16.mxu0 0
  %4870 = vmatpush1.bf16.msra.mxu0 %v4729
  %4871 = vmatprep.subr.bf16.mxu0 0
  %4872 = vmatpush1.bf16.msra.mxu0 %v4730
  %4873 = vmatprep.subr.bf16.mxu0 0
  %4874 = vmatpush1.bf16.msra.mxu0 %v4731
  %4875 = vmatprep.subr.bf16.mxu0 0
  %4876 = vmatpush1.bf16.msra.mxu0 %v4732
  %4877 = vmatprep.mubr.bf16.mxu0 %v4319
  %4878 = vmatmul.mubr.bf16.gmra.mrb[0].mxu0 %v4318
  %v4879 = vpop.f32.mrb[0].mxu0
  %v4880 = vadd.f32 %v4459, %v4879
  %v4881 = vpop.f32.mrb[0].mxu0
  %v4882 = vpop.f32.mrb[0].mxu0
  %v4883 = vpop.f32.mrb[0].mxu0
  %4884 = vdwg.mxu0
  %4885 = vmatprep.subr.bf16.mxu0 0
  %4886 = vmatpush1.bf16.msra.mxu0 %v4733
  %4887 = vmatprep.subr.bf16.mxu0 0
  %4888 = vmatpush1.bf16.msra.mxu0 %v4734
  %4889 = vmatprep.subr.bf16.mxu0 0
  %4890 = vmatpush1.bf16.msra.mxu0 %v4735
  %4891 = vmatprep.subr.bf16.mxu0 0
  %4892 = vmatpush1.bf16.msra.mxu0 %v4736
  %4893 = vmatprep.subr.bf16.mxu0 0
  %4894 = vmatpush1.bf16.msra.mxu0 %v4737
  %4895 = vmatprep.subr.bf16.mxu0 0
  %4896 = vmatpush1.bf16.msra.mxu0 %v4738
  %4897 = vmatprep.subr.bf16.mxu0 0
  %4898 = vmatpush1.bf16.msra.mxu0 %v4739
  %4899 = vmatprep.subr.bf16.mxu0 0
  %4900 = vmatpush1.bf16.msra.mxu0 %v4740
  %4901 = vmatprep.subr.bf16.mxu0 0
  %4902 = vmatpush1.bf16.msra.mxu0 %v4741
  %4903 = vmatprep.subr.bf16.mxu0 0
  %4904 = vmatpush1.bf16.msra.mxu0 %v4742
  %4905 = vmatprep.subr.bf16.mxu0 0
  %4906 = vmatpush1.bf16.msra.mxu0 %v4743
  %4907 = vmatprep.subr.bf16.mxu0 0
  %4908 = vmatpush1.bf16.msra.mxu0 %v4744
  %4909 = vmatprep.subr.bf16.mxu0 0
  %4910 = vmatpush1.bf16.msra.mxu0 %v4745
  %4911 = vmatprep.subr.bf16.mxu0 0
  %4912 = vmatpush1.bf16.msra.mxu0 %v4746
  %4913 = vmatprep.subr.bf16.mxu0 0
  %4914 = vmatpush1.bf16.msra.mxu0 %v4747
  %4915 = vmatprep.subr.bf16.mxu0 0
  %4916 = vmatpush1.bf16.msra.mxu0 %v4748
  %4917 = vmatprep.mubr.bf16.mxu0 %v4321
  %4918 = vmatmul.mubr.bf16.gmra.mrb[0].mxu0 %v4320
  %v4919 = vpop.f32.mrb[0].mxu0
  %v4920 = vadd.f32 %v4880, %v4919
  %v4921 = vpop.f32.mrb[0].mxu0
  %v4922 = vpop.f32.mrb[0].mxu0
  %v4923 = vpop.f32.mrb[0].mxu0
  %4924 = vdwg.mxu0
  %4925 = vmatprep.subr.bf16.mxu0 0
  %4926 = vmatpush1.bf16.msra.mxu0 %v4749
  %4927 = vmatprep.subr.bf16.mxu0 0
  %4928 = vmatpush1.bf16.msra.mxu0 %v4750
  %4929 = vmatprep.subr.bf16.mxu0 0
  %4930 = vmatpush1.bf16.msra.mxu0 %v4751
  %4931 = vmatprep.subr.bf16.mxu0 0
  %4932 = vmatpush1.bf16.msra.mxu0 %v4752
  %4933 = vmatprep.subr.bf16.mxu0 0
  %4934 = vmatpush1.bf16.msra.mxu0 %v4753
  %4935 = vmatprep.subr.bf16.mxu0 0
  %4936 = vmatpush1.bf16.msra.mxu0 %v4754
  %4937 = vmatprep.subr.bf16.mxu0 0
  %4938 = vmatpush1.bf16.msra.mxu0 %v4755
  %4939 = vmatprep.subr.bf16.mxu0 0
  %4940 = vmatpush1.bf16.msra.mxu0 %v4756
  %4941 = vmatprep.subr.bf16.mxu0 0
  %4942 = vmatpush1.bf16.msra.mxu0 %v4757
  %4943 = vmatprep.subr.bf16.mxu0 0
  %4944 = vmatpush1.bf16.msra.mxu0 %v4758
  %4945 = vmatprep.subr.bf16.mxu0 0
  %4946 = vmatpush1.bf16.msra.mxu0 %v4759
  %4947 = vmatprep.subr.bf16.mxu0 0
  %4948 = vmatpush1.bf16.msra.mxu0 %v4760
  %4949 = vmatprep.subr.bf16.mxu0 0
  %4950 = vmatpush1.bf16.msra.mxu0 %v4761
  %4951 = vmatprep.subr.bf16.mxu0 0
  %4952 = vmatpush1.bf16.msra.mxu0 %v4762
  %4953 = vmatprep.subr.bf16.mxu0 0
  %4954 = vmatpush1.bf16.msra.mxu0 %v4763
  %4955 = vmatprep.subr.bf16.mxu0 0
  %4956 = vmatpush1.bf16.msra.mxu0 %v4764
  %4957 = vmatprep.mubr.bf16.mxu0 %v4323
  %4958 = vmatmul.mubr.bf16.gmra.mrb[0].mxu0 %v4322
  %v4959 = vpop.f32.mrb[0].mxu0
  %v4960 = vadd.f32 %v4920, %v4959
  %v4961 = vpop.f32.mrb[0].mxu0
  %v4962 = vpop.f32.mrb[0].mxu0
  %v4963 = vpop.f32.mrb[0].mxu0
  %4964 = vdwg.mxu0
  %4965 = vmatprep.subr.bf16.mxu0 0
  %4966 = vmatpush1.bf16.msra.mxu0 %v4765
  %4967 = vmatprep.subr.bf16.mxu0 0
  %4968 = vmatpush1.bf16.msra.mxu0 %v4766
  %4969 = vmatprep.subr.bf16.mxu0 0
  %4970 = vmatpush1.bf16.msra.mxu0 %v4767
  %4971 = vmatprep.subr.bf16.mxu0 0
  %4972 = vmatpush1.bf16.msra.mxu0 %v4768
  %4973 = vmatprep.subr.bf16.mxu0 0
  %4974 = vmatpush1.bf16.msra.mxu0 %v4769
  %4975 = vmatprep.subr.bf16.mxu0 0
  %4976 = vmatpush1.bf16.msra.mxu0 %v4770
  %4977 = vmatprep.subr.bf16.mxu0 0
  %4978 = vmatpush1.bf16.msra.mxu0 %v4771
  %4979 = vmatprep.subr.bf16.mxu0 0
  %4980 = vmatpush1.bf16.msra.mxu0 %v4772
  %4981 = vmatprep.subr.bf16.mxu0 0
  %4982 = vmatpush1.bf16.msra.mxu0 %v4773
  %4983 = vmatprep.subr.bf16.mxu0 0
  %4984 = vmatpush1.bf16.msra.mxu0 %v4774
  %4985 = vmatprep.subr.bf16.mxu0 0
  %4986 = vmatpush1.bf16.msra.mxu0 %v4775
  %4987 = vmatprep.subr.bf16.mxu0 0
  %4988 = vmatpush1.bf16.msra.mxu0 %v4776
  %4989 = vmatprep.subr.bf16.mxu0 0
  %4990 = vmatpush1.bf16.msra.mxu0 %v4777
  %4991 = vmatprep.subr.bf16.mxu0 0
  %4992 = vmatpush1.bf16.msra.mxu0 %v4778
  %4993 = vmatprep.subr.bf16.mxu0 0
  %4994 = vmatpush1.bf16.msra.mxu0 %v4779
  %4995 = vmatprep.subr.bf16.mxu0 0
  %4996 = vmatpush1.bf16.msra.mxu0 %v4780
  %4997 = vmatprep.mubr.bf16.mxu0 %v4325
  %4998 = vmatmul.mubr.bf16.gmra.mrb[0].mxu0 %v4324
  %v4999 = vpop.f32.mrb[0].mxu0
  %v5000 = vadd.f32 %v4960, %v4999
  %v5001 = vpop.f32.mrb[0].mxu0
  %v5002 = vpop.f32.mrb[0].mxu0
  %v5003 = vpop.f32.mrb[0].mxu0
  %5004 = vdwg.mxu0
  %5005 = vst [vmem:[%s17] sm:$0x3] %v5000
  // Predicated region
  $region70: #{mvnetwork_forward.5} parent=0 // pred_check
    _
  $region71: #{mvnetwork_forward.5} parent=0 // pred_check_branch
    %5007 = sbr.rel (0) target = $region73
  $region72: #{mvnetwork_forward.5} parent=0 // pred_region
    _
  $region73: #{mvnetwork_forward.5} parent=0 // pred_fallthru
    _
  // Predicated region
  $region74: #{mvnetwork_forward.5} parent=0 // pred_check
    _
  $region75: #{mvnetwork_forward.5} parent=0 // pred_check_branch
    %5009 = sbr.rel (0) target = $region77
  $region76: #{mvnetwork_forward.5} parent=0 // pred_region
    _
  $region77: #{mvnetwork_forward.5} parent=0 // pred_fallthru
    _

</llo_original>
